<compile_context>
chip_gen: v7x
topology: tpu7x:2x2x1
jax: 0.10.0
libtpu: 0.0.40
codegen_flags: <defaults>
</compile_context>

<pallas_src>
import functools

import jax
import jax.numpy as jnp
from jax.experimental import pallas as pl
from jax.experimental.pallas import tpu as pltpu

CPAD = 128     # lane-dense padded channel / class width (MXU N)
KPAD = 128     # padded im2col contraction width for the stem conv (MXU K)
OUT_SUB = 8    # output sublane padding so the output block is (8, 128)-tileable


# ------------------------------ Fused kernel ------------------------------- #

def _fused_resnet_kernel(p_ref, w1_ref, b1_ref, w2_ref, b2_ref, w3_ref, b3_ref,
                         wfc_ref, bfc_ref, o_ref, h1p_ref, h2p_ref,
                         *, height, width, base, n_valid):
    """Whole ResNet forward for one image (grid axis = batch).

    p_ref   : (1, H*W, KPAD)   bf16  pre-im2col'ed input patches (stem conv)
    w1_ref  : (KPAD, CPAD)     bf16  stem im2col weight, BN scale folded
    w2/w3   : (9, CPAD, CPAD)  bf16  per-tap block-conv weights, BN folded
    b1/b2/b3: (1, CPAD)        f32   folded BN biases
    wfc_ref : (CPAD, CPAD)     bf16  FC weight with 1/(H*W) folded in
    bfc_ref : (1, CPAD)        f32   FC bias
    o_ref   : (1, OUT_SUB, CPAD) f32 softmax probs (row 0, padded lanes -> 0)
    h1p/h2p : (rows, CPAD)     f32   zero-haloed activation scratch (VMEM)
    """
    hw = height * width
    f32 = jnp.float32
    bf16 = jnp.bfloat16

    # ---- stem conv: single full-depth MXU pass + f32 epilogue ----
    acc1 = jnp.dot(p_ref[0], w1_ref[...], preferred_element_type=f32)
    h1 = jnp.maximum(acc1 + b1_ref[...], 0.0)                    # (HW, CPAD) f32

    # column-edge masks for the dx = +/-1 taps (x + dx must stay in [0, W))
    col = jax.lax.broadcasted_iota(jnp.int32, (hw, 1), 0) % width
    mask_l = col > 0
    mask_r = col < (width - 1)

    def pad_store(hp_ref, h):
        # zero the halo rows, then drop the activation at an 8-aligned offset
        hp_ref[...] = jnp.zeros_like(hp_ref)
        hp_ref[pl.ds(base, hw), :] = h

    def conv3x3(hp_ref, w_ref):
        # 9 accumulated MXU dots on full-lane-width static slices of the
        # zero-haloed scratch: no narrow-lane concatenate / relayout.
        acc = jnp.zeros((hw, CPAD), f32)
        t = 0
        for dy in (-1, 0, 1):
            for dx in (-1, 0, 1):
                tap = hp_ref[pl.ds(base + dy * width + dx, hw), :]
                if dx == -1:
                    tap = jnp.where(mask_l, tap, 0.0)
                elif dx == 1:
                    tap = jnp.where(mask_r, tap, 0.0)
                acc = acc + jnp.dot(tap.astype(bf16), w_ref[t],
                                    preferred_element_type=f32)
                t += 1
        return acc

    # ---- basic residual block ----
    pad_store(h1p_ref, h1)
    h2 = jnp.maximum(conv3x3(h1p_ref, w2_ref) + b2_ref[...], 0.0)
    pad_store(h2p_ref, h2)
    res = h1p_ref[pl.ds(base, hw), :]                            # f32 residual
    h3 = jnp.maximum(conv3x3(h2p_ref, w3_ref) + b3_ref[...] + res, 0.0)

    # ---- global average pool (on the MXU; 1/(H*W) folded into wfc) ----
    ones = jnp.ones((1, hw), bf16)
    pooled = jnp.dot(ones, h3.astype(bf16), preferred_element_type=f32)

    # ---- FC + softmax ----
    logits = jnp.dot(pooled.astype(bf16), wfc_ref[...],
                     preferred_element_type=f32) + bfc_ref[...]
    lane = jax.lax.broadcasted_iota(jnp.int32, logits.shape, 1)
    logits = jnp.where(lane < n_valid, logits, -jnp.inf)          # mask padded classes
    m = jnp.max(logits, axis=-1, keepdims=True)
    e = jnp.exp(logits - m)
    probs = e / jnp.sum(e, axis=-1, keepdims=True)                # (1, CPAD)
    o_ref[0] = jnp.broadcast_to(probs, (OUT_SUB, CPAD))


# ----------------------------- Parameter setup ----------------------------- #

def init_params(key, cin=4, cmid=8, num_classes=16):
    ks = jax.random.split(key, 8)
    conv = lambda k, co, ci: 0.1 * jax.random.normal(k, (co, ci, 3, 3), jnp.float32)
    bn = lambda k, c: dict(
        gamma=1.0 + 0.1 * jax.random.normal(k, (c,), jnp.float32),
        beta=0.05 * jax.random.normal(jax.random.fold_in(k, 1), (c,), jnp.float32),
        mean=0.05 * jax.random.normal(jax.random.fold_in(k, 2), (c,), jnp.float32),
        var=1.0 + 0.1 * jax.random.uniform(jax.random.fold_in(k, 3), (c,), jnp.float32),
    )
    return dict(
        conv1_w=conv(ks[0], cmid, cin), bn1=bn(ks[1], cmid),
        conv2_w=conv(ks[2], cmid, cmid), bn2=bn(ks[3], cmid),
        conv3_w=conv(ks[4], cmid, cmid), bn3=bn(ks[5], cmid),
        fc_w=0.1 * jax.random.normal(ks[6], (cmid, num_classes), jnp.float32),
        fc_b=0.05 * jax.random.normal(ks[7], (num_classes,), jnp.float32),
    )


def prepare_params(params, H, W, eps=1e-5):
    """One-time BN folding + padding to lane-dense bf16 MXU weights."""
    def fold(w, bn):
        scale = bn["gamma"] / jnp.sqrt(bn["var"] + eps)
        bias = bn["beta"] - bn["mean"] * scale
        return w * scale[:, None, None, None], bias

    def im2col_weight(w, bn):                                   # stem conv
        wf, bias = fold(w, bn)
        cout, cin, kh, kw = w.shape
        wm = jnp.transpose(wf, (2, 3, 1, 0)).reshape(kh * kw * cin, cout)
        wm = jnp.pad(wm, ((0, KPAD - kh * kw * cin), (0, CPAD - cout)))
        b = jnp.pad(bias, (0, CPAD - cout)).reshape(1, CPAD)
        return wm.astype(jnp.bfloat16), b.astype(jnp.float32)

    def tap_weight(w, bn):                                      # block convs
        wf, bias = fold(w, bn)
        cout, cin, kh, kw = w.shape
        wm = jnp.transpose(wf, (2, 3, 1, 0)).reshape(kh * kw, cin, cout)
        wm = jnp.pad(wm, ((0, 0), (0, CPAD - cin), (0, CPAD - cout)))
        b = jnp.pad(bias, (0, CPAD - cout)).reshape(1, CPAD)
        return wm.astype(jnp.bfloat16), b.astype(jnp.float32)

    w1, b1 = im2col_weight(params["conv1_w"], params["bn1"])
    w2, b2 = tap_weight(params["conv2_w"], params["bn2"])
    w3, b3 = tap_weight(params["conv3_w"], params["bn3"])
    cmid, ncls = params["fc_w"].shape
    wfc = jnp.zeros((CPAD, CPAD), jnp.float32).at[:cmid, :ncls].set(
        params["fc_w"] / (H * W)).astype(jnp.bfloat16)          # fold mean-pool scale
    bfc = jnp.zeros((1, CPAD), jnp.float32).at[0, :ncls].set(params["fc_b"])
    return dict(w1=w1, b1=b1, w2=w2, b2=b2, w3=w3, b3=b3, wfc=wfc, bfc=bfc)


# ------------------------------ Forward pass ------------------------------- #

def make_forward(H, W, cin, ncls):
    hw = H * W
    base = (-(-(W + 1) // 8)) * 8                      # 8-aligned halo offset
    rows = (-(-(base + W + 1 + hw) // 8)) * 8          # scratch rows incl. halo

    kernel = functools.partial(_fused_resnet_kernel, height=H, width=W,
                               base=base, n_valid=ncls)

    def forward(x_nchw, p):
        B = x_nchw.shape[0]
        # NCHW -> NHWC, zero 'same' pad, wrapper-side im2col for the stem conv.
        x = jnp.transpose(x_nchw, (0, 2, 3, 1)).astype(jnp.float32)
        xp = jnp.pad(x, ((0, 0), (1, 1), (1, 1), (0, 0)))
        taps = [xp[:, dy:dy + H, dx:dx + W, :] for dy in range(3) for dx in range(3)]
        patches = jnp.concatenate(taps, axis=-1).reshape(B, hw, 9 * cin)
        patches = jnp.pad(patches, ((0, 0), (0, 0), (0, KPAD - 9 * cin)))
        patches = patches.astype(jnp.bfloat16)

        probs_pad = pl.pallas_call(
            kernel,
            grid=(B,),
            in_specs=[
                pl.BlockSpec((1, hw, KPAD), lambda b: (b, 0, 0)),      # patches
                pl.BlockSpec((KPAD, CPAD), lambda b: (0, 0)),          # w1
                pl.BlockSpec((1, CPAD), lambda b: (0, 0)),             # b1
                pl.BlockSpec((9, CPAD, CPAD), lambda b: (0, 0, 0)),    # w2
                pl.BlockSpec((1, CPAD), lambda b: (0, 0)),             # b2
                pl.BlockSpec((9, CPAD, CPAD), lambda b: (0, 0, 0)),    # w3
                pl.BlockSpec((1, CPAD), lambda b: (0, 0)),             # b3
                pl.BlockSpec((CPAD, CPAD), lambda b: (0, 0)),          # wfc
                pl.BlockSpec((1, CPAD), lambda b: (0, 0)),             # bfc
            ],
            out_specs=pl.BlockSpec((1, OUT_SUB, CPAD), lambda b: (b, 0, 0)),
            out_shape=jax.ShapeDtypeStruct((B, OUT_SUB, CPAD), jnp.float32),
            scratch_shapes=[pltpu.VMEM((rows, CPAD), jnp.float32),
                            pltpu.VMEM((rows, CPAD), jnp.float32)],
            compiler_params=pltpu.CompilerParams(
                dimension_semantics=("parallel",),     # v7x: one image per TC
                vmem_limit_bytes=32 * 1024 * 1024),    # safe on v5e/v6e/v7x
        )(patches, p["w1"], p["b1"], p["w2"], p["b2"], p["w3"], p["b3"],
          p["wfc"], p["bfc"])
        return probs_pad[:, 0, :ncls]

    return jax.jit(forward)


# --------------------------------- Driver ---------------------------------- #

if __name__ == "__main__":
    key = jax.random.PRNGKey(0)
    k_params, k_x = jax.random.split(key)

    B, C, H, W = 2, 4, 16, 16               # PyTorch-style NCHW input
    NUM_CLASSES = 16
    x = jax.random.normal(k_x, (B, C, H, W), jnp.float32)

    params = init_params(k_params, cin=C, cmid=8, num_classes=NUM_CLASSES)
    prepped = jax.device_put(prepare_params(params, H, W))   # folded once, outside jit

    forward = make_forward(H, W, cin=C, ncls=NUM_CLASSES)
    probs = forward(x, prepped)
    probs = jax.block_until_ready(probs)

    assert probs.shape == (B, NUM_CLASSES), probs.shape
    row_sums = jnp.sum(probs, axis=-1)
    assert bool(jnp.all(jnp.abs(row_sums - 1.0) < 1e-4)), row_sums
    assert bool(jnp.all(probs >= 0.0))

    print("KERNEL_OK")
</pallas_src>

<mosaic_0001>
module attributes {stable_mosaic.version = 11 : i64} {
  func.func @_fused_resnet_kernel(%arg0: i32, %arg1: memref<1x256x128xbf16, #tpu.memory_space<vmem>>, %arg2: memref<128x128xbf16, #tpu.memory_space<vmem>>, %arg3: memref<1x128xf32, #tpu.memory_space<vmem>>, %arg4: memref<9x128x128xbf16, #tpu.memory_space<vmem>>, %arg5: memref<1x128xf32, #tpu.memory_space<vmem>>, %arg6: memref<9x128x128xbf16, #tpu.memory_space<vmem>>, %arg7: memref<1x128xf32, #tpu.memory_space<vmem>>, %arg8: memref<128x128xbf16, #tpu.memory_space<vmem>>, %arg9: memref<1x128xf32, #tpu.memory_space<vmem>>, %arg10: memref<1x8x128xf32, #tpu.memory_space<vmem>>, %arg11: memref<304x128xf32, #tpu.memory_space<vmem>>, %arg12: memref<304x128xf32, #tpu.memory_space<vmem>>) attributes {dimension_semantics = [#tpu.dimension_semantics<parallel>], iteration_bounds = array<i64: 2>, scalar_prefetch = 0 : i64, scratch_operands = 2 : i64, tpu.core_type = #tpu.core_type<tc>, window_params = [{transform_indices = @transform_0, window_bounds = array<i64: 1, 256, 128>}, {pipeline_mode = #tpu.pipeline_mode<synchronous>, transform_indices = @transform_1, window_bounds = array<i64: 128, 128>}, {pipeline_mode = #tpu.pipeline_mode<synchronous>, transform_indices = @transform_2, window_bounds = array<i64: 1, 128>}, {pipeline_mode = #tpu.pipeline_mode<synchronous>, transform_indices = @transform_3, window_bounds = array<i64: 9, 128, 128>}, {pipeline_mode = #tpu.pipeline_mode<synchronous>, transform_indices = @transform_4, window_bounds = array<i64: 1, 128>}, {pipeline_mode = #tpu.pipeline_mode<synchronous>, transform_indices = @transform_5, window_bounds = array<i64: 9, 128, 128>}, {pipeline_mode = #tpu.pipeline_mode<synchronous>, transform_indices = @transform_6, window_bounds = array<i64: 1, 128>}, {pipeline_mode = #tpu.pipeline_mode<synchronous>, transform_indices = @transform_7, window_bounds = array<i64: 128, 128>}, {pipeline_mode = #tpu.pipeline_mode<synchronous>, transform_indices = @transform_8, window_bounds = array<i64: 1, 128>}, {transform_indices = @transform_9, window_bounds = array<i64: 1, 8, 128>}]} {
    %c0 = arith.constant 0 : index
    %c0_0 = arith.constant 0 : index
    %c0_1 = arith.constant 0 : index
    %0 = vector.load %arg1[%c0, %c0_0, %c0_1] : memref<1x256x128xbf16, #tpu.memory_space<vmem>>, vector<1x256x128xbf16>
    %1 = vector.shape_cast %0 : vector<1x256x128xbf16> to vector<256x128xbf16>
    %c0_2 = arith.constant 0 : index
    %c0_3 = arith.constant 0 : index
    %2 = vector.load %arg2[%c0_2, %c0_3] : memref<128x128xbf16, #tpu.memory_space<vmem>>, vector<128x128xbf16>
    %cst = arith.constant dense<0.000000e+00> : vector<256x128xf32>
    %3 = tpu.matmul %1, %2, %cst {dimension_numbers = #tpu.dot_dimension_numbers<[1], [0], [0], [1], [0, 0, 1, 1], [], []>} : vector<256x128xbf16>, vector<128x128xbf16>, vector<256x128xf32> -> vector<256x128xf32>
    %c0_4 = arith.constant 0 : index
    %c0_5 = arith.constant 0 : index
    %4 = vector.load %arg3[%c0_4, %c0_5] : memref<1x128xf32, #tpu.memory_space<vmem>>, vector<1x128xf32>
    %5 = vector.broadcast %4 : vector<1x128xf32> to vector<256x128xf32>
    %6 = arith.addf %3, %5 : vector<256x128xf32>
    %cst_6 = arith.constant 0.000000e+00 : f32
    %7 = vector.broadcast %cst_6 : f32 to vector<256x128xf32>
    %8 = arith.maximumf %6, %7 : vector<256x128xf32>
    %9 = tpu.iota {dimensions = array<i32: 0>} : vector<256x1xi32>
    %c16_i32 = arith.constant 16 : i32
    %c0_i32 = arith.constant 0 : i32
    %10 = arith.cmpi eq, %c16_i32, %c0_i32 : i32
    %c1_i32 = arith.constant 1 : i32
    %11 = arith.select %10, %c1_i32, %c16_i32 : i32
    %12 = vector.broadcast %11 : i32 to vector<256x1xi32>
    %13 = arith.remsi %9, %12 : vector<256x1xi32>
    %c0_i32_7 = arith.constant 0 : i32
    %14 = vector.broadcast %c0_i32_7 : i32 to vector<256x1xi32>
    %15 = arith.cmpi ne, %13, %14 : vector<256x1xi32>
    %c0_i32_8 = arith.constant 0 : i32
    %16 = vector.broadcast %c0_i32_8 : i32 to vector<256x1xi32>
    %17 = arith.cmpi slt, %13, %16 : vector<256x1xi32>
    %c0_i32_9 = arith.constant 0 : i32
    %18 = arith.cmpi slt, %11, %c0_i32_9 : i32
    %19 = vector.broadcast %18 : i1 to vector<256x1xi1>
    %20 = vector.broadcast %19 : vector<256x1xi1> to vector<256x1xi1>
    %21 = arith.xori %17, %20 : vector<256x1xi1>
    %22 = arith.andi %21, %15 : vector<256x1xi1>
    %23 = vector.broadcast %11 : i32 to vector<256x1xi32>
    %24 = arith.addi %13, %23 : vector<256x1xi32>
    %25 = arith.select %22, %24, %13 : vector<256x1xi1>, vector<256x1xi32>
    %c0_i32_10 = arith.constant 0 : i32
    %26 = vector.broadcast %c0_i32_10 : i32 to vector<256x1xi32>
    %27 = arith.cmpi sgt, %25, %26 : vector<256x1xi32>
    %c15_i32 = arith.constant 15 : i32
    %28 = vector.broadcast %c15_i32 : i32 to vector<256x1xi32>
    %29 = arith.cmpi slt, %25, %28 : vector<256x1xi32>
    %cst_11 = arith.constant 0.000000e+00 : f32
    %30 = vector.broadcast %cst_11 : f32 to vector<304x128xf32>
    %c0_12 = arith.constant 0 : index
    %c0_13 = arith.constant 0 : index
    %31 = vector.load %arg11[%c0_12, %c0_13] : memref<304x128xf32, #tpu.memory_space<vmem>>, vector<304x128xf32>
    tpu.vector_store %arg11[%c0_12, %c0_13], %30 {strides = array<i32>} : memref<304x128xf32, #tpu.memory_space<vmem>>, vector<304x128xf32>,
    %c24 = arith.constant 24 : index
    %c0_14 = arith.constant 0 : index
    %32 = vector.load %arg11[%c24, %c0_14] : memref<304x128xf32, #tpu.memory_space<vmem>>, vector<256x128xf32>
    tpu.vector_store %arg11[%c24, %c0_14], %8 {strides = array<i32>} : memref<304x128xf32, #tpu.memory_space<vmem>>, vector<256x128xf32>,
    %cst_15 = arith.constant 0.000000e+00 : f32
    %33 = vector.broadcast %cst_15 : f32 to vector<256x128xf32>
    %c7 = arith.constant 7 : index
    %c0_16 = arith.constant 0 : index
    %34 = vector.load %arg11[%c7, %c0_16] : memref<304x128xf32, #tpu.memory_space<vmem>>, vector<256x128xf32>
    %cst_17 = arith.constant 0.000000e+00 : f32
    %35 = vector.shape_cast %27 : vector<256x1xi1> to vector<256x1xi1>
    %36 = vector.broadcast %35 : vector<256x1xi1> to vector<256x128xi1>
    %37 = vector.broadcast %cst_17 : f32 to vector<256x128xf32>
    %38 = arith.select %36, %34, %37 : vector<256x128xi1>, vector<256x128xf32>
    %39 = arith.truncf %38 : vector<256x128xf32> to vector<256x128xbf16>
    %c0_18 = arith.constant 0 : index
    %c0_19 = arith.constant 0 : index
    %c0_20 = arith.constant 0 : index
    %40 = vector.load %arg4[%c0_18, %c0_19, %c0_20] : memref<9x128x128xbf16, #tpu.memory_space<vmem>>, vector<1x128x128xbf16>
    %41 = vector.shape_cast %40 : vector<1x128x128xbf16> to vector<128x128xbf16>
    %cst_21 = arith.constant dense<0.000000e+00> : vector<256x128xf32>
    %42 = tpu.matmul %39, %41, %cst_21 {dimension_numbers = #tpu.dot_dimension_numbers<[1], [0], [0], [1], [0, 0, 1, 1], [], []>} : vector<256x128xbf16>, vector<128x128xbf16>, vector<256x128xf32> -> vector<256x128xf32>
    %43 = arith.addf %33, %42 : vector<256x128xf32>
    %c8 = arith.constant 8 : index
    %c0_22 = arith.constant 0 : index
    %44 = vector.load %arg11[%c8, %c0_22] : memref<304x128xf32, #tpu.memory_space<vmem>>, vector<256x128xf32>
    %45 = arith.truncf %44 : vector<256x128xf32> to vector<256x128xbf16>
    %c1 = arith.constant 1 : index
    %c0_23 = arith.constant 0 : index
    %c0_24 = arith.constant 0 : index
    %46 = vector.load %arg4[%c1, %c0_23, %c0_24] : memref<9x128x128xbf16, #tpu.memory_space<vmem>>, vector<1x128x128xbf16>
    %47 = vector.shape_cast %46 : vector<1x128x128xbf16> to vector<128x128xbf16>
    %cst_25 = arith.constant dense<0.000000e+00> : vector<256x128xf32>
    %48 = tpu.matmul %45, %47, %cst_25 {dimension_numbers = #tpu.dot_dimension_numbers<[1], [0], [0], [1], [0, 0, 1, 1], [], []>} : vector<256x128xbf16>, vector<128x128xbf16>, vector<256x128xf32> -> vector<256x128xf32>
    %49 = arith.addf %43, %48 : vector<256x128xf32>
    %c9 = arith.constant 9 : index
    %c0_26 = arith.constant 0 : index
    %50 = vector.load %arg11[%c9, %c0_26] : memref<304x128xf32, #tpu.memory_space<vmem>>, vector<256x128xf32>
    %cst_27 = arith.constant 0.000000e+00 : f32
    %51 = vector.shape_cast %29 : vector<256x1xi1> to vector<256x1xi1>
    %52 = vector.broadcast %51 : vector<256x1xi1> to vector<256x128xi1>
    %53 = vector.broadcast %cst_27 : f32 to vector<256x128xf32>
    %54 = arith.select %52, %50, %53 : vector<256x128xi1>, vector<256x128xf32>
    %55 = arith.truncf %54 : vector<256x128xf32> to vector<256x128xbf16>
    %c2 = arith.constant 2 : index
    %c0_28 = arith.constant 0 : index
    %c0_29 = arith.constant 0 : index
    %56 = vector.load %arg4[%c2, %c0_28, %c0_29] : memref<9x128x128xbf16, #tpu.memory_space<vmem>>, vector<1x128x128xbf16>
    %57 = vector.shape_cast %56 : vector<1x128x128xbf16> to vector<128x128xbf16>
    %cst_30 = arith.constant dense<0.000000e+00> : vector<256x128xf32>
    %58 = tpu.matmul %55, %57, %cst_30 {dimension_numbers = #tpu.dot_dimension_numbers<[1], [0], [0], [1], [0, 0, 1, 1], [], []>} : vector<256x128xbf16>, vector<128x128xbf16>, vector<256x128xf32> -> vector<256x128xf32>
    %59 = arith.addf %49, %58 : vector<256x128xf32>
    %c23 = arith.constant 23 : index
    %c0_31 = arith.constant 0 : index
    %60 = vector.load %arg11[%c23, %c0_31] : memref<304x128xf32, #tpu.memory_space<vmem>>, vector<256x128xf32>
    %cst_32 = arith.constant 0.000000e+00 : f32
    %61 = vector.shape_cast %27 : vector<256x1xi1> to vector<256x1xi1>
    %62 = vector.broadcast %61 : vector<256x1xi1> to vector<256x128xi1>
    %63 = vector.broadcast %cst_32 : f32 to vector<256x128xf32>
    %64 = arith.select %62, %60, %63 : vector<256x128xi1>, vector<256x128xf32>
    %65 = arith.truncf %64 : vector<256x128xf32> to vector<256x128xbf16>
    %c3 = arith.constant 3 : index
    %c0_33 = arith.constant 0 : index
    %c0_34 = arith.constant 0 : index
    %66 = vector.load %arg4[%c3, %c0_33, %c0_34] : memref<9x128x128xbf16, #tpu.memory_space<vmem>>, vector<1x128x128xbf16>
    %67 = vector.shape_cast %66 : vector<1x128x128xbf16> to vector<128x128xbf16>
    %cst_35 = arith.constant dense<0.000000e+00> : vector<256x128xf32>
    %68 = tpu.matmul %65, %67, %cst_35 {dimension_numbers = #tpu.dot_dimension_numbers<[1], [0], [0], [1], [0, 0, 1, 1], [], []>} : vector<256x128xbf16>, vector<128x128xbf16>, vector<256x128xf32> -> vector<256x128xf32>
    %69 = arith.addf %59, %68 : vector<256x128xf32>
    %c24_36 = arith.constant 24 : index
    %c0_37 = arith.constant 0 : index
    %70 = vector.load %arg11[%c24_36, %c0_37] : memref<304x128xf32, #tpu.memory_space<vmem>>, vector<256x128xf32>
    %71 = arith.truncf %70 : vector<256x128xf32> to vector<256x128xbf16>
    %c4 = arith.constant 4 : index
    %c0_38 = arith.constant 0 : index
    %c0_39 = arith.constant 0 : index
    %72 = vector.load %arg4[%c4, %c0_38, %c0_39] : memref<9x128x128xbf16, #tpu.memory_space<vmem>>, vector<1x128x128xbf16>
    %73 = vector.shape_cast %72 : vector<1x128x128xbf16> to vector<128x128xbf16>
    %cst_40 = arith.constant dense<0.000000e+00> : vector<256x128xf32>
    %74 = tpu.matmul %71, %73, %cst_40 {dimension_numbers = #tpu.dot_dimension_numbers<[1], [0], [0], [1], [0, 0, 1, 1], [], []>} : vector<256x128xbf16>, vector<128x128xbf16>, vector<256x128xf32> -> vector<256x128xf32>
    %75 = arith.addf %69, %74 : vector<256x128xf32>
    %c25 = arith.constant 25 : index
    %c0_41 = arith.constant 0 : index
    %76 = vector.load %arg11[%c25, %c0_41] : memref<304x128xf32, #tpu.memory_space<vmem>>, vector<256x128xf32>
    %cst_42 = arith.constant 0.000000e+00 : f32
    %77 = vector.shape_cast %29 : vector<256x1xi1> to vector<256x1xi1>
    %78 = vector.broadcast %77 : vector<256x1xi1> to vector<256x128xi1>
    %79 = vector.broadcast %cst_42 : f32 to vector<256x128xf32>
    %80 = arith.select %78, %76, %79 : vector<256x128xi1>, vector<256x128xf32>
    %81 = arith.truncf %80 : vector<256x128xf32> to vector<256x128xbf16>
    %c5 = arith.constant 5 : index
    %c0_43 = arith.constant 0 : index
    %c0_44 = arith.constant 0 : index
    %82 = vector.load %arg4[%c5, %c0_43, %c0_44] : memref<9x128x128xbf16, #tpu.memory_space<vmem>>, vector<1x128x128xbf16>
    %83 = vector.shape_cast %82 : vector<1x128x128xbf16> to vector<128x128xbf16>
    %cst_45 = arith.constant dense<0.000000e+00> : vector<256x128xf32>
    %84 = tpu.matmul %81, %83, %cst_45 {dimension_numbers = #tpu.dot_dimension_numbers<[1], [0], [0], [1], [0, 0, 1, 1], [], []>} : vector<256x128xbf16>, vector<128x128xbf16>, vector<256x128xf32> -> vector<256x128xf32>
    %85 = arith.addf %75, %84 : vector<256x128xf32>
    %c39 = arith.constant 39 : index
    %c0_46 = arith.constant 0 : index
    %86 = vector.load %arg11[%c39, %c0_46] : memref<304x128xf32, #tpu.memory_space<vmem>>, vector<256x128xf32>
    %cst_47 = arith.constant 0.000000e+00 : f32
    %87 = vector.shape_cast %27 : vector<256x1xi1> to vector<256x1xi1>
    %88 = vector.broadcast %87 : vector<256x1xi1> to vector<256x128xi1>
    %89 = vector.broadcast %cst_47 : f32 to vector<256x128xf32>
    %90 = arith.select %88, %86, %89 : vector<256x128xi1>, vector<256x128xf32>
    %91 = arith.truncf %90 : vector<256x128xf32> to vector<256x128xbf16>
    %c6 = arith.constant 6 : index
    %c0_48 = arith.constant 0 : index
    %c0_49 = arith.constant 0 : index
    %92 = vector.load %arg4[%c6, %c0_48, %c0_49] : memref<9x128x128xbf16, #tpu.memory_space<vmem>>, vector<1x128x128xbf16>
    %93 = vector.shape_cast %92 : vector<1x128x128xbf16> to vector<128x128xbf16>
    %cst_50 = arith.constant dense<0.000000e+00> : vector<256x128xf32>
    %94 = tpu.matmul %91, %93, %cst_50 {dimension_numbers = #tpu.dot_dimension_numbers<[1], [0], [0], [1], [0, 0, 1, 1], [], []>} : vector<256x128xbf16>, vector<128x128xbf16>, vector<256x128xf32> -> vector<256x128xf32>
    %95 = arith.addf %85, %94 : vector<256x128xf32>
    %c40 = arith.constant 40 : index
    %c0_51 = arith.constant 0 : index
    %96 = vector.load %arg11[%c40, %c0_51] : memref<304x128xf32, #tpu.memory_space<vmem>>, vector<256x128xf32>
    %97 = arith.truncf %96 : vector<256x128xf32> to vector<256x128xbf16>
    %c7_52 = arith.constant 7 : index
    %c0_53 = arith.constant 0 : index
    %c0_54 = arith.constant 0 : index
    %98 = vector.load %arg4[%c7_52, %c0_53, %c0_54] : memref<9x128x128xbf16, #tpu.memory_space<vmem>>, vector<1x128x128xbf16>
    %99 = vector.shape_cast %98 : vector<1x128x128xbf16> to vector<128x128xbf16>
    %cst_55 = arith.constant dense<0.000000e+00> : vector<256x128xf32>
    %100 = tpu.matmul %97, %99, %cst_55 {dimension_numbers = #tpu.dot_dimension_numbers<[1], [0], [0], [1], [0, 0, 1, 1], [], []>} : vector<256x128xbf16>, vector<128x128xbf16>, vector<256x128xf32> -> vector<256x128xf32>
    %101 = arith.addf %95, %100 : vector<256x128xf32>
    %c41 = arith.constant 41 : index
    %c0_56 = arith.constant 0 : index
    %102 = vector.load %arg11[%c41, %c0_56] : memref<304x128xf32, #tpu.memory_space<vmem>>, vector<256x128xf32>
    %cst_57 = arith.constant 0.000000e+00 : f32
    %103 = vector.shape_cast %29 : vector<256x1xi1> to vector<256x1xi1>
    %104 = vector.broadcast %103 : vector<256x1xi1> to vector<256x128xi1>
    %105 = vector.broadcast %cst_57 : f32 to vector<256x128xf32>
    %106 = arith.select %104, %102, %105 : vector<256x128xi1>, vector<256x128xf32>
    %107 = arith.truncf %106 : vector<256x128xf32> to vector<256x128xbf16>
    %c8_58 = arith.constant 8 : index
    %c0_59 = arith.constant 0 : index
    %c0_60 = arith.constant 0 : index
    %108 = vector.load %arg4[%c8_58, %c0_59, %c0_60] : memref<9x128x128xbf16, #tpu.memory_space<vmem>>, vector<1x128x128xbf16>
    %109 = vector.shape_cast %108 : vector<1x128x128xbf16> to vector<128x128xbf16>
    %cst_61 = arith.constant dense<0.000000e+00> : vector<256x128xf32>
    %110 = tpu.matmul %107, %109, %cst_61 {dimension_numbers = #tpu.dot_dimension_numbers<[1], [0], [0], [1], [0, 0, 1, 1], [], []>} : vector<256x128xbf16>, vector<128x128xbf16>, vector<256x128xf32> -> vector<256x128xf32>
    %111 = arith.addf %101, %110 : vector<256x128xf32>
    %c0_62 = arith.constant 0 : index
    %c0_63 = arith.constant 0 : index
    %112 = vector.load %arg5[%c0_62, %c0_63] : memref<1x128xf32, #tpu.memory_space<vmem>>, vector<1x128xf32>
    %113 = vector.broadcast %112 : vector<1x128xf32> to vector<256x128xf32>
    %114 = arith.addf %111, %113 : vector<256x128xf32>
    %cst_64 = arith.constant 0.000000e+00 : f32
    %115 = vector.broadcast %cst_64 : f32 to vector<256x128xf32>
    %116 = arith.maximumf %114, %115 : vector<256x128xf32>
    %cst_65 = arith.constant 0.000000e+00 : f32
    %117 = vector.broadcast %cst_65 : f32 to vector<304x128xf32>
    %c0_66 = arith.constant 0 : index
    %c0_67 = arith.constant 0 : index
    %118 = vector.load %arg12[%c0_66, %c0_67] : memref<304x128xf32, #tpu.memory_space<vmem>>, vector<304x128xf32>
    tpu.vector_store %arg12[%c0_66, %c0_67], %117 {strides = array<i32>} : memref<304x128xf32, #tpu.memory_space<vmem>>, vector<304x128xf32>,
    %c24_68 = arith.constant 24 : index
    %c0_69 = arith.constant 0 : index
    %119 = vector.load %arg12[%c24_68, %c0_69] : memref<304x128xf32, #tpu.memory_space<vmem>>, vector<256x128xf32>
    tpu.vector_store %arg12[%c24_68, %c0_69], %116 {strides = array<i32>} : memref<304x128xf32, #tpu.memory_space<vmem>>, vector<256x128xf32>,
    %c24_70 = arith.constant 24 : index
    %c0_71 = arith.constant 0 : index
    %120 = vector.load %arg11[%c24_70, %c0_71] : memref<304x128xf32, #tpu.memory_space<vmem>>, vector<256x128xf32>
    %cst_72 = arith.constant 0.000000e+00 : f32
    %121 = vector.broadcast %cst_72 : f32 to vector<256x128xf32>
    %c7_73 = arith.constant 7 : index
    %c0_74 = arith.constant 0 : index
    %122 = vector.load %arg12[%c7_73, %c0_74] : memref<304x128xf32, #tpu.memory_space<vmem>>, vector<256x128xf32>
    %cst_75 = arith.constant 0.000000e+00 : f32
    %123 = vector.shape_cast %27 : vector<256x1xi1> to vector<256x1xi1>
    %124 = vector.broadcast %123 : vector<256x1xi1> to vector<256x128xi1>
    %125 = vector.broadcast %cst_75 : f32 to vector<256x128xf32>
    %126 = arith.select %124, %122, %125 : vector<256x128xi1>, vector<256x128xf32>
    %127 = arith.truncf %126 : vector<256x128xf32> to vector<256x128xbf16>
    %c0_76 = arith.constant 0 : index
    %c0_77 = arith.constant 0 : index
    %c0_78 = arith.constant 0 : index
    %128 = vector.load %arg6[%c0_76, %c0_77, %c0_78] : memref<9x128x128xbf16, #tpu.memory_space<vmem>>, vector<1x128x128xbf16>
    %129 = vector.shape_cast %128 : vector<1x128x128xbf16> to vector<128x128xbf16>
    %cst_79 = arith.constant dense<0.000000e+00> : vector<256x128xf32>
    %130 = tpu.matmul %127, %129, %cst_79 {dimension_numbers = #tpu.dot_dimension_numbers<[1], [0], [0], [1], [0, 0, 1, 1], [], []>} : vector<256x128xbf16>, vector<128x128xbf16>, vector<256x128xf32> -> vector<256x128xf32>
    %131 = arith.addf %121, %130 : vector<256x128xf32>
    %c8_80 = arith.constant 8 : index
    %c0_81 = arith.constant 0 : index
    %132 = vector.load %arg12[%c8_80, %c0_81] : memref<304x128xf32, #tpu.memory_space<vmem>>, vector<256x128xf32>
    %133 = arith.truncf %132 : vector<256x128xf32> to vector<256x128xbf16>
    %c1_82 = arith.constant 1 : index
    %c0_83 = arith.constant 0 : index
    %c0_84 = arith.constant 0 : index
    %134 = vector.load %arg6[%c1_82, %c0_83, %c0_84] : memref<9x128x128xbf16, #tpu.memory_space<vmem>>, vector<1x128x128xbf16>
    %135 = vector.shape_cast %134 : vector<1x128x128xbf16> to vector<128x128xbf16>
    %cst_85 = arith.constant dense<0.000000e+00> : vector<256x128xf32>
    %136 = tpu.matmul %133, %135, %cst_85 {dimension_numbers = #tpu.dot_dimension_numbers<[1], [0], [0], [1], [0, 0, 1, 1], [], []>} : vector<256x128xbf16>, vector<128x128xbf16>, vector<256x128xf32> -> vector<256x128xf32>
    %137 = arith.addf %131, %136 : vector<256x128xf32>
    %c9_86 = arith.constant 9 : index
    %c0_87 = arith.constant 0 : index
    %138 = vector.load %arg12[%c9_86, %c0_87] : memref<304x128xf32, #tpu.memory_space<vmem>>, vector<256x128xf32>
    %cst_88 = arith.constant 0.000000e+00 : f32
    %139 = vector.shape_cast %29 : vector<256x1xi1> to vector<256x1xi1>
    %140 = vector.broadcast %139 : vector<256x1xi1> to vector<256x128xi1>
    %141 = vector.broadcast %cst_88 : f32 to vector<256x128xf32>
    %142 = arith.select %140, %138, %141 : vector<256x128xi1>, vector<256x128xf32>
    %143 = arith.truncf %142 : vector<256x128xf32> to vector<256x128xbf16>
    %c2_89 = arith.constant 2 : index
    %c0_90 = arith.constant 0 : index
    %c0_91 = arith.constant 0 : index
    %144 = vector.load %arg6[%c2_89, %c0_90, %c0_91] : memref<9x128x128xbf16, #tpu.memory_space<vmem>>, vector<1x128x128xbf16>
    %145 = vector.shape_cast %144 : vector<1x128x128xbf16> to vector<128x128xbf16>
    %cst_92 = arith.constant dense<0.000000e+00> : vector<256x128xf32>
    %146 = tpu.matmul %143, %145, %cst_92 {dimension_numbers = #tpu.dot_dimension_numbers<[1], [0], [0], [1], [0, 0, 1, 1], [], []>} : vector<256x128xbf16>, vector<128x128xbf16>, vector<256x128xf32> -> vector<256x128xf32>
    %147 = arith.addf %137, %146 : vector<256x128xf32>
    %c23_93 = arith.constant 23 : index
    %c0_94 = arith.constant 0 : index
    %148 = vector.load %arg12[%c23_93, %c0_94] : memref<304x128xf32, #tpu.memory_space<vmem>>, vector<256x128xf32>
    %cst_95 = arith.constant 0.000000e+00 : f32
    %149 = vector.shape_cast %27 : vector<256x1xi1> to vector<256x1xi1>
    %150 = vector.broadcast %149 : vector<256x1xi1> to vector<256x128xi1>
    %151 = vector.broadcast %cst_95 : f32 to vector<256x128xf32>
    %152 = arith.select %150, %148, %151 : vector<256x128xi1>, vector<256x128xf32>
    %153 = arith.truncf %152 : vector<256x128xf32> to vector<256x128xbf16>
    %c3_96 = arith.constant 3 : index
    %c0_97 = arith.constant 0 : index
    %c0_98 = arith.constant 0 : index
    %154 = vector.load %arg6[%c3_96, %c0_97, %c0_98] : memref<9x128x128xbf16, #tpu.memory_space<vmem>>, vector<1x128x128xbf16>
    %155 = vector.shape_cast %154 : vector<1x128x128xbf16> to vector<128x128xbf16>
    %cst_99 = arith.constant dense<0.000000e+00> : vector<256x128xf32>
    %156 = tpu.matmul %153, %155, %cst_99 {dimension_numbers = #tpu.dot_dimension_numbers<[1], [0], [0], [1], [0, 0, 1, 1], [], []>} : vector<256x128xbf16>, vector<128x128xbf16>, vector<256x128xf32> -> vector<256x128xf32>
    %157 = arith.addf %147, %156 : vector<256x128xf32>
    %c24_100 = arith.constant 24 : index
    %c0_101 = arith.constant 0 : index
    %158 = vector.load %arg12[%c24_100, %c0_101] : memref<304x128xf32, #tpu.memory_space<vmem>>, vector<256x128xf32>
    %159 = arith.truncf %158 : vector<256x128xf32> to vector<256x128xbf16>
    %c4_102 = arith.constant 4 : index
    %c0_103 = arith.constant 0 : index
    %c0_104 = arith.constant 0 : index
    %160 = vector.load %arg6[%c4_102, %c0_103, %c0_104] : memref<9x128x128xbf16, #tpu.memory_space<vmem>>, vector<1x128x128xbf16>
    %161 = vector.shape_cast %160 : vector<1x128x128xbf16> to vector<128x128xbf16>
    %cst_105 = arith.constant dense<0.000000e+00> : vector<256x128xf32>
    %162 = tpu.matmul %159, %161, %cst_105 {dimension_numbers = #tpu.dot_dimension_numbers<[1], [0], [0], [1], [0, 0, 1, 1], [], []>} : vector<256x128xbf16>, vector<128x128xbf16>, vector<256x128xf32> -> vector<256x128xf32>
    %163 = arith.addf %157, %162 : vector<256x128xf32>
    %c25_106 = arith.constant 25 : index
    %c0_107 = arith.constant 0 : index
    %164 = vector.load %arg12[%c25_106, %c0_107] : memref<304x128xf32, #tpu.memory_space<vmem>>, vector<256x128xf32>
    %cst_108 = arith.constant 0.000000e+00 : f32
    %165 = vector.shape_cast %29 : vector<256x1xi1> to vector<256x1xi1>
    %166 = vector.broadcast %165 : vector<256x1xi1> to vector<256x128xi1>
    %167 = vector.broadcast %cst_108 : f32 to vector<256x128xf32>
    %168 = arith.select %166, %164, %167 : vector<256x128xi1>, vector<256x128xf32>
    %169 = arith.truncf %168 : vector<256x128xf32> to vector<256x128xbf16>
    %c5_109 = arith.constant 5 : index
    %c0_110 = arith.constant 0 : index
    %c0_111 = arith.constant 0 : index
    %170 = vector.load %arg6[%c5_109, %c0_110, %c0_111] : memref<9x128x128xbf16, #tpu.memory_space<vmem>>, vector<1x128x128xbf16>
    %171 = vector.shape_cast %170 : vector<1x128x128xbf16> to vector<128x128xbf16>
    %cst_112 = arith.constant dense<0.000000e+00> : vector<256x128xf32>
    %172 = tpu.matmul %169, %171, %cst_112 {dimension_numbers = #tpu.dot_dimension_numbers<[1], [0], [0], [1], [0, 0, 1, 1], [], []>} : vector<256x128xbf16>, vector<128x128xbf16>, vector<256x128xf32> -> vector<256x128xf32>
    %173 = arith.addf %163, %172 : vector<256x128xf32>
    %c39_113 = arith.constant 39 : index
    %c0_114 = arith.constant 0 : index
    %174 = vector.load %arg12[%c39_113, %c0_114] : memref<304x128xf32, #tpu.memory_space<vmem>>, vector<256x128xf32>
    %cst_115 = arith.constant 0.000000e+00 : f32
    %175 = vector.shape_cast %27 : vector<256x1xi1> to vector<256x1xi1>
    %176 = vector.broadcast %175 : vector<256x1xi1> to vector<256x128xi1>
    %177 = vector.broadcast %cst_115 : f32 to vector<256x128xf32>
    %178 = arith.select %176, %174, %177 : vector<256x128xi1>, vector<256x128xf32>
    %179 = arith.truncf %178 : vector<256x128xf32> to vector<256x128xbf16>
    %c6_116 = arith.constant 6 : index
    %c0_117 = arith.constant 0 : index
    %c0_118 = arith.constant 0 : index
    %180 = vector.load %arg6[%c6_116, %c0_117, %c0_118] : memref<9x128x128xbf16, #tpu.memory_space<vmem>>, vector<1x128x128xbf16>
    %181 = vector.shape_cast %180 : vector<1x128x128xbf16> to vector<128x128xbf16>
    %cst_119 = arith.constant dense<0.000000e+00> : vector<256x128xf32>
    %182 = tpu.matmul %179, %181, %cst_119 {dimension_numbers = #tpu.dot_dimension_numbers<[1], [0], [0], [1], [0, 0, 1, 1], [], []>} : vector<256x128xbf16>, vector<128x128xbf16>, vector<256x128xf32> -> vector<256x128xf32>
    %183 = arith.addf %173, %182 : vector<256x128xf32>
    %c40_120 = arith.constant 40 : index
    %c0_121 = arith.constant 0 : index
    %184 = vector.load %arg12[%c40_120, %c0_121] : memref<304x128xf32, #tpu.memory_space<vmem>>, vector<256x128xf32>
    %185 = arith.truncf %184 : vector<256x128xf32> to vector<256x128xbf16>
    %c7_122 = arith.constant 7 : index
    %c0_123 = arith.constant 0 : index
    %c0_124 = arith.constant 0 : index
    %186 = vector.load %arg6[%c7_122, %c0_123, %c0_124] : memref<9x128x128xbf16, #tpu.memory_space<vmem>>, vector<1x128x128xbf16>
    %187 = vector.shape_cast %186 : vector<1x128x128xbf16> to vector<128x128xbf16>
    %cst_125 = arith.constant dense<0.000000e+00> : vector<256x128xf32>
    %188 = tpu.matmul %185, %187, %cst_125 {dimension_numbers = #tpu.dot_dimension_numbers<[1], [0], [0], [1], [0, 0, 1, 1], [], []>} : vector<256x128xbf16>, vector<128x128xbf16>, vector<256x128xf32> -> vector<256x128xf32>
    %189 = arith.addf %183, %188 : vector<256x128xf32>
    %c41_126 = arith.constant 41 : index
    %c0_127 = arith.constant 0 : index
    %190 = vector.load %arg12[%c41_126, %c0_127] : memref<304x128xf32, #tpu.memory_space<vmem>>, vector<256x128xf32>
    %cst_128 = arith.constant 0.000000e+00 : f32
    %191 = vector.shape_cast %29 : vector<256x1xi1> to vector<256x1xi1>
    %192 = vector.broadcast %191 : vector<256x1xi1> to vector<256x128xi1>
    %193 = vector.broadcast %cst_128 : f32 to vector<256x128xf32>
    %194 = arith.select %192, %190, %193 : vector<256x128xi1>, vector<256x128xf32>
    %195 = arith.truncf %194 : vector<256x128xf32> to vector<256x128xbf16>
    %c8_129 = arith.constant 8 : index
    %c0_130 = arith.constant 0 : index
    %c0_131 = arith.constant 0 : index
    %196 = vector.load %arg6[%c8_129, %c0_130, %c0_131] : memref<9x128x128xbf16, #tpu.memory_space<vmem>>, vector<1x128x128xbf16>
    %197 = vector.shape_cast %196 : vector<1x128x128xbf16> to vector<128x128xbf16>
    %cst_132 = arith.constant dense<0.000000e+00> : vector<256x128xf32>
    %198 = tpu.matmul %195, %197, %cst_132 {dimension_numbers = #tpu.dot_dimension_numbers<[1], [0], [0], [1], [0, 0, 1, 1], [], []>} : vector<256x128xbf16>, vector<128x128xbf16>, vector<256x128xf32> -> vector<256x128xf32>
    %199 = arith.addf %189, %198 : vector<256x128xf32>
    %c0_133 = arith.constant 0 : index
    %c0_134 = arith.constant 0 : index
    %200 = vector.load %arg7[%c0_133, %c0_134] : memref<1x128xf32, #tpu.memory_space<vmem>>, vector<1x128xf32>
    %201 = vector.broadcast %200 : vector<1x128xf32> to vector<256x128xf32>
    %202 = arith.addf %199, %201 : vector<256x128xf32>
    %203 = arith.addf %202, %120 : vector<256x128xf32>
    %cst_135 = arith.constant 0.000000e+00 : f32
    %204 = vector.broadcast %cst_135 : f32 to vector<256x128xf32>
    %205 = arith.maximumf %203, %204 : vector<256x128xf32>
    %cst_136 = arith.constant 1.000000e+00 : bf16
    %206 = vector.broadcast %cst_136 : bf16 to vector<1x256xbf16>
    %207 = arith.truncf %205 : vector<256x128xf32> to vector<256x128xbf16>
    %cst_137 = arith.constant dense<0.000000e+00> : vector<1x128xf32>
    %208 = tpu.matmul %206, %207, %cst_137 {dimension_numbers = #tpu.dot_dimension_numbers<[1], [0], [0], [1], [0, 0, 1, 1], [], []>} : vector<1x256xbf16>, vector<256x128xbf16>, vector<1x128xf32> -> vector<1x128xf32>
    %209 = arith.truncf %208 : vector<1x128xf32> to vector<1x128xbf16>
    %c0_138 = arith.constant 0 : index
    %c0_139 = arith.constant 0 : index
    %210 = vector.load %arg8[%c0_138, %c0_139] : memref<128x128xbf16, #tpu.memory_space<vmem>>, vector<128x128xbf16>
    %cst_140 = arith.constant dense<0.000000e+00> : vector<1x128xf32>
    %211 = tpu.matmul %209, %210, %cst_140 {dimension_numbers = #tpu.dot_dimension_numbers<[1], [0], [0], [1], [0, 0, 1, 1], [], []>} : vector<1x128xbf16>, vector<128x128xbf16>, vector<1x128xf32> -> vector<1x128xf32>
    %c0_141 = arith.constant 0 : index
    %c0_142 = arith.constant 0 : index
    %212 = vector.load %arg9[%c0_141, %c0_142] : memref<1x128xf32, #tpu.memory_space<vmem>>, vector<1x128xf32>
    %213 = arith.addf %211, %212 : vector<1x128xf32>
    %214 = tpu.iota {dimensions = array<i32: 1>} : vector<1x128xi32>
    %c16_i32_143 = arith.constant 16 : i32
    %215 = vector.broadcast %c16_i32_143 : i32 to vector<1x128xi32>
    %216 = arith.cmpi slt, %214, %215 : vector<1x128xi32>
    %cst_144 = arith.constant 0xFF800000 : f32
    %217 = vector.broadcast %cst_144 : f32 to vector<1x128xf32>
    %218 = arith.select %216, %213, %217 : vector<1x128xi1>, vector<1x128xf32>
    %cst_145 = arith.constant dense<0xFF800000> : vector<1xf32>
    %219 = vector.multi_reduction <maximumf>, %218, %cst_145 [1] : vector<1x128xf32> to vector<1xf32>
    %220 = vector.shape_cast %219 : vector<1xf32> to vector<1x1xf32>
    %221 = vector.broadcast %220 : vector<1x1xf32> to vector<1x128xf32>
    %222 = arith.subf %218, %221 : vector<1x128xf32>
    %223 = math.exp %222 : vector<1x128xf32>
    %cst_146 = arith.constant dense<0.000000e+00> : vector<1xf32>
    %224 = vector.multi_reduction <add>, %223, %cst_146 [1] : vector<1x128xf32> to vector<1xf32>
    %225 = vector.shape_cast %224 : vector<1xf32> to vector<1x1xf32>
    %226 = vector.broadcast %225 : vector<1x1xf32> to vector<1x128xf32>
    %227 = arith.divf %223, %226 : vector<1x128xf32>
    %228 = vector.shape_cast %227 : vector<1x128xf32> to vector<1x128xf32>
    %229 = vector.broadcast %228 : vector<1x128xf32> to vector<8x128xf32>
    %c0_147 = arith.constant 0 : index
    %c0_148 = arith.constant 0 : index
    %c0_149 = arith.constant 0 : index
    %230 = vector.load %arg10[%c0_147, %c0_148, %c0_149] : memref<1x8x128xf32, #tpu.memory_space<vmem>>, vector<1x8x128xf32>
    %231 = vector.shape_cast %230 : vector<1x8x128xf32> to vector<8x128xf32>
    %232 = vector.shape_cast %229 : vector<8x128xf32> to vector<1x8x128xf32>
    tpu.vector_store %arg10[%c0_147, %c0_148, %c0_149], %232 {strides = array<i32>} : memref<1x8x128xf32, #tpu.memory_space<vmem>>, vector<1x8x128xf32>,
    return
  }
  func.func @transform_0(%arg0: i32) -> (i32, i32, i32) {
    %c0_i32 = arith.constant 0 : i32
    %c0_i32_0 = arith.constant 0 : i32
    %c0_i32_1 = arith.constant 0 : i32
    return %arg0, %c0_i32, %c0_i32_0 : i32, i32, i32
  }
  func.func @transform_1(%arg0: i32) -> (i32, i32) {
    %c0_i32 = arith.constant 0 : i32
    %c0_i32_0 = arith.constant 0 : i32
    %c0_i32_1 = arith.constant 0 : i32
    return %c0_i32, %c0_i32_0 : i32, i32
  }
  func.func @transform_2(%arg0: i32) -> (i32, i32) {
    %c0_i32 = arith.constant 0 : i32
    %c0_i32_0 = arith.constant 0 : i32
    %c0_i32_1 = arith.constant 0 : i32
    return %c0_i32, %c0_i32_0 : i32, i32
  }
  func.func @transform_3(%arg0: i32) -> (i32, i32, i32) {
    %c0_i32 = arith.constant 0 : i32
    %c0_i32_0 = arith.constant 0 : i32
    %c0_i32_1 = arith.constant 0 : i32
    %c0_i32_2 = arith.constant 0 : i32
    return %c0_i32, %c0_i32_0, %c0_i32_1 : i32, i32, i32
  }
  func.func @transform_4(%arg0: i32) -> (i32, i32) {
    %c0_i32 = arith.constant 0 : i32
    %c0_i32_0 = arith.constant 0 : i32
    %c0_i32_1 = arith.constant 0 : i32
    return %c0_i32, %c0_i32_0 : i32, i32
  }
  func.func @transform_5(%arg0: i32) -> (i32, i32, i32) {
    %c0_i32 = arith.constant 0 : i32
    %c0_i32_0 = arith.constant 0 : i32
    %c0_i32_1 = arith.constant 0 : i32
    %c0_i32_2 = arith.constant 0 : i32
    return %c0_i32, %c0_i32_0, %c0_i32_1 : i32, i32, i32
  }
  func.func @transform_6(%arg0: i32) -> (i32, i32) {
    %c0_i32 = arith.constant 0 : i32
    %c0_i32_0 = arith.constant 0 : i32
    %c0_i32_1 = arith.constant 0 : i32
    return %c0_i32, %c0_i32_0 : i32, i32
  }
  func.func @transform_7(%arg0: i32) -> (i32, i32) {
    %c0_i32 = arith.constant 0 : i32
    %c0_i32_0 = arith.constant 0 : i32
    %c0_i32_1 = arith.constant 0 : i32
    return %c0_i32, %c0_i32_0 : i32, i32
  }
  func.func @transform_8(%arg0: i32) -> (i32, i32) {
    %c0_i32 = arith.constant 0 : i32
    %c0_i32_0 = arith.constant 0 : i32
    %c0_i32_1 = arith.constant 0 : i32
    return %c0_i32, %c0_i32_0 : i32, i32
  }
  func.func @transform_9(%arg0: i32) -> (i32, i32, i32) {
    %c0_i32 = arith.constant 0 : i32
    %c0_i32_0 = arith.constant 0 : i32
    %c0_i32_1 = arith.constant 0 : i32
    return %arg0, %c0_i32, %c0_i32_0 : i32, i32, i32
  }
}

</mosaic_0001>

<llo_original>
// kernel: forward.1
$region0: #{forward.1}
  #allocation0 [shape = 'u32[]', space=smem, size = 0x4, offset = 0x4, fixed_abs, tag = 'smem constant byte address 0x4 - core index']
  #allocation1 [shape = 'u32[144,128]{1,0:T(1,128)}', space=vmem, size = 0x12000, scoped, tag = 'internal scratch']
  #allocation2 [shape = 'f32[304,128]{1,0:T(8,128)}', space=vmem, size = 0x26000, scoped, tag = 'scratch operand']
  #allocation3 [shape = 'f32[304,128]{1,0:T(8,128)}', space=vmem, size = 0x26000, scoped, tag = 'scratch operand']
  %s0 = inlined_call_operand.vmem [shape: bf16[2,256,128], index: 0, kind: input, shape index: {}]
  %s1 = inlined_call_operand.vmem [shape: bf16[128,128], index: 1, kind: input, shape index: {}]
  %s2 = inlined_call_operand.vmem [shape: f32[1,128], index: 2, kind: input, shape index: {}]
  %s3 = inlined_call_operand.vmem [shape: bf16[9,128,128], index: 3, kind: input, shape index: {}]
  %s4 = inlined_call_operand.vmem [shape: f32[1,128], index: 4, kind: input, shape index: {}]
  %s5 = inlined_call_operand.vmem [shape: bf16[9,128,128], index: 5, kind: input, shape index: {}]
  %s6 = inlined_call_operand.vmem [shape: f32[1,128], index: 6, kind: input, shape index: {}]
  %s7 = inlined_call_operand.vmem [shape: bf16[128,128], index: 7, kind: input, shape index: {}]
  %s8 = inlined_call_operand.vmem [shape: f32[1,128], index: 8, kind: input, shape index: {}]
  %s9 = inlined_call_operand.vmem [shape: f32[2,8,128], index: 9, kind: output, shape index: {}]
  %s10 = sld [smem:[#allocation0]]
  $region69: #{forward.1} parent=0
    _
  %s12 = ssub.s32 1, %s10
  %s13 = scalar_select 0, %s12, %s10
  loop: start=0, step=1, limit=4
  $region2: #{forward.1} parent=0 // loop_pre_header
    _
  $region3: #{forward.1} parent=0 // loop_header
    %s15 = sphi 0, %s19
    %p16 = scmp.ge.s32.totalorder %s15, 4
    %s25 = sphi 0, %s27
    %s28 = sphi 0, %s25
    %s29 = sphi 0, %s28
    %s45 = sphi 0, %s29
    %s49 = sphi 0, %s49
    %s51 = sphi 0, %s49
    %s52 = sphi 0, %s51
    %s66 = sphi 0, %s52
    %s70 = sphi 0, %s70
    %s72 = sphi 0, %s70
    %s73 = sphi 0, %s72
    %s87 = sphi 0, %s73
    %s91 = sphi 0, %s91
    %s93 = sphi 0, %s91
    %s94 = sphi 0, %s93
    %s108 = sphi 0, %s94
    %s112 = sphi 0, %s112
    %s114 = sphi 0, %s112
    %s115 = sphi 0, %s114
    %s129 = sphi 0, %s115
    %s133 = sphi 0, %s133
    %s135 = sphi 0, %s133
    %s136 = sphi 0, %s135
    %s150 = sphi 0, %s136
    %s154 = sphi 0, %s154
    %s156 = sphi 0, %s154
    %s157 = sphi 0, %s156
    %s171 = sphi 0, %s157
    %s175 = sphi 0, %s175
    %s177 = sphi 0, %s175
    %s178 = sphi 0, %s177
    %s192 = sphi 0, %s178
    %s196 = sphi 0, %s196
    %s198 = sphi 0, %s196
    %s199 = sphi 0, %s198
    %s213 = sphi 0, %s199
    %s219 = sphi 0, %s221
    %s222 = sphi 0, %s219
    %s223 = sphi 0, %s222
    %s239 = sphi 0, %s223
  $region4: #{forward.1} parent=0 // loop_header_branch
    %18 = sbr.rel (%p16) target = $region8
  $region5: #{forward.1} parent=0 // loop_body
    %s20 = ssub.s32 %s15, 1
    %s21 = ssub.s32 %s15, 2
    %s22 = sadd.s32 %s15, 1
    %s23 = ssub.s32 %s15, %s22
    %p24 = scmp.eq.s32.totalorder %s23, 0
    %s26 = sadd.s32 %s25, 1
    %s27 = scalar_select %p24, %s25, %s26
    %p30 = pneg %p24
    %p31 = scmp.eq.s32.totalorder %s15, 1
    %p32 = por %p30, %p31
    %p33 = scmp.ne.s32.totalorder %s25, %s28
    %p34 = scmp.eq.s32.totalorder %s15, 0
    %p35 = por %p33, %p34
    %p36 = scmp.ne.s32.totalorder %s25, %s28
    %p37 = scmp.eq.s32.totalorder %s20, 1
    %p38 = por %p36, %p37
    %p39 = scmp.ne.s32.totalorder %s28, %s29
    %p40 = scmp.eq.s32.totalorder %s20, 0
    %p41 = por %p39, %p40
    %p42 = scmp.ne.s32.totalorder %s28, %s29
    %p43 = scmp.eq.s32.totalorder %s21, 1
    %p44 = por %p42, %p43
    %p46 = scmp.ne.s32.totalorder %s29, %s45
    %p47 = scmp.eq.s32.totalorder %s21, 0
    %p48 = por %p46, %p47
    %s50 = sadd.s32 %s49, 1
    %p53 = scmp.eq.s32.totalorder %s15, 1
    %p54 = scmp.ne.s32.totalorder %s49, %s51
    %p55 = scmp.eq.s32.totalorder %s15, 0
    %p56 = por %p54, %p55
    %p57 = scmp.ne.s32.totalorder %s49, %s51
    %p58 = scmp.eq.s32.totalorder %s20, 1
    %p59 = por %p57, %p58
    %p60 = scmp.ne.s32.totalorder %s51, %s52
    %p61 = scmp.eq.s32.totalorder %s20, 0
    %p62 = por %p60, %p61
    %p63 = scmp.ne.s32.totalorder %s51, %s52
    %p64 = scmp.eq.s32.totalorder %s21, 1
    %p65 = por %p63, %p64
    %p67 = scmp.ne.s32.totalorder %s52, %s66
    %p68 = scmp.eq.s32.totalorder %s21, 0
    %p69 = por %p67, %p68
    %s71 = sadd.s32 %s70, 1
    %p74 = scmp.eq.s32.totalorder %s15, 1
    %p75 = scmp.ne.s32.totalorder %s70, %s72
    %p76 = scmp.eq.s32.totalorder %s15, 0
    %p77 = por %p75, %p76
    %p78 = scmp.ne.s32.totalorder %s70, %s72
    %p79 = scmp.eq.s32.totalorder %s20, 1
    %p80 = por %p78, %p79
    %p81 = scmp.ne.s32.totalorder %s72, %s73
    %p82 = scmp.eq.s32.totalorder %s20, 0
    %p83 = por %p81, %p82
    %p84 = scmp.ne.s32.totalorder %s72, %s73
    %p85 = scmp.eq.s32.totalorder %s21, 1
    %p86 = por %p84, %p85
    %p88 = scmp.ne.s32.totalorder %s73, %s87
    %p89 = scmp.eq.s32.totalorder %s21, 0
    %p90 = por %p88, %p89
    %s92 = sadd.s32 %s91, 1
    %p95 = scmp.eq.s32.totalorder %s15, 1
    %p96 = scmp.ne.s32.totalorder %s91, %s93
    %p97 = scmp.eq.s32.totalorder %s15, 0
    %p98 = por %p96, %p97
    %p99 = scmp.ne.s32.totalorder %s91, %s93
    %p100 = scmp.eq.s32.totalorder %s20, 1
    %p101 = por %p99, %p100
    %p102 = scmp.ne.s32.totalorder %s93, %s94
    %p103 = scmp.eq.s32.totalorder %s20, 0
    %p104 = por %p102, %p103
    %p105 = scmp.ne.s32.totalorder %s93, %s94
    %p106 = scmp.eq.s32.totalorder %s21, 1
    %p107 = por %p105, %p106
    %p109 = scmp.ne.s32.totalorder %s94, %s108
    %p110 = scmp.eq.s32.totalorder %s21, 0
    %p111 = por %p109, %p110
    %s113 = sadd.s32 %s112, 1
    %p116 = scmp.eq.s32.totalorder %s15, 1
    %p117 = scmp.ne.s32.totalorder %s112, %s114
    %p118 = scmp.eq.s32.totalorder %s15, 0
    %p119 = por %p117, %p118
    %p120 = scmp.ne.s32.totalorder %s112, %s114
    %p121 = scmp.eq.s32.totalorder %s20, 1
    %p122 = por %p120, %p121
    %p123 = scmp.ne.s32.totalorder %s114, %s115
    %p124 = scmp.eq.s32.totalorder %s20, 0
    %p125 = por %p123, %p124
    %p126 = scmp.ne.s32.totalorder %s114, %s115
    %p127 = scmp.eq.s32.totalorder %s21, 1
    %p128 = por %p126, %p127
    %p130 = scmp.ne.s32.totalorder %s115, %s129
    %p131 = scmp.eq.s32.totalorder %s21, 0
    %p132 = por %p130, %p131
    %s134 = sadd.s32 %s133, 1
    %p137 = scmp.eq.s32.totalorder %s15, 1
    %p138 = scmp.ne.s32.totalorder %s133, %s135
    %p139 = scmp.eq.s32.totalorder %s15, 0
    %p140 = por %p138, %p139
    %p141 = scmp.ne.s32.totalorder %s133, %s135
    %p142 = scmp.eq.s32.totalorder %s20, 1
    %p143 = por %p141, %p142
    %p144 = scmp.ne.s32.totalorder %s135, %s136
    %p145 = scmp.eq.s32.totalorder %s20, 0
    %p146 = por %p144, %p145
    %p147 = scmp.ne.s32.totalorder %s135, %s136
    %p148 = scmp.eq.s32.totalorder %s21, 1
    %p149 = por %p147, %p148
    %p151 = scmp.ne.s32.totalorder %s136, %s150
    %p152 = scmp.eq.s32.totalorder %s21, 0
    %p153 = por %p151, %p152
    %s155 = sadd.s32 %s154, 1
    %p158 = scmp.eq.s32.totalorder %s15, 1
    %p159 = scmp.ne.s32.totalorder %s154, %s156
    %p160 = scmp.eq.s32.totalorder %s15, 0
    %p161 = por %p159, %p160
    %p162 = scmp.ne.s32.totalorder %s154, %s156
    %p163 = scmp.eq.s32.totalorder %s20, 1
    %p164 = por %p162, %p163
    %p165 = scmp.ne.s32.totalorder %s156, %s157
    %p166 = scmp.eq.s32.totalorder %s20, 0
    %p167 = por %p165, %p166
    %p168 = scmp.ne.s32.totalorder %s156, %s157
    %p169 = scmp.eq.s32.totalorder %s21, 1
    %p170 = por %p168, %p169
    %p172 = scmp.ne.s32.totalorder %s157, %s171
    %p173 = scmp.eq.s32.totalorder %s21, 0
    %p174 = por %p172, %p173
    %s176 = sadd.s32 %s175, 1
    %p179 = scmp.eq.s32.totalorder %s15, 1
    %p180 = scmp.ne.s32.totalorder %s175, %s177
    %p181 = scmp.eq.s32.totalorder %s15, 0
    %p182 = por %p180, %p181
    %p183 = scmp.ne.s32.totalorder %s175, %s177
    %p184 = scmp.eq.s32.totalorder %s20, 1
    %p185 = por %p183, %p184
    %p186 = scmp.ne.s32.totalorder %s177, %s178
    %p187 = scmp.eq.s32.totalorder %s20, 0
    %p188 = por %p186, %p187
    %p189 = scmp.ne.s32.totalorder %s177, %s178
    %p190 = scmp.eq.s32.totalorder %s21, 1
    %p191 = por %p189, %p190
    %p193 = scmp.ne.s32.totalorder %s178, %s192
    %p194 = scmp.eq.s32.totalorder %s21, 0
    %p195 = por %p193, %p194
    %s197 = sadd.s32 %s196, 1
    %p200 = scmp.eq.s32.totalorder %s15, 1
    %p201 = scmp.ne.s32.totalorder %s196, %s198
    %p202 = scmp.eq.s32.totalorder %s15, 0
    %p203 = por %p201, %p202
    %p204 = scmp.ne.s32.totalorder %s196, %s198
    %p205 = scmp.eq.s32.totalorder %s20, 1
    %p206 = por %p204, %p205
    %p207 = scmp.ne.s32.totalorder %s198, %s199
    %p208 = scmp.eq.s32.totalorder %s20, 0
    %p209 = por %p207, %p208
    %p210 = scmp.ne.s32.totalorder %s198, %s199
    %p211 = scmp.eq.s32.totalorder %s21, 1
    %p212 = por %p210, %p211
    %p214 = scmp.ne.s32.totalorder %s199, %s213
    %p215 = scmp.eq.s32.totalorder %s21, 0
    %p216 = por %p214, %p215
    %s217 = ssub.s32 %s15, %s22
    %p218 = scmp.eq.s32.totalorder %s217, 0
    %s220 = sadd.s32 %s219, 1
    %s221 = scalar_select %p218, %s219, %s220
    %p224 = pneg %p218
    %p225 = scmp.eq.s32.totalorder %s15, 1
    %p226 = por %p224, %p225
    %p227 = scmp.ne.s32.totalorder %s219, %s222
    %p228 = scmp.eq.s32.totalorder %s15, 0
    %p229 = por %p227, %p228
    %p230 = scmp.ne.s32.totalorder %s219, %s222
    %p231 = scmp.eq.s32.totalorder %s20, 1
    %p232 = por %p230, %p231
    %p233 = scmp.ne.s32.totalorder %s222, %s223
    %p234 = scmp.eq.s32.totalorder %s20, 0
    %p235 = por %p233, %p234
    %p236 = scmp.ne.s32.totalorder %s222, %s223
    %p237 = scmp.eq.s32.totalorder %s21, 1
    %p238 = por %p236, %p237
    %p240 = scmp.ne.s32.totalorder %s223, %s239
    %p241 = scmp.eq.s32.totalorder %s21, 0
    %p242 = por %p240, %p241
    %p243 = scmp.le.s32.totalorder 1, %s15
    %p244 = scmp.lt.s32.totalorder %s15, 3
    %p245 = pnand %p243, %p244
    %p246 = pneg %p245
    // Predicated region
    $region9: #{forward.1} parent=5 // pred_check
      _
    $region10: #{forward.1} parent=5 // pred_check_branch
      %248 = sbr.rel (%p245) target = $region12
    $region11: #{forward.1} parent=5 // pred_region
      %s249 = ssub.s32 %s15, 1
      // Predicated region
      $region13: #{forward.1} parent=11 // pred_check
        %p250 = pneg %p62
      $region14: #{forward.1} parent=11 // pred_check_branch
        %252 = sbr.rel (%p250) target = $region16
      $region15: #{forward.1} parent=11 // pred_region
        _
      $region16: #{forward.1} parent=11 // pred_fallthru
        _
      // Predicated region
      $region17: #{forward.1} parent=11 // pred_check
        %p253 = pneg %p83
      $region18: #{forward.1} parent=11 // pred_check_branch
        %255 = sbr.rel (%p253) target = $region20
      $region19: #{forward.1} parent=11 // pred_region
        _
      $region20: #{forward.1} parent=11 // pred_fallthru
        _
      // Predicated region
      $region21: #{forward.1} parent=11 // pred_check
        %p256 = pneg %p104
      $region22: #{forward.1} parent=11 // pred_check_branch
        %258 = sbr.rel (%p256) target = $region24
      $region23: #{forward.1} parent=11 // pred_region
        _
      $region24: #{forward.1} parent=11 // pred_fallthru
        _
      // Predicated region
      $region25: #{forward.1} parent=11 // pred_check
        %p259 = pneg %p125
      $region26: #{forward.1} parent=11 // pred_check_branch
        %261 = sbr.rel (%p259) target = $region28
      $region27: #{forward.1} parent=11 // pred_region
        _
      $region28: #{forward.1} parent=11 // pred_fallthru
        _
      // Predicated region
      $region29: #{forward.1} parent=11 // pred_check
        %p262 = pneg %p146
      $region30: #{forward.1} parent=11 // pred_check_branch
        %264 = sbr.rel (%p262) target = $region32
      $region31: #{forward.1} parent=11 // pred_region
        _
      $region32: #{forward.1} parent=11 // pred_fallthru
        _
      // Predicated region
      $region33: #{forward.1} parent=11 // pred_check
        %p265 = pneg %p167
      $region34: #{forward.1} parent=11 // pred_check_branch
        %267 = sbr.rel (%p265) target = $region36
      $region35: #{forward.1} parent=11 // pred_region
        _
      $region36: #{forward.1} parent=11 // pred_fallthru
        _
      // Predicated region
      $region37: #{forward.1} parent=11 // pred_check
        %p268 = pneg %p188
      $region38: #{forward.1} parent=11 // pred_check_branch
        %270 = sbr.rel (%p268) target = $region40
      $region39: #{forward.1} parent=11 // pred_region
        _
      $region40: #{forward.1} parent=11 // pred_fallthru
        _
      // Predicated region
      $region41: #{forward.1} parent=11 // pred_check
        %p271 = pneg %p209
      $region42: #{forward.1} parent=11 // pred_check_branch
        %273 = sbr.rel (%p271) target = $region44
      $region43: #{forward.1} parent=11 // pred_region
        _
      $region44: #{forward.1} parent=11 // pred_fallthru
        _
    $region12: #{forward.1} parent=5 // pred_fallthru
      _
    %p274 = scmp.lt.s32.totalorder %s15, 2
    // Predicated region
    $region45: #{forward.1} parent=5 // pred_check
      %p275 = pneg %p274
    $region46: #{forward.1} parent=5 // pred_check_branch
      %277 = sbr.rel (%p275) target = $region48
    $region47: #{forward.1} parent=5 // pred_region
      // Predicated region
      $region49: #{forward.1} parent=47 // pred_check
        %p278 = pneg %p35
      $region50: #{forward.1} parent=47 // pred_check_branch
        %280 = sbr.rel (%p278) target = $region52
      $region51: #{forward.1} parent=47 // pred_region
        %p281 = scmp.lt.s32.totalorder %s15, 1
        %s282 = scalar_select %p281, %s15, 1
        %s283 = smul.addr %s282, 32
        %s284 = smul.addr %s283, 4
        %s285 = scalar_lea.vmem %s0, %s284
      $region52: #{forward.1} parent=47 // pred_fallthru
        _
    $region48: #{forward.1} parent=5 // pred_fallthru
      _
    %p286 = scmp.le.s32.totalorder 1, %s15
    %p287 = scmp.lt.s32.totalorder %s15, 3
    %p288 = pnand %p286, %p287
    %p289 = pneg %p288
    // Predicated region
    $region53: #{forward.1} parent=5 // pred_check
      _
    $region54: #{forward.1} parent=5 // pred_check_branch
      %291 = sbr.rel (%p288) target = $region56
    $region55: #{forward.1} parent=5 // pred_region
      %s292 = ssub.s32 %s15, 1
      %p293 = scmp.lt.s32.totalorder %s20, 1
      %s294 = scalar_select %p293, %s20, 1
      %s295 = smul.addr %s294, 32
      %s296 = smul.addr %s295, 4
      %s297 = scalar_lea.vmem %s0, %s296
      %p298 = pneg %p41
      %p299 = pneg %p38
      %p300 = pneg %p62
      %p301 = pneg %p59
      %p302 = pneg %p83
      %p303 = pneg %p80
      %p304 = pneg %p104
      %p305 = pneg %p101
      %p306 = pneg %p125
      %p307 = pneg %p122
      %p308 = pneg %p146
      %p309 = pneg %p143
      %p310 = pneg %p167
      %p311 = pneg %p164
      %p312 = pneg %p188
      %p313 = pneg %p185
      %p314 = pneg %p209
      %p315 = pneg %p206
      %p316 = pneg %p235
      %p317 = pneg %p232
      %p318 = scmp.lt.s32.totalorder %s20, 1
      %s319 = scalar_select %p318, %s20, 1
      %s320 = smul.addr %s319, 8
      %s321 = scalar_lea.vmem %s9, %s320
      %p322 = scmp.lt.s32.totalorder %s20, 1
      %s323 = scalar_select %p322, %s20, 1
      %s324 = smul.addr %s323, 32
      %s325 = smul.addr %s324, 4
      %s326 = scalar_lea.vmem %s0, %s325
      %p327 = scmp.lt.s32.totalorder %s20, 1
      %s328 = scalar_select %p327, %s20, 1
      %s329 = smul.addr %s328, 8
      %s330 = scalar_lea.vmem %s9, %s329
      %v333 = vld [vmem:[%s326] sm:$0xf]
      %v334 = vld [vmem:[%s326 + $0x4] sm:$0xf]
      %v335 = vld [vmem:[%s326 + $0x8] sm:$0xf]
      %v336 = vld [vmem:[%s326 + $0xc] sm:$0xf]
      %v337 = vld [vmem:[%s326 + $0x10] sm:$0xf]
      %v338 = vld [vmem:[%s326 + $0x14] sm:$0xf]
      %v339 = vld [vmem:[%s326 + $0x18] sm:$0xf]
      %v340 = vld [vmem:[%s326 + $0x1c] sm:$0xf]
      %v341 = vld [vmem:[%s326 + $0x20] sm:$0xf]
      %v342 = vld [vmem:[%s326 + $0x24] sm:$0xf]
      %v343 = vld [vmem:[%s326 + $0x28] sm:$0xf]
      %v344 = vld [vmem:[%s326 + $0x2c] sm:$0xf]
      %v345 = vld [vmem:[%s326 + $0x30] sm:$0xf]
      %v346 = vld [vmem:[%s326 + $0x34] sm:$0xf]
      %v347 = vld [vmem:[%s326 + $0x38] sm:$0xf]
      %v348 = vld [vmem:[%s326 + $0x3c] sm:$0xf]
      %v349 = vld [vmem:[%s326 + $0x40] sm:$0xf]
      %v350 = vld [vmem:[%s326 + $0x44] sm:$0xf]
      %v351 = vld [vmem:[%s326 + $0x48] sm:$0xf]
      %v352 = vld [vmem:[%s326 + $0x4c] sm:$0xf]
      %v353 = vld [vmem:[%s326 + $0x50] sm:$0xf]
      %v354 = vld [vmem:[%s326 + $0x54] sm:$0xf]
      %v355 = vld [vmem:[%s326 + $0x58] sm:$0xf]
      %v356 = vld [vmem:[%s326 + $0x5c] sm:$0xf]
      %v357 = vld [vmem:[%s326 + $0x60] sm:$0xf]
      %v358 = vld [vmem:[%s326 + $0x64] sm:$0xf]
      %v359 = vld [vmem:[%s326 + $0x68] sm:$0xf]
      %v360 = vld [vmem:[%s326 + $0x6c] sm:$0xf]
      %v361 = vld [vmem:[%s326 + $0x70] sm:$0xf]
      %v362 = vld [vmem:[%s326 + $0x74] sm:$0xf]
      %v363 = vld [vmem:[%s326 + $0x78] sm:$0xf]
      %v364 = vld [vmem:[%s326 + $0x7c] sm:$0xf]
      %v365 = vld [vmem:[%s1] sm:$0xf]
      %v366 = vld [vmem:[%s1 + $0x4] sm:$0xf]
      %v367 = vld [vmem:[%s1 + $0x8] sm:$0xf]
      %v368 = vld [vmem:[%s1 + $0xc] sm:$0xf]
      %v369 = vld [vmem:[%s1 + $0x10] sm:$0xf]
      %v370 = vld [vmem:[%s1 + $0x14] sm:$0xf]
      %v371 = vld [vmem:[%s1 + $0x18] sm:$0xf]
      %v372 = vld [vmem:[%s1 + $0x1c] sm:$0xf]
      %v373 = vld [vmem:[%s1 + $0x20] sm:$0xf]
      %v374 = vld [vmem:[%s1 + $0x24] sm:$0xf]
      %v375 = vld [vmem:[%s1 + $0x28] sm:$0xf]
      %v376 = vld [vmem:[%s1 + $0x2c] sm:$0xf]
      %v377 = vld [vmem:[%s1 + $0x30] sm:$0xf]
      %v378 = vld [vmem:[%s1 + $0x34] sm:$0xf]
      %v379 = vld [vmem:[%s1 + $0x38] sm:$0xf]
      %v380 = vld [vmem:[%s1 + $0x3c] sm:$0xf]
      %v381 = vld [vmem:[%s2] sm:$0x1]
      %v383 = vlaneseq
      %v384 = vshrl.u32 %v383, 7
      %v385 = vsub.s32 0, %v384
      %v386 = vrot.slane %v381, %v385
      %v420 = vunpack.c.l.b16 %v333
      %v421 = vunpack.c.l.b16 %v334
      %v422 = vunpack.c.l.b16 %v335
      %v423 = vunpack.c.l.b16 %v336
      %v424 = vunpack.c.l.b16 %v337
      %v425 = vunpack.c.l.b16 %v338
      %v426 = vunpack.c.l.b16 %v339
      %v427 = vunpack.c.l.b16 %v340
      %v428 = vunpack.c.l.b16 %v341
      %v429 = vunpack.c.l.b16 %v342
      %v430 = vunpack.c.l.b16 %v343
      %v431 = vunpack.c.l.b16 %v344
      %v432 = vunpack.c.l.b16 %v345
      %v433 = vunpack.c.l.b16 %v346
      %v434 = vunpack.c.l.b16 %v347
      %v435 = vunpack.c.l.b16 %v348
      %v436 = vunpack.c.l.b16 %v349
      %v437 = vunpack.c.l.b16 %v350
      %v438 = vunpack.c.l.b16 %v351
      %v439 = vunpack.c.l.b16 %v352
      %v440 = vunpack.c.l.b16 %v353
      %v441 = vunpack.c.l.b16 %v354
      %v442 = vunpack.c.l.b16 %v355
      %v443 = vunpack.c.l.b16 %v356
      %v444 = vunpack.c.l.b16 %v357
      %v445 = vunpack.c.l.b16 %v358
      %v446 = vunpack.c.l.b16 %v359
      %v447 = vunpack.c.l.b16 %v360
      %v448 = vunpack.c.l.b16 %v361
      %v449 = vunpack.c.l.b16 %v362
      %v450 = vunpack.c.l.b16 %v363
      %v451 = vunpack.c.l.b16 %v364
      %v452 = vpack.c.b16 %v421, %v420
      %v453 = vpack.c.b16 %v423, %v422
      %v454 = vpack.c.b16 %v425, %v424
      %v455 = vpack.c.b16 %v427, %v426
      %v456 = vpack.c.b16 %v429, %v428
      %v457 = vpack.c.b16 %v431, %v430
      %v458 = vpack.c.b16 %v433, %v432
      %v459 = vpack.c.b16 %v435, %v434
      %v460 = vpack.c.b16 %v437, %v436
      %v461 = vpack.c.b16 %v439, %v438
      %v462 = vpack.c.b16 %v441, %v440
      %v463 = vpack.c.b16 %v443, %v442
      %v464 = vpack.c.b16 %v445, %v444
      %v465 = vpack.c.b16 %v447, %v446
      %v466 = vpack.c.b16 %v449, %v448
      %v467 = vpack.c.b16 %v451, %v450
      %v500 = vunpack.c.l.b16 %v365
      %v501 = vunpack.c.l.b16 %v366
      %v502 = vunpack.c.l.b16 %v367
      %v503 = vunpack.c.l.b16 %v368
      %v504 = vunpack.c.l.b16 %v369
      %v505 = vunpack.c.l.b16 %v370
      %v506 = vunpack.c.l.b16 %v371
      %v507 = vunpack.c.l.b16 %v372
      %v508 = vunpack.c.l.b16 %v373
      %v509 = vunpack.c.l.b16 %v374
      %v510 = vunpack.c.l.b16 %v375
      %v511 = vunpack.c.l.b16 %v376
      %v512 = vunpack.c.l.b16 %v377
      %v513 = vunpack.c.l.b16 %v378
      %v514 = vunpack.c.l.b16 %v379
      %v515 = vunpack.c.l.b16 %v380
      %v516 = vpack.c.b16 %v501, %v500
      %v517 = vpack.c.b16 %v503, %v502
      %v518 = vpack.c.b16 %v505, %v504
      %v519 = vpack.c.b16 %v507, %v506
      %v520 = vpack.c.b16 %v509, %v508
      %v521 = vpack.c.b16 %v511, %v510
      %v522 = vpack.c.b16 %v513, %v512
      %v523 = vpack.c.b16 %v515, %v514
      %532 = vmatprep.subr.bf16.mxu0 0
      %533 = vmatpush1.bf16.msra.mxu0 %v516
      %534 = vmatprep.subr.bf16.mxu0 0
      %535 = vmatpush1.bf16.msra.mxu0 %v517
      %536 = vmatprep.subr.bf16.mxu0 0
      %537 = vmatpush1.bf16.msra.mxu0 %v518
      %538 = vmatprep.subr.bf16.mxu0 0
      %539 = vmatpush1.bf16.msra.mxu0 %v519
      %540 = vmatprep.subr.bf16.mxu0 0
      %541 = vmatpush1.bf16.msra.mxu0 %v520
      %542 = vmatprep.subr.bf16.mxu0 0
      %543 = vmatpush1.bf16.msra.mxu0 %v521
      %544 = vmatprep.subr.bf16.mxu0 0
      %545 = vmatpush1.bf16.msra.mxu0 %v522
      %546 = vmatprep.subr.bf16.mxu0 0
      %547 = vmatpush1.bf16.msra.mxu0 %v523
      %548 = vmatprep.subr.bf16.mxu0 0
      %549 = vmatpush1.bf16.msra.mxu0 0
      %550 = vmatprep.subr.bf16.mxu0 0
      %551 = vmatpush1.bf16.msra.mxu0 0
      %552 = vmatprep.subr.bf16.mxu0 0
      %553 = vmatpush1.bf16.msra.mxu0 0
      %554 = vmatprep.subr.bf16.mxu0 0
      %555 = vmatpush1.bf16.msra.mxu0 0
      %556 = vmatprep.subr.bf16.mxu0 0
      %557 = vmatpush1.bf16.msra.mxu0 0
      %558 = vmatprep.subr.bf16.mxu0 0
      %559 = vmatpush1.bf16.msra.mxu0 0
      %560 = vmatprep.subr.bf16.mxu0 0
      %561 = vmatpush1.bf16.msra.mxu0 0
      %562 = vmatprep.subr.bf16.mxu0 0
      %563 = vmatpush1.bf16.msra.mxu0 0
      %564 = vmatprep.mubr.bf16.mxu0 0
      %565 = vmatmul.mubr.bf16.gmra.mrb[0].mxu0 %v452
      %v566 = vpop.f32.mrb[0].mxu0
      %v567 = vadd.f32 %v386, %v566
      %v568 = vpop.f32.mrb[0].mxu0
      %v569 = vpop.f32.mrb[0].mxu0
      %v570 = vadd.f32 %v386, %v569
      %v571 = vpop.f32.mrb[0].mxu0
      %572 = vmatprep.mubr.bf16.mxu0 0
      %573 = vmatmul.mubr.bf16.gmra.mrb[0].mxu0 %v453
      %v574 = vpop.f32.mrb[0].mxu0
      %v575 = vadd.f32 %v386, %v574
      %v576 = vpop.f32.mrb[0].mxu0
      %v577 = vpop.f32.mrb[0].mxu0
      %v578 = vadd.f32 %v386, %v577
      %v579 = vpop.f32.mrb[0].mxu0
      %580 = vmatprep.mubr.bf16.mxu0 0
      %581 = vmatmul.mubr.bf16.gmra.mrb[0].mxu0 %v454
      %v582 = vpop.f32.mrb[0].mxu0
      %v583 = vadd.f32 %v386, %v582
      %v584 = vpop.f32.mrb[0].mxu0
      %v585 = vpop.f32.mrb[0].mxu0
      %v586 = vadd.f32 %v386, %v585
      %v587 = vpop.f32.mrb[0].mxu0
      %588 = vmatprep.mubr.bf16.mxu0 0
      %589 = vmatmul.mubr.bf16.gmra.mrb[0].mxu0 %v455
      %v590 = vpop.f32.mrb[0].mxu0
      %v591 = vadd.f32 %v386, %v590
      %v592 = vpop.f32.mrb[0].mxu0
      %v593 = vpop.f32.mrb[0].mxu0
      %v594 = vadd.f32 %v386, %v593
      %v595 = vpop.f32.mrb[0].mxu0
      %596 = vmatprep.mubr.bf16.mxu0 0
      %597 = vmatmul.mubr.bf16.gmra.mrb[0].mxu0 %v456
      %v598 = vpop.f32.mrb[0].mxu0
      %v599 = vadd.f32 %v386, %v598
      %v600 = vpop.f32.mrb[0].mxu0
      %v601 = vpop.f32.mrb[0].mxu0
      %v602 = vadd.f32 %v386, %v601
      %v603 = vpop.f32.mrb[0].mxu0
      %604 = vmatprep.mubr.bf16.mxu0 0
      %605 = vmatmul.mubr.bf16.gmra.mrb[0].mxu0 %v457
      %v606 = vpop.f32.mrb[0].mxu0
      %v607 = vadd.f32 %v386, %v606
      %v608 = vpop.f32.mrb[0].mxu0
      %v609 = vpop.f32.mrb[0].mxu0
      %v610 = vadd.f32 %v386, %v609
      %v611 = vpop.f32.mrb[0].mxu0
      %612 = vmatprep.mubr.bf16.mxu0 0
      %613 = vmatmul.mubr.bf16.gmra.mrb[0].mxu0 %v458
      %v614 = vpop.f32.mrb[0].mxu0
      %v615 = vadd.f32 %v386, %v614
      %v616 = vpop.f32.mrb[0].mxu0
      %v617 = vpop.f32.mrb[0].mxu0
      %v618 = vadd.f32 %v386, %v617
      %v619 = vpop.f32.mrb[0].mxu0
      %620 = vmatprep.mubr.bf16.mxu0 0
      %621 = vmatmul.mubr.bf16.gmra.mrb[0].mxu0 %v459
      %v622 = vpop.f32.mrb[0].mxu0
      %v623 = vadd.f32 %v386, %v622
      %v624 = vpop.f32.mrb[0].mxu0
      %v625 = vpop.f32.mrb[0].mxu0
      %v626 = vadd.f32 %v386, %v625
      %v627 = vpop.f32.mrb[0].mxu0
      %628 = vmatprep.mubr.bf16.mxu0 0
      %629 = vmatmul.mubr.bf16.gmra.mrb[0].mxu0 %v460
      %v630 = vpop.f32.mrb[0].mxu0
      %v631 = vadd.f32 %v386, %v630
      %v632 = vpop.f32.mrb[0].mxu0
      %v633 = vpop.f32.mrb[0].mxu0
      %v634 = vadd.f32 %v386, %v633
      %v635 = vpop.f32.mrb[0].mxu0
      %636 = vmatprep.mubr.bf16.mxu0 0
      %637 = vmatmul.mubr.bf16.gmra.mrb[0].mxu0 %v461
      %v638 = vpop.f32.mrb[0].mxu0
      %v639 = vadd.f32 %v386, %v638
      %v640 = vpop.f32.mrb[0].mxu0
      %v641 = vpop.f32.mrb[0].mxu0
      %v642 = vadd.f32 %v386, %v641
      %v643 = vpop.f32.mrb[0].mxu0
      %644 = vmatprep.mubr.bf16.mxu0 0
      %645 = vmatmul.mubr.bf16.gmra.mrb[0].mxu0 %v462
      %v646 = vpop.f32.mrb[0].mxu0
      %v647 = vadd.f32 %v386, %v646
      %v648 = vpop.f32.mrb[0].mxu0
      %v649 = vpop.f32.mrb[0].mxu0
      %v650 = vadd.f32 %v386, %v649
      %v651 = vpop.f32.mrb[0].mxu0
      %652 = vmatprep.mubr.bf16.mxu0 0
      %653 = vmatmul.mubr.bf16.gmra.mrb[0].mxu0 %v463
      %v654 = vpop.f32.mrb[0].mxu0
      %v655 = vadd.f32 %v386, %v654
      %v656 = vpop.f32.mrb[0].mxu0
      %v657 = vpop.f32.mrb[0].mxu0
      %v658 = vadd.f32 %v386, %v657
      %v659 = vpop.f32.mrb[0].mxu0
      %660 = vmatprep.mubr.bf16.mxu0 0
      %661 = vmatmul.mubr.bf16.gmra.mrb[0].mxu0 %v464
      %v662 = vpop.f32.mrb[0].mxu0
      %v663 = vadd.f32 %v386, %v662
      %v664 = vpop.f32.mrb[0].mxu0
      %v665 = vpop.f32.mrb[0].mxu0
      %v666 = vadd.f32 %v386, %v665
      %v667 = vpop.f32.mrb[0].mxu0
      %668 = vmatprep.mubr.bf16.mxu0 0
      %669 = vmatmul.mubr.bf16.gmra.mrb[0].mxu0 %v465
      %v670 = vpop.f32.mrb[0].mxu0
      %v671 = vadd.f32 %v386, %v670
      %v672 = vpop.f32.mrb[0].mxu0
      %v673 = vpop.f32.mrb[0].mxu0
      %v674 = vadd.f32 %v386, %v673
      %v675 = vpop.f32.mrb[0].mxu0
      %676 = vmatprep.mubr.bf16.mxu0 0
      %677 = vmatmul.mubr.bf16.gmra.mrb[0].mxu0 %v466
      %v678 = vpop.f32.mrb[0].mxu0
      %v679 = vadd.f32 %v386, %v678
      %v680 = vpop.f32.mrb[0].mxu0
      %v681 = vpop.f32.mrb[0].mxu0
      %v682 = vadd.f32 %v386, %v681
      %v683 = vpop.f32.mrb[0].mxu0
      %684 = vmatprep.mubr.bf16.mxu0 0
      %685 = vmatmul.mubr.bf16.gmra.mrb[0].mxu0 %v467
      %v686 = vpop.f32.mrb[0].mxu0
      %v687 = vadd.f32 %v386, %v686
      %v688 = vpop.f32.mrb[0].mxu0
      %v689 = vpop.f32.mrb[0].mxu0
      %v690 = vadd.f32 %v386, %v689
      %v691 = vpop.f32.mrb[0].mxu0
      %692 = vdwg.mxu0
      %v693 = vmax.f32 %v567, 0.0
      %v694 = vmax.f32 %v570, 0.0
      %v695 = vmax.f32 %v575, 0.0
      %v696 = vmax.f32 %v578, 0.0
      %v697 = vmax.f32 %v583, 0.0
      %v698 = vmax.f32 %v586, 0.0
      %v699 = vmax.f32 %v591, 0.0
      %v700 = vmax.f32 %v594, 0.0
      %v701 = vmax.f32 %v599, 0.0
      %v702 = vmax.f32 %v602, 0.0
      %v703 = vmax.f32 %v607, 0.0
      %v704 = vmax.f32 %v610, 0.0
      %v705 = vmax.f32 %v615, 0.0
      %v706 = vmax.f32 %v618, 0.0
      %v707 = vmax.f32 %v623, 0.0
      %v708 = vmax.f32 %v626, 0.0
      %v709 = vmax.f32 %v631, 0.0
      %v710 = vmax.f32 %v634, 0.0
      %v711 = vmax.f32 %v639, 0.0
      %v712 = vmax.f32 %v642, 0.0
      %v713 = vmax.f32 %v647, 0.0
      %v714 = vmax.f32 %v650, 0.0
      %v715 = vmax.f32 %v655, 0.0
      %v716 = vmax.f32 %v658, 0.0
      %v717 = vmax.f32 %v663, 0.0
      %v718 = vmax.f32 %v666, 0.0
      %v719 = vmax.f32 %v671, 0.0
      %v720 = vmax.f32 %v674, 0.0
      %v721 = vmax.f32 %v679, 0.0
      %v722 = vmax.f32 %v682, 0.0
      %v723 = vmax.f32 %v687, 0.0
      %v724 = vmax.f32 %v690, 0.0
      %v725 = vlaneseq
      %v726 = vshrl.u32 %v725, 7
      %v727 = vadd.s32 %v726, 8
      %v728 = vadd.s32 %v726, 16
      %v729 = vadd.s32 %v726, 24
      %v730 = vadd.s32 %v726, 32
      %v731 = vadd.s32 %v726, 40
      %v732 = vadd.s32 %v726, 48
      %v733 = vadd.s32 %v726, 56
      %v734 = vadd.s32 %v726, 64
      %v735 = vadd.s32 %v726, 72
      %v736 = vadd.s32 %v726, 80
      %v737 = vadd.s32 %v726, 88
      %v738 = vadd.s32 %v726, 96
      %v739 = vadd.s32 %v726, 104
      %v740 = vadd.s32 %v726, 112
      %v741 = vadd.s32 %v726, 120
      %v742 = vadd.s32 %v726, 128
      %v743 = vadd.s32 %v726, 136
      %v744 = vadd.s32 %v726, 144
      %v745 = vadd.s32 %v726, 152
      %v746 = vadd.s32 %v726, 160
      %v747 = vadd.s32 %v726, 168
      %v748 = vadd.s32 %v726, 176
      %v749 = vadd.s32 %v726, 184
      %v750 = vadd.s32 %v726, 192
      %v751 = vadd.s32 %v726, 200
      %v752 = vadd.s32 %v726, 208
      %v753 = vadd.s32 %v726, 216
      %v754 = vadd.s32 %v726, 224
      %v755 = vadd.s32 %v726, 232
      %v756 = vadd.s32 %v726, 240
      %v757 = vadd.s32 %v726, 248
      %vm758 = vcmp.lt.s32.totalorder %v726, 0
      %v759 = vsub.s32 0, %v726
      %v760 = vsel %vm758, %v759, %v726
      %v761 = vshrl.u32 %v760, 4
      %v762 = vand.u32 %v760, 15
      %v763 = vsub.s32 0, %v762
      %v764 = vsel %vm758, %v763, %v762
      %vm765 = vcmp.lt.s32.totalorder %v727, 0
      %v766 = vsub.s32 0, %v727
      %v767 = vsel %vm765, %v766, %v727
      %v768 = vshrl.u32 %v767, 4
      %v769 = vand.u32 %v767, 15
      %v770 = vsub.s32 0, %v769
      %v771 = vsel %vm765, %v770, %v769
      %vm772 = vcmp.lt.s32.totalorder %v728, 0
      %v773 = vsub.s32 0, %v728
      %v774 = vsel %vm772, %v773, %v728
      %v775 = vshrl.u32 %v774, 4
      %v776 = vand.u32 %v774, 15
      %v777 = vsub.s32 0, %v776
      %v778 = vsel %vm772, %v777, %v776
      %vm779 = vcmp.lt.s32.totalorder %v729, 0
      %v780 = vsub.s32 0, %v729
      %v781 = vsel %vm779, %v780, %v729
      %v782 = vshrl.u32 %v781, 4
      %v783 = vand.u32 %v781, 15
      %v784 = vsub.s32 0, %v783
      %v785 = vsel %vm779, %v784, %v783
      %vm786 = vcmp.lt.s32.totalorder %v730, 0
      %v787 = vsub.s32 0, %v730
      %v788 = vsel %vm786, %v787, %v730
      %v789 = vshrl.u32 %v788, 4
      %v790 = vand.u32 %v788, 15
      %v791 = vsub.s32 0, %v790
      %v792 = vsel %vm786, %v791, %v790
      %vm793 = vcmp.lt.s32.totalorder %v731, 0
      %v794 = vsub.s32 0, %v731
      %v795 = vsel %vm793, %v794, %v731
      %v796 = vshrl.u32 %v795, 4
      %v797 = vand.u32 %v795, 15
      %v798 = vsub.s32 0, %v797
      %v799 = vsel %vm793, %v798, %v797
      %vm800 = vcmp.lt.s32.totalorder %v732, 0
      %v801 = vsub.s32 0, %v732
      %v802 = vsel %vm800, %v801, %v732
      %v803 = vshrl.u32 %v802, 4
      %v804 = vand.u32 %v802, 15
      %v805 = vsub.s32 0, %v804
      %v806 = vsel %vm800, %v805, %v804
      %vm807 = vcmp.lt.s32.totalorder %v733, 0
      %v808 = vsub.s32 0, %v733
      %v809 = vsel %vm807, %v808, %v733
      %v810 = vshrl.u32 %v809, 4
      %v811 = vand.u32 %v809, 15
      %v812 = vsub.s32 0, %v811
      %v813 = vsel %vm807, %v812, %v811
      %vm814 = vcmp.lt.s32.totalorder %v734, 0
      %v815 = vsub.s32 0, %v734
      %v816 = vsel %vm814, %v815, %v734
      %v817 = vshrl.u32 %v816, 4
      %v818 = vand.u32 %v816, 15
      %v819 = vsub.s32 0, %v818
      %v820 = vsel %vm814, %v819, %v818
      %vm821 = vcmp.lt.s32.totalorder %v735, 0
      %v822 = vsub.s32 0, %v735
      %v823 = vsel %vm821, %v822, %v735
      %v824 = vshrl.u32 %v823, 4
      %v825 = vand.u32 %v823, 15
      %v826 = vsub.s32 0, %v825
      %v827 = vsel %vm821, %v826, %v825
      %vm828 = vcmp.lt.s32.totalorder %v736, 0
      %v829 = vsub.s32 0, %v736
      %v830 = vsel %vm828, %v829, %v736
      %v831 = vshrl.u32 %v830, 4
      %v832 = vand.u32 %v830, 15
      %v833 = vsub.s32 0, %v832
      %v834 = vsel %vm828, %v833, %v832
      %vm835 = vcmp.lt.s32.totalorder %v737, 0
      %v836 = vsub.s32 0, %v737
      %v837 = vsel %vm835, %v836, %v737
      %v838 = vshrl.u32 %v837, 4
      %v839 = vand.u32 %v837, 15
      %v840 = vsub.s32 0, %v839
      %v841 = vsel %vm835, %v840, %v839
      %vm842 = vcmp.lt.s32.totalorder %v738, 0
      %v843 = vsub.s32 0, %v738
      %v844 = vsel %vm842, %v843, %v738
      %v845 = vshrl.u32 %v844, 4
      %v846 = vand.u32 %v844, 15
      %v847 = vsub.s32 0, %v846
      %v848 = vsel %vm842, %v847, %v846
      %vm849 = vcmp.lt.s32.totalorder %v739, 0
      %v850 = vsub.s32 0, %v739
      %v851 = vsel %vm849, %v850, %v739
      %v852 = vshrl.u32 %v851, 4
      %v853 = vand.u32 %v851, 15
      %v854 = vsub.s32 0, %v853
      %v855 = vsel %vm849, %v854, %v853
      %vm856 = vcmp.lt.s32.totalorder %v740, 0
      %v857 = vsub.s32 0, %v740
      %v858 = vsel %vm856, %v857, %v740
      %v859 = vshrl.u32 %v858, 4
      %v860 = vand.u32 %v858, 15
      %v861 = vsub.s32 0, %v860
      %v862 = vsel %vm856, %v861, %v860
      %vm863 = vcmp.lt.s32.totalorder %v741, 0
      %v864 = vsub.s32 0, %v741
      %v865 = vsel %vm863, %v864, %v741
      %v866 = vshrl.u32 %v865, 4
      %v867 = vand.u32 %v865, 15
      %v868 = vsub.s32 0, %v867
      %v869 = vsel %vm863, %v868, %v867
      %vm870 = vcmp.lt.s32.totalorder %v742, 0
      %v871 = vsub.s32 0, %v742
      %v872 = vsel %vm870, %v871, %v742
      %v873 = vshrl.u32 %v872, 4
      %v874 = vand.u32 %v872, 15
      %v875 = vsub.s32 0, %v874
      %v876 = vsel %vm870, %v875, %v874
      %vm877 = vcmp.lt.s32.totalorder %v743, 0
      %v878 = vsub.s32 0, %v743
      %v879 = vsel %vm877, %v878, %v743
      %v880 = vshrl.u32 %v879, 4
      %v881 = vand.u32 %v879, 15
      %v882 = vsub.s32 0, %v881
      %v883 = vsel %vm877, %v882, %v881
      %vm884 = vcmp.lt.s32.totalorder %v744, 0
      %v885 = vsub.s32 0, %v744
      %v886 = vsel %vm884, %v885, %v744
      %v887 = vshrl.u32 %v886, 4
      %v888 = vand.u32 %v886, 15
      %v889 = vsub.s32 0, %v888
      %v890 = vsel %vm884, %v889, %v888
      %vm891 = vcmp.lt.s32.totalorder %v745, 0
      %v892 = vsub.s32 0, %v745
      %v893 = vsel %vm891, %v892, %v745
      %v894 = vshrl.u32 %v893, 4
      %v895 = vand.u32 %v893, 15
      %v896 = vsub.s32 0, %v895
      %v897 = vsel %vm891, %v896, %v895
      %vm898 = vcmp.lt.s32.totalorder %v746, 0
      %v899 = vsub.s32 0, %v746
      %v900 = vsel %vm898, %v899, %v746
      %v901 = vshrl.u32 %v900, 4
      %v902 = vand.u32 %v900, 15
      %v903 = vsub.s32 0, %v902
      %v904 = vsel %vm898, %v903, %v902
      %vm905 = vcmp.lt.s32.totalorder %v747, 0
      %v906 = vsub.s32 0, %v747
      %v907 = vsel %vm905, %v906, %v747
      %v908 = vshrl.u32 %v907, 4
      %v909 = vand.u32 %v907, 15
      %v910 = vsub.s32 0, %v909
      %v911 = vsel %vm905, %v910, %v909
      %vm912 = vcmp.lt.s32.totalorder %v748, 0
      %v913 = vsub.s32 0, %v748
      %v914 = vsel %vm912, %v913, %v748
      %v915 = vshrl.u32 %v914, 4
      %v916 = vand.u32 %v914, 15
      %v917 = vsub.s32 0, %v916
      %v918 = vsel %vm912, %v917, %v916
      %vm919 = vcmp.lt.s32.totalorder %v749, 0
      %v920 = vsub.s32 0, %v749
      %v921 = vsel %vm919, %v920, %v749
      %v922 = vshrl.u32 %v921, 4
      %v923 = vand.u32 %v921, 15
      %v924 = vsub.s32 0, %v923
      %v925 = vsel %vm919, %v924, %v923
      %vm926 = vcmp.lt.s32.totalorder %v750, 0
      %v927 = vsub.s32 0, %v750
      %v928 = vsel %vm926, %v927, %v750
      %v929 = vshrl.u32 %v928, 4
      %v930 = vand.u32 %v928, 15
      %v931 = vsub.s32 0, %v930
      %v932 = vsel %vm926, %v931, %v930
      %vm933 = vcmp.lt.s32.totalorder %v751, 0
      %v934 = vsub.s32 0, %v751
      %v935 = vsel %vm933, %v934, %v751
      %v936 = vshrl.u32 %v935, 4
      %v937 = vand.u32 %v935, 15
      %v938 = vsub.s32 0, %v937
      %v939 = vsel %vm933, %v938, %v937
      %vm940 = vcmp.lt.s32.totalorder %v752, 0
      %v941 = vsub.s32 0, %v752
      %v942 = vsel %vm940, %v941, %v752
      %v943 = vshrl.u32 %v942, 4
      %v944 = vand.u32 %v942, 15
      %v945 = vsub.s32 0, %v944
      %v946 = vsel %vm940, %v945, %v944
      %vm947 = vcmp.lt.s32.totalorder %v753, 0
      %v948 = vsub.s32 0, %v753
      %v949 = vsel %vm947, %v948, %v753
      %v950 = vshrl.u32 %v949, 4
      %v951 = vand.u32 %v949, 15
      %v952 = vsub.s32 0, %v951
      %v953 = vsel %vm947, %v952, %v951
      %vm954 = vcmp.lt.s32.totalorder %v754, 0
      %v955 = vsub.s32 0, %v754
      %v956 = vsel %vm954, %v955, %v754
      %v957 = vshrl.u32 %v956, 4
      %v958 = vand.u32 %v956, 15
      %v959 = vsub.s32 0, %v958
      %v960 = vsel %vm954, %v959, %v958
      %vm961 = vcmp.lt.s32.totalorder %v755, 0
      %v962 = vsub.s32 0, %v755
      %v963 = vsel %vm961, %v962, %v755
      %v964 = vshrl.u32 %v963, 4
      %v965 = vand.u32 %v963, 15
      %v966 = vsub.s32 0, %v965
      %v967 = vsel %vm961, %v966, %v965
      %vm968 = vcmp.lt.s32.totalorder %v756, 0
      %v969 = vsub.s32 0, %v756
      %v970 = vsel %vm968, %v969, %v756
      %v971 = vshrl.u32 %v970, 4
      %v972 = vand.u32 %v970, 15
      %v973 = vsub.s32 0, %v972
      %v974 = vsel %vm968, %v973, %v972
      %vm975 = vcmp.lt.s32.totalorder %v757, 0
      %v976 = vsub.s32 0, %v757
      %v977 = vsel %vm975, %v976, %v757
      %v978 = vshrl.u32 %v977, 4
      %v979 = vand.u32 %v977, 15
      %v980 = vsub.s32 0, %v979
      %v981 = vsel %vm975, %v980, %v979
      %vm982 = vcmp.ne.s32.totalorder %v764, 0
      %vm983 = vcmp.ne.s32.totalorder %v771, 0
      %vm984 = vcmp.ne.s32.totalorder %v778, 0
      %vm985 = vcmp.ne.s32.totalorder %v785, 0
      %vm986 = vcmp.ne.s32.totalorder %v792, 0
      %vm987 = vcmp.ne.s32.totalorder %v799, 0
      %vm988 = vcmp.ne.s32.totalorder %v806, 0
      %vm989 = vcmp.ne.s32.totalorder %v813, 0
      %vm990 = vcmp.ne.s32.totalorder %v820, 0
      %vm991 = vcmp.ne.s32.totalorder %v827, 0
      %vm992 = vcmp.ne.s32.totalorder %v834, 0
      %vm993 = vcmp.ne.s32.totalorder %v841, 0
      %vm994 = vcmp.ne.s32.totalorder %v848, 0
      %vm995 = vcmp.ne.s32.totalorder %v855, 0
      %vm996 = vcmp.ne.s32.totalorder %v862, 0
      %vm997 = vcmp.ne.s32.totalorder %v869, 0
      %vm998 = vcmp.ne.s32.totalorder %v876, 0
      %vm999 = vcmp.ne.s32.totalorder %v883, 0
      %vm1000 = vcmp.ne.s32.totalorder %v890, 0
      %vm1001 = vcmp.ne.s32.totalorder %v897, 0
      %vm1002 = vcmp.ne.s32.totalorder %v904, 0
      %vm1003 = vcmp.ne.s32.totalorder %v911, 0
      %vm1004 = vcmp.ne.s32.totalorder %v918, 0
      %vm1005 = vcmp.ne.s32.totalorder %v925, 0
      %vm1006 = vcmp.ne.s32.totalorder %v932, 0
      %vm1007 = vcmp.ne.s32.totalorder %v939, 0
      %vm1008 = vcmp.ne.s32.totalorder %v946, 0
      %vm1009 = vcmp.ne.s32.totalorder %v953, 0
      %vm1010 = vcmp.ne.s32.totalorder %v960, 0
      %vm1011 = vcmp.ne.s32.totalorder %v967, 0
      %vm1012 = vcmp.ne.s32.totalorder %v974, 0
      %vm1013 = vcmp.ne.s32.totalorder %v981, 0
      %vm1014 = vcmp.lt.s32.totalorder %v764, 0
      %vm1015 = vcmp.lt.s32.totalorder %v771, 0
      %vm1016 = vcmp.lt.s32.totalorder %v778, 0
      %vm1017 = vcmp.lt.s32.totalorder %v785, 0
      %vm1018 = vcmp.lt.s32.totalorder %v792, 0
      %vm1019 = vcmp.lt.s32.totalorder %v799, 0
      %vm1020 = vcmp.lt.s32.totalorder %v806, 0
      %vm1021 = vcmp.lt.s32.totalorder %v813, 0
      %vm1022 = vcmp.lt.s32.totalorder %v820, 0
      %vm1023 = vcmp.lt.s32.totalorder %v827, 0
      %vm1024 = vcmp.lt.s32.totalorder %v834, 0
      %vm1025 = vcmp.lt.s32.totalorder %v841, 0
      %vm1026 = vcmp.lt.s32.totalorder %v848, 0
      %vm1027 = vcmp.lt.s32.totalorder %v855, 0
      %vm1028 = vcmp.lt.s32.totalorder %v862, 0
      %vm1029 = vcmp.lt.s32.totalorder %v869, 0
      %vm1030 = vcmp.lt.s32.totalorder %v876, 0
      %vm1031 = vcmp.lt.s32.totalorder %v883, 0
      %vm1032 = vcmp.lt.s32.totalorder %v890, 0
      %vm1033 = vcmp.lt.s32.totalorder %v897, 0
      %vm1034 = vcmp.lt.s32.totalorder %v904, 0
      %vm1035 = vcmp.lt.s32.totalorder %v911, 0
      %vm1036 = vcmp.lt.s32.totalorder %v918, 0
      %vm1037 = vcmp.lt.s32.totalorder %v925, 0
      %vm1038 = vcmp.lt.s32.totalorder %v932, 0
      %vm1039 = vcmp.lt.s32.totalorder %v939, 0
      %vm1040 = vcmp.lt.s32.totalorder %v946, 0
      %vm1041 = vcmp.lt.s32.totalorder %v953, 0
      %vm1042 = vcmp.lt.s32.totalorder %v960, 0
      %vm1043 = vcmp.lt.s32.totalorder %v967, 0
      %vm1044 = vcmp.lt.s32.totalorder %v974, 0
      %vm1045 = vcmp.lt.s32.totalorder %v981, 0
      %vm1046 = vmand %vm1014, %vm982
      %vm1047 = vmand %vm1015, %vm983
      %vm1048 = vmand %vm1016, %vm984
      %vm1049 = vmand %vm1017, %vm985
      %vm1050 = vmand %vm1018, %vm986
      %vm1051 = vmand %vm1019, %vm987
      %vm1052 = vmand %vm1020, %vm988
      %vm1053 = vmand %vm1021, %vm989
      %vm1054 = vmand %vm1022, %vm990
      %vm1055 = vmand %vm1023, %vm991
      %vm1056 = vmand %vm1024, %vm992
      %vm1057 = vmand %vm1025, %vm993
      %vm1058 = vmand %vm1026, %vm994
      %vm1059 = vmand %vm1027, %vm995
      %vm1060 = vmand %vm1028, %vm996
      %vm1061 = vmand %vm1029, %vm997
      %vm1062 = vmand %vm1030, %vm998
      %vm1063 = vmand %vm1031, %vm999
      %vm1064 = vmand %vm1032, %vm1000
      %vm1065 = vmand %vm1033, %vm1001
      %vm1066 = vmand %vm1034, %vm1002
      %vm1067 = vmand %vm1035, %vm1003
      %vm1068 = vmand %vm1036, %vm1004
      %vm1069 = vmand %vm1037, %vm1005
      %vm1070 = vmand %vm1038, %vm1006
      %vm1071 = vmand %vm1039, %vm1007
      %vm1072 = vmand %vm1040, %vm1008
      %vm1073 = vmand %vm1041, %vm1009
      %vm1074 = vmand %vm1042, %vm1010
      %vm1075 = vmand %vm1043, %vm1011
      %vm1076 = vmand %vm1044, %vm1012
      %vm1077 = vmand %vm1045, %vm1013
      %v1078 = vadd.s32 %v764, 16
      %v1079 = vadd.s32 %v771, 16
      %v1080 = vadd.s32 %v778, 16
      %v1081 = vadd.s32 %v785, 16
      %v1082 = vadd.s32 %v792, 16
      %v1083 = vadd.s32 %v799, 16
      %v1084 = vadd.s32 %v806, 16
      %v1085 = vadd.s32 %v813, 16
      %v1086 = vadd.s32 %v820, 16
      %v1087 = vadd.s32 %v827, 16
      %v1088 = vadd.s32 %v834, 16
      %v1089 = vadd.s32 %v841, 16
      %v1090 = vadd.s32 %v848, 16
      %v1091 = vadd.s32 %v855, 16
      %v1092 = vadd.s32 %v862, 16
      %v1093 = vadd.s32 %v869, 16
      %v1094 = vadd.s32 %v876, 16
      %v1095 = vadd.s32 %v883, 16
      %v1096 = vadd.s32 %v890, 16
      %v1097 = vadd.s32 %v897, 16
      %v1098 = vadd.s32 %v904, 16
      %v1099 = vadd.s32 %v911, 16
      %v1100 = vadd.s32 %v918, 16
      %v1101 = vadd.s32 %v925, 16
      %v1102 = vadd.s32 %v932, 16
      %v1103 = vadd.s32 %v939, 16
      %v1104 = vadd.s32 %v946, 16
      %v1105 = vadd.s32 %v953, 16
      %v1106 = vadd.s32 %v960, 16
      %v1107 = vadd.s32 %v967, 16
      %v1108 = vadd.s32 %v974, 16
      %v1109 = vadd.s32 %v981, 16
      %v1110 = vsel %vm1046, %v1078, %v764
      %v1111 = vsel %vm1047, %v1079, %v771
      %v1112 = vsel %vm1048, %v1080, %v778
      %v1113 = vsel %vm1049, %v1081, %v785
      %v1114 = vsel %vm1050, %v1082, %v792
      %v1115 = vsel %vm1051, %v1083, %v799
      %v1116 = vsel %vm1052, %v1084, %v806
      %v1117 = vsel %vm1053, %v1085, %v813
      %v1118 = vsel %vm1054, %v1086, %v820
      %v1119 = vsel %vm1055, %v1087, %v827
      %v1120 = vsel %vm1056, %v1088, %v834
      %v1121 = vsel %vm1057, %v1089, %v841
      %v1122 = vsel %vm1058, %v1090, %v848
      %v1123 = vsel %vm1059, %v1091, %v855
      %v1124 = vsel %vm1060, %v1092, %v862
      %v1125 = vsel %vm1061, %v1093, %v869
      %v1126 = vsel %vm1062, %v1094, %v876
      %v1127 = vsel %vm1063, %v1095, %v883
      %v1128 = vsel %vm1064, %v1096, %v890
      %v1129 = vsel %vm1065, %v1097, %v897
      %v1130 = vsel %vm1066, %v1098, %v904
      %v1131 = vsel %vm1067, %v1099, %v911
      %v1132 = vsel %vm1068, %v1100, %v918
      %v1133 = vsel %vm1069, %v1101, %v925
      %v1134 = vsel %vm1070, %v1102, %v932
      %v1135 = vsel %vm1071, %v1103, %v939
      %v1136 = vsel %vm1072, %v1104, %v946
      %v1137 = vsel %vm1073, %v1105, %v953
      %v1138 = vsel %vm1074, %v1106, %v960
      %v1139 = vsel %vm1075, %v1107, %v967
      %v1140 = vsel %vm1076, %v1108, %v974
      %v1141 = vsel %vm1077, %v1109, %v981
      %vm1142 = vcmp.gt.s32.totalorder %v1110, 0
      %vm1143 = vcmp.gt.s32.totalorder %v1111, 0
      %vm1144 = vcmp.gt.s32.totalorder %v1112, 0
      %vm1145 = vcmp.gt.s32.totalorder %v1113, 0
      %vm1146 = vcmp.gt.s32.totalorder %v1114, 0
      %vm1147 = vcmp.gt.s32.totalorder %v1115, 0
      %vm1148 = vcmp.gt.s32.totalorder %v1116, 0
      %vm1149 = vcmp.gt.s32.totalorder %v1117, 0
      %vm1150 = vcmp.gt.s32.totalorder %v1118, 0
      %vm1151 = vcmp.gt.s32.totalorder %v1119, 0
      %vm1152 = vcmp.gt.s32.totalorder %v1120, 0
      %vm1153 = vcmp.gt.s32.totalorder %v1121, 0
      %vm1154 = vcmp.gt.s32.totalorder %v1122, 0
      %vm1155 = vcmp.gt.s32.totalorder %v1123, 0
      %vm1156 = vcmp.gt.s32.totalorder %v1124, 0
      %vm1157 = vcmp.gt.s32.totalorder %v1125, 0
      %vm1158 = vcmp.gt.s32.totalorder %v1126, 0
      %vm1159 = vcmp.gt.s32.totalorder %v1127, 0
      %vm1160 = vcmp.gt.s32.totalorder %v1128, 0
      %vm1161 = vcmp.gt.s32.totalorder %v1129, 0
      %vm1162 = vcmp.gt.s32.totalorder %v1130, 0
      %vm1163 = vcmp.gt.s32.totalorder %v1131, 0
      %vm1164 = vcmp.gt.s32.totalorder %v1132, 0
      %vm1165 = vcmp.gt.s32.totalorder %v1133, 0
      %vm1166 = vcmp.gt.s32.totalorder %v1134, 0
      %vm1167 = vcmp.gt.s32.totalorder %v1135, 0
      %vm1168 = vcmp.gt.s32.totalorder %v1136, 0
      %vm1169 = vcmp.gt.s32.totalorder %v1137, 0
      %vm1170 = vcmp.gt.s32.totalorder %v1138, 0
      %vm1171 = vcmp.gt.s32.totalorder %v1139, 0
      %vm1172 = vcmp.gt.s32.totalorder %v1140, 0
      %vm1173 = vcmp.gt.s32.totalorder %v1141, 0
      %vm1174 = vcmp.lt.s32.totalorder %v1110, 15
      %vm1175 = vcmp.lt.s32.totalorder %v1111, 15
      %vm1176 = vcmp.lt.s32.totalorder %v1112, 15
      %vm1177 = vcmp.lt.s32.totalorder %v1113, 15
      %vm1178 = vcmp.lt.s32.totalorder %v1114, 15
      %vm1179 = vcmp.lt.s32.totalorder %v1115, 15
      %vm1180 = vcmp.lt.s32.totalorder %v1116, 15
      %vm1181 = vcmp.lt.s32.totalorder %v1117, 15
      %vm1182 = vcmp.lt.s32.totalorder %v1118, 15
      %vm1183 = vcmp.lt.s32.totalorder %v1119, 15
      %vm1184 = vcmp.lt.s32.totalorder %v1120, 15
      %vm1185 = vcmp.lt.s32.totalorder %v1121, 15
      %vm1186 = vcmp.lt.s32.totalorder %v1122, 15
      %vm1187 = vcmp.lt.s32.totalorder %v1123, 15
      %vm1188 = vcmp.lt.s32.totalorder %v1124, 15
      %vm1189 = vcmp.lt.s32.totalorder %v1125, 15
      %vm1190 = vcmp.lt.s32.totalorder %v1126, 15
      %vm1191 = vcmp.lt.s32.totalorder %v1127, 15
      %vm1192 = vcmp.lt.s32.totalorder %v1128, 15
      %vm1193 = vcmp.lt.s32.totalorder %v1129, 15
      %vm1194 = vcmp.lt.s32.totalorder %v1130, 15
      %vm1195 = vcmp.lt.s32.totalorder %v1131, 15
      %vm1196 = vcmp.lt.s32.totalorder %v1132, 15
      %vm1197 = vcmp.lt.s32.totalorder %v1133, 15
      %vm1198 = vcmp.lt.s32.totalorder %v1134, 15
      %vm1199 = vcmp.lt.s32.totalorder %v1135, 15
      %vm1200 = vcmp.lt.s32.totalorder %v1136, 15
      %vm1201 = vcmp.lt.s32.totalorder %v1137, 15
      %vm1202 = vcmp.lt.s32.totalorder %v1138, 15
      %vm1203 = vcmp.lt.s32.totalorder %v1139, 15
      %vm1204 = vcmp.lt.s32.totalorder %v1140, 15
      %vm1205 = vcmp.lt.s32.totalorder %v1141, 15
      %1206 = vst [vmem:[#allocation2] sm:$0xff] 0.0
      %1207 = vst [vmem:[#allocation2 + $0x8] sm:$0xff] 0.0
      %1208 = vst [vmem:[#allocation2 + $0x10] sm:$0xff] 0.0
      %1209 = vst [vmem:[#allocation2 + $0x18] sm:$0xff] 0.0
      %1210 = vst [vmem:[#allocation2 + $0x20] sm:$0xff] 0.0
      %1211 = vst [vmem:[#allocation2 + $0x28] sm:$0xff] 0.0
      %1212 = vst [vmem:[#allocation2 + $0x30] sm:$0xff] 0.0
      %1213 = vst [vmem:[#allocation2 + $0x38] sm:$0xff] 0.0
      %1214 = vst [vmem:[#allocation2 + $0x40] sm:$0xff] 0.0
      %1215 = vst [vmem:[#allocation2 + $0x48] sm:$0xff] 0.0
      %1216 = vst [vmem:[#allocation2 + $0x50] sm:$0xff] 0.0
      %1217 = vst [vmem:[#allocation2 + $0x58] sm:$0xff] 0.0
      %1218 = vst [vmem:[#allocation2 + $0x60] sm:$0xff] 0.0
      %1219 = vst [vmem:[#allocation2 + $0x68] sm:$0xff] 0.0
      %1220 = vst [vmem:[#allocation2 + $0x70] sm:$0xff] 0.0
      %1221 = vst [vmem:[#allocation2 + $0x78] sm:$0xff] 0.0
      %1222 = vst [vmem:[#allocation2 + $0x80] sm:$0xff] 0.0
      %1223 = vst [vmem:[#allocation2 + $0x88] sm:$0xff] 0.0
      %1224 = vst [vmem:[#allocation2 + $0x90] sm:$0xff] 0.0
      %1225 = vst [vmem:[#allocation2 + $0x98] sm:$0xff] 0.0
      %1226 = vst [vmem:[#allocation2 + $0xa0] sm:$0xff] 0.0
      %1227 = vst [vmem:[#allocation2 + $0xa8] sm:$0xff] 0.0
      %1228 = vst [vmem:[#allocation2 + $0xb0] sm:$0xff] 0.0
      %1229 = vst [vmem:[#allocation2 + $0xb8] sm:$0xff] 0.0
      %1230 = vst [vmem:[#allocation2 + $0xc0] sm:$0xff] 0.0
      %1231 = vst [vmem:[#allocation2 + $0xc8] sm:$0xff] 0.0
      %1232 = vst [vmem:[#allocation2 + $0xd0] sm:$0xff] 0.0
      %1233 = vst [vmem:[#allocation2 + $0xd8] sm:$0xff] 0.0
      %1234 = vst [vmem:[#allocation2 + $0xe0] sm:$0xff] 0.0
      %1235 = vst [vmem:[#allocation2 + $0xe8] sm:$0xff] 0.0
      %1236 = vst [vmem:[#allocation2 + $0xf0] sm:$0xff] 0.0
      %1237 = vst [vmem:[#allocation2 + $0xf8] sm:$0xff] 0.0
      %1238 = vst [vmem:[#allocation2 + $0x100] sm:$0xff] 0.0
      %1239 = vst [vmem:[#allocation2 + $0x108] sm:$0xff] 0.0
      %1240 = vst [vmem:[#allocation2 + $0x110] sm:$0xff] 0.0
      %1241 = vst [vmem:[#allocation2 + $0x118] sm:$0xff] 0.0
      %1242 = vst [vmem:[#allocation2 + $0x120] sm:$0xff] 0.0
      %1243 = vst [vmem:[#allocation2 + $0x128] sm:$0xff] 0.0
      %1244 = vst [vmem:[#allocation2 + $0x18] sm:$0xff] %v693
      %1245 = vst [vmem:[#allocation2 + $0x20] sm:$0xff] %v694
      %1246 = vst [vmem:[#allocation2 + $0x28] sm:$0xff] %v695
      %1247 = vst [vmem:[#allocation2 + $0x30] sm:$0xff] %v696
      %1248 = vst [vmem:[#allocation2 + $0x38] sm:$0xff] %v697
      %1249 = vst [vmem:[#allocation2 + $0x40] sm:$0xff] %v698
      %1250 = vst [vmem:[#allocation2 + $0x48] sm:$0xff] %v699
      %1251 = vst [vmem:[#allocation2 + $0x50] sm:$0xff] %v700
      %1252 = vst [vmem:[#allocation2 + $0x58] sm:$0xff] %v701
      %1253 = vst [vmem:[#allocation2 + $0x60] sm:$0xff] %v702
      %1254 = vst [vmem:[#allocation2 + $0x68] sm:$0xff] %v703
      %1255 = vst [vmem:[#allocation2 + $0x70] sm:$0xff] %v704
      %1256 = vst [vmem:[#allocation2 + $0x78] sm:$0xff] %v705
      %1257 = vst [vmem:[#allocation2 + $0x80] sm:$0xff] %v706
      %1258 = vst [vmem:[#allocation2 + $0x88] sm:$0xff] %v707
      %1259 = vst [vmem:[#allocation2 + $0x90] sm:$0xff] %v708
      %1260 = vst [vmem:[#allocation2 + $0x98] sm:$0xff] %v709
      %1261 = vst [vmem:[#allocation2 + $0xa0] sm:$0xff] %v710
      %1262 = vst [vmem:[#allocation2 + $0xa8] sm:$0xff] %v711
      %1263 = vst [vmem:[#allocation2 + $0xb0] sm:$0xff] %v712
      %1264 = vst [vmem:[#allocation2 + $0xb8] sm:$0xff] %v713
      %1265 = vst [vmem:[#allocation2 + $0xc0] sm:$0xff] %v714
      %1266 = vst [vmem:[#allocation2 + $0xc8] sm:$0xff] %v715
      %1267 = vst [vmem:[#allocation2 + $0xd0] sm:$0xff] %v716
      %1268 = vst [vmem:[#allocation2 + $0xd8] sm:$0xff] %v717
      %1269 = vst [vmem:[#allocation2 + $0xe0] sm:$0xff] %v718
      %1270 = vst [vmem:[#allocation2 + $0xe8] sm:$0xff] %v719
      %1271 = vst [vmem:[#allocation2 + $0xf0] sm:$0xff] %v720
      %1272 = vst [vmem:[#allocation2 + $0xf8] sm:$0xff] %v721
      %1273 = vst [vmem:[#allocation2 + $0x100] sm:$0xff] %v722
      %1274 = vst [vmem:[#allocation2 + $0x108] sm:$0xff] %v723
      %1275 = vst [vmem:[#allocation2 + $0x110] sm:$0xff] %v724
      %v1276 = vld [vmem:[#allocation2 + $0x7] sm:$0xff]
      %v1277 = vld [vmem:[#allocation2 + $0xf] sm:$0xff]
      %v1278 = vld [vmem:[#allocation2 + $0x17] sm:$0xff]
      %v1279 = vld [vmem:[#allocation2 + $0x1f] sm:$0xff]
      %v1280 = vld [vmem:[#allocation2 + $0x27] sm:$0xff]
      %v1281 = vld [vmem:[#allocation2 + $0x2f] sm:$0xff]
      %v1282 = vld [vmem:[#allocation2 + $0x37] sm:$0xff]
      %v1283 = vld [vmem:[#allocation2 + $0x3f] sm:$0xff]
      %v1284 = vld [vmem:[#allocation2 + $0x47] sm:$0xff]
      %v1285 = vld [vmem:[#allocation2 + $0x4f] sm:$0xff]
      %v1286 = vld [vmem:[#allocation2 + $0x57] sm:$0xff]
      %v1287 = vld [vmem:[#allocation2 + $0x5f] sm:$0xff]
      %v1288 = vld [vmem:[#allocation2 + $0x67] sm:$0xff]
      %v1289 = vld [vmem:[#allocation2 + $0x6f] sm:$0xff]
      %v1290 = vld [vmem:[#allocation2 + $0x77] sm:$0xff]
      %v1291 = vld [vmem:[#allocation2 + $0x7f] sm:$0xff]
      %v1292 = vld [vmem:[#allocation2 + $0x87] sm:$0xff]
      %v1293 = vld [vmem:[#allocation2 + $0x8f] sm:$0xff]
      %v1294 = vld [vmem:[#allocation2 + $0x97] sm:$0xff]
      %v1295 = vld [vmem:[#allocation2 + $0x9f] sm:$0xff]
      %v1296 = vld [vmem:[#allocation2 + $0xa7] sm:$0xff]
      %v1297 = vld [vmem:[#allocation2 + $0xaf] sm:$0xff]
      %v1298 = vld [vmem:[#allocation2 + $0xb7] sm:$0xff]
      %v1299 = vld [vmem:[#allocation2 + $0xbf] sm:$0xff]
      %v1300 = vld [vmem:[#allocation2 + $0xc7] sm:$0xff]
      %v1301 = vld [vmem:[#allocation2 + $0xcf] sm:$0xff]
      %v1302 = vld [vmem:[#allocation2 + $0xd7] sm:$0xff]
      %v1303 = vld [vmem:[#allocation2 + $0xdf] sm:$0xff]
      %v1304 = vld [vmem:[#allocation2 + $0xe7] sm:$0xff]
      %v1305 = vld [vmem:[#allocation2 + $0xef] sm:$0xff]
      %v1306 = vld [vmem:[#allocation2 + $0xf7] sm:$0xff]
      %v1307 = vld [vmem:[#allocation2 + $0xff] sm:$0xff]
      %v1308 = vsel %vm1142, 1, 0
      %v1309 = vsel %vm1143, 1, 0
      %v1310 = vsel %vm1144, 1, 0
      %v1311 = vsel %vm1145, 1, 0
      %v1312 = vsel %vm1146, 1, 0
      %v1313 = vsel %vm1147, 1, 0
      %v1314 = vsel %vm1148, 1, 0
      %v1315 = vsel %vm1149, 1, 0
      %v1316 = vsel %vm1150, 1, 0
      %v1317 = vsel %vm1151, 1, 0
      %v1318 = vsel %vm1152, 1, 0
      %v1319 = vsel %vm1153, 1, 0
      %v1320 = vsel %vm1154, 1, 0
      %v1321 = vsel %vm1155, 1, 0
      %v1322 = vsel %vm1156, 1, 0
      %v1323 = vsel %vm1157, 1, 0
      %v1324 = vsel %vm1158, 1, 0
      %v1325 = vsel %vm1159, 1, 0
      %v1326 = vsel %vm1160, 1, 0
      %v1327 = vsel %vm1161, 1, 0
      %v1328 = vsel %vm1162, 1, 0
      %v1329 = vsel %vm1163, 1, 0
      %v1330 = vsel %vm1164, 1, 0
      %v1331 = vsel %vm1165, 1, 0
      %v1332 = vsel %vm1166, 1, 0
      %v1333 = vsel %vm1167, 1, 0
      %v1334 = vsel %vm1168, 1, 0
      %v1335 = vsel %vm1169, 1, 0
      %v1336 = vsel %vm1170, 1, 0
      %v1337 = vsel %vm1171, 1, 0
      %v1338 = vsel %vm1172, 1, 0
      %v1339 = vsel %vm1173, 1, 0
      %vm1340 = vcmp.eq.s32.totalorder %v1308, 1
      %vm1341 = vcmp.eq.s32.totalorder %v1309, 1
      %vm1342 = vcmp.eq.s32.totalorder %v1310, 1
      %vm1343 = vcmp.eq.s32.totalorder %v1311, 1
      %vm1344 = vcmp.eq.s32.totalorder %v1312, 1
      %vm1345 = vcmp.eq.s32.totalorder %v1313, 1
      %vm1346 = vcmp.eq.s32.totalorder %v1314, 1
      %vm1347 = vcmp.eq.s32.totalorder %v1315, 1
      %vm1348 = vcmp.eq.s32.totalorder %v1316, 1
      %vm1349 = vcmp.eq.s32.totalorder %v1317, 1
      %vm1350 = vcmp.eq.s32.totalorder %v1318, 1
      %vm1351 = vcmp.eq.s32.totalorder %v1319, 1
      %vm1352 = vcmp.eq.s32.totalorder %v1320, 1
      %vm1353 = vcmp.eq.s32.totalorder %v1321, 1
      %vm1354 = vcmp.eq.s32.totalorder %v1322, 1
      %vm1355 = vcmp.eq.s32.totalorder %v1323, 1
      %vm1356 = vcmp.eq.s32.totalorder %v1324, 1
      %vm1357 = vcmp.eq.s32.totalorder %v1325, 1
      %vm1358 = vcmp.eq.s32.totalorder %v1326, 1
      %vm1359 = vcmp.eq.s32.totalorder %v1327, 1
      %vm1360 = vcmp.eq.s32.totalorder %v1328, 1
      %vm1361 = vcmp.eq.s32.totalorder %v1329, 1
      %vm1362 = vcmp.eq.s32.totalorder %v1330, 1
      %vm1363 = vcmp.eq.s32.totalorder %v1331, 1
      %vm1364 = vcmp.eq.s32.totalorder %v1332, 1
      %vm1365 = vcmp.eq.s32.totalorder %v1333, 1
      %vm1366 = vcmp.eq.s32.totalorder %v1334, 1
      %vm1367 = vcmp.eq.s32.totalorder %v1335, 1
      %vm1368 = vcmp.eq.s32.totalorder %v1336, 1
      %vm1369 = vcmp.eq.s32.totalorder %v1337, 1
      %vm1370 = vcmp.eq.s32.totalorder %v1338, 1
      %vm1371 = vcmp.eq.s32.totalorder %v1339, 1
      %v1372 = vsel %vm1340, %v1276, 0.0
      %v1373 = vsel %vm1341, %v1277, 0.0
      %v1374 = vsel %vm1342, %v1278, 0.0
      %v1375 = vsel %vm1343, %v1279, 0.0
      %v1376 = vsel %vm1344, %v1280, 0.0
      %v1377 = vsel %vm1345, %v1281, 0.0
      %v1378 = vsel %vm1346, %v1282, 0.0
      %v1379 = vsel %vm1347, %v1283, 0.0
      %v1380 = vsel %vm1348, %v1284, 0.0
      %v1381 = vsel %vm1349, %v1285, 0.0
      %v1382 = vsel %vm1350, %v1286, 0.0
      %v1383 = vsel %vm1351, %v1287, 0.0
      %v1384 = vsel %vm1352, %v1288, 0.0
      %v1385 = vsel %vm1353, %v1289, 0.0
      %v1386 = vsel %vm1354, %v1290, 0.0
      %v1387 = vsel %vm1355, %v1291, 0.0
      %v1388 = vsel %vm1356, %v1292, 0.0
      %v1389 = vsel %vm1357, %v1293, 0.0
      %v1390 = vsel %vm1358, %v1294, 0.0
      %v1391 = vsel %vm1359, %v1295, 0.0
      %v1392 = vsel %vm1360, %v1296, 0.0
      %v1393 = vsel %vm1361, %v1297, 0.0
      %v1394 = vsel %vm1362, %v1298, 0.0
      %v1395 = vsel %vm1363, %v1299, 0.0
      %v1396 = vsel %vm1364, %v1300, 0.0
      %v1397 = vsel %vm1365, %v1301, 0.0
      %v1398 = vsel %vm1366, %v1302, 0.0
      %v1399 = vsel %vm1367, %v1303, 0.0
      %v1400 = vsel %vm1368, %v1304, 0.0
      %v1401 = vsel %vm1369, %v1305, 0.0
      %v1402 = vsel %vm1370, %v1306, 0.0
      %v1403 = vsel %vm1371, %v1307, 0.0
      %v1404 = vpack.c.bf16 %v1373, %v1372
      %v1405 = vpack.c.bf16 %v1375, %v1374
      %v1406 = vpack.c.bf16 %v1377, %v1376
      %v1407 = vpack.c.bf16 %v1379, %v1378
      %v1408 = vpack.c.bf16 %v1381, %v1380
      %v1409 = vpack.c.bf16 %v1383, %v1382
      %v1410 = vpack.c.bf16 %v1385, %v1384
      %v1411 = vpack.c.bf16 %v1387, %v1386
      %v1412 = vpack.c.bf16 %v1389, %v1388
      %v1413 = vpack.c.bf16 %v1391, %v1390
      %v1414 = vpack.c.bf16 %v1393, %v1392
      %v1415 = vpack.c.bf16 %v1395, %v1394
      %v1416 = vpack.c.bf16 %v1397, %v1396
      %v1417 = vpack.c.bf16 %v1399, %v1398
      %v1418 = vpack.c.bf16 %v1401, %v1400
      %v1419 = vpack.c.bf16 %v1403, %v1402
      %v1420 = vld [vmem:[%s3] sm:$0xf]
      %v1421 = vld [vmem:[%s3 + $0x4] sm:$0xf]
      %v1422 = vld [vmem:[%s3 + $0x8] sm:$0xf]
      %v1423 = vld [vmem:[%s3 + $0xc] sm:$0xf]
      %v1424 = vld [vmem:[%s3 + $0x10] sm:$0xf]
      %v1425 = vld [vmem:[%s3 + $0x14] sm:$0xf]
      %v1426 = vld [vmem:[%s3 + $0x18] sm:$0xf]
      %v1427 = vld [vmem:[%s3 + $0x1c] sm:$0xf]
      %v1428 = vld [vmem:[%s3 + $0x20] sm:$0xf]
      %v1429 = vld [vmem:[%s3 + $0x24] sm:$0xf]
      %v1430 = vld [vmem:[%s3 + $0x28] sm:$0xf]
      %v1431 = vld [vmem:[%s3 + $0x2c] sm:$0xf]
      %v1432 = vld [vmem:[%s3 + $0x30] sm:$0xf]
      %v1433 = vld [vmem:[%s3 + $0x34] sm:$0xf]
      %v1434 = vld [vmem:[%s3 + $0x38] sm:$0xf]
      %v1435 = vld [vmem:[%s3 + $0x3c] sm:$0xf]
      %v1436 = vld [vmem:[#allocation2 + $0x8] sm:$0xff]
      %v1437 = vld [vmem:[#allocation2 + $0x10] sm:$0xff]
      %v1438 = vld [vmem:[#allocation2 + $0x18] sm:$0xff]
      %v1439 = vld [vmem:[#allocation2 + $0x20] sm:$0xff]
      %v1440 = vld [vmem:[#allocation2 + $0x28] sm:$0xff]
      %v1441 = vld [vmem:[#allocation2 + $0x30] sm:$0xff]
      %v1442 = vld [vmem:[#allocation2 + $0x38] sm:$0xff]
      %v1443 = vld [vmem:[#allocation2 + $0x40] sm:$0xff]
      %v1444 = vld [vmem:[#allocation2 + $0x48] sm:$0xff]
      %v1445 = vld [vmem:[#allocation2 + $0x50] sm:$0xff]
      %v1446 = vld [vmem:[#allocation2 + $0x58] sm:$0xff]
      %v1447 = vld [vmem:[#allocation2 + $0x60] sm:$0xff]
      %v1448 = vld [vmem:[#allocation2 + $0x68] sm:$0xff]
      %v1449 = vld [vmem:[#allocation2 + $0x70] sm:$0xff]
      %v1450 = vld [vmem:[#allocation2 + $0x78] sm:$0xff]
      %v1451 = vld [vmem:[#allocation2 + $0x80] sm:$0xff]
      %v1452 = vld [vmem:[#allocation2 + $0x88] sm:$0xff]
      %v1453 = vld [vmem:[#allocation2 + $0x90] sm:$0xff]
      %v1454 = vld [vmem:[#allocation2 + $0x98] sm:$0xff]
      %v1455 = vld [vmem:[#allocation2 + $0xa0] sm:$0xff]
      %v1456 = vld [vmem:[#allocation2 + $0xa8] sm:$0xff]
      %v1457 = vld [vmem:[#allocation2 + $0xb0] sm:$0xff]
      %v1458 = vld [vmem:[#allocation2 + $0xb8] sm:$0xff]
      %v1459 = vld [vmem:[#allocation2 + $0xc0] sm:$0xff]
      %v1460 = vld [vmem:[#allocation2 + $0xc8] sm:$0xff]
      %v1461 = vld [vmem:[#allocation2 + $0xd0] sm:$0xff]
      %v1462 = vld [vmem:[#allocation2 + $0xd8] sm:$0xff]
      %v1463 = vld [vmem:[#allocation2 + $0xe0] sm:$0xff]
      %v1464 = vld [vmem:[#allocation2 + $0xe8] sm:$0xff]
      %v1465 = vld [vmem:[#allocation2 + $0xf0] sm:$0xff]
      %v1466 = vld [vmem:[#allocation2 + $0xf8] sm:$0xff]
      %v1467 = vld [vmem:[#allocation2 + $0x100] sm:$0xff]
      %v1468 = vpack.c.bf16 %v1437, %v1436
      %v1469 = vpack.c.bf16 %v1439, %v1438
      %v1470 = vpack.c.bf16 %v1441, %v1440
      %v1471 = vpack.c.bf16 %v1443, %v1442
      %v1472 = vpack.c.bf16 %v1445, %v1444
      %v1473 = vpack.c.bf16 %v1447, %v1446
      %v1474 = vpack.c.bf16 %v1449, %v1448
      %v1475 = vpack.c.bf16 %v1451, %v1450
      %v1476 = vpack.c.bf16 %v1453, %v1452
      %v1477 = vpack.c.bf16 %v1455, %v1454
      %v1478 = vpack.c.bf16 %v1457, %v1456
      %v1479 = vpack.c.bf16 %v1459, %v1458
      %v1480 = vpack.c.bf16 %v1461, %v1460
      %v1481 = vpack.c.bf16 %v1463, %v1462
      %v1482 = vpack.c.bf16 %v1465, %v1464
      %v1483 = vpack.c.bf16 %v1467, %v1466
      %s1484 = scalar_lea.vmem %s3, 64
      %v1485 = vld [vmem:[%s1484] sm:$0xf]
      %v1486 = vld [vmem:[%s1484 + $0x4] sm:$0xf]
      %v1487 = vld [vmem:[%s1484 + $0x8] sm:$0xf]
      %v1488 = vld [vmem:[%s1484 + $0xc] sm:$0xf]
      %v1489 = vld [vmem:[%s1484 + $0x10] sm:$0xf]
      %v1490 = vld [vmem:[%s1484 + $0x14] sm:$0xf]
      %v1491 = vld [vmem:[%s1484 + $0x18] sm:$0xf]
      %v1492 = vld [vmem:[%s1484 + $0x1c] sm:$0xf]
      %v1493 = vld [vmem:[%s1484 + $0x20] sm:$0xf]
      %v1494 = vld [vmem:[%s1484 + $0x24] sm:$0xf]
      %v1495 = vld [vmem:[%s1484 + $0x28] sm:$0xf]
      %v1496 = vld [vmem:[%s1484 + $0x2c] sm:$0xf]
      %v1497 = vld [vmem:[%s1484 + $0x30] sm:$0xf]
      %v1498 = vld [vmem:[%s1484 + $0x34] sm:$0xf]
      %v1499 = vld [vmem:[%s1484 + $0x38] sm:$0xf]
      %v1500 = vld [vmem:[%s1484 + $0x3c] sm:$0xf]
      %v1517 = vunpack.c.l.b16 %v1485
      %v1518 = vunpack.c.l.b16 %v1486
      %v1519 = vunpack.c.l.b16 %v1487
      %v1520 = vunpack.c.l.b16 %v1488
      %v1521 = vunpack.c.l.b16 %v1489
      %v1522 = vunpack.c.l.b16 %v1490
      %v1523 = vunpack.c.l.b16 %v1491
      %v1524 = vunpack.c.l.b16 %v1492
      %v1525 = vunpack.c.l.b16 %v1493
      %v1526 = vunpack.c.l.b16 %v1494
      %v1527 = vunpack.c.l.b16 %v1495
      %v1528 = vunpack.c.l.b16 %v1496
      %v1529 = vunpack.c.l.b16 %v1497
      %v1530 = vunpack.c.l.b16 %v1498
      %v1531 = vunpack.c.l.b16 %v1499
      %v1532 = vunpack.c.l.b16 %v1500
      %v1533 = vpack.c.b16 %v1518, %v1517
      %v1534 = vpack.c.b16 %v1520, %v1519
      %v1535 = vpack.c.b16 %v1522, %v1521
      %v1536 = vpack.c.b16 %v1524, %v1523
      %v1537 = vpack.c.b16 %v1526, %v1525
      %v1538 = vpack.c.b16 %v1528, %v1527
      %v1539 = vpack.c.b16 %v1530, %v1529
      %v1540 = vpack.c.b16 %v1532, %v1531
      %1549 = vmatprep.subr.bf16.mxu0 0
      %1550 = vmatpush1.bf16.msra.mxu0 %v1533
      %1551 = vmatprep.subr.bf16.mxu0 0
      %1552 = vmatpush1.bf16.msra.mxu0 %v1534
      %1553 = vmatprep.subr.bf16.mxu0 0
      %1554 = vmatpush1.bf16.msra.mxu0 %v1535
      %1555 = vmatprep.subr.bf16.mxu0 0
      %1556 = vmatpush1.bf16.msra.mxu0 %v1536
      %1557 = vmatprep.subr.bf16.mxu0 0
      %1558 = vmatpush1.bf16.msra.mxu0 %v1537
      %1559 = vmatprep.subr.bf16.mxu0 0
      %1560 = vmatpush1.bf16.msra.mxu0 %v1538
      %1561 = vmatprep.subr.bf16.mxu0 0
      %1562 = vmatpush1.bf16.msra.mxu0 %v1539
      %1563 = vmatprep.subr.bf16.mxu0 0
      %1564 = vmatpush1.bf16.msra.mxu0 %v1540
      %1565 = vmatprep.subr.bf16.mxu0 0
      %1566 = vmatpush1.bf16.msra.mxu0 0
      %1567 = vmatprep.subr.bf16.mxu0 0
      %1568 = vmatpush1.bf16.msra.mxu0 0
      %1569 = vmatprep.subr.bf16.mxu0 0
      %1570 = vmatpush1.bf16.msra.mxu0 0
      %1571 = vmatprep.subr.bf16.mxu0 0
      %1572 = vmatpush1.bf16.msra.mxu0 0
      %1573 = vmatprep.subr.bf16.mxu0 0
      %1574 = vmatpush1.bf16.msra.mxu0 0
      %1575 = vmatprep.subr.bf16.mxu0 0
      %1576 = vmatpush1.bf16.msra.mxu0 0
      %1577 = vmatprep.subr.bf16.mxu0 0
      %1578 = vmatpush1.bf16.msra.mxu0 0
      %1579 = vmatprep.subr.bf16.mxu0 0
      %1580 = vmatpush1.bf16.msra.mxu0 0
      %1581 = vmatprep.mubr.bf16.mxu0 0
      %1582 = vmatmul.mubr.bf16.gmra.mrb[0].mxu0 %v1468
      %v1583 = vpop.f32.mrb[0].mxu0
      %v1584 = vadd.f32 0.0, %v1583
      %v1585 = vpop.f32.mrb[0].mxu0
      %v1586 = vpop.f32.mrb[0].mxu0
      %v1587 = vadd.f32 0.0, %v1586
      %v1588 = vpop.f32.mrb[0].mxu0
      %1589 = vmatprep.mubr.bf16.mxu0 0
      %1590 = vmatmul.mubr.bf16.gmra.mrb[0].mxu0 %v1469
      %v1591 = vpop.f32.mrb[0].mxu0
      %v1592 = vadd.f32 0.0, %v1591
      %v1593 = vpop.f32.mrb[0].mxu0
      %v1594 = vpop.f32.mrb[0].mxu0
      %v1595 = vadd.f32 0.0, %v1594
      %v1596 = vpop.f32.mrb[0].mxu0
      %1597 = vmatprep.mubr.bf16.mxu0 0
      %1598 = vmatmul.mubr.bf16.gmra.mrb[0].mxu0 %v1470
      %v1599 = vpop.f32.mrb[0].mxu0
      %v1600 = vadd.f32 0.0, %v1599
      %v1601 = vpop.f32.mrb[0].mxu0
      %v1602 = vpop.f32.mrb[0].mxu0
      %v1603 = vadd.f32 0.0, %v1602
      %v1604 = vpop.f32.mrb[0].mxu0
      %1605 = vmatprep.mubr.bf16.mxu0 0
      %1606 = vmatmul.mubr.bf16.gmra.mrb[0].mxu0 %v1471
      %v1607 = vpop.f32.mrb[0].mxu0
      %v1608 = vadd.f32 0.0, %v1607
      %v1609 = vpop.f32.mrb[0].mxu0
      %v1610 = vpop.f32.mrb[0].mxu0
      %v1611 = vadd.f32 0.0, %v1610
      %v1612 = vpop.f32.mrb[0].mxu0
      %1613 = vmatprep.mubr.bf16.mxu0 0
      %1614 = vmatmul.mubr.bf16.gmra.mrb[0].mxu0 %v1472
      %v1615 = vpop.f32.mrb[0].mxu0
      %v1616 = vadd.f32 0.0, %v1615
      %v1617 = vpop.f32.mrb[0].mxu0
      %v1618 = vpop.f32.mrb[0].mxu0
      %v1619 = vadd.f32 0.0, %v1618
      %v1620 = vpop.f32.mrb[0].mxu0
      %1621 = vmatprep.mubr.bf16.mxu0 0
      %1622 = vmatmul.mubr.bf16.gmra.mrb[0].mxu0 %v1473
      %v1623 = vpop.f32.mrb[0].mxu0
      %v1624 = vadd.f32 0.0, %v1623
      %v1625 = vpop.f32.mrb[0].mxu0
      %v1626 = vpop.f32.mrb[0].mxu0
      %v1627 = vadd.f32 0.0, %v1626
      %v1628 = vpop.f32.mrb[0].mxu0
      %1629 = vmatprep.mubr.bf16.mxu0 0
      %1630 = vmatmul.mubr.bf16.gmra.mrb[0].mxu0 %v1474
      %v1631 = vpop.f32.mrb[0].mxu0
      %v1632 = vadd.f32 0.0, %v1631
      %v1633 = vpop.f32.mrb[0].mxu0
      %v1634 = vpop.f32.mrb[0].mxu0
      %v1635 = vadd.f32 0.0, %v1634
      %v1636 = vpop.f32.mrb[0].mxu0
      %1637 = vmatprep.mubr.bf16.mxu0 0
      %1638 = vmatmul.mubr.bf16.gmra.mrb[0].mxu0 %v1475
      %v1639 = vpop.f32.mrb[0].mxu0
      %v1640 = vadd.f32 0.0, %v1639
      %v1641 = vpop.f32.mrb[0].mxu0
      %v1642 = vpop.f32.mrb[0].mxu0
      %v1643 = vadd.f32 0.0, %v1642
      %v1644 = vpop.f32.mrb[0].mxu0
      %1645 = vmatprep.mubr.bf16.mxu0 0
      %1646 = vmatmul.mubr.bf16.gmra.mrb[0].mxu0 %v1476
      %v1647 = vpop.f32.mrb[0].mxu0
      %v1648 = vadd.f32 0.0, %v1647
      %v1649 = vpop.f32.mrb[0].mxu0
      %v1650 = vpop.f32.mrb[0].mxu0
      %v1651 = vadd.f32 0.0, %v1650
      %v1652 = vpop.f32.mrb[0].mxu0
      %1653 = vmatprep.mubr.bf16.mxu0 0
      %1654 = vmatmul.mubr.bf16.gmra.mrb[0].mxu0 %v1477
      %v1655 = vpop.f32.mrb[0].mxu0
      %v1656 = vadd.f32 0.0, %v1655
      %v1657 = vpop.f32.mrb[0].mxu0
      %v1658 = vpop.f32.mrb[0].mxu0
      %v1659 = vadd.f32 0.0, %v1658
      %v1660 = vpop.f32.mrb[0].mxu0
      %1661 = vmatprep.mubr.bf16.mxu0 0
      %1662 = vmatmul.mubr.bf16.gmra.mrb[0].mxu0 %v1478
      %v1663 = vpop.f32.mrb[0].mxu0
      %v1664 = vadd.f32 0.0, %v1663
      %v1665 = vpop.f32.mrb[0].mxu0
      %v1666 = vpop.f32.mrb[0].mxu0
      %v1667 = vadd.f32 0.0, %v1666
      %v1668 = vpop.f32.mrb[0].mxu0
      %1669 = vmatprep.mubr.bf16.mxu0 0
      %1670 = vmatmul.mubr.bf16.gmra.mrb[0].mxu0 %v1479
      %v1671 = vpop.f32.mrb[0].mxu0
      %v1672 = vadd.f32 0.0, %v1671
      %v1673 = vpop.f32.mrb[0].mxu0
      %v1674 = vpop.f32.mrb[0].mxu0
      %v1675 = vadd.f32 0.0, %v1674
      %v1676 = vpop.f32.mrb[0].mxu0
      %1677 = vmatprep.mubr.bf16.mxu0 0
      %1678 = vmatmul.mubr.bf16.gmra.mrb[0].mxu0 %v1480
      %v1679 = vpop.f32.mrb[0].mxu0
      %v1680 = vadd.f32 0.0, %v1679
      %v1681 = vpop.f32.mrb[0].mxu0
      %v1682 = vpop.f32.mrb[0].mxu0
      %v1683 = vadd.f32 0.0, %v1682
      %v1684 = vpop.f32.mrb[0].mxu0
      %1685 = vmatprep.mubr.bf16.mxu0 0
      %1686 = vmatmul.mubr.bf16.gmra.mrb[0].mxu0 %v1481
      %v1687 = vpop.f32.mrb[0].mxu0
      %v1688 = vadd.f32 0.0, %v1687
      %v1689 = vpop.f32.mrb[0].mxu0
      %v1690 = vpop.f32.mrb[0].mxu0
      %v1691 = vadd.f32 0.0, %v1690
      %v1692 = vpop.f32.mrb[0].mxu0
      %1693 = vmatprep.mubr.bf16.mxu0 0
      %1694 = vmatmul.mubr.bf16.gmra.mrb[0].mxu0 %v1482
      %v1695 = vpop.f32.mrb[0].mxu0
      %v1696 = vadd.f32 0.0, %v1695
      %v1697 = vpop.f32.mrb[0].mxu0
      %v1698 = vpop.f32.mrb[0].mxu0
      %v1699 = vadd.f32 0.0, %v1698
      %v1700 = vpop.f32.mrb[0].mxu0
      %1701 = vmatprep.mubr.bf16.mxu0 0
      %1702 = vmatmul.mubr.bf16.gmra.mrb[0].mxu0 %v1483
      %v1703 = vpop.f32.mrb[0].mxu0
      %v1704 = vadd.f32 0.0, %v1703
      %v1705 = vpop.f32.mrb[0].mxu0
      %v1706 = vpop.f32.mrb[0].mxu0
      %v1707 = vadd.f32 0.0, %v1706
      %v1708 = vpop.f32.mrb[0].mxu0
      %1709 = vdwg.mxu0
      %v1726 = vunpack.c.l.b16 %v1420
      %v1727 = vunpack.c.l.b16 %v1421
      %v1728 = vunpack.c.l.b16 %v1422
      %v1729 = vunpack.c.l.b16 %v1423
      %v1730 = vunpack.c.l.b16 %v1424
      %v1731 = vunpack.c.l.b16 %v1425
      %v1732 = vunpack.c.l.b16 %v1426
      %v1733 = vunpack.c.l.b16 %v1427
      %v1734 = vunpack.c.l.b16 %v1428
      %v1735 = vunpack.c.l.b16 %v1429
      %v1736 = vunpack.c.l.b16 %v1430
      %v1737 = vunpack.c.l.b16 %v1431
      %v1738 = vunpack.c.l.b16 %v1432
      %v1739 = vunpack.c.l.b16 %v1433
      %v1740 = vunpack.c.l.b16 %v1434
      %v1741 = vunpack.c.l.b16 %v1435
      %v1742 = vpack.c.b16 %v1727, %v1726
      %v1743 = vpack.c.b16 %v1729, %v1728
      %v1744 = vpack.c.b16 %v1731, %v1730
      %v1745 = vpack.c.b16 %v1733, %v1732
      %v1746 = vpack.c.b16 %v1735, %v1734
      %v1747 = vpack.c.b16 %v1737, %v1736
      %v1748 = vpack.c.b16 %v1739, %v1738
      %v1749 = vpack.c.b16 %v1741, %v1740
      %1758 = vmatprep.subr.bf16.mxu0 0
      %1759 = vmatpush1.bf16.msra.mxu0 %v1742
      %1760 = vmatprep.subr.bf16.mxu0 0
      %1761 = vmatpush1.bf16.msra.mxu0 %v1743
      %1762 = vmatprep.subr.bf16.mxu0 0
      %1763 = vmatpush1.bf16.msra.mxu0 %v1744
      %1764 = vmatprep.subr.bf16.mxu0 0
      %1765 = vmatpush1.bf16.msra.mxu0 %v1745
      %1766 = vmatprep.subr.bf16.mxu0 0
      %1767 = vmatpush1.bf16.msra.mxu0 %v1746
      %1768 = vmatprep.subr.bf16.mxu0 0
      %1769 = vmatpush1.bf16.msra.mxu0 %v1747
      %1770 = vmatprep.subr.bf16.mxu0 0
      %1771 = vmatpush1.bf16.msra.mxu0 %v1748
      %1772 = vmatprep.subr.bf16.mxu0 0
      %1773 = vmatpush1.bf16.msra.mxu0 %v1749
      %1774 = vmatprep.subr.bf16.mxu0 0
      %1775 = vmatpush1.bf16.msra.mxu0 0
      %1776 = vmatprep.subr.bf16.mxu0 0
      %1777 = vmatpush1.bf16.msra.mxu0 0
      %1778 = vmatprep.subr.bf16.mxu0 0
      %1779 = vmatpush1.bf16.msra.mxu0 0
      %1780 = vmatprep.subr.bf16.mxu0 0
      %1781 = vmatpush1.bf16.msra.mxu0 0
      %1782 = vmatprep.subr.bf16.mxu0 0
      %1783 = vmatpush1.bf16.msra.mxu0 0
      %1784 = vmatprep.subr.bf16.mxu0 0
      %1785 = vmatpush1.bf16.msra.mxu0 0
      %1786 = vmatprep.subr.bf16.mxu0 0
      %1787 = vmatpush1.bf16.msra.mxu0 0
      %1788 = vmatprep.subr.bf16.mxu0 0
      %1789 = vmatpush1.bf16.msra.mxu0 0
      %1790 = vmatprep.mubr.bf16.mxu0 0
      %1791 = vmatmul.mubr.bf16.gmra.mrb[0].mxu0 %v1404
      %v1792 = vpop.f32.mrb[0].mxu0
      %v1793 = vadd.f32 %v1584, %v1792
      %v1794 = vpop.f32.mrb[0].mxu0
      %v1795 = vpop.f32.mrb[0].mxu0
      %v1796 = vadd.f32 %v1587, %v1795
      %v1797 = vpop.f32.mrb[0].mxu0
      %1798 = vmatprep.mubr.bf16.mxu0 0
      %1799 = vmatmul.mubr.bf16.gmra.mrb[0].mxu0 %v1405
      %v1800 = vpop.f32.mrb[0].mxu0
      %v1801 = vadd.f32 %v1592, %v1800
      %v1802 = vpop.f32.mrb[0].mxu0
      %v1803 = vpop.f32.mrb[0].mxu0
      %v1804 = vadd.f32 %v1595, %v1803
      %v1805 = vpop.f32.mrb[0].mxu0
      %1806 = vmatprep.mubr.bf16.mxu0 0
      %1807 = vmatmul.mubr.bf16.gmra.mrb[0].mxu0 %v1406
      %v1808 = vpop.f32.mrb[0].mxu0
      %v1809 = vadd.f32 %v1600, %v1808
      %v1810 = vpop.f32.mrb[0].mxu0
      %v1811 = vpop.f32.mrb[0].mxu0
      %v1812 = vadd.f32 %v1603, %v1811
      %v1813 = vpop.f32.mrb[0].mxu0
      %1814 = vmatprep.mubr.bf16.mxu0 0
      %1815 = vmatmul.mubr.bf16.gmra.mrb[0].mxu0 %v1407
      %v1816 = vpop.f32.mrb[0].mxu0
      %v1817 = vadd.f32 %v1608, %v1816
      %v1818 = vpop.f32.mrb[0].mxu0
      %v1819 = vpop.f32.mrb[0].mxu0
      %v1820 = vadd.f32 %v1611, %v1819
      %v1821 = vpop.f32.mrb[0].mxu0
      %1822 = vmatprep.mubr.bf16.mxu0 0
      %1823 = vmatmul.mubr.bf16.gmra.mrb[0].mxu0 %v1408
      %v1824 = vpop.f32.mrb[0].mxu0
      %v1825 = vadd.f32 %v1616, %v1824
      %v1826 = vpop.f32.mrb[0].mxu0
      %v1827 = vpop.f32.mrb[0].mxu0
      %v1828 = vadd.f32 %v1619, %v1827
      %v1829 = vpop.f32.mrb[0].mxu0
      %1830 = vmatprep.mubr.bf16.mxu0 0
      %1831 = vmatmul.mubr.bf16.gmra.mrb[0].mxu0 %v1409
      %v1832 = vpop.f32.mrb[0].mxu0
      %v1833 = vadd.f32 %v1624, %v1832
      %v1834 = vpop.f32.mrb[0].mxu0
      %v1835 = vpop.f32.mrb[0].mxu0
      %v1836 = vadd.f32 %v1627, %v1835
      %v1837 = vpop.f32.mrb[0].mxu0
      %1838 = vmatprep.mubr.bf16.mxu0 0
      %1839 = vmatmul.mubr.bf16.gmra.mrb[0].mxu0 %v1410
      %v1840 = vpop.f32.mrb[0].mxu0
      %v1841 = vadd.f32 %v1632, %v1840
      %v1842 = vpop.f32.mrb[0].mxu0
      %v1843 = vpop.f32.mrb[0].mxu0
      %v1844 = vadd.f32 %v1635, %v1843
      %v1845 = vpop.f32.mrb[0].mxu0
      %1846 = vmatprep.mubr.bf16.mxu0 0
      %1847 = vmatmul.mubr.bf16.gmra.mrb[0].mxu0 %v1411
      %v1848 = vpop.f32.mrb[0].mxu0
      %v1849 = vadd.f32 %v1640, %v1848
      %v1850 = vpop.f32.mrb[0].mxu0
      %v1851 = vpop.f32.mrb[0].mxu0
      %v1852 = vadd.f32 %v1643, %v1851
      %v1853 = vpop.f32.mrb[0].mxu0
      %1854 = vmatprep.mubr.bf16.mxu0 0
      %1855 = vmatmul.mubr.bf16.gmra.mrb[0].mxu0 %v1412
      %v1856 = vpop.f32.mrb[0].mxu0
      %v1857 = vadd.f32 %v1648, %v1856
      %v1858 = vpop.f32.mrb[0].mxu0
      %v1859 = vpop.f32.mrb[0].mxu0
      %v1860 = vadd.f32 %v1651, %v1859
      %v1861 = vpop.f32.mrb[0].mxu0
      %1862 = vmatprep.mubr.bf16.mxu0 0
      %1863 = vmatmul.mubr.bf16.gmra.mrb[0].mxu0 %v1413
      %v1864 = vpop.f32.mrb[0].mxu0
      %v1865 = vadd.f32 %v1656, %v1864
      %v1866 = vpop.f32.mrb[0].mxu0
      %v1867 = vpop.f32.mrb[0].mxu0
      %v1868 = vadd.f32 %v1659, %v1867
      %v1869 = vpop.f32.mrb[0].mxu0
      %1870 = vmatprep.mubr.bf16.mxu0 0
      %1871 = vmatmul.mubr.bf16.gmra.mrb[0].mxu0 %v1414
      %v1872 = vpop.f32.mrb[0].mxu0
      %v1873 = vadd.f32 %v1664, %v1872
      %v1874 = vpop.f32.mrb[0].mxu0
      %v1875 = vpop.f32.mrb[0].mxu0
      %v1876 = vadd.f32 %v1667, %v1875
      %v1877 = vpop.f32.mrb[0].mxu0
      %1878 = vmatprep.mubr.bf16.mxu0 0
      %1879 = vmatmul.mubr.bf16.gmra.mrb[0].mxu0 %v1415
      %v1880 = vpop.f32.mrb[0].mxu0
      %v1881 = vadd.f32 %v1672, %v1880
      %v1882 = vpop.f32.mrb[0].mxu0
      %v1883 = vpop.f32.mrb[0].mxu0
      %v1884 = vadd.f32 %v1675, %v1883
      %v1885 = vpop.f32.mrb[0].mxu0
      %1886 = vmatprep.mubr.bf16.mxu0 0
      %1887 = vmatmul.mubr.bf16.gmra.mrb[0].mxu0 %v1416
      %v1888 = vpop.f32.mrb[0].mxu0
      %v1889 = vadd.f32 %v1680, %v1888
      %v1890 = vpop.f32.mrb[0].mxu0
      %v1891 = vpop.f32.mrb[0].mxu0
      %v1892 = vadd.f32 %v1683, %v1891
      %v1893 = vpop.f32.mrb[0].mxu0
      %1894 = vmatprep.mubr.bf16.mxu0 0
      %1895 = vmatmul.mubr.bf16.gmra.mrb[0].mxu0 %v1417
      %v1896 = vpop.f32.mrb[0].mxu0
      %v1897 = vadd.f32 %v1688, %v1896
      %v1898 = vpop.f32.mrb[0].mxu0
      %v1899 = vpop.f32.mrb[0].mxu0
      %v1900 = vadd.f32 %v1691, %v1899
      %v1901 = vpop.f32.mrb[0].mxu0
      %1902 = vmatprep.mubr.bf16.mxu0 0
      %1903 = vmatmul.mubr.bf16.gmra.mrb[0].mxu0 %v1418
      %v1904 = vpop.f32.mrb[0].mxu0
      %v1905 = vadd.f32 %v1696, %v1904
      %v1906 = vpop.f32.mrb[0].mxu0
      %v1907 = vpop.f32.mrb[0].mxu0
      %v1908 = vadd.f32 %v1699, %v1907
      %v1909 = vpop.f32.mrb[0].mxu0
      %1910 = vmatprep.mubr.bf16.mxu0 0
      %1911 = vmatmul.mubr.bf16.gmra.mrb[0].mxu0 %v1419
      %v1912 = vpop.f32.mrb[0].mxu0
      %v1913 = vadd.f32 %v1704, %v1912
      %v1914 = vpop.f32.mrb[0].mxu0
      %v1915 = vpop.f32.mrb[0].mxu0
      %v1916 = vadd.f32 %v1707, %v1915
      %v1917 = vpop.f32.mrb[0].mxu0
      %1918 = vdwg.mxu0
      %v1919 = vld [vmem:[#allocation2 + $0x9] sm:$0xff]
      %v1920 = vld [vmem:[#allocation2 + $0x11] sm:$0xff]
      %v1921 = vld [vmem:[#allocation2 + $0x19] sm:$0xff]
      %v1922 = vld [vmem:[#allocation2 + $0x21] sm:$0xff]
      %v1923 = vld [vmem:[#allocation2 + $0x29] sm:$0xff]
      %v1924 = vld [vmem:[#allocation2 + $0x31] sm:$0xff]
      %v1925 = vld [vmem:[#allocation2 + $0x39] sm:$0xff]
      %v1926 = vld [vmem:[#allocation2 + $0x41] sm:$0xff]
      %v1927 = vld [vmem:[#allocation2 + $0x49] sm:$0xff]
      %v1928 = vld [vmem:[#allocation2 + $0x51] sm:$0xff]
      %v1929 = vld [vmem:[#allocation2 + $0x59] sm:$0xff]
      %v1930 = vld [vmem:[#allocation2 + $0x61] sm:$0xff]
      %v1931 = vld [vmem:[#allocation2 + $0x69] sm:$0xff]
      %v1932 = vld [vmem:[#allocation2 + $0x71] sm:$0xff]
      %v1933 = vld [vmem:[#allocation2 + $0x79] sm:$0xff]
      %v1934 = vld [vmem:[#allocation2 + $0x81] sm:$0xff]
      %v1935 = vld [vmem:[#allocation2 + $0x89] sm:$0xff]
      %v1936 = vld [vmem:[#allocation2 + $0x91] sm:$0xff]
      %v1937 = vld [vmem:[#allocation2 + $0x99] sm:$0xff]
      %v1938 = vld [vmem:[#allocation2 + $0xa1] sm:$0xff]
      %v1939 = vld [vmem:[#allocation2 + $0xa9] sm:$0xff]
      %v1940 = vld [vmem:[#allocation2 + $0xb1] sm:$0xff]
      %v1941 = vld [vmem:[#allocation2 + $0xb9] sm:$0xff]
      %v1942 = vld [vmem:[#allocation2 + $0xc1] sm:$0xff]
      %v1943 = vld [vmem:[#allocation2 + $0xc9] sm:$0xff]
      %v1944 = vld [vmem:[#allocation2 + $0xd1] sm:$0xff]
      %v1945 = vld [vmem:[#allocation2 + $0xd9] sm:$0xff]
      %v1946 = vld [vmem:[#allocation2 + $0xe1] sm:$0xff]
      %v1947 = vld [vmem:[#allocation2 + $0xe9] sm:$0xff]
      %v1948 = vld [vmem:[#allocation2 + $0xf1] sm:$0xff]
      %v1949 = vld [vmem:[#allocation2 + $0xf9] sm:$0xff]
      %v1950 = vld [vmem:[#allocation2 + $0x101] sm:$0xff]
      %v1951 = vsel %vm1174, 1, 0
      %v1952 = vsel %vm1175, 1, 0
      %v1953 = vsel %vm1176, 1, 0
      %v1954 = vsel %vm1177, 1, 0
      %v1955 = vsel %vm1178, 1, 0
      %v1956 = vsel %vm1179, 1, 0
      %v1957 = vsel %vm1180, 1, 0
      %v1958 = vsel %vm1181, 1, 0
      %v1959 = vsel %vm1182, 1, 0
      %v1960 = vsel %vm1183, 1, 0
      %v1961 = vsel %vm1184, 1, 0
      %v1962 = vsel %vm1185, 1, 0
      %v1963 = vsel %vm1186, 1, 0
      %v1964 = vsel %vm1187, 1, 0
      %v1965 = vsel %vm1188, 1, 0
      %v1966 = vsel %vm1189, 1, 0
      %v1967 = vsel %vm1190, 1, 0
      %v1968 = vsel %vm1191, 1, 0
      %v1969 = vsel %vm1192, 1, 0
      %v1970 = vsel %vm1193, 1, 0
      %v1971 = vsel %vm1194, 1, 0
      %v1972 = vsel %vm1195, 1, 0
      %v1973 = vsel %vm1196, 1, 0
      %v1974 = vsel %vm1197, 1, 0
      %v1975 = vsel %vm1198, 1, 0
      %v1976 = vsel %vm1199, 1, 0
      %v1977 = vsel %vm1200, 1, 0
      %v1978 = vsel %vm1201, 1, 0
      %v1979 = vsel %vm1202, 1, 0
      %v1980 = vsel %vm1203, 1, 0
      %v1981 = vsel %vm1204, 1, 0
      %v1982 = vsel %vm1205, 1, 0
      %vm1983 = vcmp.eq.s32.totalorder %v1951, 1
      %vm1984 = vcmp.eq.s32.totalorder %v1952, 1
      %vm1985 = vcmp.eq.s32.totalorder %v1953, 1
      %vm1986 = vcmp.eq.s32.totalorder %v1954, 1
      %vm1987 = vcmp.eq.s32.totalorder %v1955, 1
      %vm1988 = vcmp.eq.s32.totalorder %v1956, 1
      %vm1989 = vcmp.eq.s32.totalorder %v1957, 1
      %vm1990 = vcmp.eq.s32.totalorder %v1958, 1
      %vm1991 = vcmp.eq.s32.totalorder %v1959, 1
      %vm1992 = vcmp.eq.s32.totalorder %v1960, 1
      %vm1993 = vcmp.eq.s32.totalorder %v1961, 1
      %vm1994 = vcmp.eq.s32.totalorder %v1962, 1
      %vm1995 = vcmp.eq.s32.totalorder %v1963, 1
      %vm1996 = vcmp.eq.s32.totalorder %v1964, 1
      %vm1997 = vcmp.eq.s32.totalorder %v1965, 1
      %vm1998 = vcmp.eq.s32.totalorder %v1966, 1
      %vm1999 = vcmp.eq.s32.totalorder %v1967, 1
      %vm2000 = vcmp.eq.s32.totalorder %v1968, 1
      %vm2001 = vcmp.eq.s32.totalorder %v1969, 1
      %vm2002 = vcmp.eq.s32.totalorder %v1970, 1
      %vm2003 = vcmp.eq.s32.totalorder %v1971, 1
      %vm2004 = vcmp.eq.s32.totalorder %v1972, 1
      %vm2005 = vcmp.eq.s32.totalorder %v1973, 1
      %vm2006 = vcmp.eq.s32.totalorder %v1974, 1
      %vm2007 = vcmp.eq.s32.totalorder %v1975, 1
      %vm2008 = vcmp.eq.s32.totalorder %v1976, 1
      %vm2009 = vcmp.eq.s32.totalorder %v1977, 1
      %vm2010 = vcmp.eq.s32.totalorder %v1978, 1
      %vm2011 = vcmp.eq.s32.totalorder %v1979, 1
      %vm2012 = vcmp.eq.s32.totalorder %v1980, 1
      %vm2013 = vcmp.eq.s32.totalorder %v1981, 1
      %vm2014 = vcmp.eq.s32.totalorder %v1982, 1
      %v2015 = vsel %vm1983, %v1919, 0.0
      %v2016 = vsel %vm1984, %v1920, 0.0
      %v2017 = vsel %vm1985, %v1921, 0.0
      %v2018 = vsel %vm1986, %v1922, 0.0
      %v2019 = vsel %vm1987, %v1923, 0.0
      %v2020 = vsel %vm1988, %v1924, 0.0
      %v2021 = vsel %vm1989, %v1925, 0.0
      %v2022 = vsel %vm1990, %v1926, 0.0
      %v2023 = vsel %vm1991, %v1927, 0.0
      %v2024 = vsel %vm1992, %v1928, 0.0
      %v2025 = vsel %vm1993, %v1929, 0.0
      %v2026 = vsel %vm1994, %v1930, 0.0
      %v2027 = vsel %vm1995, %v1931, 0.0
      %v2028 = vsel %vm1996, %v1932, 0.0
      %v2029 = vsel %vm1997, %v1933, 0.0
      %v2030 = vsel %vm1998, %v1934, 0.0
      %v2031 = vsel %vm1999, %v1935, 0.0
      %v2032 = vsel %vm2000, %v1936, 0.0
      %v2033 = vsel %vm2001, %v1937, 0.0
      %v2034 = vsel %vm2002, %v1938, 0.0
      %v2035 = vsel %vm2003, %v1939, 0.0
      %v2036 = vsel %vm2004, %v1940, 0.0
      %v2037 = vsel %vm2005, %v1941, 0.0
      %v2038 = vsel %vm2006, %v1942, 0.0
      %v2039 = vsel %vm2007, %v1943, 0.0
      %v2040 = vsel %vm2008, %v1944, 0.0
      %v2041 = vsel %vm2009, %v1945, 0.0
      %v2042 = vsel %vm2010, %v1946, 0.0
      %v2043 = vsel %vm2011, %v1947, 0.0
      %v2044 = vsel %vm2012, %v1948, 0.0
      %v2045 = vsel %vm2013, %v1949, 0.0
      %v2046 = vsel %vm2014, %v1950, 0.0
      %v2047 = vpack.c.bf16 %v2016, %v2015
      %v2048 = vpack.c.bf16 %v2018, %v2017
      %v2049 = vpack.c.bf16 %v2020, %v2019
      %v2050 = vpack.c.bf16 %v2022, %v2021
      %v2051 = vpack.c.bf16 %v2024, %v2023
      %v2052 = vpack.c.bf16 %v2026, %v2025
      %v2053 = vpack.c.bf16 %v2028, %v2027
      %v2054 = vpack.c.bf16 %v2030, %v2029
      %v2055 = vpack.c.bf16 %v2032, %v2031
      %v2056 = vpack.c.bf16 %v2034, %v2033
      %v2057 = vpack.c.bf16 %v2036, %v2035
      %v2058 = vpack.c.bf16 %v2038, %v2037
      %v2059 = vpack.c.bf16 %v2040, %v2039
      %v2060 = vpack.c.bf16 %v2042, %v2041
      %v2061 = vpack.c.bf16 %v2044, %v2043
      %v2062 = vpack.c.bf16 %v2046, %v2045
      %s2063 = scalar_lea.vmem %s3, 128
      %v2064 = vld [vmem:[%s2063] sm:$0xf]
      %v2065 = vld [vmem:[%s2063 + $0x4] sm:$0xf]
      %v2066 = vld [vmem:[%s2063 + $0x8] sm:$0xf]
      %v2067 = vld [vmem:[%s2063 + $0xc] sm:$0xf]
      %v2068 = vld [vmem:[%s2063 + $0x10] sm:$0xf]
      %v2069 = vld [vmem:[%s2063 + $0x14] sm:$0xf]
      %v2070 = vld [vmem:[%s2063 + $0x18] sm:$0xf]
      %v2071 = vld [vmem:[%s2063 + $0x1c] sm:$0xf]
      %v2072 = vld [vmem:[%s2063 + $0x20] sm:$0xf]
      %v2073 = vld [vmem:[%s2063 + $0x24] sm:$0xf]
      %v2074 = vld [vmem:[%s2063 + $0x28] sm:$0xf]
      %v2075 = vld [vmem:[%s2063 + $0x2c] sm:$0xf]
      %v2076 = vld [vmem:[%s2063 + $0x30] sm:$0xf]
      %v2077 = vld [vmem:[%s2063 + $0x34] sm:$0xf]
      %v2078 = vld [vmem:[%s2063 + $0x38] sm:$0xf]
      %v2079 = vld [vmem:[%s2063 + $0x3c] sm:$0xf]
      %v2096 = vunpack.c.l.b16 %v2064
      %v2097 = vunpack.c.l.b16 %v2065
      %v2098 = vunpack.c.l.b16 %v2066
      %v2099 = vunpack.c.l.b16 %v2067
      %v2100 = vunpack.c.l.b16 %v2068
      %v2101 = vunpack.c.l.b16 %v2069
      %v2102 = vunpack.c.l.b16 %v2070
      %v2103 = vunpack.c.l.b16 %v2071
      %v2104 = vunpack.c.l.b16 %v2072
      %v2105 = vunpack.c.l.b16 %v2073
      %v2106 = vunpack.c.l.b16 %v2074
      %v2107 = vunpack.c.l.b16 %v2075
      %v2108 = vunpack.c.l.b16 %v2076
      %v2109 = vunpack.c.l.b16 %v2077
      %v2110 = vunpack.c.l.b16 %v2078
      %v2111 = vunpack.c.l.b16 %v2079
      %v2112 = vpack.c.b16 %v2097, %v2096
      %v2113 = vpack.c.b16 %v2099, %v2098
      %v2114 = vpack.c.b16 %v2101, %v2100
      %v2115 = vpack.c.b16 %v2103, %v2102
      %v2116 = vpack.c.b16 %v2105, %v2104
      %v2117 = vpack.c.b16 %v2107, %v2106
      %v2118 = vpack.c.b16 %v2109, %v2108
      %v2119 = vpack.c.b16 %v2111, %v2110
      %2128 = vmatprep.subr.bf16.mxu0 0
      %2129 = vmatpush1.bf16.msra.mxu0 %v2112
      %2130 = vmatprep.subr.bf16.mxu0 0
      %2131 = vmatpush1.bf16.msra.mxu0 %v2113
      %2132 = vmatprep.subr.bf16.mxu0 0
      %2133 = vmatpush1.bf16.msra.mxu0 %v2114
      %2134 = vmatprep.subr.bf16.mxu0 0
      %2135 = vmatpush1.bf16.msra.mxu0 %v2115
      %2136 = vmatprep.subr.bf16.mxu0 0
      %2137 = vmatpush1.bf16.msra.mxu0 %v2116
      %2138 = vmatprep.subr.bf16.mxu0 0
      %2139 = vmatpush1.bf16.msra.mxu0 %v2117
      %2140 = vmatprep.subr.bf16.mxu0 0
      %2141 = vmatpush1.bf16.msra.mxu0 %v2118
      %2142 = vmatprep.subr.bf16.mxu0 0
      %2143 = vmatpush1.bf16.msra.mxu0 %v2119
      %2144 = vmatprep.subr.bf16.mxu0 0
      %2145 = vmatpush1.bf16.msra.mxu0 0
      %2146 = vmatprep.subr.bf16.mxu0 0
      %2147 = vmatpush1.bf16.msra.mxu0 0
      %2148 = vmatprep.subr.bf16.mxu0 0
      %2149 = vmatpush1.bf16.msra.mxu0 0
      %2150 = vmatprep.subr.bf16.mxu0 0
      %2151 = vmatpush1.bf16.msra.mxu0 0
      %2152 = vmatprep.subr.bf16.mxu0 0
      %2153 = vmatpush1.bf16.msra.mxu0 0
      %2154 = vmatprep.subr.bf16.mxu0 0
      %2155 = vmatpush1.bf16.msra.mxu0 0
      %2156 = vmatprep.subr.bf16.mxu0 0
      %2157 = vmatpush1.bf16.msra.mxu0 0
      %2158 = vmatprep.subr.bf16.mxu0 0
      %2159 = vmatpush1.bf16.msra.mxu0 0
      %2160 = vmatprep.mubr.bf16.mxu0 0
      %2161 = vmatmul.mubr.bf16.gmra.mrb[0].mxu0 %v2047
      %v2162 = vpop.f32.mrb[0].mxu0
      %v2163 = vadd.f32 0.0, %v2162
      %v2164 = vpop.f32.mrb[0].mxu0
      %v2165 = vpop.f32.mrb[0].mxu0
      %v2166 = vadd.f32 0.0, %v2165
      %v2167 = vpop.f32.mrb[0].mxu0
      %2168 = vmatprep.mubr.bf16.mxu0 0
      %2169 = vmatmul.mubr.bf16.gmra.mrb[0].mxu0 %v2048
      %v2170 = vpop.f32.mrb[0].mxu0
      %v2171 = vadd.f32 0.0, %v2170
      %v2172 = vpop.f32.mrb[0].mxu0
      %v2173 = vpop.f32.mrb[0].mxu0
      %v2174 = vadd.f32 0.0, %v2173
      %v2175 = vpop.f32.mrb[0].mxu0
      %2176 = vmatprep.mubr.bf16.mxu0 0
      %2177 = vmatmul.mubr.bf16.gmra.mrb[0].mxu0 %v2049
      %v2178 = vpop.f32.mrb[0].mxu0
      %v2179 = vadd.f32 0.0, %v2178
      %v2180 = vpop.f32.mrb[0].mxu0
      %v2181 = vpop.f32.mrb[0].mxu0
      %v2182 = vadd.f32 0.0, %v2181
      %v2183 = vpop.f32.mrb[0].mxu0
      %2184 = vmatprep.mubr.bf16.mxu0 0
      %2185 = vmatmul.mubr.bf16.gmra.mrb[0].mxu0 %v2050
      %v2186 = vpop.f32.mrb[0].mxu0
      %v2187 = vadd.f32 0.0, %v2186
      %v2188 = vpop.f32.mrb[0].mxu0
      %v2189 = vpop.f32.mrb[0].mxu0
      %v2190 = vadd.f32 0.0, %v2189
      %v2191 = vpop.f32.mrb[0].mxu0
      %2192 = vmatprep.mubr.bf16.mxu0 0
      %2193 = vmatmul.mubr.bf16.gmra.mrb[0].mxu0 %v2051
      %v2194 = vpop.f32.mrb[0].mxu0
      %v2195 = vadd.f32 0.0, %v2194
      %v2196 = vpop.f32.mrb[0].mxu0
      %v2197 = vpop.f32.mrb[0].mxu0
      %v2198 = vadd.f32 0.0, %v2197
      %v2199 = vpop.f32.mrb[0].mxu0
      %2200 = vmatprep.mubr.bf16.mxu0 0
      %2201 = vmatmul.mubr.bf16.gmra.mrb[0].mxu0 %v2052
      %v2202 = vpop.f32.mrb[0].mxu0
      %v2203 = vadd.f32 0.0, %v2202
      %v2204 = vpop.f32.mrb[0].mxu0
      %v2205 = vpop.f32.mrb[0].mxu0
      %v2206 = vadd.f32 0.0, %v2205
      %v2207 = vpop.f32.mrb[0].mxu0
      %2208 = vmatprep.mubr.bf16.mxu0 0
      %2209 = vmatmul.mubr.bf16.gmra.mrb[0].mxu0 %v2053
      %v2210 = vpop.f32.mrb[0].mxu0
      %v2211 = vadd.f32 0.0, %v2210
      %v2212 = vpop.f32.mrb[0].mxu0
      %v2213 = vpop.f32.mrb[0].mxu0
      %v2214 = vadd.f32 0.0, %v2213
      %v2215 = vpop.f32.mrb[0].mxu0
      %2216 = vmatprep.mubr.bf16.mxu0 0
      %2217 = vmatmul.mubr.bf16.gmra.mrb[0].mxu0 %v2054
      %v2218 = vpop.f32.mrb[0].mxu0
      %v2219 = vadd.f32 0.0, %v2218
      %v2220 = vpop.f32.mrb[0].mxu0
      %v2221 = vpop.f32.mrb[0].mxu0
      %v2222 = vadd.f32 0.0, %v2221
      %v2223 = vpop.f32.mrb[0].mxu0
      %2224 = vmatprep.mubr.bf16.mxu0 0
      %2225 = vmatmul.mubr.bf16.gmra.mrb[0].mxu0 %v2055
      %v2226 = vpop.f32.mrb[0].mxu0
      %v2227 = vadd.f32 0.0, %v2226
      %v2228 = vpop.f32.mrb[0].mxu0
      %v2229 = vpop.f32.mrb[0].mxu0
      %v2230 = vadd.f32 0.0, %v2229
      %v2231 = vpop.f32.mrb[0].mxu0
      %2232 = vmatprep.mubr.bf16.mxu0 0
      %2233 = vmatmul.mubr.bf16.gmra.mrb[0].mxu0 %v2056
      %v2234 = vpop.f32.mrb[0].mxu0
      %v2235 = vadd.f32 0.0, %v2234
      %v2236 = vpop.f32.mrb[0].mxu0
      %v2237 = vpop.f32.mrb[0].mxu0
      %v2238 = vadd.f32 0.0, %v2237
      %v2239 = vpop.f32.mrb[0].mxu0
      %2240 = vmatprep.mubr.bf16.mxu0 0
      %2241 = vmatmul.mubr.bf16.gmra.mrb[0].mxu0 %v2057
      %v2242 = vpop.f32.mrb[0].mxu0
      %v2243 = vadd.f32 0.0, %v2242
      %v2244 = vpop.f32.mrb[0].mxu0
      %v2245 = vpop.f32.mrb[0].mxu0
      %v2246 = vadd.f32 0.0, %v2245
      %v2247 = vpop.f32.mrb[0].mxu0
      %2248 = vmatprep.mubr.bf16.mxu0 0
      %2249 = vmatmul.mubr.bf16.gmra.mrb[0].mxu0 %v2058
      %v2250 = vpop.f32.mrb[0].mxu0
      %v2251 = vadd.f32 0.0, %v2250
      %v2252 = vpop.f32.mrb[0].mxu0
      %v2253 = vpop.f32.mrb[0].mxu0
      %v2254 = vadd.f32 0.0, %v2253
      %v2255 = vpop.f32.mrb[0].mxu0
      %2256 = vmatprep.mubr.bf16.mxu0 0
      %2257 = vmatmul.mubr.bf16.gmra.mrb[0].mxu0 %v2059
      %v2258 = vpop.f32.mrb[0].mxu0
      %v2259 = vadd.f32 0.0, %v2258
      %v2260 = vpop.f32.mrb[0].mxu0
      %v2261 = vpop.f32.mrb[0].mxu0
      %v2262 = vadd.f32 0.0, %v2261
      %v2263 = vpop.f32.mrb[0].mxu0
      %2264 = vmatprep.mubr.bf16.mxu0 0
      %2265 = vmatmul.mubr.bf16.gmra.mrb[0].mxu0 %v2060
      %v2266 = vpop.f32.mrb[0].mxu0
      %v2267 = vadd.f32 0.0, %v2266
      %v2268 = vpop.f32.mrb[0].mxu0
      %v2269 = vpop.f32.mrb[0].mxu0
      %v2270 = vadd.f32 0.0, %v2269
      %v2271 = vpop.f32.mrb[0].mxu0
      %2272 = vmatprep.mubr.bf16.mxu0 0
      %2273 = vmatmul.mubr.bf16.gmra.mrb[0].mxu0 %v2061
      %v2274 = vpop.f32.mrb[0].mxu0
      %v2275 = vadd.f32 0.0, %v2274
      %v2276 = vpop.f32.mrb[0].mxu0
      %v2277 = vpop.f32.mrb[0].mxu0
      %v2278 = vadd.f32 0.0, %v2277
      %v2279 = vpop.f32.mrb[0].mxu0
      %2280 = vmatprep.mubr.bf16.mxu0 0
      %2281 = vmatmul.mubr.bf16.gmra.mrb[0].mxu0 %v2062
      %v2282 = vpop.f32.mrb[0].mxu0
      %v2283 = vadd.f32 0.0, %v2282
      %v2284 = vpop.f32.mrb[0].mxu0
      %v2285 = vpop.f32.mrb[0].mxu0
      %v2286 = vadd.f32 0.0, %v2285
      %v2287 = vpop.f32.mrb[0].mxu0
      %2288 = vdwg.mxu0
      %v2289 = vadd.f32 %v1793, %v2163
      %v2290 = vadd.f32 %v1796, %v2166
      %v2291 = vadd.f32 %v1801, %v2171
      %v2292 = vadd.f32 %v1804, %v2174
      %v2293 = vadd.f32 %v1809, %v2179
      %v2294 = vadd.f32 %v1812, %v2182
      %v2295 = vadd.f32 %v1817, %v2187
      %v2296 = vadd.f32 %v1820, %v2190
      %v2297 = vadd.f32 %v1825, %v2195
      %v2298 = vadd.f32 %v1828, %v2198
      %v2299 = vadd.f32 %v1833, %v2203
      %v2300 = vadd.f32 %v1836, %v2206
      %v2301 = vadd.f32 %v1841, %v2211
      %v2302 = vadd.f32 %v1844, %v2214
      %v2303 = vadd.f32 %v1849, %v2219
      %v2304 = vadd.f32 %v1852, %v2222
      %v2305 = vadd.f32 %v1857, %v2227
      %v2306 = vadd.f32 %v1860, %v2230
      %v2307 = vadd.f32 %v1865, %v2235
      %v2308 = vadd.f32 %v1868, %v2238
      %v2309 = vadd.f32 %v1873, %v2243
      %v2310 = vadd.f32 %v1876, %v2246
      %v2311 = vadd.f32 %v1881, %v2251
      %v2312 = vadd.f32 %v1884, %v2254
      %v2313 = vadd.f32 %v1889, %v2259
      %v2314 = vadd.f32 %v1892, %v2262
      %v2315 = vadd.f32 %v1897, %v2267
      %v2316 = vadd.f32 %v1900, %v2270
      %v2317 = vadd.f32 %v1905, %v2275
      %v2318 = vadd.f32 %v1908, %v2278
      %v2319 = vadd.f32 %v1913, %v2283
      %v2320 = vadd.f32 %v1916, %v2286
      %v2321 = vld [vmem:[#allocation2 + $0x17] sm:$0xff]
      %v2322 = vld [vmem:[#allocation2 + $0x1f] sm:$0xff]
      %v2323 = vld [vmem:[#allocation2 + $0x27] sm:$0xff]
      %v2324 = vld [vmem:[#allocation2 + $0x2f] sm:$0xff]
      %v2325 = vld [vmem:[#allocation2 + $0x37] sm:$0xff]
      %v2326 = vld [vmem:[#allocation2 + $0x3f] sm:$0xff]
      %v2327 = vld [vmem:[#allocation2 + $0x47] sm:$0xff]
      %v2328 = vld [vmem:[#allocation2 + $0x4f] sm:$0xff]
      %v2329 = vld [vmem:[#allocation2 + $0x57] sm:$0xff]
      %v2330 = vld [vmem:[#allocation2 + $0x5f] sm:$0xff]
      %v2331 = vld [vmem:[#allocation2 + $0x67] sm:$0xff]
      %v2332 = vld [vmem:[#allocation2 + $0x6f] sm:$0xff]
      %v2333 = vld [vmem:[#allocation2 + $0x77] sm:$0xff]
      %v2334 = vld [vmem:[#allocation2 + $0x7f] sm:$0xff]
      %v2335 = vld [vmem:[#allocation2 + $0x87] sm:$0xff]
      %v2336 = vld [vmem:[#allocation2 + $0x8f] sm:$0xff]
      %v2337 = vld [vmem:[#allocation2 + $0x97] sm:$0xff]
      %v2338 = vld [vmem:[#allocation2 + $0x9f] sm:$0xff]
      %v2339 = vld [vmem:[#allocation2 + $0xa7] sm:$0xff]
      %v2340 = vld [vmem:[#allocation2 + $0xaf] sm:$0xff]
      %v2341 = vld [vmem:[#allocation2 + $0xb7] sm:$0xff]
      %v2342 = vld [vmem:[#allocation2 + $0xbf] sm:$0xff]
      %v2343 = vld [vmem:[#allocation2 + $0xc7] sm:$0xff]
      %v2344 = vld [vmem:[#allocation2 + $0xcf] sm:$0xff]
      %v2345 = vld [vmem:[#allocation2 + $0xd7] sm:$0xff]
      %v2346 = vld [vmem:[#allocation2 + $0xdf] sm:$0xff]
      %v2347 = vld [vmem:[#allocation2 + $0xe7] sm:$0xff]
      %v2348 = vld [vmem:[#allocation2 + $0xef] sm:$0xff]
      %v2349 = vld [vmem:[#allocation2 + $0xf7] sm:$0xff]
      %v2350 = vld [vmem:[#allocation2 + $0xff] sm:$0xff]
      %v2351 = vld [vmem:[#allocation2 + $0x107] sm:$0xff]
      %v2352 = vld [vmem:[#allocation2 + $0x10f] sm:$0xff]
      %v2353 = vsel %vm1340, %v2321, 0.0
      %v2354 = vsel %vm1341, %v2322, 0.0
      %v2355 = vsel %vm1342, %v2323, 0.0
      %v2356 = vsel %vm1343, %v2324, 0.0
      %v2357 = vsel %vm1344, %v2325, 0.0
      %v2358 = vsel %vm1345, %v2326, 0.0
      %v2359 = vsel %vm1346, %v2327, 0.0
      %v2360 = vsel %vm1347, %v2328, 0.0
      %v2361 = vsel %vm1348, %v2329, 0.0
      %v2362 = vsel %vm1349, %v2330, 0.0
      %v2363 = vsel %vm1350, %v2331, 0.0
      %v2364 = vsel %vm1351, %v2332, 0.0
      %v2365 = vsel %vm1352, %v2333, 0.0
      %v2366 = vsel %vm1353, %v2334, 0.0
      %v2367 = vsel %vm1354, %v2335, 0.0
      %v2368 = vsel %vm1355, %v2336, 0.0
      %v2369 = vsel %vm1356, %v2337, 0.0
      %v2370 = vsel %vm1357, %v2338, 0.0
      %v2371 = vsel %vm1358, %v2339, 0.0
      %v2372 = vsel %vm1359, %v2340, 0.0
      %v2373 = vsel %vm1360, %v2341, 0.0
      %v2374 = vsel %vm1361, %v2342, 0.0
      %v2375 = vsel %vm1362, %v2343, 0.0
      %v2376 = vsel %vm1363, %v2344, 0.0
      %v2377 = vsel %vm1364, %v2345, 0.0
      %v2378 = vsel %vm1365, %v2346, 0.0
      %v2379 = vsel %vm1366, %v2347, 0.0
      %v2380 = vsel %vm1367, %v2348, 0.0
      %v2381 = vsel %vm1368, %v2349, 0.0
      %v2382 = vsel %vm1369, %v2350, 0.0
      %v2383 = vsel %vm1370, %v2351, 0.0
      %v2384 = vsel %vm1371, %v2352, 0.0
      %v2385 = vpack.c.bf16 %v2354, %v2353
      %v2386 = vpack.c.bf16 %v2356, %v2355
      %v2387 = vpack.c.bf16 %v2358, %v2357
      %v2388 = vpack.c.bf16 %v2360, %v2359
      %v2389 = vpack.c.bf16 %v2362, %v2361
      %v2390 = vpack.c.bf16 %v2364, %v2363
      %v2391 = vpack.c.bf16 %v2366, %v2365
      %v2392 = vpack.c.bf16 %v2368, %v2367
      %v2393 = vpack.c.bf16 %v2370, %v2369
      %v2394 = vpack.c.bf16 %v2372, %v2371
      %v2395 = vpack.c.bf16 %v2374, %v2373
      %v2396 = vpack.c.bf16 %v2376, %v2375
      %v2397 = vpack.c.bf16 %v2378, %v2377
      %v2398 = vpack.c.bf16 %v2380, %v2379
      %v2399 = vpack.c.bf16 %v2382, %v2381
      %v2400 = vpack.c.bf16 %v2384, %v2383
      %s2401 = scalar_lea.vmem %s3, 192
      %v2402 = vld [vmem:[%s2401] sm:$0xf]
      %v2403 = vld [vmem:[%s2401 + $0x4] sm:$0xf]
      %v2404 = vld [vmem:[%s2401 + $0x8] sm:$0xf]
      %v2405 = vld [vmem:[%s2401 + $0xc] sm:$0xf]
      %v2406 = vld [vmem:[%s2401 + $0x10] sm:$0xf]
      %v2407 = vld [vmem:[%s2401 + $0x14] sm:$0xf]
      %v2408 = vld [vmem:[%s2401 + $0x18] sm:$0xf]
      %v2409 = vld [vmem:[%s2401 + $0x1c] sm:$0xf]
      %v2410 = vld [vmem:[%s2401 + $0x20] sm:$0xf]
      %v2411 = vld [vmem:[%s2401 + $0x24] sm:$0xf]
      %v2412 = vld [vmem:[%s2401 + $0x28] sm:$0xf]
      %v2413 = vld [vmem:[%s2401 + $0x2c] sm:$0xf]
      %v2414 = vld [vmem:[%s2401 + $0x30] sm:$0xf]
      %v2415 = vld [vmem:[%s2401 + $0x34] sm:$0xf]
      %v2416 = vld [vmem:[%s2401 + $0x38] sm:$0xf]
      %v2417 = vld [vmem:[%s2401 + $0x3c] sm:$0xf]
      %v2434 = vunpack.c.l.b16 %v2402
      %v2435 = vunpack.c.l.b16 %v2403
      %v2436 = vunpack.c.l.b16 %v2404
      %v2437 = vunpack.c.l.b16 %v2405
      %v2438 = vunpack.c.l.b16 %v2406
      %v2439 = vunpack.c.l.b16 %v2407
      %v2440 = vunpack.c.l.b16 %v2408
      %v2441 = vunpack.c.l.b16 %v2409
      %v2442 = vunpack.c.l.b16 %v2410
      %v2443 = vunpack.c.l.b16 %v2411
      %v2444 = vunpack.c.l.b16 %v2412
      %v2445 = vunpack.c.l.b16 %v2413
      %v2446 = vunpack.c.l.b16 %v2414
      %v2447 = vunpack.c.l.b16 %v2415
      %v2448 = vunpack.c.l.b16 %v2416
      %v2449 = vunpack.c.l.b16 %v2417
      %v2450 = vpack.c.b16 %v2435, %v2434
      %v2451 = vpack.c.b16 %v2437, %v2436
      %v2452 = vpack.c.b16 %v2439, %v2438
      %v2453 = vpack.c.b16 %v2441, %v2440
      %v2454 = vpack.c.b16 %v2443, %v2442
      %v2455 = vpack.c.b16 %v2445, %v2444
      %v2456 = vpack.c.b16 %v2447, %v2446
      %v2457 = vpack.c.b16 %v2449, %v2448
      %2466 = vmatprep.subr.bf16.mxu0 0
      %2467 = vmatpush1.bf16.msra.mxu0 %v2450
      %2468 = vmatprep.subr.bf16.mxu0 0
      %2469 = vmatpush1.bf16.msra.mxu0 %v2451
      %2470 = vmatprep.subr.bf16.mxu0 0
      %2471 = vmatpush1.bf16.msra.mxu0 %v2452
      %2472 = vmatprep.subr.bf16.mxu0 0
      %2473 = vmatpush1.bf16.msra.mxu0 %v2453
      %2474 = vmatprep.subr.bf16.mxu0 0
      %2475 = vmatpush1.bf16.msra.mxu0 %v2454
      %2476 = vmatprep.subr.bf16.mxu0 0
      %2477 = vmatpush1.bf16.msra.mxu0 %v2455
      %2478 = vmatprep.subr.bf16.mxu0 0
      %2479 = vmatpush1.bf16.msra.mxu0 %v2456
      %2480 = vmatprep.subr.bf16.mxu0 0
      %2481 = vmatpush1.bf16.msra.mxu0 %v2457
      %2482 = vmatprep.subr.bf16.mxu0 0
      %2483 = vmatpush1.bf16.msra.mxu0 0
      %2484 = vmatprep.subr.bf16.mxu0 0
      %2485 = vmatpush1.bf16.msra.mxu0 0
      %2486 = vmatprep.subr.bf16.mxu0 0
      %2487 = vmatpush1.bf16.msra.mxu0 0
      %2488 = vmatprep.subr.bf16.mxu0 0
      %2489 = vmatpush1.bf16.msra.mxu0 0
      %2490 = vmatprep.subr.bf16.mxu0 0
      %2491 = vmatpush1.bf16.msra.mxu0 0
      %2492 = vmatprep.subr.bf16.mxu0 0
      %2493 = vmatpush1.bf16.msra.mxu0 0
      %2494 = vmatprep.subr.bf16.mxu0 0
      %2495 = vmatpush1.bf16.msra.mxu0 0
      %2496 = vmatprep.subr.bf16.mxu0 0
      %2497 = vmatpush1.bf16.msra.mxu0 0
      %2498 = vmatprep.mubr.bf16.mxu0 0
      %2499 = vmatmul.mubr.bf16.gmra.mrb[0].mxu0 %v2385
      %v2500 = vpop.f32.mrb[0].mxu0
      %v2501 = vadd.f32 0.0, %v2500
      %v2502 = vpop.f32.mrb[0].mxu0
      %v2503 = vpop.f32.mrb[0].mxu0
      %v2504 = vadd.f32 0.0, %v2503
      %v2505 = vpop.f32.mrb[0].mxu0
      %2506 = vmatprep.mubr.bf16.mxu0 0
      %2507 = vmatmul.mubr.bf16.gmra.mrb[0].mxu0 %v2386
      %v2508 = vpop.f32.mrb[0].mxu0
      %v2509 = vadd.f32 0.0, %v2508
      %v2510 = vpop.f32.mrb[0].mxu0
      %v2511 = vpop.f32.mrb[0].mxu0
      %v2512 = vadd.f32 0.0, %v2511
      %v2513 = vpop.f32.mrb[0].mxu0
      %2514 = vmatprep.mubr.bf16.mxu0 0
      %2515 = vmatmul.mubr.bf16.gmra.mrb[0].mxu0 %v2387
      %v2516 = vpop.f32.mrb[0].mxu0
      %v2517 = vadd.f32 0.0, %v2516
      %v2518 = vpop.f32.mrb[0].mxu0
      %v2519 = vpop.f32.mrb[0].mxu0
      %v2520 = vadd.f32 0.0, %v2519
      %v2521 = vpop.f32.mrb[0].mxu0
      %2522 = vmatprep.mubr.bf16.mxu0 0
      %2523 = vmatmul.mubr.bf16.gmra.mrb[0].mxu0 %v2388
      %v2524 = vpop.f32.mrb[0].mxu0
      %v2525 = vadd.f32 0.0, %v2524
      %v2526 = vpop.f32.mrb[0].mxu0
      %v2527 = vpop.f32.mrb[0].mxu0
      %v2528 = vadd.f32 0.0, %v2527
      %v2529 = vpop.f32.mrb[0].mxu0
      %2530 = vmatprep.mubr.bf16.mxu0 0
      %2531 = vmatmul.mubr.bf16.gmra.mrb[0].mxu0 %v2389
      %v2532 = vpop.f32.mrb[0].mxu0
      %v2533 = vadd.f32 0.0, %v2532
      %v2534 = vpop.f32.mrb[0].mxu0
      %v2535 = vpop.f32.mrb[0].mxu0
      %v2536 = vadd.f32 0.0, %v2535
      %v2537 = vpop.f32.mrb[0].mxu0
      %2538 = vmatprep.mubr.bf16.mxu0 0
      %2539 = vmatmul.mubr.bf16.gmra.mrb[0].mxu0 %v2390
      %v2540 = vpop.f32.mrb[0].mxu0
      %v2541 = vadd.f32 0.0, %v2540
      %v2542 = vpop.f32.mrb[0].mxu0
      %v2543 = vpop.f32.mrb[0].mxu0
      %v2544 = vadd.f32 0.0, %v2543
      %v2545 = vpop.f32.mrb[0].mxu0
      %2546 = vmatprep.mubr.bf16.mxu0 0
      %2547 = vmatmul.mubr.bf16.gmra.mrb[0].mxu0 %v2391
      %v2548 = vpop.f32.mrb[0].mxu0
      %v2549 = vadd.f32 0.0, %v2548
      %v2550 = vpop.f32.mrb[0].mxu0
      %v2551 = vpop.f32.mrb[0].mxu0
      %v2552 = vadd.f32 0.0, %v2551
      %v2553 = vpop.f32.mrb[0].mxu0
      %2554 = vmatprep.mubr.bf16.mxu0 0
      %2555 = vmatmul.mubr.bf16.gmra.mrb[0].mxu0 %v2392
      %v2556 = vpop.f32.mrb[0].mxu0
      %v2557 = vadd.f32 0.0, %v2556
      %v2558 = vpop.f32.mrb[0].mxu0
      %v2559 = vpop.f32.mrb[0].mxu0
      %v2560 = vadd.f32 0.0, %v2559
      %v2561 = vpop.f32.mrb[0].mxu0
      %2562 = vmatprep.mubr.bf16.mxu0 0
      %2563 = vmatmul.mubr.bf16.gmra.mrb[0].mxu0 %v2393
      %v2564 = vpop.f32.mrb[0].mxu0
      %v2565 = vadd.f32 0.0, %v2564
      %v2566 = vpop.f32.mrb[0].mxu0
      %v2567 = vpop.f32.mrb[0].mxu0
      %v2568 = vadd.f32 0.0, %v2567
      %v2569 = vpop.f32.mrb[0].mxu0
      %2570 = vmatprep.mubr.bf16.mxu0 0
      %2571 = vmatmul.mubr.bf16.gmra.mrb[0].mxu0 %v2394
      %v2572 = vpop.f32.mrb[0].mxu0
      %v2573 = vadd.f32 0.0, %v2572
      %v2574 = vpop.f32.mrb[0].mxu0
      %v2575 = vpop.f32.mrb[0].mxu0
      %v2576 = vadd.f32 0.0, %v2575
      %v2577 = vpop.f32.mrb[0].mxu0
      %2578 = vmatprep.mubr.bf16.mxu0 0
      %2579 = vmatmul.mubr.bf16.gmra.mrb[0].mxu0 %v2395
      %v2580 = vpop.f32.mrb[0].mxu0
      %v2581 = vadd.f32 0.0, %v2580
      %v2582 = vpop.f32.mrb[0].mxu0
      %v2583 = vpop.f32.mrb[0].mxu0
      %v2584 = vadd.f32 0.0, %v2583
      %v2585 = vpop.f32.mrb[0].mxu0
      %2586 = vmatprep.mubr.bf16.mxu0 0
      %2587 = vmatmul.mubr.bf16.gmra.mrb[0].mxu0 %v2396
      %v2588 = vpop.f32.mrb[0].mxu0
      %v2589 = vadd.f32 0.0, %v2588
      %v2590 = vpop.f32.mrb[0].mxu0
      %v2591 = vpop.f32.mrb[0].mxu0
      %v2592 = vadd.f32 0.0, %v2591
      %v2593 = vpop.f32.mrb[0].mxu0
      %2594 = vmatprep.mubr.bf16.mxu0 0
      %2595 = vmatmul.mubr.bf16.gmra.mrb[0].mxu0 %v2397
      %v2596 = vpop.f32.mrb[0].mxu0
      %v2597 = vadd.f32 0.0, %v2596
      %v2598 = vpop.f32.mrb[0].mxu0
      %v2599 = vpop.f32.mrb[0].mxu0
      %v2600 = vadd.f32 0.0, %v2599
      %v2601 = vpop.f32.mrb[0].mxu0
      %2602 = vmatprep.mubr.bf16.mxu0 0
      %2603 = vmatmul.mubr.bf16.gmra.mrb[0].mxu0 %v2398
      %v2604 = vpop.f32.mrb[0].mxu0
      %v2605 = vadd.f32 0.0, %v2604
      %v2606 = vpop.f32.mrb[0].mxu0
      %v2607 = vpop.f32.mrb[0].mxu0
      %v2608 = vadd.f32 0.0, %v2607
      %v2609 = vpop.f32.mrb[0].mxu0
      %2610 = vmatprep.mubr.bf16.mxu0 0
      %2611 = vmatmul.mubr.bf16.gmra.mrb[0].mxu0 %v2399
      %v2612 = vpop.f32.mrb[0].mxu0
      %v2613 = vadd.f32 0.0, %v2612
      %v2614 = vpop.f32.mrb[0].mxu0
      %v2615 = vpop.f32.mrb[0].mxu0
      %v2616 = vadd.f32 0.0, %v2615
      %v2617 = vpop.f32.mrb[0].mxu0
      %2618 = vmatprep.mubr.bf16.mxu0 0
      %2619 = vmatmul.mubr.bf16.gmra.mrb[0].mxu0 %v2400
      %v2620 = vpop.f32.mrb[0].mxu0
      %v2621 = vadd.f32 0.0, %v2620
      %v2622 = vpop.f32.mrb[0].mxu0
      %v2623 = vpop.f32.mrb[0].mxu0
      %v2624 = vadd.f32 0.0, %v2623
      %v2625 = vpop.f32.mrb[0].mxu0
      %2626 = vdwg.mxu0
      %v2627 = vadd.f32 %v2289, %v2501
      %v2628 = vadd.f32 %v2290, %v2504
      %v2629 = vadd.f32 %v2291, %v2509
      %v2630 = vadd.f32 %v2292, %v2512
      %v2631 = vadd.f32 %v2293, %v2517
      %v2632 = vadd.f32 %v2294, %v2520
      %v2633 = vadd.f32 %v2295, %v2525
      %v2634 = vadd.f32 %v2296, %v2528
      %v2635 = vadd.f32 %v2297, %v2533
      %v2636 = vadd.f32 %v2298, %v2536
      %v2637 = vadd.f32 %v2299, %v2541
      %v2638 = vadd.f32 %v2300, %v2544
      %v2639 = vadd.f32 %v2301, %v2549
      %v2640 = vadd.f32 %v2302, %v2552
      %v2641 = vadd.f32 %v2303, %v2557
      %v2642 = vadd.f32 %v2304, %v2560
      %v2643 = vadd.f32 %v2305, %v2565
      %v2644 = vadd.f32 %v2306, %v2568
      %v2645 = vadd.f32 %v2307, %v2573
      %v2646 = vadd.f32 %v2308, %v2576
      %v2647 = vadd.f32 %v2309, %v2581
      %v2648 = vadd.f32 %v2310, %v2584
      %v2649 = vadd.f32 %v2311, %v2589
      %v2650 = vadd.f32 %v2312, %v2592
      %v2651 = vadd.f32 %v2313, %v2597
      %v2652 = vadd.f32 %v2314, %v2600
      %v2653 = vadd.f32 %v2315, %v2605
      %v2654 = vadd.f32 %v2316, %v2608
      %v2655 = vadd.f32 %v2317, %v2613
      %v2656 = vadd.f32 %v2318, %v2616
      %v2657 = vadd.f32 %v2319, %v2621
      %v2658 = vadd.f32 %v2320, %v2624
      %v2659 = vld [vmem:[#allocation2 + $0x18] sm:$0xff]
      %v2660 = vld [vmem:[#allocation2 + $0x20] sm:$0xff]
      %v2661 = vld [vmem:[#allocation2 + $0x28] sm:$0xff]
      %v2662 = vld [vmem:[#allocation2 + $0x30] sm:$0xff]
      %v2663 = vld [vmem:[#allocation2 + $0x38] sm:$0xff]
      %v2664 = vld [vmem:[#allocation2 + $0x40] sm:$0xff]
      %v2665 = vld [vmem:[#allocation2 + $0x48] sm:$0xff]
      %v2666 = vld [vmem:[#allocation2 + $0x50] sm:$0xff]
      %v2667 = vld [vmem:[#allocation2 + $0x58] sm:$0xff]
      %v2668 = vld [vmem:[#allocation2 + $0x60] sm:$0xff]
      %v2669 = vld [vmem:[#allocation2 + $0x68] sm:$0xff]
      %v2670 = vld [vmem:[#allocation2 + $0x70] sm:$0xff]
      %v2671 = vld [vmem:[#allocation2 + $0x78] sm:$0xff]
      %v2672 = vld [vmem:[#allocation2 + $0x80] sm:$0xff]
      %v2673 = vld [vmem:[#allocation2 + $0x88] sm:$0xff]
      %v2674 = vld [vmem:[#allocation2 + $0x90] sm:$0xff]
      %v2675 = vld [vmem:[#allocation2 + $0x98] sm:$0xff]
      %v2676 = vld [vmem:[#allocation2 + $0xa0] sm:$0xff]
      %v2677 = vld [vmem:[#allocation2 + $0xa8] sm:$0xff]
      %v2678 = vld [vmem:[#allocation2 + $0xb0] sm:$0xff]
      %v2679 = vld [vmem:[#allocation2 + $0xb8] sm:$0xff]
      %v2680 = vld [vmem:[#allocation2 + $0xc0] sm:$0xff]
      %v2681 = vld [vmem:[#allocation2 + $0xc8] sm:$0xff]
      %v2682 = vld [vmem:[#allocation2 + $0xd0] sm:$0xff]
      %v2683 = vld [vmem:[#allocation2 + $0xd8] sm:$0xff]
      %v2684 = vld [vmem:[#allocation2 + $0xe0] sm:$0xff]
      %v2685 = vld [vmem:[#allocation2 + $0xe8] sm:$0xff]
      %v2686 = vld [vmem:[#allocation2 + $0xf0] sm:$0xff]
      %v2687 = vld [vmem:[#allocation2 + $0xf8] sm:$0xff]
      %v2688 = vld [vmem:[#allocation2 + $0x100] sm:$0xff]
      %v2689 = vld [vmem:[#allocation2 + $0x108] sm:$0xff]
      %v2690 = vld [vmem:[#allocation2 + $0x110] sm:$0xff]
      %v2691 = vpack.c.bf16 %v2660, %v2659
      %v2692 = vpack.c.bf16 %v2662, %v2661
      %v2693 = vpack.c.bf16 %v2664, %v2663
      %v2694 = vpack.c.bf16 %v2666, %v2665
      %v2695 = vpack.c.bf16 %v2668, %v2667
      %v2696 = vpack.c.bf16 %v2670, %v2669
      %v2697 = vpack.c.bf16 %v2672, %v2671
      %v2698 = vpack.c.bf16 %v2674, %v2673
      %v2699 = vpack.c.bf16 %v2676, %v2675
      %v2700 = vpack.c.bf16 %v2678, %v2677
      %v2701 = vpack.c.bf16 %v2680, %v2679
      %v2702 = vpack.c.bf16 %v2682, %v2681
      %v2703 = vpack.c.bf16 %v2684, %v2683
      %v2704 = vpack.c.bf16 %v2686, %v2685
      %v2705 = vpack.c.bf16 %v2688, %v2687
      %v2706 = vpack.c.bf16 %v2690, %v2689
      %s2707 = scalar_lea.vmem %s3, 256
      %v2708 = vld [vmem:[%s2707] sm:$0xf]
      %v2709 = vld [vmem:[%s2707 + $0x4] sm:$0xf]
      %v2710 = vld [vmem:[%s2707 + $0x8] sm:$0xf]
      %v2711 = vld [vmem:[%s2707 + $0xc] sm:$0xf]
      %v2712 = vld [vmem:[%s2707 + $0x10] sm:$0xf]
      %v2713 = vld [vmem:[%s2707 + $0x14] sm:$0xf]
      %v2714 = vld [vmem:[%s2707 + $0x18] sm:$0xf]
      %v2715 = vld [vmem:[%s2707 + $0x1c] sm:$0xf]
      %v2716 = vld [vmem:[%s2707 + $0x20] sm:$0xf]
      %v2717 = vld [vmem:[%s2707 + $0x24] sm:$0xf]
      %v2718 = vld [vmem:[%s2707 + $0x28] sm:$0xf]
      %v2719 = vld [vmem:[%s2707 + $0x2c] sm:$0xf]
      %v2720 = vld [vmem:[%s2707 + $0x30] sm:$0xf]
      %v2721 = vld [vmem:[%s2707 + $0x34] sm:$0xf]
      %v2722 = vld [vmem:[%s2707 + $0x38] sm:$0xf]
      %v2723 = vld [vmem:[%s2707 + $0x3c] sm:$0xf]
      %v2740 = vunpack.c.l.b16 %v2708
      %v2741 = vunpack.c.l.b16 %v2709
      %v2742 = vunpack.c.l.b16 %v2710
      %v2743 = vunpack.c.l.b16 %v2711
      %v2744 = vunpack.c.l.b16 %v2712
      %v2745 = vunpack.c.l.b16 %v2713
      %v2746 = vunpack.c.l.b16 %v2714
      %v2747 = vunpack.c.l.b16 %v2715
      %v2748 = vunpack.c.l.b16 %v2716
      %v2749 = vunpack.c.l.b16 %v2717
      %v2750 = vunpack.c.l.b16 %v2718
      %v2751 = vunpack.c.l.b16 %v2719
      %v2752 = vunpack.c.l.b16 %v2720
      %v2753 = vunpack.c.l.b16 %v2721
      %v2754 = vunpack.c.l.b16 %v2722
      %v2755 = vunpack.c.l.b16 %v2723
      %v2756 = vpack.c.b16 %v2741, %v2740
      %v2757 = vpack.c.b16 %v2743, %v2742
      %v2758 = vpack.c.b16 %v2745, %v2744
      %v2759 = vpack.c.b16 %v2747, %v2746
      %v2760 = vpack.c.b16 %v2749, %v2748
      %v2761 = vpack.c.b16 %v2751, %v2750
      %v2762 = vpack.c.b16 %v2753, %v2752
      %v2763 = vpack.c.b16 %v2755, %v2754
      %2772 = vmatprep.subr.bf16.mxu0 0
      %2773 = vmatpush1.bf16.msra.mxu0 %v2756
      %2774 = vmatprep.subr.bf16.mxu0 0
      %2775 = vmatpush1.bf16.msra.mxu0 %v2757
      %2776 = vmatprep.subr.bf16.mxu0 0
      %2777 = vmatpush1.bf16.msra.mxu0 %v2758
      %2778 = vmatprep.subr.bf16.mxu0 0
      %2779 = vmatpush1.bf16.msra.mxu0 %v2759
      %2780 = vmatprep.subr.bf16.mxu0 0
      %2781 = vmatpush1.bf16.msra.mxu0 %v2760
      %2782 = vmatprep.subr.bf16.mxu0 0
      %2783 = vmatpush1.bf16.msra.mxu0 %v2761
      %2784 = vmatprep.subr.bf16.mxu0 0
      %2785 = vmatpush1.bf16.msra.mxu0 %v2762
      %2786 = vmatprep.subr.bf16.mxu0 0
      %2787 = vmatpush1.bf16.msra.mxu0 %v2763
      %2788 = vmatprep.subr.bf16.mxu0 0
      %2789 = vmatpush1.bf16.msra.mxu0 0
      %2790 = vmatprep.subr.bf16.mxu0 0
      %2791 = vmatpush1.bf16.msra.mxu0 0
      %2792 = vmatprep.subr.bf16.mxu0 0
      %2793 = vmatpush1.bf16.msra.mxu0 0
      %2794 = vmatprep.subr.bf16.mxu0 0
      %2795 = vmatpush1.bf16.msra.mxu0 0
      %2796 = vmatprep.subr.bf16.mxu0 0
      %2797 = vmatpush1.bf16.msra.mxu0 0
      %2798 = vmatprep.subr.bf16.mxu0 0
      %2799 = vmatpush1.bf16.msra.mxu0 0
      %2800 = vmatprep.subr.bf16.mxu0 0
      %2801 = vmatpush1.bf16.msra.mxu0 0
      %2802 = vmatprep.subr.bf16.mxu0 0
      %2803 = vmatpush1.bf16.msra.mxu0 0
      %2804 = vmatprep.mubr.bf16.mxu0 0
      %2805 = vmatmul.mubr.bf16.gmra.mrb[0].mxu0 %v2691
      %v2806 = vpop.f32.mrb[0].mxu0
      %v2807 = vadd.f32 0.0, %v2806
      %v2808 = vpop.f32.mrb[0].mxu0
      %v2809 = vpop.f32.mrb[0].mxu0
      %v2810 = vadd.f32 0.0, %v2809
      %v2811 = vpop.f32.mrb[0].mxu0
      %2812 = vmatprep.mubr.bf16.mxu0 0
      %2813 = vmatmul.mubr.bf16.gmra.mrb[0].mxu0 %v2692
      %v2814 = vpop.f32.mrb[0].mxu0
      %v2815 = vadd.f32 0.0, %v2814
      %v2816 = vpop.f32.mrb[0].mxu0
      %v2817 = vpop.f32.mrb[0].mxu0
      %v2818 = vadd.f32 0.0, %v2817
      %v2819 = vpop.f32.mrb[0].mxu0
      %2820 = vmatprep.mubr.bf16.mxu0 0
      %2821 = vmatmul.mubr.bf16.gmra.mrb[0].mxu0 %v2693
      %v2822 = vpop.f32.mrb[0].mxu0
      %v2823 = vadd.f32 0.0, %v2822
      %v2824 = vpop.f32.mrb[0].mxu0
      %v2825 = vpop.f32.mrb[0].mxu0
      %v2826 = vadd.f32 0.0, %v2825
      %v2827 = vpop.f32.mrb[0].mxu0
      %2828 = vmatprep.mubr.bf16.mxu0 0
      %2829 = vmatmul.mubr.bf16.gmra.mrb[0].mxu0 %v2694
      %v2830 = vpop.f32.mrb[0].mxu0
      %v2831 = vadd.f32 0.0, %v2830
      %v2832 = vpop.f32.mrb[0].mxu0
      %v2833 = vpop.f32.mrb[0].mxu0
      %v2834 = vadd.f32 0.0, %v2833
      %v2835 = vpop.f32.mrb[0].mxu0
      %2836 = vmatprep.mubr.bf16.mxu0 0
      %2837 = vmatmul.mubr.bf16.gmra.mrb[0].mxu0 %v2695
      %v2838 = vpop.f32.mrb[0].mxu0
      %v2839 = vadd.f32 0.0, %v2838
      %v2840 = vpop.f32.mrb[0].mxu0
      %v2841 = vpop.f32.mrb[0].mxu0
      %v2842 = vadd.f32 0.0, %v2841
      %v2843 = vpop.f32.mrb[0].mxu0
      %2844 = vmatprep.mubr.bf16.mxu0 0
      %2845 = vmatmul.mubr.bf16.gmra.mrb[0].mxu0 %v2696
      %v2846 = vpop.f32.mrb[0].mxu0
      %v2847 = vadd.f32 0.0, %v2846
      %v2848 = vpop.f32.mrb[0].mxu0
      %v2849 = vpop.f32.mrb[0].mxu0
      %v2850 = vadd.f32 0.0, %v2849
      %v2851 = vpop.f32.mrb[0].mxu0
      %2852 = vmatprep.mubr.bf16.mxu0 0
      %2853 = vmatmul.mubr.bf16.gmra.mrb[0].mxu0 %v2697
      %v2854 = vpop.f32.mrb[0].mxu0
      %v2855 = vadd.f32 0.0, %v2854
      %v2856 = vpop.f32.mrb[0].mxu0
      %v2857 = vpop.f32.mrb[0].mxu0
      %v2858 = vadd.f32 0.0, %v2857
      %v2859 = vpop.f32.mrb[0].mxu0
      %2860 = vmatprep.mubr.bf16.mxu0 0
      %2861 = vmatmul.mubr.bf16.gmra.mrb[0].mxu0 %v2698
      %v2862 = vpop.f32.mrb[0].mxu0
      %v2863 = vadd.f32 0.0, %v2862
      %v2864 = vpop.f32.mrb[0].mxu0
      %v2865 = vpop.f32.mrb[0].mxu0
      %v2866 = vadd.f32 0.0, %v2865
      %v2867 = vpop.f32.mrb[0].mxu0
      %2868 = vmatprep.mubr.bf16.mxu0 0
      %2869 = vmatmul.mubr.bf16.gmra.mrb[0].mxu0 %v2699
      %v2870 = vpop.f32.mrb[0].mxu0
      %v2871 = vadd.f32 0.0, %v2870
      %v2872 = vpop.f32.mrb[0].mxu0
      %v2873 = vpop.f32.mrb[0].mxu0
      %v2874 = vadd.f32 0.0, %v2873
      %v2875 = vpop.f32.mrb[0].mxu0
      %2876 = vmatprep.mubr.bf16.mxu0 0
      %2877 = vmatmul.mubr.bf16.gmra.mrb[0].mxu0 %v2700
      %v2878 = vpop.f32.mrb[0].mxu0
      %v2879 = vadd.f32 0.0, %v2878
      %v2880 = vpop.f32.mrb[0].mxu0
      %v2881 = vpop.f32.mrb[0].mxu0
      %v2882 = vadd.f32 0.0, %v2881
      %v2883 = vpop.f32.mrb[0].mxu0
      %2884 = vmatprep.mubr.bf16.mxu0 0
      %2885 = vmatmul.mubr.bf16.gmra.mrb[0].mxu0 %v2701
      %v2886 = vpop.f32.mrb[0].mxu0
      %v2887 = vadd.f32 0.0, %v2886
      %v2888 = vpop.f32.mrb[0].mxu0
      %v2889 = vpop.f32.mrb[0].mxu0
      %v2890 = vadd.f32 0.0, %v2889
      %v2891 = vpop.f32.mrb[0].mxu0
      %2892 = vmatprep.mubr.bf16.mxu0 0
      %2893 = vmatmul.mubr.bf16.gmra.mrb[0].mxu0 %v2702
      %v2894 = vpop.f32.mrb[0].mxu0
      %v2895 = vadd.f32 0.0, %v2894
      %v2896 = vpop.f32.mrb[0].mxu0
      %v2897 = vpop.f32.mrb[0].mxu0
      %v2898 = vadd.f32 0.0, %v2897
      %v2899 = vpop.f32.mrb[0].mxu0
      %2900 = vmatprep.mubr.bf16.mxu0 0
      %2901 = vmatmul.mubr.bf16.gmra.mrb[0].mxu0 %v2703
      %v2902 = vpop.f32.mrb[0].mxu0
      %v2903 = vadd.f32 0.0, %v2902
      %v2904 = vpop.f32.mrb[0].mxu0
      %v2905 = vpop.f32.mrb[0].mxu0
      %v2906 = vadd.f32 0.0, %v2905
      %v2907 = vpop.f32.mrb[0].mxu0
      %2908 = vmatprep.mubr.bf16.mxu0 0
      %2909 = vmatmul.mubr.bf16.gmra.mrb[0].mxu0 %v2704
      %v2910 = vpop.f32.mrb[0].mxu0
      %v2911 = vadd.f32 0.0, %v2910
      %v2912 = vpop.f32.mrb[0].mxu0
      %v2913 = vpop.f32.mrb[0].mxu0
      %v2914 = vadd.f32 0.0, %v2913
      %v2915 = vpop.f32.mrb[0].mxu0
      %2916 = vmatprep.mubr.bf16.mxu0 0
      %2917 = vmatmul.mubr.bf16.gmra.mrb[0].mxu0 %v2705
      %v2918 = vpop.f32.mrb[0].mxu0
      %v2919 = vadd.f32 0.0, %v2918
      %v2920 = vpop.f32.mrb[0].mxu0
      %v2921 = vpop.f32.mrb[0].mxu0
      %v2922 = vadd.f32 0.0, %v2921
      %v2923 = vpop.f32.mrb[0].mxu0
      %2924 = vmatprep.mubr.bf16.mxu0 0
      %2925 = vmatmul.mubr.bf16.gmra.mrb[0].mxu0 %v2706
      %v2926 = vpop.f32.mrb[0].mxu0
      %v2927 = vadd.f32 0.0, %v2926
      %v2928 = vpop.f32.mrb[0].mxu0
      %v2929 = vpop.f32.mrb[0].mxu0
      %v2930 = vadd.f32 0.0, %v2929
      %v2931 = vpop.f32.mrb[0].mxu0
      %2932 = vdwg.mxu0
      %v2933 = vadd.f32 %v2627, %v2807
      %v2934 = vadd.f32 %v2628, %v2810
      %v2935 = vadd.f32 %v2629, %v2815
      %v2936 = vadd.f32 %v2630, %v2818
      %v2937 = vadd.f32 %v2631, %v2823
      %v2938 = vadd.f32 %v2632, %v2826
      %v2939 = vadd.f32 %v2633, %v2831
      %v2940 = vadd.f32 %v2634, %v2834
      %v2941 = vadd.f32 %v2635, %v2839
      %v2942 = vadd.f32 %v2636, %v2842
      %v2943 = vadd.f32 %v2637, %v2847
      %v2944 = vadd.f32 %v2638, %v2850
      %v2945 = vadd.f32 %v2639, %v2855
      %v2946 = vadd.f32 %v2640, %v2858
      %v2947 = vadd.f32 %v2641, %v2863
      %v2948 = vadd.f32 %v2642, %v2866
      %v2949 = vadd.f32 %v2643, %v2871
      %v2950 = vadd.f32 %v2644, %v2874
      %v2951 = vadd.f32 %v2645, %v2879
      %v2952 = vadd.f32 %v2646, %v2882
      %v2953 = vadd.f32 %v2647, %v2887
      %v2954 = vadd.f32 %v2648, %v2890
      %v2955 = vadd.f32 %v2649, %v2895
      %v2956 = vadd.f32 %v2650, %v2898
      %v2957 = vadd.f32 %v2651, %v2903
      %v2958 = vadd.f32 %v2652, %v2906
      %v2959 = vadd.f32 %v2653, %v2911
      %v2960 = vadd.f32 %v2654, %v2914
      %v2961 = vadd.f32 %v2655, %v2919
      %v2962 = vadd.f32 %v2656, %v2922
      %v2963 = vadd.f32 %v2657, %v2927
      %v2964 = vadd.f32 %v2658, %v2930
      %v2965 = vld [vmem:[#allocation2 + $0x19] sm:$0xff]
      %v2966 = vld [vmem:[#allocation2 + $0x21] sm:$0xff]
      %v2967 = vld [vmem:[#allocation2 + $0x29] sm:$0xff]
      %v2968 = vld [vmem:[#allocation2 + $0x31] sm:$0xff]
      %v2969 = vld [vmem:[#allocation2 + $0x39] sm:$0xff]
      %v2970 = vld [vmem:[#allocation2 + $0x41] sm:$0xff]
      %v2971 = vld [vmem:[#allocation2 + $0x49] sm:$0xff]
      %v2972 = vld [vmem:[#allocation2 + $0x51] sm:$0xff]
      %v2973 = vld [vmem:[#allocation2 + $0x59] sm:$0xff]
      %v2974 = vld [vmem:[#allocation2 + $0x61] sm:$0xff]
      %v2975 = vld [vmem:[#allocation2 + $0x69] sm:$0xff]
      %v2976 = vld [vmem:[#allocation2 + $0x71] sm:$0xff]
      %v2977 = vld [vmem:[#allocation2 + $0x79] sm:$0xff]
      %v2978 = vld [vmem:[#allocation2 + $0x81] sm:$0xff]
      %v2979 = vld [vmem:[#allocation2 + $0x89] sm:$0xff]
      %v2980 = vld [vmem:[#allocation2 + $0x91] sm:$0xff]
      %v2981 = vld [vmem:[#allocation2 + $0x99] sm:$0xff]
      %v2982 = vld [vmem:[#allocation2 + $0xa1] sm:$0xff]
      %v2983 = vld [vmem:[#allocation2 + $0xa9] sm:$0xff]
      %v2984 = vld [vmem:[#allocation2 + $0xb1] sm:$0xff]
      %v2985 = vld [vmem:[#allocation2 + $0xb9] sm:$0xff]
      %v2986 = vld [vmem:[#allocation2 + $0xc1] sm:$0xff]
      %v2987 = vld [vmem:[#allocation2 + $0xc9] sm:$0xff]
      %v2988 = vld [vmem:[#allocation2 + $0xd1] sm:$0xff]
      %v2989 = vld [vmem:[#allocation2 + $0xd9] sm:$0xff]
      %v2990 = vld [vmem:[#allocation2 + $0xe1] sm:$0xff]
      %v2991 = vld [vmem:[#allocation2 + $0xe9] sm:$0xff]
      %v2992 = vld [vmem:[#allocation2 + $0xf1] sm:$0xff]
      %v2993 = vld [vmem:[#allocation2 + $0xf9] sm:$0xff]
      %v2994 = vld [vmem:[#allocation2 + $0x101] sm:$0xff]
      %v2995 = vld [vmem:[#allocation2 + $0x109] sm:$0xff]
      %v2996 = vld [vmem:[#allocation2 + $0x111] sm:$0xff]
      %v2997 = vsel %vm1983, %v2965, 0.0
      %v2998 = vsel %vm1984, %v2966, 0.0
      %v2999 = vsel %vm1985, %v2967, 0.0
      %v3000 = vsel %vm1986, %v2968, 0.0
      %v3001 = vsel %vm1987, %v2969, 0.0
      %v3002 = vsel %vm1988, %v2970, 0.0
      %v3003 = vsel %vm1989, %v2971, 0.0
      %v3004 = vsel %vm1990, %v2972, 0.0
      %v3005 = vsel %vm1991, %v2973, 0.0
      %v3006 = vsel %vm1992, %v2974, 0.0
      %v3007 = vsel %vm1993, %v2975, 0.0
      %v3008 = vsel %vm1994, %v2976, 0.0
      %v3009 = vsel %vm1995, %v2977, 0.0
      %v3010 = vsel %vm1996, %v2978, 0.0
      %v3011 = vsel %vm1997, %v2979, 0.0
      %v3012 = vsel %vm1998, %v2980, 0.0
      %v3013 = vsel %vm1999, %v2981, 0.0
      %v3014 = vsel %vm2000, %v2982, 0.0
      %v3015 = vsel %vm2001, %v2983, 0.0
      %v3016 = vsel %vm2002, %v2984, 0.0
      %v3017 = vsel %vm2003, %v2985, 0.0
      %v3018 = vsel %vm2004, %v2986, 0.0
      %v3019 = vsel %vm2005, %v2987, 0.0
      %v3020 = vsel %vm2006, %v2988, 0.0
      %v3021 = vsel %vm2007, %v2989, 0.0
      %v3022 = vsel %vm2008, %v2990, 0.0
      %v3023 = vsel %vm2009, %v2991, 0.0
      %v3024 = vsel %vm2010, %v2992, 0.0
      %v3025 = vsel %vm2011, %v2993, 0.0
      %v3026 = vsel %vm2012, %v2994, 0.0
      %v3027 = vsel %vm2013, %v2995, 0.0
      %v3028 = vsel %vm2014, %v2996, 0.0
      %v3029 = vpack.c.bf16 %v2998, %v2997
      %v3030 = vpack.c.bf16 %v3000, %v2999
      %v3031 = vpack.c.bf16 %v3002, %v3001
      %v3032 = vpack.c.bf16 %v3004, %v3003
      %v3033 = vpack.c.bf16 %v3006, %v3005
      %v3034 = vpack.c.bf16 %v3008, %v3007
      %v3035 = vpack.c.bf16 %v3010, %v3009
      %v3036 = vpack.c.bf16 %v3012, %v3011
      %v3037 = vpack.c.bf16 %v3014, %v3013
      %v3038 = vpack.c.bf16 %v3016, %v3015
      %v3039 = vpack.c.bf16 %v3018, %v3017
      %v3040 = vpack.c.bf16 %v3020, %v3019
      %v3041 = vpack.c.bf16 %v3022, %v3021
      %v3042 = vpack.c.bf16 %v3024, %v3023
      %v3043 = vpack.c.bf16 %v3026, %v3025
      %v3044 = vpack.c.bf16 %v3028, %v3027
      %s3045 = scalar_lea.vmem %s3, 320
      %v3046 = vld [vmem:[%s3045] sm:$0xf]
      %v3047 = vld [vmem:[%s3045 + $0x4] sm:$0xf]
      %v3048 = vld [vmem:[%s3045 + $0x8] sm:$0xf]
      %v3049 = vld [vmem:[%s3045 + $0xc] sm:$0xf]
      %v3050 = vld [vmem:[%s3045 + $0x10] sm:$0xf]
      %v3051 = vld [vmem:[%s3045 + $0x14] sm:$0xf]
      %v3052 = vld [vmem:[%s3045 + $0x18] sm:$0xf]
      %v3053 = vld [vmem:[%s3045 + $0x1c] sm:$0xf]
      %v3054 = vld [vmem:[%s3045 + $0x20] sm:$0xf]
      %v3055 = vld [vmem:[%s3045 + $0x24] sm:$0xf]
      %v3056 = vld [vmem:[%s3045 + $0x28] sm:$0xf]
      %v3057 = vld [vmem:[%s3045 + $0x2c] sm:$0xf]
      %v3058 = vld [vmem:[%s3045 + $0x30] sm:$0xf]
      %v3059 = vld [vmem:[%s3045 + $0x34] sm:$0xf]
      %v3060 = vld [vmem:[%s3045 + $0x38] sm:$0xf]
      %v3061 = vld [vmem:[%s3045 + $0x3c] sm:$0xf]
      %v3078 = vunpack.c.l.b16 %v3046
      %v3079 = vunpack.c.l.b16 %v3047
      %v3080 = vunpack.c.l.b16 %v3048
      %v3081 = vunpack.c.l.b16 %v3049
      %v3082 = vunpack.c.l.b16 %v3050
      %v3083 = vunpack.c.l.b16 %v3051
      %v3084 = vunpack.c.l.b16 %v3052
      %v3085 = vunpack.c.l.b16 %v3053
      %v3086 = vunpack.c.l.b16 %v3054
      %v3087 = vunpack.c.l.b16 %v3055
      %v3088 = vunpack.c.l.b16 %v3056
      %v3089 = vunpack.c.l.b16 %v3057
      %v3090 = vunpack.c.l.b16 %v3058
      %v3091 = vunpack.c.l.b16 %v3059
      %v3092 = vunpack.c.l.b16 %v3060
      %v3093 = vunpack.c.l.b16 %v3061
      %v3094 = vpack.c.b16 %v3079, %v3078
      %v3095 = vpack.c.b16 %v3081, %v3080
      %v3096 = vpack.c.b16 %v3083, %v3082
      %v3097 = vpack.c.b16 %v3085, %v3084
      %v3098 = vpack.c.b16 %v3087, %v3086
      %v3099 = vpack.c.b16 %v3089, %v3088
      %v3100 = vpack.c.b16 %v3091, %v3090
      %v3101 = vpack.c.b16 %v3093, %v3092
      %3110 = vmatprep.subr.bf16.mxu0 0
      %3111 = vmatpush1.bf16.msra.mxu0 %v3094
      %3112 = vmatprep.subr.bf16.mxu0 0
      %3113 = vmatpush1.bf16.msra.mxu0 %v3095
      %3114 = vmatprep.subr.bf16.mxu0 0
      %3115 = vmatpush1.bf16.msra.mxu0 %v3096
      %3116 = vmatprep.subr.bf16.mxu0 0
      %3117 = vmatpush1.bf16.msra.mxu0 %v3097
      %3118 = vmatprep.subr.bf16.mxu0 0
      %3119 = vmatpush1.bf16.msra.mxu0 %v3098
      %3120 = vmatprep.subr.bf16.mxu0 0
      %3121 = vmatpush1.bf16.msra.mxu0 %v3099
      %3122 = vmatprep.subr.bf16.mxu0 0
      %3123 = vmatpush1.bf16.msra.mxu0 %v3100
      %3124 = vmatprep.subr.bf16.mxu0 0
      %3125 = vmatpush1.bf16.msra.mxu0 %v3101
      %3126 = vmatprep.subr.bf16.mxu0 0
      %3127 = vmatpush1.bf16.msra.mxu0 0
      %3128 = vmatprep.subr.bf16.mxu0 0
      %3129 = vmatpush1.bf16.msra.mxu0 0
      %3130 = vmatprep.subr.bf16.mxu0 0
      %3131 = vmatpush1.bf16.msra.mxu0 0
      %3132 = vmatprep.subr.bf16.mxu0 0
      %3133 = vmatpush1.bf16.msra.mxu0 0
      %3134 = vmatprep.subr.bf16.mxu0 0
      %3135 = vmatpush1.bf16.msra.mxu0 0
      %3136 = vmatprep.subr.bf16.mxu0 0
      %3137 = vmatpush1.bf16.msra.mxu0 0
      %3138 = vmatprep.subr.bf16.mxu0 0
      %3139 = vmatpush1.bf16.msra.mxu0 0
      %3140 = vmatprep.subr.bf16.mxu0 0
      %3141 = vmatpush1.bf16.msra.mxu0 0
      %3142 = vmatprep.mubr.bf16.mxu0 0
      %3143 = vmatmul.mubr.bf16.gmra.mrb[0].mxu0 %v3029
      %v3144 = vpop.f32.mrb[0].mxu0
      %v3145 = vadd.f32 0.0, %v3144
      %v3146 = vpop.f32.mrb[0].mxu0
      %v3147 = vpop.f32.mrb[0].mxu0
      %v3148 = vadd.f32 0.0, %v3147
      %v3149 = vpop.f32.mrb[0].mxu0
      %3150 = vmatprep.mubr.bf16.mxu0 0
      %3151 = vmatmul.mubr.bf16.gmra.mrb[0].mxu0 %v3030
      %v3152 = vpop.f32.mrb[0].mxu0
      %v3153 = vadd.f32 0.0, %v3152
      %v3154 = vpop.f32.mrb[0].mxu0
      %v3155 = vpop.f32.mrb[0].mxu0
      %v3156 = vadd.f32 0.0, %v3155
      %v3157 = vpop.f32.mrb[0].mxu0
      %3158 = vmatprep.mubr.bf16.mxu0 0
      %3159 = vmatmul.mubr.bf16.gmra.mrb[0].mxu0 %v3031
      %v3160 = vpop.f32.mrb[0].mxu0
      %v3161 = vadd.f32 0.0, %v3160
      %v3162 = vpop.f32.mrb[0].mxu0
      %v3163 = vpop.f32.mrb[0].mxu0
      %v3164 = vadd.f32 0.0, %v3163
      %v3165 = vpop.f32.mrb[0].mxu0
      %3166 = vmatprep.mubr.bf16.mxu0 0
      %3167 = vmatmul.mubr.bf16.gmra.mrb[0].mxu0 %v3032
      %v3168 = vpop.f32.mrb[0].mxu0
      %v3169 = vadd.f32 0.0, %v3168
      %v3170 = vpop.f32.mrb[0].mxu0
      %v3171 = vpop.f32.mrb[0].mxu0
      %v3172 = vadd.f32 0.0, %v3171
      %v3173 = vpop.f32.mrb[0].mxu0
      %3174 = vmatprep.mubr.bf16.mxu0 0
      %3175 = vmatmul.mubr.bf16.gmra.mrb[0].mxu0 %v3033
      %v3176 = vpop.f32.mrb[0].mxu0
      %v3177 = vadd.f32 0.0, %v3176
      %v3178 = vpop.f32.mrb[0].mxu0
      %v3179 = vpop.f32.mrb[0].mxu0
      %v3180 = vadd.f32 0.0, %v3179
      %v3181 = vpop.f32.mrb[0].mxu0
      %3182 = vmatprep.mubr.bf16.mxu0 0
      %3183 = vmatmul.mubr.bf16.gmra.mrb[0].mxu0 %v3034
      %v3184 = vpop.f32.mrb[0].mxu0
      %v3185 = vadd.f32 0.0, %v3184
      %v3186 = vpop.f32.mrb[0].mxu0
      %v3187 = vpop.f32.mrb[0].mxu0
      %v3188 = vadd.f32 0.0, %v3187
      %v3189 = vpop.f32.mrb[0].mxu0
      %3190 = vmatprep.mubr.bf16.mxu0 0
      %3191 = vmatmul.mubr.bf16.gmra.mrb[0].mxu0 %v3035
      %v3192 = vpop.f32.mrb[0].mxu0
      %v3193 = vadd.f32 0.0, %v3192
      %v3194 = vpop.f32.mrb[0].mxu0
      %v3195 = vpop.f32.mrb[0].mxu0
      %v3196 = vadd.f32 0.0, %v3195
      %v3197 = vpop.f32.mrb[0].mxu0
      %3198 = vmatprep.mubr.bf16.mxu0 0
      %3199 = vmatmul.mubr.bf16.gmra.mrb[0].mxu0 %v3036
      %v3200 = vpop.f32.mrb[0].mxu0
      %v3201 = vadd.f32 0.0, %v3200
      %v3202 = vpop.f32.mrb[0].mxu0
      %v3203 = vpop.f32.mrb[0].mxu0
      %v3204 = vadd.f32 0.0, %v3203
      %v3205 = vpop.f32.mrb[0].mxu0
      %3206 = vmatprep.mubr.bf16.mxu0 0
      %3207 = vmatmul.mubr.bf16.gmra.mrb[0].mxu0 %v3037
      %v3208 = vpop.f32.mrb[0].mxu0
      %v3209 = vadd.f32 0.0, %v3208
      %v3210 = vpop.f32.mrb[0].mxu0
      %v3211 = vpop.f32.mrb[0].mxu0
      %v3212 = vadd.f32 0.0, %v3211
      %v3213 = vpop.f32.mrb[0].mxu0
      %3214 = vmatprep.mubr.bf16.mxu0 0
      %3215 = vmatmul.mubr.bf16.gmra.mrb[0].mxu0 %v3038
      %v3216 = vpop.f32.mrb[0].mxu0
      %v3217 = vadd.f32 0.0, %v3216
      %v3218 = vpop.f32.mrb[0].mxu0
      %v3219 = vpop.f32.mrb[0].mxu0
      %v3220 = vadd.f32 0.0, %v3219
      %v3221 = vpop.f32.mrb[0].mxu0
      %3222 = vmatprep.mubr.bf16.mxu0 0
      %3223 = vmatmul.mubr.bf16.gmra.mrb[0].mxu0 %v3039
      %v3224 = vpop.f32.mrb[0].mxu0
      %v3225 = vadd.f32 0.0, %v3224
      %v3226 = vpop.f32.mrb[0].mxu0
      %v3227 = vpop.f32.mrb[0].mxu0
      %v3228 = vadd.f32 0.0, %v3227
      %v3229 = vpop.f32.mrb[0].mxu0
      %3230 = vmatprep.mubr.bf16.mxu0 0
      %3231 = vmatmul.mubr.bf16.gmra.mrb[0].mxu0 %v3040
      %v3232 = vpop.f32.mrb[0].mxu0
      %v3233 = vadd.f32 0.0, %v3232
      %v3234 = vpop.f32.mrb[0].mxu0
      %v3235 = vpop.f32.mrb[0].mxu0
      %v3236 = vadd.f32 0.0, %v3235
      %v3237 = vpop.f32.mrb[0].mxu0
      %3238 = vmatprep.mubr.bf16.mxu0 0
      %3239 = vmatmul.mubr.bf16.gmra.mrb[0].mxu0 %v3041
      %v3240 = vpop.f32.mrb[0].mxu0
      %v3241 = vadd.f32 0.0, %v3240
      %v3242 = vpop.f32.mrb[0].mxu0
      %v3243 = vpop.f32.mrb[0].mxu0
      %v3244 = vadd.f32 0.0, %v3243
      %v3245 = vpop.f32.mrb[0].mxu0
      %3246 = vmatprep.mubr.bf16.mxu0 0
      %3247 = vmatmul.mubr.bf16.gmra.mrb[0].mxu0 %v3042
      %v3248 = vpop.f32.mrb[0].mxu0
      %v3249 = vadd.f32 0.0, %v3248
      %v3250 = vpop.f32.mrb[0].mxu0
      %v3251 = vpop.f32.mrb[0].mxu0
      %v3252 = vadd.f32 0.0, %v3251
      %v3253 = vpop.f32.mrb[0].mxu0
      %3254 = vmatprep.mubr.bf16.mxu0 0
      %3255 = vmatmul.mubr.bf16.gmra.mrb[0].mxu0 %v3043
      %v3256 = vpop.f32.mrb[0].mxu0
      %v3257 = vadd.f32 0.0, %v3256
      %v3258 = vpop.f32.mrb[0].mxu0
      %v3259 = vpop.f32.mrb[0].mxu0
      %v3260 = vadd.f32 0.0, %v3259
      %v3261 = vpop.f32.mrb[0].mxu0
      %3262 = vmatprep.mubr.bf16.mxu0 0
      %3263 = vmatmul.mubr.bf16.gmra.mrb[0].mxu0 %v3044
      %v3264 = vpop.f32.mrb[0].mxu0
      %v3265 = vadd.f32 0.0, %v3264
      %v3266 = vpop.f32.mrb[0].mxu0
      %v3267 = vpop.f32.mrb[0].mxu0
      %v3268 = vadd.f32 0.0, %v3267
      %v3269 = vpop.f32.mrb[0].mxu0
      %3270 = vdwg.mxu0
      %v3271 = vadd.f32 %v2933, %v3145
      %v3272 = vadd.f32 %v2934, %v3148
      %v3273 = vadd.f32 %v2935, %v3153
      %v3274 = vadd.f32 %v2936, %v3156
      %v3275 = vadd.f32 %v2937, %v3161
      %v3276 = vadd.f32 %v2938, %v3164
      %v3277 = vadd.f32 %v2939, %v3169
      %v3278 = vadd.f32 %v2940, %v3172
      %v3279 = vadd.f32 %v2941, %v3177
      %v3280 = vadd.f32 %v2942, %v3180
      %v3281 = vadd.f32 %v2943, %v3185
      %v3282 = vadd.f32 %v2944, %v3188
      %v3283 = vadd.f32 %v2945, %v3193
      %v3284 = vadd.f32 %v2946, %v3196
      %v3285 = vadd.f32 %v2947, %v3201
      %v3286 = vadd.f32 %v2948, %v3204
      %v3287 = vadd.f32 %v2949, %v3209
      %v3288 = vadd.f32 %v2950, %v3212
      %v3289 = vadd.f32 %v2951, %v3217
      %v3290 = vadd.f32 %v2952, %v3220
      %v3291 = vadd.f32 %v2953, %v3225
      %v3292 = vadd.f32 %v2954, %v3228
      %v3293 = vadd.f32 %v2955, %v3233
      %v3294 = vadd.f32 %v2956, %v3236
      %v3295 = vadd.f32 %v2957, %v3241
      %v3296 = vadd.f32 %v2958, %v3244
      %v3297 = vadd.f32 %v2959, %v3249
      %v3298 = vadd.f32 %v2960, %v3252
      %v3299 = vadd.f32 %v2961, %v3257
      %v3300 = vadd.f32 %v2962, %v3260
      %v3301 = vadd.f32 %v2963, %v3265
      %v3302 = vadd.f32 %v2964, %v3268
      %v3303 = vld [vmem:[#allocation2 + $0x27] sm:$0xff]
      %v3304 = vld [vmem:[#allocation2 + $0x2f] sm:$0xff]
      %v3305 = vld [vmem:[#allocation2 + $0x37] sm:$0xff]
      %v3306 = vld [vmem:[#allocation2 + $0x3f] sm:$0xff]
      %v3307 = vld [vmem:[#allocation2 + $0x47] sm:$0xff]
      %v3308 = vld [vmem:[#allocation2 + $0x4f] sm:$0xff]
      %v3309 = vld [vmem:[#allocation2 + $0x57] sm:$0xff]
      %v3310 = vld [vmem:[#allocation2 + $0x5f] sm:$0xff]
      %v3311 = vld [vmem:[#allocation2 + $0x67] sm:$0xff]
      %v3312 = vld [vmem:[#allocation2 + $0x6f] sm:$0xff]
      %v3313 = vld [vmem:[#allocation2 + $0x77] sm:$0xff]
      %v3314 = vld [vmem:[#allocation2 + $0x7f] sm:$0xff]
      %v3315 = vld [vmem:[#allocation2 + $0x87] sm:$0xff]
      %v3316 = vld [vmem:[#allocation2 + $0x8f] sm:$0xff]
      %v3317 = vld [vmem:[#allocation2 + $0x97] sm:$0xff]
      %v3318 = vld [vmem:[#allocation2 + $0x9f] sm:$0xff]
      %v3319 = vld [vmem:[#allocation2 + $0xa7] sm:$0xff]
      %v3320 = vld [vmem:[#allocation2 + $0xaf] sm:$0xff]
      %v3321 = vld [vmem:[#allocation2 + $0xb7] sm:$0xff]
      %v3322 = vld [vmem:[#allocation2 + $0xbf] sm:$0xff]
      %v3323 = vld [vmem:[#allocation2 + $0xc7] sm:$0xff]
      %v3324 = vld [vmem:[#allocation2 + $0xcf] sm:$0xff]
      %v3325 = vld [vmem:[#allocation2 + $0xd7] sm:$0xff]
      %v3326 = vld [vmem:[#allocation2 + $0xdf] sm:$0xff]
      %v3327 = vld [vmem:[#allocation2 + $0xe7] sm:$0xff]
      %v3328 = vld [vmem:[#allocation2 + $0xef] sm:$0xff]
      %v3329 = vld [vmem:[#allocation2 + $0xf7] sm:$0xff]
      %v3330 = vld [vmem:[#allocation2 + $0xff] sm:$0xff]
      %v3331 = vld [vmem:[#allocation2 + $0x107] sm:$0xff]
      %v3332 = vld [vmem:[#allocation2 + $0x10f] sm:$0xff]
      %v3333 = vld [vmem:[#allocation2 + $0x117] sm:$0xff]
      %v3334 = vld [vmem:[#allocation2 + $0x11f] sm:$0xff]
      %v3335 = vsel %vm1340, %v3303, 0.0
      %v3336 = vsel %vm1341, %v3304, 0.0
      %v3337 = vsel %vm1342, %v3305, 0.0
      %v3338 = vsel %vm1343, %v3306, 0.0
      %v3339 = vsel %vm1344, %v3307, 0.0
      %v3340 = vsel %vm1345, %v3308, 0.0
      %v3341 = vsel %vm1346, %v3309, 0.0
      %v3342 = vsel %vm1347, %v3310, 0.0
      %v3343 = vsel %vm1348, %v3311, 0.0
      %v3344 = vsel %vm1349, %v3312, 0.0
      %v3345 = vsel %vm1350, %v3313, 0.0
      %v3346 = vsel %vm1351, %v3314, 0.0
      %v3347 = vsel %vm1352, %v3315, 0.0
      %v3348 = vsel %vm1353, %v3316, 0.0
      %v3349 = vsel %vm1354, %v3317, 0.0
      %v3350 = vsel %vm1355, %v3318, 0.0
      %v3351 = vsel %vm1356, %v3319, 0.0
      %v3352 = vsel %vm1357, %v3320, 0.0
      %v3353 = vsel %vm1358, %v3321, 0.0
      %v3354 = vsel %vm1359, %v3322, 0.0
      %v3355 = vsel %vm1360, %v3323, 0.0
      %v3356 = vsel %vm1361, %v3324, 0.0
      %v3357 = vsel %vm1362, %v3325, 0.0
      %v3358 = vsel %vm1363, %v3326, 0.0
      %v3359 = vsel %vm1364, %v3327, 0.0
      %v3360 = vsel %vm1365, %v3328, 0.0
      %v3361 = vsel %vm1366, %v3329, 0.0
      %v3362 = vsel %vm1367, %v3330, 0.0
      %v3363 = vsel %vm1368, %v3331, 0.0
      %v3364 = vsel %vm1369, %v3332, 0.0
      %v3365 = vsel %vm1370, %v3333, 0.0
      %v3366 = vsel %vm1371, %v3334, 0.0
      %v3367 = vpack.c.bf16 %v3336, %v3335
      %v3368 = vpack.c.bf16 %v3338, %v3337
      %v3369 = vpack.c.bf16 %v3340, %v3339
      %v3370 = vpack.c.bf16 %v3342, %v3341
      %v3371 = vpack.c.bf16 %v3344, %v3343
      %v3372 = vpack.c.bf16 %v3346, %v3345
      %v3373 = vpack.c.bf16 %v3348, %v3347
      %v3374 = vpack.c.bf16 %v3350, %v3349
      %v3375 = vpack.c.bf16 %v3352, %v3351
      %v3376 = vpack.c.bf16 %v3354, %v3353
      %v3377 = vpack.c.bf16 %v3356, %v3355
      %v3378 = vpack.c.bf16 %v3358, %v3357
      %v3379 = vpack.c.bf16 %v3360, %v3359
      %v3380 = vpack.c.bf16 %v3362, %v3361
      %v3381 = vpack.c.bf16 %v3364, %v3363
      %v3382 = vpack.c.bf16 %v3366, %v3365
      %s3383 = scalar_lea.vmem %s3, 384
      %v3384 = vld [vmem:[%s3383] sm:$0xf]
      %v3385 = vld [vmem:[%s3383 + $0x4] sm:$0xf]
      %v3386 = vld [vmem:[%s3383 + $0x8] sm:$0xf]
      %v3387 = vld [vmem:[%s3383 + $0xc] sm:$0xf]
      %v3388 = vld [vmem:[%s3383 + $0x10] sm:$0xf]
      %v3389 = vld [vmem:[%s3383 + $0x14] sm:$0xf]
      %v3390 = vld [vmem:[%s3383 + $0x18] sm:$0xf]
      %v3391 = vld [vmem:[%s3383 + $0x1c] sm:$0xf]
      %v3392 = vld [vmem:[%s3383 + $0x20] sm:$0xf]
      %v3393 = vld [vmem:[%s3383 + $0x24] sm:$0xf]
      %v3394 = vld [vmem:[%s3383 + $0x28] sm:$0xf]
      %v3395 = vld [vmem:[%s3383 + $0x2c] sm:$0xf]
      %v3396 = vld [vmem:[%s3383 + $0x30] sm:$0xf]
      %v3397 = vld [vmem:[%s3383 + $0x34] sm:$0xf]
      %v3398 = vld [vmem:[%s3383 + $0x38] sm:$0xf]
      %v3399 = vld [vmem:[%s3383 + $0x3c] sm:$0xf]
      %v3416 = vunpack.c.l.b16 %v3384
      %v3417 = vunpack.c.l.b16 %v3385
      %v3418 = vunpack.c.l.b16 %v3386
      %v3419 = vunpack.c.l.b16 %v3387
      %v3420 = vunpack.c.l.b16 %v3388
      %v3421 = vunpack.c.l.b16 %v3389
      %v3422 = vunpack.c.l.b16 %v3390
      %v3423 = vunpack.c.l.b16 %v3391
      %v3424 = vunpack.c.l.b16 %v3392
      %v3425 = vunpack.c.l.b16 %v3393
      %v3426 = vunpack.c.l.b16 %v3394
      %v3427 = vunpack.c.l.b16 %v3395
      %v3428 = vunpack.c.l.b16 %v3396
      %v3429 = vunpack.c.l.b16 %v3397
      %v3430 = vunpack.c.l.b16 %v3398
      %v3431 = vunpack.c.l.b16 %v3399
      %v3432 = vpack.c.b16 %v3417, %v3416
      %v3433 = vpack.c.b16 %v3419, %v3418
      %v3434 = vpack.c.b16 %v3421, %v3420
      %v3435 = vpack.c.b16 %v3423, %v3422
      %v3436 = vpack.c.b16 %v3425, %v3424
      %v3437 = vpack.c.b16 %v3427, %v3426
      %v3438 = vpack.c.b16 %v3429, %v3428
      %v3439 = vpack.c.b16 %v3431, %v3430
      %3448 = vmatprep.subr.bf16.mxu0 0
      %3449 = vmatpush1.bf16.msra.mxu0 %v3432
      %3450 = vmatprep.subr.bf16.mxu0 0
      %3451 = vmatpush1.bf16.msra.mxu0 %v3433
      %3452 = vmatprep.subr.bf16.mxu0 0
      %3453 = vmatpush1.bf16.msra.mxu0 %v3434
      %3454 = vmatprep.subr.bf16.mxu0 0
      %3455 = vmatpush1.bf16.msra.mxu0 %v3435
      %3456 = vmatprep.subr.bf16.mxu0 0
      %3457 = vmatpush1.bf16.msra.mxu0 %v3436
      %3458 = vmatprep.subr.bf16.mxu0 0
      %3459 = vmatpush1.bf16.msra.mxu0 %v3437
      %3460 = vmatprep.subr.bf16.mxu0 0
      %3461 = vmatpush1.bf16.msra.mxu0 %v3438
      %3462 = vmatprep.subr.bf16.mxu0 0
      %3463 = vmatpush1.bf16.msra.mxu0 %v3439
      %3464 = vmatprep.subr.bf16.mxu0 0
      %3465 = vmatpush1.bf16.msra.mxu0 0
      %3466 = vmatprep.subr.bf16.mxu0 0
      %3467 = vmatpush1.bf16.msra.mxu0 0
      %3468 = vmatprep.subr.bf16.mxu0 0
      %3469 = vmatpush1.bf16.msra.mxu0 0
      %3470 = vmatprep.subr.bf16.mxu0 0
      %3471 = vmatpush1.bf16.msra.mxu0 0
      %3472 = vmatprep.subr.bf16.mxu0 0
      %3473 = vmatpush1.bf16.msra.mxu0 0
      %3474 = vmatprep.subr.bf16.mxu0 0
      %3475 = vmatpush1.bf16.msra.mxu0 0
      %3476 = vmatprep.subr.bf16.mxu0 0
      %3477 = vmatpush1.bf16.msra.mxu0 0
      %3478 = vmatprep.subr.bf16.mxu0 0
      %3479 = vmatpush1.bf16.msra.mxu0 0
      %3480 = vmatprep.mubr.bf16.mxu0 0
      %3481 = vmatmul.mubr.bf16.gmra.mrb[0].mxu0 %v3367
      %v3482 = vpop.f32.mrb[0].mxu0
      %v3483 = vadd.f32 0.0, %v3482
      %v3484 = vpop.f32.mrb[0].mxu0
      %v3485 = vpop.f32.mrb[0].mxu0
      %v3486 = vadd.f32 0.0, %v3485
      %v3487 = vpop.f32.mrb[0].mxu0
      %3488 = vmatprep.mubr.bf16.mxu0 0
      %3489 = vmatmul.mubr.bf16.gmra.mrb[0].mxu0 %v3368
      %v3490 = vpop.f32.mrb[0].mxu0
      %v3491 = vadd.f32 0.0, %v3490
      %v3492 = vpop.f32.mrb[0].mxu0
      %v3493 = vpop.f32.mrb[0].mxu0
      %v3494 = vadd.f32 0.0, %v3493
      %v3495 = vpop.f32.mrb[0].mxu0
      %3496 = vmatprep.mubr.bf16.mxu0 0
      %3497 = vmatmul.mubr.bf16.gmra.mrb[0].mxu0 %v3369
      %v3498 = vpop.f32.mrb[0].mxu0
      %v3499 = vadd.f32 0.0, %v3498
      %v3500 = vpop.f32.mrb[0].mxu0
      %v3501 = vpop.f32.mrb[0].mxu0
      %v3502 = vadd.f32 0.0, %v3501
      %v3503 = vpop.f32.mrb[0].mxu0
      %3504 = vmatprep.mubr.bf16.mxu0 0
      %3505 = vmatmul.mubr.bf16.gmra.mrb[0].mxu0 %v3370
      %v3506 = vpop.f32.mrb[0].mxu0
      %v3507 = vadd.f32 0.0, %v3506
      %v3508 = vpop.f32.mrb[0].mxu0
      %v3509 = vpop.f32.mrb[0].mxu0
      %v3510 = vadd.f32 0.0, %v3509
      %v3511 = vpop.f32.mrb[0].mxu0
      %3512 = vmatprep.mubr.bf16.mxu0 0
      %3513 = vmatmul.mubr.bf16.gmra.mrb[0].mxu0 %v3371
      %v3514 = vpop.f32.mrb[0].mxu0
      %v3515 = vadd.f32 0.0, %v3514
      %v3516 = vpop.f32.mrb[0].mxu0
      %v3517 = vpop.f32.mrb[0].mxu0
      %v3518 = vadd.f32 0.0, %v3517
      %v3519 = vpop.f32.mrb[0].mxu0
      %3520 = vmatprep.mubr.bf16.mxu0 0
      %3521 = vmatmul.mubr.bf16.gmra.mrb[0].mxu0 %v3372
      %v3522 = vpop.f32.mrb[0].mxu0
      %v3523 = vadd.f32 0.0, %v3522
      %v3524 = vpop.f32.mrb[0].mxu0
      %v3525 = vpop.f32.mrb[0].mxu0
      %v3526 = vadd.f32 0.0, %v3525
      %v3527 = vpop.f32.mrb[0].mxu0
      %3528 = vmatprep.mubr.bf16.mxu0 0
      %3529 = vmatmul.mubr.bf16.gmra.mrb[0].mxu0 %v3373
      %v3530 = vpop.f32.mrb[0].mxu0
      %v3531 = vadd.f32 0.0, %v3530
      %v3532 = vpop.f32.mrb[0].mxu0
      %v3533 = vpop.f32.mrb[0].mxu0
      %v3534 = vadd.f32 0.0, %v3533
      %v3535 = vpop.f32.mrb[0].mxu0
      %3536 = vmatprep.mubr.bf16.mxu0 0
      %3537 = vmatmul.mubr.bf16.gmra.mrb[0].mxu0 %v3374
      %v3538 = vpop.f32.mrb[0].mxu0
      %v3539 = vadd.f32 0.0, %v3538
      %v3540 = vpop.f32.mrb[0].mxu0
      %v3541 = vpop.f32.mrb[0].mxu0
      %v3542 = vadd.f32 0.0, %v3541
      %v3543 = vpop.f32.mrb[0].mxu0
      %3544 = vmatprep.mubr.bf16.mxu0 0
      %3545 = vmatmul.mubr.bf16.gmra.mrb[0].mxu0 %v3375
      %v3546 = vpop.f32.mrb[0].mxu0
      %v3547 = vadd.f32 0.0, %v3546
      %v3548 = vpop.f32.mrb[0].mxu0
      %v3549 = vpop.f32.mrb[0].mxu0
      %v3550 = vadd.f32 0.0, %v3549
      %v3551 = vpop.f32.mrb[0].mxu0
      %3552 = vmatprep.mubr.bf16.mxu0 0
      %3553 = vmatmul.mubr.bf16.gmra.mrb[0].mxu0 %v3376
      %v3554 = vpop.f32.mrb[0].mxu0
      %v3555 = vadd.f32 0.0, %v3554
      %v3556 = vpop.f32.mrb[0].mxu0
      %v3557 = vpop.f32.mrb[0].mxu0
      %v3558 = vadd.f32 0.0, %v3557
      %v3559 = vpop.f32.mrb[0].mxu0
      %3560 = vmatprep.mubr.bf16.mxu0 0
      %3561 = vmatmul.mubr.bf16.gmra.mrb[0].mxu0 %v3377
      %v3562 = vpop.f32.mrb[0].mxu0
      %v3563 = vadd.f32 0.0, %v3562
      %v3564 = vpop.f32.mrb[0].mxu0
      %v3565 = vpop.f32.mrb[0].mxu0
      %v3566 = vadd.f32 0.0, %v3565
      %v3567 = vpop.f32.mrb[0].mxu0
      %3568 = vmatprep.mubr.bf16.mxu0 0
      %3569 = vmatmul.mubr.bf16.gmra.mrb[0].mxu0 %v3378
      %v3570 = vpop.f32.mrb[0].mxu0
      %v3571 = vadd.f32 0.0, %v3570
      %v3572 = vpop.f32.mrb[0].mxu0
      %v3573 = vpop.f32.mrb[0].mxu0
      %v3574 = vadd.f32 0.0, %v3573
      %v3575 = vpop.f32.mrb[0].mxu0
      %3576 = vmatprep.mubr.bf16.mxu0 0
      %3577 = vmatmul.mubr.bf16.gmra.mrb[0].mxu0 %v3379
      %v3578 = vpop.f32.mrb[0].mxu0
      %v3579 = vadd.f32 0.0, %v3578
      %v3580 = vpop.f32.mrb[0].mxu0
      %v3581 = vpop.f32.mrb[0].mxu0
      %v3582 = vadd.f32 0.0, %v3581
      %v3583 = vpop.f32.mrb[0].mxu0
      %3584 = vmatprep.mubr.bf16.mxu0 0
      %3585 = vmatmul.mubr.bf16.gmra.mrb[0].mxu0 %v3380
      %v3586 = vpop.f32.mrb[0].mxu0
      %v3587 = vadd.f32 0.0, %v3586
      %v3588 = vpop.f32.mrb[0].mxu0
      %v3589 = vpop.f32.mrb[0].mxu0
      %v3590 = vadd.f32 0.0, %v3589
      %v3591 = vpop.f32.mrb[0].mxu0
      %3592 = vmatprep.mubr.bf16.mxu0 0
      %3593 = vmatmul.mubr.bf16.gmra.mrb[0].mxu0 %v3381
      %v3594 = vpop.f32.mrb[0].mxu0
      %v3595 = vadd.f32 0.0, %v3594
      %v3596 = vpop.f32.mrb[0].mxu0
      %v3597 = vpop.f32.mrb[0].mxu0
      %v3598 = vadd.f32 0.0, %v3597
      %v3599 = vpop.f32.mrb[0].mxu0
      %3600 = vmatprep.mubr.bf16.mxu0 0
      %3601 = vmatmul.mubr.bf16.gmra.mrb[0].mxu0 %v3382
      %v3602 = vpop.f32.mrb[0].mxu0
      %v3603 = vadd.f32 0.0, %v3602
      %v3604 = vpop.f32.mrb[0].mxu0
      %v3605 = vpop.f32.mrb[0].mxu0
      %v3606 = vadd.f32 0.0, %v3605
      %v3607 = vpop.f32.mrb[0].mxu0
      %3608 = vdwg.mxu0
      %v3609 = vadd.f32 %v3271, %v3483
      %v3610 = vadd.f32 %v3272, %v3486
      %v3611 = vadd.f32 %v3273, %v3491
      %v3612 = vadd.f32 %v3274, %v3494
      %v3613 = vadd.f32 %v3275, %v3499
      %v3614 = vadd.f32 %v3276, %v3502
      %v3615 = vadd.f32 %v3277, %v3507
      %v3616 = vadd.f32 %v3278, %v3510
      %v3617 = vadd.f32 %v3279, %v3515
      %v3618 = vadd.f32 %v3280, %v3518
      %v3619 = vadd.f32 %v3281, %v3523
      %v3620 = vadd.f32 %v3282, %v3526
      %v3621 = vadd.f32 %v3283, %v3531
      %v3622 = vadd.f32 %v3284, %v3534
      %v3623 = vadd.f32 %v3285, %v3539
      %v3624 = vadd.f32 %v3286, %v3542
      %v3625 = vadd.f32 %v3287, %v3547
      %v3626 = vadd.f32 %v3288, %v3550
      %v3627 = vadd.f32 %v3289, %v3555
      %v3628 = vadd.f32 %v3290, %v3558
      %v3629 = vadd.f32 %v3291, %v3563
      %v3630 = vadd.f32 %v3292, %v3566
      %v3631 = vadd.f32 %v3293, %v3571
      %v3632 = vadd.f32 %v3294, %v3574
      %v3633 = vadd.f32 %v3295, %v3579
      %v3634 = vadd.f32 %v3296, %v3582
      %v3635 = vadd.f32 %v3297, %v3587
      %v3636 = vadd.f32 %v3298, %v3590
      %v3637 = vadd.f32 %v3299, %v3595
      %v3638 = vadd.f32 %v3300, %v3598
      %v3639 = vadd.f32 %v3301, %v3603
      %v3640 = vadd.f32 %v3302, %v3606
      %v3641 = vld [vmem:[#allocation2 + $0x28] sm:$0xff]
      %v3642 = vld [vmem:[#allocation2 + $0x30] sm:$0xff]
      %v3643 = vld [vmem:[#allocation2 + $0x38] sm:$0xff]
      %v3644 = vld [vmem:[#allocation2 + $0x40] sm:$0xff]
      %v3645 = vld [vmem:[#allocation2 + $0x48] sm:$0xff]
      %v3646 = vld [vmem:[#allocation2 + $0x50] sm:$0xff]
      %v3647 = vld [vmem:[#allocation2 + $0x58] sm:$0xff]
      %v3648 = vld [vmem:[#allocation2 + $0x60] sm:$0xff]
      %v3649 = vld [vmem:[#allocation2 + $0x68] sm:$0xff]
      %v3650 = vld [vmem:[#allocation2 + $0x70] sm:$0xff]
      %v3651 = vld [vmem:[#allocation2 + $0x78] sm:$0xff]
      %v3652 = vld [vmem:[#allocation2 + $0x80] sm:$0xff]
      %v3653 = vld [vmem:[#allocation2 + $0x88] sm:$0xff]
      %v3654 = vld [vmem:[#allocation2 + $0x90] sm:$0xff]
      %v3655 = vld [vmem:[#allocation2 + $0x98] sm:$0xff]
      %v3656 = vld [vmem:[#allocation2 + $0xa0] sm:$0xff]
      %v3657 = vld [vmem:[#allocation2 + $0xa8] sm:$0xff]
      %v3658 = vld [vmem:[#allocation2 + $0xb0] sm:$0xff]
      %v3659 = vld [vmem:[#allocation2 + $0xb8] sm:$0xff]
      %v3660 = vld [vmem:[#allocation2 + $0xc0] sm:$0xff]
      %v3661 = vld [vmem:[#allocation2 + $0xc8] sm:$0xff]
      %v3662 = vld [vmem:[#allocation2 + $0xd0] sm:$0xff]
      %v3663 = vld [vmem:[#allocation2 + $0xd8] sm:$0xff]
      %v3664 = vld [vmem:[#allocation2 + $0xe0] sm:$0xff]
      %v3665 = vld [vmem:[#allocation2 + $0xe8] sm:$0xff]
      %v3666 = vld [vmem:[#allocation2 + $0xf0] sm:$0xff]
      %v3667 = vld [vmem:[#allocation2 + $0xf8] sm:$0xff]
      %v3668 = vld [vmem:[#allocation2 + $0x100] sm:$0xff]
      %v3669 = vld [vmem:[#allocation2 + $0x108] sm:$0xff]
      %v3670 = vld [vmem:[#allocation2 + $0x110] sm:$0xff]
      %v3671 = vld [vmem:[#allocation2 + $0x118] sm:$0xff]
      %v3672 = vld [vmem:[#allocation2 + $0x120] sm:$0xff]
      %v3673 = vpack.c.bf16 %v3642, %v3641
      %v3674 = vpack.c.bf16 %v3644, %v3643
      %v3675 = vpack.c.bf16 %v3646, %v3645
      %v3676 = vpack.c.bf16 %v3648, %v3647
      %v3677 = vpack.c.bf16 %v3650, %v3649
      %v3678 = vpack.c.bf16 %v3652, %v3651
      %v3679 = vpack.c.bf16 %v3654, %v3653
      %v3680 = vpack.c.bf16 %v3656, %v3655
      %v3681 = vpack.c.bf16 %v3658, %v3657
      %v3682 = vpack.c.bf16 %v3660, %v3659
      %v3683 = vpack.c.bf16 %v3662, %v3661
      %v3684 = vpack.c.bf16 %v3664, %v3663
      %v3685 = vpack.c.bf16 %v3666, %v3665
      %v3686 = vpack.c.bf16 %v3668, %v3667
      %v3687 = vpack.c.bf16 %v3670, %v3669
      %v3688 = vpack.c.bf16 %v3672, %v3671
      %s3689 = scalar_lea.vmem %s3, 448
      %v3690 = vld [vmem:[%s3689] sm:$0xf]
      %v3691 = vld [vmem:[%s3689 + $0x4] sm:$0xf]
      %v3692 = vld [vmem:[%s3689 + $0x8] sm:$0xf]
      %v3693 = vld [vmem:[%s3689 + $0xc] sm:$0xf]
      %v3694 = vld [vmem:[%s3689 + $0x10] sm:$0xf]
      %v3695 = vld [vmem:[%s3689 + $0x14] sm:$0xf]
      %v3696 = vld [vmem:[%s3689 + $0x18] sm:$0xf]
      %v3697 = vld [vmem:[%s3689 + $0x1c] sm:$0xf]
      %v3698 = vld [vmem:[%s3689 + $0x20] sm:$0xf]
      %v3699 = vld [vmem:[%s3689 + $0x24] sm:$0xf]
      %v3700 = vld [vmem:[%s3689 + $0x28] sm:$0xf]
      %v3701 = vld [vmem:[%s3689 + $0x2c] sm:$0xf]
      %v3702 = vld [vmem:[%s3689 + $0x30] sm:$0xf]
      %v3703 = vld [vmem:[%s3689 + $0x34] sm:$0xf]
      %v3704 = vld [vmem:[%s3689 + $0x38] sm:$0xf]
      %v3705 = vld [vmem:[%s3689 + $0x3c] sm:$0xf]
      %v3722 = vunpack.c.l.b16 %v3690
      %v3723 = vunpack.c.l.b16 %v3691
      %v3724 = vunpack.c.l.b16 %v3692
      %v3725 = vunpack.c.l.b16 %v3693
      %v3726 = vunpack.c.l.b16 %v3694
      %v3727 = vunpack.c.l.b16 %v3695
      %v3728 = vunpack.c.l.b16 %v3696
      %v3729 = vunpack.c.l.b16 %v3697
      %v3730 = vunpack.c.l.b16 %v3698
      %v3731 = vunpack.c.l.b16 %v3699
      %v3732 = vunpack.c.l.b16 %v3700
      %v3733 = vunpack.c.l.b16 %v3701
      %v3734 = vunpack.c.l.b16 %v3702
      %v3735 = vunpack.c.l.b16 %v3703
      %v3736 = vunpack.c.l.b16 %v3704
      %v3737 = vunpack.c.l.b16 %v3705
      %v3738 = vpack.c.b16 %v3723, %v3722
      %v3739 = vpack.c.b16 %v3725, %v3724
      %v3740 = vpack.c.b16 %v3727, %v3726
      %v3741 = vpack.c.b16 %v3729, %v3728
      %v3742 = vpack.c.b16 %v3731, %v3730
      %v3743 = vpack.c.b16 %v3733, %v3732
      %v3744 = vpack.c.b16 %v3735, %v3734
      %v3745 = vpack.c.b16 %v3737, %v3736
      %3754 = vmatprep.subr.bf16.mxu0 0
      %3755 = vmatpush1.bf16.msra.mxu0 %v3738
      %3756 = vmatprep.subr.bf16.mxu0 0
      %3757 = vmatpush1.bf16.msra.mxu0 %v3739
      %3758 = vmatprep.subr.bf16.mxu0 0
      %3759 = vmatpush1.bf16.msra.mxu0 %v3740
      %3760 = vmatprep.subr.bf16.mxu0 0
      %3761 = vmatpush1.bf16.msra.mxu0 %v3741
      %3762 = vmatprep.subr.bf16.mxu0 0
      %3763 = vmatpush1.bf16.msra.mxu0 %v3742
      %3764 = vmatprep.subr.bf16.mxu0 0
      %3765 = vmatpush1.bf16.msra.mxu0 %v3743
      %3766 = vmatprep.subr.bf16.mxu0 0
      %3767 = vmatpush1.bf16.msra.mxu0 %v3744
      %3768 = vmatprep.subr.bf16.mxu0 0
      %3769 = vmatpush1.bf16.msra.mxu0 %v3745
      %3770 = vmatprep.subr.bf16.mxu0 0
      %3771 = vmatpush1.bf16.msra.mxu0 0
      %3772 = vmatprep.subr.bf16.mxu0 0
      %3773 = vmatpush1.bf16.msra.mxu0 0
      %3774 = vmatprep.subr.bf16.mxu0 0
      %3775 = vmatpush1.bf16.msra.mxu0 0
      %3776 = vmatprep.subr.bf16.mxu0 0
      %3777 = vmatpush1.bf16.msra.mxu0 0
      %3778 = vmatprep.subr.bf16.mxu0 0
      %3779 = vmatpush1.bf16.msra.mxu0 0
      %3780 = vmatprep.subr.bf16.mxu0 0
      %3781 = vmatpush1.bf16.msra.mxu0 0
      %3782 = vmatprep.subr.bf16.mxu0 0
      %3783 = vmatpush1.bf16.msra.mxu0 0
      %3784 = vmatprep.subr.bf16.mxu0 0
      %3785 = vmatpush1.bf16.msra.mxu0 0
      %3786 = vmatprep.mubr.bf16.mxu0 0
      %3787 = vmatmul.mubr.bf16.gmra.mrb[0].mxu0 %v3673
      %v3788 = vpop.f32.mrb[0].mxu0
      %v3789 = vadd.f32 0.0, %v3788
      %v3790 = vpop.f32.mrb[0].mxu0
      %v3791 = vpop.f32.mrb[0].mxu0
      %v3792 = vadd.f32 0.0, %v3791
      %v3793 = vpop.f32.mrb[0].mxu0
      %3794 = vmatprep.mubr.bf16.mxu0 0
      %3795 = vmatmul.mubr.bf16.gmra.mrb[0].mxu0 %v3674
      %v3796 = vpop.f32.mrb[0].mxu0
      %v3797 = vadd.f32 0.0, %v3796
      %v3798 = vpop.f32.mrb[0].mxu0
      %v3799 = vpop.f32.mrb[0].mxu0
      %v3800 = vadd.f32 0.0, %v3799
      %v3801 = vpop.f32.mrb[0].mxu0
      %3802 = vmatprep.mubr.bf16.mxu0 0
      %3803 = vmatmul.mubr.bf16.gmra.mrb[0].mxu0 %v3675
      %v3804 = vpop.f32.mrb[0].mxu0
      %v3805 = vadd.f32 0.0, %v3804
      %v3806 = vpop.f32.mrb[0].mxu0
      %v3807 = vpop.f32.mrb[0].mxu0
      %v3808 = vadd.f32 0.0, %v3807
      %v3809 = vpop.f32.mrb[0].mxu0
      %3810 = vmatprep.mubr.bf16.mxu0 0
      %3811 = vmatmul.mubr.bf16.gmra.mrb[0].mxu0 %v3676
      %v3812 = vpop.f32.mrb[0].mxu0
      %v3813 = vadd.f32 0.0, %v3812
      %v3814 = vpop.f32.mrb[0].mxu0
      %v3815 = vpop.f32.mrb[0].mxu0
      %v3816 = vadd.f32 0.0, %v3815
      %v3817 = vpop.f32.mrb[0].mxu0
      %3818 = vmatprep.mubr.bf16.mxu0 0
      %3819 = vmatmul.mubr.bf16.gmra.mrb[0].mxu0 %v3677
      %v3820 = vpop.f32.mrb[0].mxu0
      %v3821 = vadd.f32 0.0, %v3820
      %v3822 = vpop.f32.mrb[0].mxu0
      %v3823 = vpop.f32.mrb[0].mxu0
      %v3824 = vadd.f32 0.0, %v3823
      %v3825 = vpop.f32.mrb[0].mxu0
      %3826 = vmatprep.mubr.bf16.mxu0 0
      %3827 = vmatmul.mubr.bf16.gmra.mrb[0].mxu0 %v3678
      %v3828 = vpop.f32.mrb[0].mxu0
      %v3829 = vadd.f32 0.0, %v3828
      %v3830 = vpop.f32.mrb[0].mxu0
      %v3831 = vpop.f32.mrb[0].mxu0
      %v3832 = vadd.f32 0.0, %v3831
      %v3833 = vpop.f32.mrb[0].mxu0
      %3834 = vmatprep.mubr.bf16.mxu0 0
      %3835 = vmatmul.mubr.bf16.gmra.mrb[0].mxu0 %v3679
      %v3836 = vpop.f32.mrb[0].mxu0
      %v3837 = vadd.f32 0.0, %v3836
      %v3838 = vpop.f32.mrb[0].mxu0
      %v3839 = vpop.f32.mrb[0].mxu0
      %v3840 = vadd.f32 0.0, %v3839
      %v3841 = vpop.f32.mrb[0].mxu0
      %3842 = vmatprep.mubr.bf16.mxu0 0
      %3843 = vmatmul.mubr.bf16.gmra.mrb[0].mxu0 %v3680
      %v3844 = vpop.f32.mrb[0].mxu0
      %v3845 = vadd.f32 0.0, %v3844
      %v3846 = vpop.f32.mrb[0].mxu0
      %v3847 = vpop.f32.mrb[0].mxu0
      %v3848 = vadd.f32 0.0, %v3847
      %v3849 = vpop.f32.mrb[0].mxu0
      %3850 = vmatprep.mubr.bf16.mxu0 0
      %3851 = vmatmul.mubr.bf16.gmra.mrb[0].mxu0 %v3681
      %v3852 = vpop.f32.mrb[0].mxu0
      %v3853 = vadd.f32 0.0, %v3852
      %v3854 = vpop.f32.mrb[0].mxu0
      %v3855 = vpop.f32.mrb[0].mxu0
      %v3856 = vadd.f32 0.0, %v3855
      %v3857 = vpop.f32.mrb[0].mxu0
      %3858 = vmatprep.mubr.bf16.mxu0 0
      %3859 = vmatmul.mubr.bf16.gmra.mrb[0].mxu0 %v3682
      %v3860 = vpop.f32.mrb[0].mxu0
      %v3861 = vadd.f32 0.0, %v3860
      %v3862 = vpop.f32.mrb[0].mxu0
      %v3863 = vpop.f32.mrb[0].mxu0
      %v3864 = vadd.f32 0.0, %v3863
      %v3865 = vpop.f32.mrb[0].mxu0
      %3866 = vmatprep.mubr.bf16.mxu0 0
      %3867 = vmatmul.mubr.bf16.gmra.mrb[0].mxu0 %v3683
      %v3868 = vpop.f32.mrb[0].mxu0
      %v3869 = vadd.f32 0.0, %v3868
      %v3870 = vpop.f32.mrb[0].mxu0
      %v3871 = vpop.f32.mrb[0].mxu0
      %v3872 = vadd.f32 0.0, %v3871
      %v3873 = vpop.f32.mrb[0].mxu0
      %3874 = vmatprep.mubr.bf16.mxu0 0
      %3875 = vmatmul.mubr.bf16.gmra.mrb[0].mxu0 %v3684
      %v3876 = vpop.f32.mrb[0].mxu0
      %v3877 = vadd.f32 0.0, %v3876
      %v3878 = vpop.f32.mrb[0].mxu0
      %v3879 = vpop.f32.mrb[0].mxu0
      %v3880 = vadd.f32 0.0, %v3879
      %v3881 = vpop.f32.mrb[0].mxu0
      %3882 = vmatprep.mubr.bf16.mxu0 0
      %3883 = vmatmul.mubr.bf16.gmra.mrb[0].mxu0 %v3685
      %v3884 = vpop.f32.mrb[0].mxu0
      %v3885 = vadd.f32 0.0, %v3884
      %v3886 = vpop.f32.mrb[0].mxu0
      %v3887 = vpop.f32.mrb[0].mxu0
      %v3888 = vadd.f32 0.0, %v3887
      %v3889 = vpop.f32.mrb[0].mxu0
      %3890 = vmatprep.mubr.bf16.mxu0 0
      %3891 = vmatmul.mubr.bf16.gmra.mrb[0].mxu0 %v3686
      %v3892 = vpop.f32.mrb[0].mxu0
      %v3893 = vadd.f32 0.0, %v3892
      %v3894 = vpop.f32.mrb[0].mxu0
      %v3895 = vpop.f32.mrb[0].mxu0
      %v3896 = vadd.f32 0.0, %v3895
      %v3897 = vpop.f32.mrb[0].mxu0
      %3898 = vmatprep.mubr.bf16.mxu0 0
      %3899 = vmatmul.mubr.bf16.gmra.mrb[0].mxu0 %v3687
      %v3900 = vpop.f32.mrb[0].mxu0
      %v3901 = vadd.f32 0.0, %v3900
      %v3902 = vpop.f32.mrb[0].mxu0
      %v3903 = vpop.f32.mrb[0].mxu0
      %v3904 = vadd.f32 0.0, %v3903
      %v3905 = vpop.f32.mrb[0].mxu0
      %3906 = vmatprep.mubr.bf16.mxu0 0
      %3907 = vmatmul.mubr.bf16.gmra.mrb[0].mxu0 %v3688
      %v3908 = vpop.f32.mrb[0].mxu0
      %v3909 = vadd.f32 0.0, %v3908
      %v3910 = vpop.f32.mrb[0].mxu0
      %v3911 = vpop.f32.mrb[0].mxu0
      %v3912 = vadd.f32 0.0, %v3911
      %v3913 = vpop.f32.mrb[0].mxu0
      %3914 = vdwg.mxu0
      %v3915 = vadd.f32 %v3609, %v3789
      %v3916 = vadd.f32 %v3610, %v3792
      %v3917 = vadd.f32 %v3611, %v3797
      %v3918 = vadd.f32 %v3612, %v3800
      %v3919 = vadd.f32 %v3613, %v3805
      %v3920 = vadd.f32 %v3614, %v3808
      %v3921 = vadd.f32 %v3615, %v3813
      %v3922 = vadd.f32 %v3616, %v3816
      %v3923 = vadd.f32 %v3617, %v3821
      %v3924 = vadd.f32 %v3618, %v3824
      %v3925 = vadd.f32 %v3619, %v3829
      %v3926 = vadd.f32 %v3620, %v3832
      %v3927 = vadd.f32 %v3621, %v3837
      %v3928 = vadd.f32 %v3622, %v3840
      %v3929 = vadd.f32 %v3623, %v3845
      %v3930 = vadd.f32 %v3624, %v3848
      %v3931 = vadd.f32 %v3625, %v3853
      %v3932 = vadd.f32 %v3626, %v3856
      %v3933 = vadd.f32 %v3627, %v3861
      %v3934 = vadd.f32 %v3628, %v3864
      %v3935 = vadd.f32 %v3629, %v3869
      %v3936 = vadd.f32 %v3630, %v3872
      %v3937 = vadd.f32 %v3631, %v3877
      %v3938 = vadd.f32 %v3632, %v3880
      %v3939 = vadd.f32 %v3633, %v3885
      %v3940 = vadd.f32 %v3634, %v3888
      %v3941 = vadd.f32 %v3635, %v3893
      %v3942 = vadd.f32 %v3636, %v3896
      %v3943 = vadd.f32 %v3637, %v3901
      %v3944 = vadd.f32 %v3638, %v3904
      %v3945 = vadd.f32 %v3639, %v3909
      %v3946 = vadd.f32 %v3640, %v3912
      %v3947 = vld [vmem:[#allocation2 + $0x29] sm:$0xff]
      %v3948 = vld [vmem:[#allocation2 + $0x31] sm:$0xff]
      %v3949 = vld [vmem:[#allocation2 + $0x39] sm:$0xff]
      %v3950 = vld [vmem:[#allocation2 + $0x41] sm:$0xff]
      %v3951 = vld [vmem:[#allocation2 + $0x49] sm:$0xff]
      %v3952 = vld [vmem:[#allocation2 + $0x51] sm:$0xff]
      %v3953 = vld [vmem:[#allocation2 + $0x59] sm:$0xff]
      %v3954 = vld [vmem:[#allocation2 + $0x61] sm:$0xff]
      %v3955 = vld [vmem:[#allocation2 + $0x69] sm:$0xff]
      %v3956 = vld [vmem:[#allocation2 + $0x71] sm:$0xff]
      %v3957 = vld [vmem:[#allocation2 + $0x79] sm:$0xff]
      %v3958 = vld [vmem:[#allocation2 + $0x81] sm:$0xff]
      %v3959 = vld [vmem:[#allocation2 + $0x89] sm:$0xff]
      %v3960 = vld [vmem:[#allocation2 + $0x91] sm:$0xff]
      %v3961 = vld [vmem:[#allocation2 + $0x99] sm:$0xff]
      %v3962 = vld [vmem:[#allocation2 + $0xa1] sm:$0xff]
      %v3963 = vld [vmem:[#allocation2 + $0xa9] sm:$0xff]
      %v3964 = vld [vmem:[#allocation2 + $0xb1] sm:$0xff]
      %v3965 = vld [vmem:[#allocation2 + $0xb9] sm:$0xff]
      %v3966 = vld [vmem:[#allocation2 + $0xc1] sm:$0xff]
      %v3967 = vld [vmem:[#allocation2 + $0xc9] sm:$0xff]
      %v3968 = vld [vmem:[#allocation2 + $0xd1] sm:$0xff]
      %v3969 = vld [vmem:[#allocation2 + $0xd9] sm:$0xff]
      %v3970 = vld [vmem:[#allocation2 + $0xe1] sm:$0xff]
      %v3971 = vld [vmem:[#allocation2 + $0xe9] sm:$0xff]
      %v3972 = vld [vmem:[#allocation2 + $0xf1] sm:$0xff]
      %v3973 = vld [vmem:[#allocation2 + $0xf9] sm:$0xff]
      %v3974 = vld [vmem:[#allocation2 + $0x101] sm:$0xff]
      %v3975 = vld [vmem:[#allocation2 + $0x109] sm:$0xff]
      %v3976 = vld [vmem:[#allocation2 + $0x111] sm:$0xff]
      %v3977 = vld [vmem:[#allocation2 + $0x119] sm:$0xff]
      %v3978 = vld [vmem:[#allocation2 + $0x121] sm:$0xff]
      %v3979 = vsel %vm1983, %v3947, 0.0
      %v3980 = vsel %vm1984, %v3948, 0.0
      %v3981 = vsel %vm1985, %v3949, 0.0
      %v3982 = vsel %vm1986, %v3950, 0.0
      %v3983 = vsel %vm1987, %v3951, 0.0
      %v3984 = vsel %vm1988, %v3952, 0.0
      %v3985 = vsel %vm1989, %v3953, 0.0
      %v3986 = vsel %vm1990, %v3954, 0.0
      %v3987 = vsel %vm1991, %v3955, 0.0
      %v3988 = vsel %vm1992, %v3956, 0.0
      %v3989 = vsel %vm1993, %v3957, 0.0
      %v3990 = vsel %vm1994, %v3958, 0.0
      %v3991 = vsel %vm1995, %v3959, 0.0
      %v3992 = vsel %vm1996, %v3960, 0.0
      %v3993 = vsel %vm1997, %v3961, 0.0
      %v3994 = vsel %vm1998, %v3962, 0.0
      %v3995 = vsel %vm1999, %v3963, 0.0
      %v3996 = vsel %vm2000, %v3964, 0.0
      %v3997 = vsel %vm2001, %v3965, 0.0
      %v3998 = vsel %vm2002, %v3966, 0.0
      %v3999 = vsel %vm2003, %v3967, 0.0
      %v4000 = vsel %vm2004, %v3968, 0.0
      %v4001 = vsel %vm2005, %v3969, 0.0
      %v4002 = vsel %vm2006, %v3970, 0.0
      %v4003 = vsel %vm2007, %v3971, 0.0
      %v4004 = vsel %vm2008, %v3972, 0.0
      %v4005 = vsel %vm2009, %v3973, 0.0
      %v4006 = vsel %vm2010, %v3974, 0.0
      %v4007 = vsel %vm2011, %v3975, 0.0
      %v4008 = vsel %vm2012, %v3976, 0.0
      %v4009 = vsel %vm2013, %v3977, 0.0
      %v4010 = vsel %vm2014, %v3978, 0.0
      %v4011 = vpack.c.bf16 %v3980, %v3979
      %v4012 = vpack.c.bf16 %v3982, %v3981
      %v4013 = vpack.c.bf16 %v3984, %v3983
      %v4014 = vpack.c.bf16 %v3986, %v3985
      %v4015 = vpack.c.bf16 %v3988, %v3987
      %v4016 = vpack.c.bf16 %v3990, %v3989
      %v4017 = vpack.c.bf16 %v3992, %v3991
      %v4018 = vpack.c.bf16 %v3994, %v3993
      %v4019 = vpack.c.bf16 %v3996, %v3995
      %v4020 = vpack.c.bf16 %v3998, %v3997
      %v4021 = vpack.c.bf16 %v4000, %v3999
      %v4022 = vpack.c.bf16 %v4002, %v4001
      %v4023 = vpack.c.bf16 %v4004, %v4003
      %v4024 = vpack.c.bf16 %v4006, %v4005
      %v4025 = vpack.c.bf16 %v4008, %v4007
      %v4026 = vpack.c.bf16 %v4010, %v4009
      %s4027 = scalar_lea.vmem %s3, 512
      %v4028 = vld [vmem:[%s4027] sm:$0xf]
      %v4029 = vld [vmem:[%s4027 + $0x4] sm:$0xf]
      %v4030 = vld [vmem:[%s4027 + $0x8] sm:$0xf]
      %v4031 = vld [vmem:[%s4027 + $0xc] sm:$0xf]
      %v4032 = vld [vmem:[%s4027 + $0x10] sm:$0xf]
      %v4033 = vld [vmem:[%s4027 + $0x14] sm:$0xf]
      %v4034 = vld [vmem:[%s4027 + $0x18] sm:$0xf]
      %v4035 = vld [vmem:[%s4027 + $0x1c] sm:$0xf]
      %v4036 = vld [vmem:[%s4027 + $0x20] sm:$0xf]
      %v4037 = vld [vmem:[%s4027 + $0x24] sm:$0xf]
      %v4038 = vld [vmem:[%s4027 + $0x28] sm:$0xf]
      %v4039 = vld [vmem:[%s4027 + $0x2c] sm:$0xf]
      %v4040 = vld [vmem:[%s4027 + $0x30] sm:$0xf]
      %v4041 = vld [vmem:[%s4027 + $0x34] sm:$0xf]
      %v4042 = vld [vmem:[%s4027 + $0x38] sm:$0xf]
      %v4043 = vld [vmem:[%s4027 + $0x3c] sm:$0xf]
      %v4060 = vunpack.c.l.b16 %v4028
      %v4061 = vunpack.c.l.b16 %v4029
      %v4062 = vunpack.c.l.b16 %v4030
      %v4063 = vunpack.c.l.b16 %v4031
      %v4064 = vunpack.c.l.b16 %v4032
      %v4065 = vunpack.c.l.b16 %v4033
      %v4066 = vunpack.c.l.b16 %v4034
      %v4067 = vunpack.c.l.b16 %v4035
      %v4068 = vunpack.c.l.b16 %v4036
      %v4069 = vunpack.c.l.b16 %v4037
      %v4070 = vunpack.c.l.b16 %v4038
      %v4071 = vunpack.c.l.b16 %v4039
      %v4072 = vunpack.c.l.b16 %v4040
      %v4073 = vunpack.c.l.b16 %v4041
      %v4074 = vunpack.c.l.b16 %v4042
      %v4075 = vunpack.c.l.b16 %v4043
      %v4076 = vpack.c.b16 %v4061, %v4060
      %v4077 = vpack.c.b16 %v4063, %v4062
      %v4078 = vpack.c.b16 %v4065, %v4064
      %v4079 = vpack.c.b16 %v4067, %v4066
      %v4080 = vpack.c.b16 %v4069, %v4068
      %v4081 = vpack.c.b16 %v4071, %v4070
      %v4082 = vpack.c.b16 %v4073, %v4072
      %v4083 = vpack.c.b16 %v4075, %v4074
      %4092 = vmatprep.subr.bf16.mxu0 0
      %4093 = vmatpush1.bf16.msra.mxu0 %v4076
      %4094 = vmatprep.subr.bf16.mxu0 0
      %4095 = vmatpush1.bf16.msra.mxu0 %v4077
      %4096 = vmatprep.subr.bf16.mxu0 0
      %4097 = vmatpush1.bf16.msra.mxu0 %v4078
      %4098 = vmatprep.subr.bf16.mxu0 0
      %4099 = vmatpush1.bf16.msra.mxu0 %v4079
      %4100 = vmatprep.subr.bf16.mxu0 0
      %4101 = vmatpush1.bf16.msra.mxu0 %v4080
      %4102 = vmatprep.subr.bf16.mxu0 0
      %4103 = vmatpush1.bf16.msra.mxu0 %v4081
      %4104 = vmatprep.subr.bf16.mxu0 0
      %4105 = vmatpush1.bf16.msra.mxu0 %v4082
      %4106 = vmatprep.subr.bf16.mxu0 0
      %4107 = vmatpush1.bf16.msra.mxu0 %v4083
      %4108 = vmatprep.subr.bf16.mxu0 0
      %4109 = vmatpush1.bf16.msra.mxu0 0
      %4110 = vmatprep.subr.bf16.mxu0 0
      %4111 = vmatpush1.bf16.msra.mxu0 0
      %4112 = vmatprep.subr.bf16.mxu0 0
      %4113 = vmatpush1.bf16.msra.mxu0 0
      %4114 = vmatprep.subr.bf16.mxu0 0
      %4115 = vmatpush1.bf16.msra.mxu0 0
      %4116 = vmatprep.subr.bf16.mxu0 0
      %4117 = vmatpush1.bf16.msra.mxu0 0
      %4118 = vmatprep.subr.bf16.mxu0 0
      %4119 = vmatpush1.bf16.msra.mxu0 0
      %4120 = vmatprep.subr.bf16.mxu0 0
      %4121 = vmatpush1.bf16.msra.mxu0 0
      %4122 = vmatprep.subr.bf16.mxu0 0
      %4123 = vmatpush1.bf16.msra.mxu0 0
      %4124 = vmatprep.mubr.bf16.mxu0 0
      %4125 = vmatmul.mubr.bf16.gmra.mrb[0].mxu0 %v4011
      %v4126 = vpop.f32.mrb[0].mxu0
      %v4127 = vadd.f32 0.0, %v4126
      %v4128 = vpop.f32.mrb[0].mxu0
      %v4129 = vpop.f32.mrb[0].mxu0
      %v4130 = vadd.f32 0.0, %v4129
      %v4131 = vpop.f32.mrb[0].mxu0
      %4132 = vmatprep.mubr.bf16.mxu0 0
      %4133 = vmatmul.mubr.bf16.gmra.mrb[0].mxu0 %v4012
      %v4134 = vpop.f32.mrb[0].mxu0
      %v4135 = vadd.f32 0.0, %v4134
      %v4136 = vpop.f32.mrb[0].mxu0
      %v4137 = vpop.f32.mrb[0].mxu0
      %v4138 = vadd.f32 0.0, %v4137
      %v4139 = vpop.f32.mrb[0].mxu0
      %4140 = vmatprep.mubr.bf16.mxu0 0
      %4141 = vmatmul.mubr.bf16.gmra.mrb[0].mxu0 %v4013
      %v4142 = vpop.f32.mrb[0].mxu0
      %v4143 = vadd.f32 0.0, %v4142
      %v4144 = vpop.f32.mrb[0].mxu0
      %v4145 = vpop.f32.mrb[0].mxu0
      %v4146 = vadd.f32 0.0, %v4145
      %v4147 = vpop.f32.mrb[0].mxu0
      %4148 = vmatprep.mubr.bf16.mxu0 0
      %4149 = vmatmul.mubr.bf16.gmra.mrb[0].mxu0 %v4014
      %v4150 = vpop.f32.mrb[0].mxu0
      %v4151 = vadd.f32 0.0, %v4150
      %v4152 = vpop.f32.mrb[0].mxu0
      %v4153 = vpop.f32.mrb[0].mxu0
      %v4154 = vadd.f32 0.0, %v4153
      %v4155 = vpop.f32.mrb[0].mxu0
      %4156 = vmatprep.mubr.bf16.mxu0 0
      %4157 = vmatmul.mubr.bf16.gmra.mrb[0].mxu0 %v4015
      %v4158 = vpop.f32.mrb[0].mxu0
      %v4159 = vadd.f32 0.0, %v4158
      %v4160 = vpop.f32.mrb[0].mxu0
      %v4161 = vpop.f32.mrb[0].mxu0
      %v4162 = vadd.f32 0.0, %v4161
      %v4163 = vpop.f32.mrb[0].mxu0
      %4164 = vmatprep.mubr.bf16.mxu0 0
      %4165 = vmatmul.mubr.bf16.gmra.mrb[0].mxu0 %v4016
      %v4166 = vpop.f32.mrb[0].mxu0
      %v4167 = vadd.f32 0.0, %v4166
      %v4168 = vpop.f32.mrb[0].mxu0
      %v4169 = vpop.f32.mrb[0].mxu0
      %v4170 = vadd.f32 0.0, %v4169
      %v4171 = vpop.f32.mrb[0].mxu0
      %4172 = vmatprep.mubr.bf16.mxu0 0
      %4173 = vmatmul.mubr.bf16.gmra.mrb[0].mxu0 %v4017
      %v4174 = vpop.f32.mrb[0].mxu0
      %v4175 = vadd.f32 0.0, %v4174
      %v4176 = vpop.f32.mrb[0].mxu0
      %v4177 = vpop.f32.mrb[0].mxu0
      %v4178 = vadd.f32 0.0, %v4177
      %v4179 = vpop.f32.mrb[0].mxu0
      %4180 = vmatprep.mubr.bf16.mxu0 0
      %4181 = vmatmul.mubr.bf16.gmra.mrb[0].mxu0 %v4018
      %v4182 = vpop.f32.mrb[0].mxu0
      %v4183 = vadd.f32 0.0, %v4182
      %v4184 = vpop.f32.mrb[0].mxu0
      %v4185 = vpop.f32.mrb[0].mxu0
      %v4186 = vadd.f32 0.0, %v4185
      %v4187 = vpop.f32.mrb[0].mxu0
      %4188 = vmatprep.mubr.bf16.mxu0 0
      %4189 = vmatmul.mubr.bf16.gmra.mrb[0].mxu0 %v4019
      %v4190 = vpop.f32.mrb[0].mxu0
      %v4191 = vadd.f32 0.0, %v4190
      %v4192 = vpop.f32.mrb[0].mxu0
      %v4193 = vpop.f32.mrb[0].mxu0
      %v4194 = vadd.f32 0.0, %v4193
      %v4195 = vpop.f32.mrb[0].mxu0
      %4196 = vmatprep.mubr.bf16.mxu0 0
      %4197 = vmatmul.mubr.bf16.gmra.mrb[0].mxu0 %v4020
      %v4198 = vpop.f32.mrb[0].mxu0
      %v4199 = vadd.f32 0.0, %v4198
      %v4200 = vpop.f32.mrb[0].mxu0
      %v4201 = vpop.f32.mrb[0].mxu0
      %v4202 = vadd.f32 0.0, %v4201
      %v4203 = vpop.f32.mrb[0].mxu0
      %4204 = vmatprep.mubr.bf16.mxu0 0
      %4205 = vmatmul.mubr.bf16.gmra.mrb[0].mxu0 %v4021
      %v4206 = vpop.f32.mrb[0].mxu0
      %v4207 = vadd.f32 0.0, %v4206
      %v4208 = vpop.f32.mrb[0].mxu0
      %v4209 = vpop.f32.mrb[0].mxu0
      %v4210 = vadd.f32 0.0, %v4209
      %v4211 = vpop.f32.mrb[0].mxu0
      %4212 = vmatprep.mubr.bf16.mxu0 0
      %4213 = vmatmul.mubr.bf16.gmra.mrb[0].mxu0 %v4022
      %v4214 = vpop.f32.mrb[0].mxu0
      %v4215 = vadd.f32 0.0, %v4214
      %v4216 = vpop.f32.mrb[0].mxu0
      %v4217 = vpop.f32.mrb[0].mxu0
      %v4218 = vadd.f32 0.0, %v4217
      %v4219 = vpop.f32.mrb[0].mxu0
      %4220 = vmatprep.mubr.bf16.mxu0 0
      %4221 = vmatmul.mubr.bf16.gmra.mrb[0].mxu0 %v4023
      %v4222 = vpop.f32.mrb[0].mxu0
      %v4223 = vadd.f32 0.0, %v4222
      %v4224 = vpop.f32.mrb[0].mxu0
      %v4225 = vpop.f32.mrb[0].mxu0
      %v4226 = vadd.f32 0.0, %v4225
      %v4227 = vpop.f32.mrb[0].mxu0
      %4228 = vmatprep.mubr.bf16.mxu0 0
      %4229 = vmatmul.mubr.bf16.gmra.mrb[0].mxu0 %v4024
      %v4230 = vpop.f32.mrb[0].mxu0
      %v4231 = vadd.f32 0.0, %v4230
      %v4232 = vpop.f32.mrb[0].mxu0
      %v4233 = vpop.f32.mrb[0].mxu0
      %v4234 = vadd.f32 0.0, %v4233
      %v4235 = vpop.f32.mrb[0].mxu0
      %4236 = vmatprep.mubr.bf16.mxu0 0
      %4237 = vmatmul.mubr.bf16.gmra.mrb[0].mxu0 %v4025
      %v4238 = vpop.f32.mrb[0].mxu0
      %v4239 = vadd.f32 0.0, %v4238
      %v4240 = vpop.f32.mrb[0].mxu0
      %v4241 = vpop.f32.mrb[0].mxu0
      %v4242 = vadd.f32 0.0, %v4241
      %v4243 = vpop.f32.mrb[0].mxu0
      %4244 = vmatprep.mubr.bf16.mxu0 0
      %4245 = vmatmul.mubr.bf16.gmra.mrb[0].mxu0 %v4026
      %v4246 = vpop.f32.mrb[0].mxu0
      %v4247 = vadd.f32 0.0, %v4246
      %v4248 = vpop.f32.mrb[0].mxu0
      %v4249 = vpop.f32.mrb[0].mxu0
      %v4250 = vadd.f32 0.0, %v4249
      %v4251 = vpop.f32.mrb[0].mxu0
      %4252 = vdwg.mxu0
      %v4253 = vadd.f32 %v3915, %v4127
      %v4254 = vadd.f32 %v3916, %v4130
      %v4255 = vadd.f32 %v3917, %v4135
      %v4256 = vadd.f32 %v3918, %v4138
      %v4257 = vadd.f32 %v3919, %v4143
      %v4258 = vadd.f32 %v3920, %v4146
      %v4259 = vadd.f32 %v3921, %v4151
      %v4260 = vadd.f32 %v3922, %v4154
      %v4261 = vadd.f32 %v3923, %v4159
      %v4262 = vadd.f32 %v3924, %v4162
      %v4263 = vadd.f32 %v3925, %v4167
      %v4264 = vadd.f32 %v3926, %v4170
      %v4265 = vadd.f32 %v3927, %v4175
      %v4266 = vadd.f32 %v3928, %v4178
      %v4267 = vadd.f32 %v3929, %v4183
      %v4268 = vadd.f32 %v3930, %v4186
      %v4269 = vadd.f32 %v3931, %v4191
      %v4270 = vadd.f32 %v3932, %v4194
      %v4271 = vadd.f32 %v3933, %v4199
      %v4272 = vadd.f32 %v3934, %v4202
      %v4273 = vadd.f32 %v3935, %v4207
      %v4274 = vadd.f32 %v3936, %v4210
      %v4275 = vadd.f32 %v3937, %v4215
      %v4276 = vadd.f32 %v3938, %v4218
      %v4277 = vadd.f32 %v3939, %v4223
      %v4278 = vadd.f32 %v3940, %v4226
      %v4279 = vadd.f32 %v3941, %v4231
      %v4280 = vadd.f32 %v3942, %v4234
      %v4281 = vadd.f32 %v3943, %v4239
      %v4282 = vadd.f32 %v3944, %v4242
      %v4283 = vadd.f32 %v3945, %v4247
      %v4284 = vadd.f32 %v3946, %v4250
      %v4285 = vld [vmem:[%s4] sm:$0x1]
      %v4287 = vlaneseq
      %v4288 = vshrl.u32 %v4287, 7
      %v4289 = vsub.s32 0, %v4288
      %v4290 = vrot.slane %v4285, %v4289
      %v4292 = vadd.f32 %v4253, %v4290
      %v4293 = vadd.f32 %v4254, %v4290
      %v4294 = vadd.f32 %v4255, %v4290
      %v4295 = vadd.f32 %v4256, %v4290
      %v4296 = vadd.f32 %v4257, %v4290
      %v4297 = vadd.f32 %v4258, %v4290
      %v4298 = vadd.f32 %v4259, %v4290
      %v4299 = vadd.f32 %v4260, %v4290
      %v4300 = vadd.f32 %v4261, %v4290
      %v4301 = vadd.f32 %v4262, %v4290
      %v4302 = vadd.f32 %v4263, %v4290
      %v4303 = vadd.f32 %v4264, %v4290
      %v4304 = vadd.f32 %v4265, %v4290
      %v4305 = vadd.f32 %v4266, %v4290
      %v4306 = vadd.f32 %v4267, %v4290
      %v4307 = vadd.f32 %v4268, %v4290
      %v4308 = vadd.f32 %v4269, %v4290
      %v4309 = vadd.f32 %v4270, %v4290
      %v4310 = vadd.f32 %v4271, %v4290
      %v4311 = vadd.f32 %v4272, %v4290
      %v4312 = vadd.f32 %v4273, %v4290
      %v4313 = vadd.f32 %v4274, %v4290
      %v4314 = vadd.f32 %v4275, %v4290
      %v4315 = vadd.f32 %v4276, %v4290
      %v4316 = vadd.f32 %v4277, %v4290
      %v4317 = vadd.f32 %v4278, %v4290
      %v4318 = vadd.f32 %v4279, %v4290
      %v4319 = vadd.f32 %v4280, %v4290
      %v4320 = vadd.f32 %v4281, %v4290
      %v4321 = vadd.f32 %v4282, %v4290
      %v4322 = vadd.f32 %v4283, %v4290
      %v4323 = vadd.f32 %v4284, %v4290
      %v4324 = vmax.f32 %v4292, 0.0
      %v4325 = vmax.f32 %v4293, 0.0
      %v4326 = vmax.f32 %v4294, 0.0
      %v4327 = vmax.f32 %v4295, 0.0
      %v4328 = vmax.f32 %v4296, 0.0
      %v4329 = vmax.f32 %v4297, 0.0
      %v4330 = vmax.f32 %v4298, 0.0
      %v4331 = vmax.f32 %v4299, 0.0
      %v4332 = vmax.f32 %v4300, 0.0
      %v4333 = vmax.f32 %v4301, 0.0
      %v4334 = vmax.f32 %v4302, 0.0
      %v4335 = vmax.f32 %v4303, 0.0
      %v4336 = vmax.f32 %v4304, 0.0
      %v4337 = vmax.f32 %v4305, 0.0
      %v4338 = vmax.f32 %v4306, 0.0
      %v4339 = vmax.f32 %v4307, 0.0
      %v4340 = vmax.f32 %v4308, 0.0
      %v4341 = vmax.f32 %v4309, 0.0
      %v4342 = vmax.f32 %v4310, 0.0
      %v4343 = vmax.f32 %v4311, 0.0
      %v4344 = vmax.f32 %v4312, 0.0
      %v4345 = vmax.f32 %v4313, 0.0
      %v4346 = vmax.f32 %v4314, 0.0
      %v4347 = vmax.f32 %v4315, 0.0
      %v4348 = vmax.f32 %v4316, 0.0
      %v4349 = vmax.f32 %v4317, 0.0
      %v4350 = vmax.f32 %v4318, 0.0
      %v4351 = vmax.f32 %v4319, 0.0
      %v4352 = vmax.f32 %v4320, 0.0
      %v4353 = vmax.f32 %v4321, 0.0
      %v4354 = vmax.f32 %v4322, 0.0
      %v4355 = vmax.f32 %v4323, 0.0
      %4356 = vst [vmem:[#allocation3] sm:$0xff] 0.0
      %4357 = vst [vmem:[#allocation3 + $0x8] sm:$0xff] 0.0
      %4358 = vst [vmem:[#allocation3 + $0x10] sm:$0xff] 0.0
      %4359 = vst [vmem:[#allocation3 + $0x18] sm:$0xff] 0.0
      %4360 = vst [vmem:[#allocation3 + $0x20] sm:$0xff] 0.0
      %4361 = vst [vmem:[#allocation3 + $0x28] sm:$0xff] 0.0
      %4362 = vst [vmem:[#allocation3 + $0x30] sm:$0xff] 0.0
      %4363 = vst [vmem:[#allocation3 + $0x38] sm:$0xff] 0.0
      %4364 = vst [vmem:[#allocation3 + $0x40] sm:$0xff] 0.0
      %4365 = vst [vmem:[#allocation3 + $0x48] sm:$0xff] 0.0
      %4366 = vst [vmem:[#allocation3 + $0x50] sm:$0xff] 0.0
      %4367 = vst [vmem:[#allocation3 + $0x58] sm:$0xff] 0.0
      %4368 = vst [vmem:[#allocation3 + $0x60] sm:$0xff] 0.0
      %4369 = vst [vmem:[#allocation3 + $0x68] sm:$0xff] 0.0
      %4370 = vst [vmem:[#allocation3 + $0x70] sm:$0xff] 0.0
      %4371 = vst [vmem:[#allocation3 + $0x78] sm:$0xff] 0.0
      %4372 = vst [vmem:[#allocation3 + $0x80] sm:$0xff] 0.0
      %4373 = vst [vmem:[#allocation3 + $0x88] sm:$0xff] 0.0
      %4374 = vst [vmem:[#allocation3 + $0x90] sm:$0xff] 0.0
      %4375 = vst [vmem:[#allocation3 + $0x98] sm:$0xff] 0.0
      %4376 = vst [vmem:[#allocation3 + $0xa0] sm:$0xff] 0.0
      %4377 = vst [vmem:[#allocation3 + $0xa8] sm:$0xff] 0.0
      %4378 = vst [vmem:[#allocation3 + $0xb0] sm:$0xff] 0.0
      %4379 = vst [vmem:[#allocation3 + $0xb8] sm:$0xff] 0.0
      %4380 = vst [vmem:[#allocation3 + $0xc0] sm:$0xff] 0.0
      %4381 = vst [vmem:[#allocation3 + $0xc8] sm:$0xff] 0.0
      %4382 = vst [vmem:[#allocation3 + $0xd0] sm:$0xff] 0.0
      %4383 = vst [vmem:[#allocation3 + $0xd8] sm:$0xff] 0.0
      %4384 = vst [vmem:[#allocation3 + $0xe0] sm:$0xff] 0.0
      %4385 = vst [vmem:[#allocation3 + $0xe8] sm:$0xff] 0.0
      %4386 = vst [vmem:[#allocation3 + $0xf0] sm:$0xff] 0.0
      %4387 = vst [vmem:[#allocation3 + $0xf8] sm:$0xff] 0.0
      %4388 = vst [vmem:[#allocation3 + $0x100] sm:$0xff] 0.0
      %4389 = vst [vmem:[#allocation3 + $0x108] sm:$0xff] 0.0
      %4390 = vst [vmem:[#allocation3 + $0x110] sm:$0xff] 0.0
      %4391 = vst [vmem:[#allocation3 + $0x118] sm:$0xff] 0.0
      %4392 = vst [vmem:[#allocation3 + $0x120] sm:$0xff] 0.0
      %4393 = vst [vmem:[#allocation3 + $0x128] sm:$0xff] 0.0
      %4394 = vst [vmem:[#allocation3 + $0x18] sm:$0xff] %v4324
      %4395 = vst [vmem:[#allocation3 + $0x20] sm:$0xff] %v4325
      %4396 = vst [vmem:[#allocation3 + $0x28] sm:$0xff] %v4326
      %4397 = vst [vmem:[#allocation3 + $0x30] sm:$0xff] %v4327
      %4398 = vst [vmem:[#allocation3 + $0x38] sm:$0xff] %v4328
      %4399 = vst [vmem:[#allocation3 + $0x40] sm:$0xff] %v4329
      %4400 = vst [vmem:[#allocation3 + $0x48] sm:$0xff] %v4330
      %4401 = vst [vmem:[#allocation3 + $0x50] sm:$0xff] %v4331
      %4402 = vst [vmem:[#allocation3 + $0x58] sm:$0xff] %v4332
      %4403 = vst [vmem:[#allocation3 + $0x60] sm:$0xff] %v4333
      %4404 = vst [vmem:[#allocation3 + $0x68] sm:$0xff] %v4334
      %4405 = vst [vmem:[#allocation3 + $0x70] sm:$0xff] %v4335
      %4406 = vst [vmem:[#allocation3 + $0x78] sm:$0xff] %v4336
      %4407 = vst [vmem:[#allocation3 + $0x80] sm:$0xff] %v4337
      %4408 = vst [vmem:[#allocation3 + $0x88] sm:$0xff] %v4338
      %4409 = vst [vmem:[#allocation3 + $0x90] sm:$0xff] %v4339
      %4410 = vst [vmem:[#allocation3 + $0x98] sm:$0xff] %v4340
      %4411 = vst [vmem:[#allocation3 + $0xa0] sm:$0xff] %v4341
      %4412 = vst [vmem:[#allocation3 + $0xa8] sm:$0xff] %v4342
      %4413 = vst [vmem:[#allocation3 + $0xb0] sm:$0xff] %v4343
      %4414 = vst [vmem:[#allocation3 + $0xb8] sm:$0xff] %v4344
      %4415 = vst [vmem:[#allocation3 + $0xc0] sm:$0xff] %v4345
      %4416 = vst [vmem:[#allocation3 + $0xc8] sm:$0xff] %v4346
      %4417 = vst [vmem:[#allocation3 + $0xd0] sm:$0xff] %v4347
      %4418 = vst [vmem:[#allocation3 + $0xd8] sm:$0xff] %v4348
      %4419 = vst [vmem:[#allocation3 + $0xe0] sm:$0xff] %v4349
      %4420 = vst [vmem:[#allocation3 + $0xe8] sm:$0xff] %v4350
      %4421 = vst [vmem:[#allocation3 + $0xf0] sm:$0xff] %v4351
      %4422 = vst [vmem:[#allocation3 + $0xf8] sm:$0xff] %v4352
      %4423 = vst [vmem:[#allocation3 + $0x100] sm:$0xff] %v4353
      %4424 = vst [vmem:[#allocation3 + $0x108] sm:$0xff] %v4354
      %4425 = vst [vmem:[#allocation3 + $0x110] sm:$0xff] %v4355
      %v4426 = vld [vmem:[#allocation2 + $0x18] sm:$0xff]
      %v4427 = vld [vmem:[#allocation2 + $0x20] sm:$0xff]
      %v4428 = vld [vmem:[#allocation2 + $0x28] sm:$0xff]
      %v4429 = vld [vmem:[#allocation2 + $0x30] sm:$0xff]
      %v4430 = vld [vmem:[#allocation2 + $0x38] sm:$0xff]
      %v4431 = vld [vmem:[#allocation2 + $0x40] sm:$0xff]
      %v4432 = vld [vmem:[#allocation2 + $0x48] sm:$0xff]
      %v4433 = vld [vmem:[#allocation2 + $0x50] sm:$0xff]
      %v4434 = vld [vmem:[#allocation2 + $0x58] sm:$0xff]
      %v4435 = vld [vmem:[#allocation2 + $0x60] sm:$0xff]
      %v4436 = vld [vmem:[#allocation2 + $0x68] sm:$0xff]
      %v4437 = vld [vmem:[#allocation2 + $0x70] sm:$0xff]
      %v4438 = vld [vmem:[#allocation2 + $0x78] sm:$0xff]
      %v4439 = vld [vmem:[#allocation2 + $0x80] sm:$0xff]
      %v4440 = vld [vmem:[#allocation2 + $0x88] sm:$0xff]
      %v4441 = vld [vmem:[#allocation2 + $0x90] sm:$0xff]
      %v4442 = vld [vmem:[#allocation2 + $0x98] sm:$0xff]
      %v4443 = vld [vmem:[#allocation2 + $0xa0] sm:$0xff]
      %v4444 = vld [vmem:[#allocation2 + $0xa8] sm:$0xff]
      %v4445 = vld [vmem:[#allocation2 + $0xb0] sm:$0xff]
      %v4446 = vld [vmem:[#allocation2 + $0xb8] sm:$0xff]
      %v4447 = vld [vmem:[#allocation2 + $0xc0] sm:$0xff]
      %v4448 = vld [vmem:[#allocation2 + $0xc8] sm:$0xff]
      %v4449 = vld [vmem:[#allocation2 + $0xd0] sm:$0xff]
      %v4450 = vld [vmem:[#allocation2 + $0xd8] sm:$0xff]
      %v4451 = vld [vmem:[#allocation2 + $0xe0] sm:$0xff]
      %v4452 = vld [vmem:[#allocation2 + $0xe8] sm:$0xff]
      %v4453 = vld [vmem:[#allocation2 + $0xf0] sm:$0xff]
      %v4454 = vld [vmem:[#allocation2 + $0xf8] sm:$0xff]
      %v4455 = vld [vmem:[#allocation2 + $0x100] sm:$0xff]
      %v4456 = vld [vmem:[#allocation2 + $0x108] sm:$0xff]
      %v4457 = vld [vmem:[#allocation2 + $0x110] sm:$0xff]
      %v4458 = vld [vmem:[#allocation3 + $0x7] sm:$0xff]
      %v4459 = vld [vmem:[#allocation3 + $0xf] sm:$0xff]
      %v4460 = vld [vmem:[#allocation3 + $0x17] sm:$0xff]
      %v4461 = vld [vmem:[#allocation3 + $0x1f] sm:$0xff]
      %v4462 = vld [vmem:[#allocation3 + $0x27] sm:$0xff]
      %v4463 = vld [vmem:[#allocation3 + $0x2f] sm:$0xff]
      %v4464 = vld [vmem:[#allocation3 + $0x37] sm:$0xff]
      %v4465 = vld [vmem:[#allocation3 + $0x3f] sm:$0xff]
      %v4466 = vld [vmem:[#allocation3 + $0x47] sm:$0xff]
      %v4467 = vld [vmem:[#allocation3 + $0x4f] sm:$0xff]
      %v4468 = vld [vmem:[#allocation3 + $0x57] sm:$0xff]
      %v4469 = vld [vmem:[#allocation3 + $0x5f] sm:$0xff]
      %v4470 = vld [vmem:[#allocation3 + $0x67] sm:$0xff]
      %v4471 = vld [vmem:[#allocation3 + $0x6f] sm:$0xff]
      %v4472 = vld [vmem:[#allocation3 + $0x77] sm:$0xff]
      %v4473 = vld [vmem:[#allocation3 + $0x7f] sm:$0xff]
      %v4474 = vld [vmem:[#allocation3 + $0x87] sm:$0xff]
      %v4475 = vld [vmem:[#allocation3 + $0x8f] sm:$0xff]
      %v4476 = vld [vmem:[#allocation3 + $0x97] sm:$0xff]
      %v4477 = vld [vmem:[#allocation3 + $0x9f] sm:$0xff]
      %v4478 = vld [vmem:[#allocation3 + $0xa7] sm:$0xff]
      %v4479 = vld [vmem:[#allocation3 + $0xaf] sm:$0xff]
      %v4480 = vld [vmem:[#allocation3 + $0xb7] sm:$0xff]
      %v4481 = vld [vmem:[#allocation3 + $0xbf] sm:$0xff]
      %v4482 = vld [vmem:[#allocation3 + $0xc7] sm:$0xff]
      %v4483 = vld [vmem:[#allocation3 + $0xcf] sm:$0xff]
      %v4484 = vld [vmem:[#allocation3 + $0xd7] sm:$0xff]
      %v4485 = vld [vmem:[#allocation3 + $0xdf] sm:$0xff]
      %v4486 = vld [vmem:[#allocation3 + $0xe7] sm:$0xff]
      %v4487 = vld [vmem:[#allocation3 + $0xef] sm:$0xff]
      %v4488 = vld [vmem:[#allocation3 + $0xf7] sm:$0xff]
      %v4489 = vld [vmem:[#allocation3 + $0xff] sm:$0xff]
      %v4490 = vsel %vm1340, %v4458, 0.0
      %v4491 = vsel %vm1341, %v4459, 0.0
      %v4492 = vsel %vm1342, %v4460, 0.0
      %v4493 = vsel %vm1343, %v4461, 0.0
      %v4494 = vsel %vm1344, %v4462, 0.0
      %v4495 = vsel %vm1345, %v4463, 0.0
      %v4496 = vsel %vm1346, %v4464, 0.0
      %v4497 = vsel %vm1347, %v4465, 0.0
      %v4498 = vsel %vm1348, %v4466, 0.0
      %v4499 = vsel %vm1349, %v4467, 0.0
      %v4500 = vsel %vm1350, %v4468, 0.0
      %v4501 = vsel %vm1351, %v4469, 0.0
      %v4502 = vsel %vm1352, %v4470, 0.0
      %v4503 = vsel %vm1353, %v4471, 0.0
      %v4504 = vsel %vm1354, %v4472, 0.0
      %v4505 = vsel %vm1355, %v4473, 0.0
      %v4506 = vsel %vm1356, %v4474, 0.0
      %v4507 = vsel %vm1357, %v4475, 0.0
      %v4508 = vsel %vm1358, %v4476, 0.0
      %v4509 = vsel %vm1359, %v4477, 0.0
      %v4510 = vsel %vm1360, %v4478, 0.0
      %v4511 = vsel %vm1361, %v4479, 0.0
      %v4512 = vsel %vm1362, %v4480, 0.0
      %v4513 = vsel %vm1363, %v4481, 0.0
      %v4514 = vsel %vm1364, %v4482, 0.0
      %v4515 = vsel %vm1365, %v4483, 0.0
      %v4516 = vsel %vm1366, %v4484, 0.0
      %v4517 = vsel %vm1367, %v4485, 0.0
      %v4518 = vsel %vm1368, %v4486, 0.0
      %v4519 = vsel %vm1369, %v4487, 0.0
      %v4520 = vsel %vm1370, %v4488, 0.0
      %v4521 = vsel %vm1371, %v4489, 0.0
      %v4522 = vpack.c.bf16 %v4491, %v4490
      %v4523 = vpack.c.bf16 %v4493, %v4492
      %v4524 = vpack.c.bf16 %v4495, %v4494
      %v4525 = vpack.c.bf16 %v4497, %v4496
      %v4526 = vpack.c.bf16 %v4499, %v4498
      %v4527 = vpack.c.bf16 %v4501, %v4500
      %v4528 = vpack.c.bf16 %v4503, %v4502
      %v4529 = vpack.c.bf16 %v4505, %v4504
      %v4530 = vpack.c.bf16 %v4507, %v4506
      %v4531 = vpack.c.bf16 %v4509, %v4508
      %v4532 = vpack.c.bf16 %v4511, %v4510
      %v4533 = vpack.c.bf16 %v4513, %v4512
      %v4534 = vpack.c.bf16 %v4515, %v4514
      %v4535 = vpack.c.bf16 %v4517, %v4516
      %v4536 = vpack.c.bf16 %v4519, %v4518
      %v4537 = vpack.c.bf16 %v4521, %v4520
      %v4538 = vld [vmem:[%s5] sm:$0xf]
      %v4539 = vld [vmem:[%s5 + $0x4] sm:$0xf]
      %v4540 = vld [vmem:[%s5 + $0x8] sm:$0xf]
      %v4541 = vld [vmem:[%s5 + $0xc] sm:$0xf]
      %v4542 = vld [vmem:[%s5 + $0x10] sm:$0xf]
      %v4543 = vld [vmem:[%s5 + $0x14] sm:$0xf]
      %v4544 = vld [vmem:[%s5 + $0x18] sm:$0xf]
      %v4545 = vld [vmem:[%s5 + $0x1c] sm:$0xf]
      %v4546 = vld [vmem:[%s5 + $0x20] sm:$0xf]
      %v4547 = vld [vmem:[%s5 + $0x24] sm:$0xf]
      %v4548 = vld [vmem:[%s5 + $0x28] sm:$0xf]
      %v4549 = vld [vmem:[%s5 + $0x2c] sm:$0xf]
      %v4550 = vld [vmem:[%s5 + $0x30] sm:$0xf]
      %v4551 = vld [vmem:[%s5 + $0x34] sm:$0xf]
      %v4552 = vld [vmem:[%s5 + $0x38] sm:$0xf]
      %v4553 = vld [vmem:[%s5 + $0x3c] sm:$0xf]
      %v4554 = vld [vmem:[#allocation3 + $0x8] sm:$0xff]
      %v4555 = vld [vmem:[#allocation3 + $0x10] sm:$0xff]
      %v4556 = vld [vmem:[#allocation3 + $0x18] sm:$0xff]
      %v4557 = vld [vmem:[#allocation3 + $0x20] sm:$0xff]
      %v4558 = vld [vmem:[#allocation3 + $0x28] sm:$0xff]
      %v4559 = vld [vmem:[#allocation3 + $0x30] sm:$0xff]
      %v4560 = vld [vmem:[#allocation3 + $0x38] sm:$0xff]
      %v4561 = vld [vmem:[#allocation3 + $0x40] sm:$0xff]
      %v4562 = vld [vmem:[#allocation3 + $0x48] sm:$0xff]
      %v4563 = vld [vmem:[#allocation3 + $0x50] sm:$0xff]
      %v4564 = vld [vmem:[#allocation3 + $0x58] sm:$0xff]
      %v4565 = vld [vmem:[#allocation3 + $0x60] sm:$0xff]
      %v4566 = vld [vmem:[#allocation3 + $0x68] sm:$0xff]
      %v4567 = vld [vmem:[#allocation3 + $0x70] sm:$0xff]
      %v4568 = vld [vmem:[#allocation3 + $0x78] sm:$0xff]
      %v4569 = vld [vmem:[#allocation3 + $0x80] sm:$0xff]
      %v4570 = vld [vmem:[#allocation3 + $0x88] sm:$0xff]
      %v4571 = vld [vmem:[#allocation3 + $0x90] sm:$0xff]
      %v4572 = vld [vmem:[#allocation3 + $0x98] sm:$0xff]
      %v4573 = vld [vmem:[#allocation3 + $0xa0] sm:$0xff]
      %v4574 = vld [vmem:[#allocation3 + $0xa8] sm:$0xff]
      %v4575 = vld [vmem:[#allocation3 + $0xb0] sm:$0xff]
      %v4576 = vld [vmem:[#allocation3 + $0xb8] sm:$0xff]
      %v4577 = vld [vmem:[#allocation3 + $0xc0] sm:$0xff]
      %v4578 = vld [vmem:[#allocation3 + $0xc8] sm:$0xff]
      %v4579 = vld [vmem:[#allocation3 + $0xd0] sm:$0xff]
      %v4580 = vld [vmem:[#allocation3 + $0xd8] sm:$0xff]
      %v4581 = vld [vmem:[#allocation3 + $0xe0] sm:$0xff]
      %v4582 = vld [vmem:[#allocation3 + $0xe8] sm:$0xff]
      %v4583 = vld [vmem:[#allocation3 + $0xf0] sm:$0xff]
      %v4584 = vld [vmem:[#allocation3 + $0xf8] sm:$0xff]
      %v4585 = vld [vmem:[#allocation3 + $0x100] sm:$0xff]
      %v4586 = vpack.c.bf16 %v4555, %v4554
      %v4587 = vpack.c.bf16 %v4557, %v4556
      %v4588 = vpack.c.bf16 %v4559, %v4558
      %v4589 = vpack.c.bf16 %v4561, %v4560
      %v4590 = vpack.c.bf16 %v4563, %v4562
      %v4591 = vpack.c.bf16 %v4565, %v4564
      %v4592 = vpack.c.bf16 %v4567, %v4566
      %v4593 = vpack.c.bf16 %v4569, %v4568
      %v4594 = vpack.c.bf16 %v4571, %v4570
      %v4595 = vpack.c.bf16 %v4573, %v4572
      %v4596 = vpack.c.bf16 %v4575, %v4574
      %v4597 = vpack.c.bf16 %v4577, %v4576
      %v4598 = vpack.c.bf16 %v4579, %v4578
      %v4599 = vpack.c.bf16 %v4581, %v4580
      %v4600 = vpack.c.bf16 %v4583, %v4582
      %v4601 = vpack.c.bf16 %v4585, %v4584
      %s4602 = scalar_lea.vmem %s5, 64
      %v4603 = vld [vmem:[%s4602] sm:$0xf]
      %v4604 = vld [vmem:[%s4602 + $0x4] sm:$0xf]
      %v4605 = vld [vmem:[%s4602 + $0x8] sm:$0xf]
      %v4606 = vld [vmem:[%s4602 + $0xc] sm:$0xf]
      %v4607 = vld [vmem:[%s4602 + $0x10] sm:$0xf]
      %v4608 = vld [vmem:[%s4602 + $0x14] sm:$0xf]
      %v4609 = vld [vmem:[%s4602 + $0x18] sm:$0xf]
      %v4610 = vld [vmem:[%s4602 + $0x1c] sm:$0xf]
      %v4611 = vld [vmem:[%s4602 + $0x20] sm:$0xf]
      %v4612 = vld [vmem:[%s4602 + $0x24] sm:$0xf]
      %v4613 = vld [vmem:[%s4602 + $0x28] sm:$0xf]
      %v4614 = vld [vmem:[%s4602 + $0x2c] sm:$0xf]
      %v4615 = vld [vmem:[%s4602 + $0x30] sm:$0xf]
      %v4616 = vld [vmem:[%s4602 + $0x34] sm:$0xf]
      %v4617 = vld [vmem:[%s4602 + $0x38] sm:$0xf]
      %v4618 = vld [vmem:[%s4602 + $0x3c] sm:$0xf]
      %v4635 = vunpack.c.l.b16 %v4603
      %v4636 = vunpack.c.l.b16 %v4604
      %v4637 = vunpack.c.l.b16 %v4605
      %v4638 = vunpack.c.l.b16 %v4606
      %v4639 = vunpack.c.l.b16 %v4607
      %v4640 = vunpack.c.l.b16 %v4608
      %v4641 = vunpack.c.l.b16 %v4609
      %v4642 = vunpack.c.l.b16 %v4610
      %v4643 = vunpack.c.l.b16 %v4611
      %v4644 = vunpack.c.l.b16 %v4612
      %v4645 = vunpack.c.l.b16 %v4613
      %v4646 = vunpack.c.l.b16 %v4614
      %v4647 = vunpack.c.l.b16 %v4615
      %v4648 = vunpack.c.l.b16 %v4616
      %v4649 = vunpack.c.l.b16 %v4617
      %v4650 = vunpack.c.l.b16 %v4618
      %v4651 = vpack.c.b16 %v4636, %v4635
      %v4652 = vpack.c.b16 %v4638, %v4637
      %v4653 = vpack.c.b16 %v4640, %v4639
      %v4654 = vpack.c.b16 %v4642, %v4641
      %v4655 = vpack.c.b16 %v4644, %v4643
      %v4656 = vpack.c.b16 %v4646, %v4645
      %v4657 = vpack.c.b16 %v4648, %v4647
      %v4658 = vpack.c.b16 %v4650, %v4649
      %4667 = vmatprep.subr.bf16.mxu0 0
      %4668 = vmatpush1.bf16.msra.mxu0 %v4651
      %4669 = vmatprep.subr.bf16.mxu0 0
      %4670 = vmatpush1.bf16.msra.mxu0 %v4652
      %4671 = vmatprep.subr.bf16.mxu0 0
      %4672 = vmatpush1.bf16.msra.mxu0 %v4653
      %4673 = vmatprep.subr.bf16.mxu0 0
      %4674 = vmatpush1.bf16.msra.mxu0 %v4654
      %4675 = vmatprep.subr.bf16.mxu0 0
      %4676 = vmatpush1.bf16.msra.mxu0 %v4655
      %4677 = vmatprep.subr.bf16.mxu0 0
      %4678 = vmatpush1.bf16.msra.mxu0 %v4656
      %4679 = vmatprep.subr.bf16.mxu0 0
      %4680 = vmatpush1.bf16.msra.mxu0 %v4657
      %4681 = vmatprep.subr.bf16.mxu0 0
      %4682 = vmatpush1.bf16.msra.mxu0 %v4658
      %4683 = vmatprep.subr.bf16.mxu0 0
      %4684 = vmatpush1.bf16.msra.mxu0 0
      %4685 = vmatprep.subr.bf16.mxu0 0
      %4686 = vmatpush1.bf16.msra.mxu0 0
      %4687 = vmatprep.subr.bf16.mxu0 0
      %4688 = vmatpush1.bf16.msra.mxu0 0
      %4689 = vmatprep.subr.bf16.mxu0 0
      %4690 = vmatpush1.bf16.msra.mxu0 0
      %4691 = vmatprep.subr.bf16.mxu0 0
      %4692 = vmatpush1.bf16.msra.mxu0 0
      %4693 = vmatprep.subr.bf16.mxu0 0
      %4694 = vmatpush1.bf16.msra.mxu0 0
      %4695 = vmatprep.subr.bf16.mxu0 0
      %4696 = vmatpush1.bf16.msra.mxu0 0
      %4697 = vmatprep.subr.bf16.mxu0 0
      %4698 = vmatpush1.bf16.msra.mxu0 0
      %4699 = vmatprep.mubr.bf16.mxu0 0
      %4700 = vmatmul.mubr.bf16.gmra.mrb[0].mxu0 %v4586
      %v4701 = vpop.f32.mrb[0].mxu0
      %v4702 = vadd.f32 0.0, %v4701
      %v4703 = vpop.f32.mrb[0].mxu0
      %v4704 = vpop.f32.mrb[0].mxu0
      %v4705 = vadd.f32 0.0, %v4704
      %v4706 = vpop.f32.mrb[0].mxu0
      %4707 = vmatprep.mubr.bf16.mxu0 0
      %4708 = vmatmul.mubr.bf16.gmra.mrb[0].mxu0 %v4587
      %v4709 = vpop.f32.mrb[0].mxu0
      %v4710 = vadd.f32 0.0, %v4709
      %v4711 = vpop.f32.mrb[0].mxu0
      %v4712 = vpop.f32.mrb[0].mxu0
      %v4713 = vadd.f32 0.0, %v4712
      %v4714 = vpop.f32.mrb[0].mxu0
      %4715 = vmatprep.mubr.bf16.mxu0 0
      %4716 = vmatmul.mubr.bf16.gmra.mrb[0].mxu0 %v4588
      %v4717 = vpop.f32.mrb[0].mxu0
      %v4718 = vadd.f32 0.0, %v4717
      %v4719 = vpop.f32.mrb[0].mxu0
      %v4720 = vpop.f32.mrb[0].mxu0
      %v4721 = vadd.f32 0.0, %v4720
      %v4722 = vpop.f32.mrb[0].mxu0
      %4723 = vmatprep.mubr.bf16.mxu0 0
      %4724 = vmatmul.mubr.bf16.gmra.mrb[0].mxu0 %v4589
      %v4725 = vpop.f32.mrb[0].mxu0
      %v4726 = vadd.f32 0.0, %v4725
      %v4727 = vpop.f32.mrb[0].mxu0
      %v4728 = vpop.f32.mrb[0].mxu0
      %v4729 = vadd.f32 0.0, %v4728
      %v4730 = vpop.f32.mrb[0].mxu0
      %4731 = vmatprep.mubr.bf16.mxu0 0
      %4732 = vmatmul.mubr.bf16.gmra.mrb[0].mxu0 %v4590
      %v4733 = vpop.f32.mrb[0].mxu0
      %v4734 = vadd.f32 0.0, %v4733
      %v4735 = vpop.f32.mrb[0].mxu0
      %v4736 = vpop.f32.mrb[0].mxu0
      %v4737 = vadd.f32 0.0, %v4736
      %v4738 = vpop.f32.mrb[0].mxu0
      %4739 = vmatprep.mubr.bf16.mxu0 0
      %4740 = vmatmul.mubr.bf16.gmra.mrb[0].mxu0 %v4591
      %v4741 = vpop.f32.mrb[0].mxu0
      %v4742 = vadd.f32 0.0, %v4741
      %v4743 = vpop.f32.mrb[0].mxu0
      %v4744 = vpop.f32.mrb[0].mxu0
      %v4745 = vadd.f32 0.0, %v4744
      %v4746 = vpop.f32.mrb[0].mxu0
      %4747 = vmatprep.mubr.bf16.mxu0 0
      %4748 = vmatmul.mubr.bf16.gmra.mrb[0].mxu0 %v4592
      %v4749 = vpop.f32.mrb[0].mxu0
      %v4750 = vadd.f32 0.0, %v4749
      %v4751 = vpop.f32.mrb[0].mxu0
      %v4752 = vpop.f32.mrb[0].mxu0
      %v4753 = vadd.f32 0.0, %v4752
      %v4754 = vpop.f32.mrb[0].mxu0
      %4755 = vmatprep.mubr.bf16.mxu0 0
      %4756 = vmatmul.mubr.bf16.gmra.mrb[0].mxu0 %v4593
      %v4757 = vpop.f32.mrb[0].mxu0
      %v4758 = vadd.f32 0.0, %v4757
      %v4759 = vpop.f32.mrb[0].mxu0
      %v4760 = vpop.f32.mrb[0].mxu0
      %v4761 = vadd.f32 0.0, %v4760
      %v4762 = vpop.f32.mrb[0].mxu0
      %4763 = vmatprep.mubr.bf16.mxu0 0
      %4764 = vmatmul.mubr.bf16.gmra.mrb[0].mxu0 %v4594
      %v4765 = vpop.f32.mrb[0].mxu0
      %v4766 = vadd.f32 0.0, %v4765
      %v4767 = vpop.f32.mrb[0].mxu0
      %v4768 = vpop.f32.mrb[0].mxu0
      %v4769 = vadd.f32 0.0, %v4768
      %v4770 = vpop.f32.mrb[0].mxu0
      %4771 = vmatprep.mubr.bf16.mxu0 0
      %4772 = vmatmul.mubr.bf16.gmra.mrb[0].mxu0 %v4595
      %v4773 = vpop.f32.mrb[0].mxu0
      %v4774 = vadd.f32 0.0, %v4773
      %v4775 = vpop.f32.mrb[0].mxu0
      %v4776 = vpop.f32.mrb[0].mxu0
      %v4777 = vadd.f32 0.0, %v4776
      %v4778 = vpop.f32.mrb[0].mxu0
      %4779 = vmatprep.mubr.bf16.mxu0 0
      %4780 = vmatmul.mubr.bf16.gmra.mrb[0].mxu0 %v4596
      %v4781 = vpop.f32.mrb[0].mxu0
      %v4782 = vadd.f32 0.0, %v4781
      %v4783 = vpop.f32.mrb[0].mxu0
      %v4784 = vpop.f32.mrb[0].mxu0
      %v4785 = vadd.f32 0.0, %v4784
      %v4786 = vpop.f32.mrb[0].mxu0
      %4787 = vmatprep.mubr.bf16.mxu0 0
      %4788 = vmatmul.mubr.bf16.gmra.mrb[0].mxu0 %v4597
      %v4789 = vpop.f32.mrb[0].mxu0
      %v4790 = vadd.f32 0.0, %v4789
      %v4791 = vpop.f32.mrb[0].mxu0
      %v4792 = vpop.f32.mrb[0].mxu0
      %v4793 = vadd.f32 0.0, %v4792
      %v4794 = vpop.f32.mrb[0].mxu0
      %4795 = vmatprep.mubr.bf16.mxu0 0
      %4796 = vmatmul.mubr.bf16.gmra.mrb[0].mxu0 %v4598
      %v4797 = vpop.f32.mrb[0].mxu0
      %v4798 = vadd.f32 0.0, %v4797
      %v4799 = vpop.f32.mrb[0].mxu0
      %v4800 = vpop.f32.mrb[0].mxu0
      %v4801 = vadd.f32 0.0, %v4800
      %v4802 = vpop.f32.mrb[0].mxu0
      %4803 = vmatprep.mubr.bf16.mxu0 0
      %4804 = vmatmul.mubr.bf16.gmra.mrb[0].mxu0 %v4599
      %v4805 = vpop.f32.mrb[0].mxu0
      %v4806 = vadd.f32 0.0, %v4805
      %v4807 = vpop.f32.mrb[0].mxu0
      %v4808 = vpop.f32.mrb[0].mxu0
      %v4809 = vadd.f32 0.0, %v4808
      %v4810 = vpop.f32.mrb[0].mxu0
      %4811 = vmatprep.mubr.bf16.mxu0 0
      %4812 = vmatmul.mubr.bf16.gmra.mrb[0].mxu0 %v4600
      %v4813 = vpop.f32.mrb[0].mxu0
      %v4814 = vadd.f32 0.0, %v4813
      %v4815 = vpop.f32.mrb[0].mxu0
      %v4816 = vpop.f32.mrb[0].mxu0
      %v4817 = vadd.f32 0.0, %v4816
      %v4818 = vpop.f32.mrb[0].mxu0
      %4819 = vmatprep.mubr.bf16.mxu0 0
      %4820 = vmatmul.mubr.bf16.gmra.mrb[0].mxu0 %v4601
      %v4821 = vpop.f32.mrb[0].mxu0
      %v4822 = vadd.f32 0.0, %v4821
      %v4823 = vpop.f32.mrb[0].mxu0
      %v4824 = vpop.f32.mrb[0].mxu0
      %v4825 = vadd.f32 0.0, %v4824
      %v4826 = vpop.f32.mrb[0].mxu0
      %4827 = vdwg.mxu0
      %v4844 = vunpack.c.l.b16 %v4538
      %v4845 = vunpack.c.l.b16 %v4539
      %v4846 = vunpack.c.l.b16 %v4540
      %v4847 = vunpack.c.l.b16 %v4541
      %v4848 = vunpack.c.l.b16 %v4542
      %v4849 = vunpack.c.l.b16 %v4543
      %v4850 = vunpack.c.l.b16 %v4544
      %v4851 = vunpack.c.l.b16 %v4545
      %v4852 = vunpack.c.l.b16 %v4546
      %v4853 = vunpack.c.l.b16 %v4547
      %v4854 = vunpack.c.l.b16 %v4548
      %v4855 = vunpack.c.l.b16 %v4549
      %v4856 = vunpack.c.l.b16 %v4550
      %v4857 = vunpack.c.l.b16 %v4551
      %v4858 = vunpack.c.l.b16 %v4552
      %v4859 = vunpack.c.l.b16 %v4553
      %v4860 = vpack.c.b16 %v4845, %v4844
      %v4861 = vpack.c.b16 %v4847, %v4846
      %v4862 = vpack.c.b16 %v4849, %v4848
      %v4863 = vpack.c.b16 %v4851, %v4850
      %v4864 = vpack.c.b16 %v4853, %v4852
      %v4865 = vpack.c.b16 %v4855, %v4854
      %v4866 = vpack.c.b16 %v4857, %v4856
      %v4867 = vpack.c.b16 %v4859, %v4858
      %4876 = vmatprep.subr.bf16.mxu0 0
      %4877 = vmatpush1.bf16.msra.mxu0 %v4860
      %4878 = vmatprep.subr.bf16.mxu0 0
      %4879 = vmatpush1.bf16.msra.mxu0 %v4861
      %4880 = vmatprep.subr.bf16.mxu0 0
      %4881 = vmatpush1.bf16.msra.mxu0 %v4862
      %4882 = vmatprep.subr.bf16.mxu0 0
      %4883 = vmatpush1.bf16.msra.mxu0 %v4863
      %4884 = vmatprep.subr.bf16.mxu0 0
      %4885 = vmatpush1.bf16.msra.mxu0 %v4864
      %4886 = vmatprep.subr.bf16.mxu0 0
      %4887 = vmatpush1.bf16.msra.mxu0 %v4865
      %4888 = vmatprep.subr.bf16.mxu0 0
      %4889 = vmatpush1.bf16.msra.mxu0 %v4866
      %4890 = vmatprep.subr.bf16.mxu0 0
      %4891 = vmatpush1.bf16.msra.mxu0 %v4867
      %4892 = vmatprep.subr.bf16.mxu0 0
      %4893 = vmatpush1.bf16.msra.mxu0 0
      %4894 = vmatprep.subr.bf16.mxu0 0
      %4895 = vmatpush1.bf16.msra.mxu0 0
      %4896 = vmatprep.subr.bf16.mxu0 0
      %4897 = vmatpush1.bf16.msra.mxu0 0
      %4898 = vmatprep.subr.bf16.mxu0 0
      %4899 = vmatpush1.bf16.msra.mxu0 0
      %4900 = vmatprep.subr.bf16.mxu0 0
      %4901 = vmatpush1.bf16.msra.mxu0 0
      %4902 = vmatprep.subr.bf16.mxu0 0
      %4903 = vmatpush1.bf16.msra.mxu0 0
      %4904 = vmatprep.subr.bf16.mxu0 0
      %4905 = vmatpush1.bf16.msra.mxu0 0
      %4906 = vmatprep.subr.bf16.mxu0 0
      %4907 = vmatpush1.bf16.msra.mxu0 0
      %4908 = vmatprep.mubr.bf16.mxu0 0
      %4909 = vmatmul.mubr.bf16.gmra.mrb[0].mxu0 %v4522
      %v4910 = vpop.f32.mrb[0].mxu0
      %v4911 = vadd.f32 %v4702, %v4910
      %v4912 = vpop.f32.mrb[0].mxu0
      %v4913 = vpop.f32.mrb[0].mxu0
      %v4914 = vadd.f32 %v4705, %v4913
      %v4915 = vpop.f32.mrb[0].mxu0
      %4916 = vmatprep.mubr.bf16.mxu0 0
      %4917 = vmatmul.mubr.bf16.gmra.mrb[0].mxu0 %v4523
      %v4918 = vpop.f32.mrb[0].mxu0
      %v4919 = vadd.f32 %v4710, %v4918
      %v4920 = vpop.f32.mrb[0].mxu0
      %v4921 = vpop.f32.mrb[0].mxu0
      %v4922 = vadd.f32 %v4713, %v4921
      %v4923 = vpop.f32.mrb[0].mxu0
      %4924 = vmatprep.mubr.bf16.mxu0 0
      %4925 = vmatmul.mubr.bf16.gmra.mrb[0].mxu0 %v4524
      %v4926 = vpop.f32.mrb[0].mxu0
      %v4927 = vadd.f32 %v4718, %v4926
      %v4928 = vpop.f32.mrb[0].mxu0
      %v4929 = vpop.f32.mrb[0].mxu0
      %v4930 = vadd.f32 %v4721, %v4929
      %v4931 = vpop.f32.mrb[0].mxu0
      %4932 = vmatprep.mubr.bf16.mxu0 0
      %4933 = vmatmul.mubr.bf16.gmra.mrb[0].mxu0 %v4525
      %v4934 = vpop.f32.mrb[0].mxu0
      %v4935 = vadd.f32 %v4726, %v4934
      %v4936 = vpop.f32.mrb[0].mxu0
      %v4937 = vpop.f32.mrb[0].mxu0
      %v4938 = vadd.f32 %v4729, %v4937
      %v4939 = vpop.f32.mrb[0].mxu0
      %4940 = vmatprep.mubr.bf16.mxu0 0
      %4941 = vmatmul.mubr.bf16.gmra.mrb[0].mxu0 %v4526
      %v4942 = vpop.f32.mrb[0].mxu0
      %v4943 = vadd.f32 %v4734, %v4942
      %v4944 = vpop.f32.mrb[0].mxu0
      %v4945 = vpop.f32.mrb[0].mxu0
      %v4946 = vadd.f32 %v4737, %v4945
      %v4947 = vpop.f32.mrb[0].mxu0
      %4948 = vmatprep.mubr.bf16.mxu0 0
      %4949 = vmatmul.mubr.bf16.gmra.mrb[0].mxu0 %v4527
      %v4950 = vpop.f32.mrb[0].mxu0
      %v4951 = vadd.f32 %v4742, %v4950
      %v4952 = vpop.f32.mrb[0].mxu0
      %v4953 = vpop.f32.mrb[0].mxu0
      %v4954 = vadd.f32 %v4745, %v4953
      %v4955 = vpop.f32.mrb[0].mxu0
      %4956 = vmatprep.mubr.bf16.mxu0 0
      %4957 = vmatmul.mubr.bf16.gmra.mrb[0].mxu0 %v4528
      %v4958 = vpop.f32.mrb[0].mxu0
      %v4959 = vadd.f32 %v4750, %v4958
      %v4960 = vpop.f32.mrb[0].mxu0
      %v4961 = vpop.f32.mrb[0].mxu0
      %v4962 = vadd.f32 %v4753, %v4961
      %v4963 = vpop.f32.mrb[0].mxu0
      %4964 = vmatprep.mubr.bf16.mxu0 0
      %4965 = vmatmul.mubr.bf16.gmra.mrb[0].mxu0 %v4529
      %v4966 = vpop.f32.mrb[0].mxu0
      %v4967 = vadd.f32 %v4758, %v4966
      %v4968 = vpop.f32.mrb[0].mxu0
      %v4969 = vpop.f32.mrb[0].mxu0
      %v4970 = vadd.f32 %v4761, %v4969
      %v4971 = vpop.f32.mrb[0].mxu0
      %4972 = vmatprep.mubr.bf16.mxu0 0
      %4973 = vmatmul.mubr.bf16.gmra.mrb[0].mxu0 %v4530
      %v4974 = vpop.f32.mrb[0].mxu0
      %v4975 = vadd.f32 %v4766, %v4974
      %v4976 = vpop.f32.mrb[0].mxu0
      %v4977 = vpop.f32.mrb[0].mxu0
      %v4978 = vadd.f32 %v4769, %v4977
      %v4979 = vpop.f32.mrb[0].mxu0
      %4980 = vmatprep.mubr.bf16.mxu0 0
      %4981 = vmatmul.mubr.bf16.gmra.mrb[0].mxu0 %v4531
      %v4982 = vpop.f32.mrb[0].mxu0
      %v4983 = vadd.f32 %v4774, %v4982
      %v4984 = vpop.f32.mrb[0].mxu0
      %v4985 = vpop.f32.mrb[0].mxu0
      %v4986 = vadd.f32 %v4777, %v4985
      %v4987 = vpop.f32.mrb[0].mxu0
      %4988 = vmatprep.mubr.bf16.mxu0 0
      %4989 = vmatmul.mubr.bf16.gmra.mrb[0].mxu0 %v4532
      %v4990 = vpop.f32.mrb[0].mxu0
      %v4991 = vadd.f32 %v4782, %v4990
      %v4992 = vpop.f32.mrb[0].mxu0
      %v4993 = vpop.f32.mrb[0].mxu0
      %v4994 = vadd.f32 %v4785, %v4993
      %v4995 = vpop.f32.mrb[0].mxu0
      %4996 = vmatprep.mubr.bf16.mxu0 0
      %4997 = vmatmul.mubr.bf16.gmra.mrb[0].mxu0 %v4533
      %v4998 = vpop.f32.mrb[0].mxu0
      %v4999 = vadd.f32 %v4790, %v4998
      %v5000 = vpop.f32.mrb[0].mxu0
      %v5001 = vpop.f32.mrb[0].mxu0
      %v5002 = vadd.f32 %v4793, %v5001
      %v5003 = vpop.f32.mrb[0].mxu0
      %5004 = vmatprep.mubr.bf16.mxu0 0
      %5005 = vmatmul.mubr.bf16.gmra.mrb[0].mxu0 %v4534
      %v5006 = vpop.f32.mrb[0].mxu0
      %v5007 = vadd.f32 %v4798, %v5006
      %v5008 = vpop.f32.mrb[0].mxu0
      %v5009 = vpop.f32.mrb[0].mxu0
      %v5010 = vadd.f32 %v4801, %v5009
      %v5011 = vpop.f32.mrb[0].mxu0
      %5012 = vmatprep.mubr.bf16.mxu0 0
      %5013 = vmatmul.mubr.bf16.gmra.mrb[0].mxu0 %v4535
      %v5014 = vpop.f32.mrb[0].mxu0
      %v5015 = vadd.f32 %v4806, %v5014
      %v5016 = vpop.f32.mrb[0].mxu0
      %v5017 = vpop.f32.mrb[0].mxu0
      %v5018 = vadd.f32 %v4809, %v5017
      %v5019 = vpop.f32.mrb[0].mxu0
      %5020 = vmatprep.mubr.bf16.mxu0 0
      %5021 = vmatmul.mubr.bf16.gmra.mrb[0].mxu0 %v4536
      %v5022 = vpop.f32.mrb[0].mxu0
      %v5023 = vadd.f32 %v4814, %v5022
      %v5024 = vpop.f32.mrb[0].mxu0
      %v5025 = vpop.f32.mrb[0].mxu0
      %v5026 = vadd.f32 %v4817, %v5025
      %v5027 = vpop.f32.mrb[0].mxu0
      %5028 = vmatprep.mubr.bf16.mxu0 0
      %5029 = vmatmul.mubr.bf16.gmra.mrb[0].mxu0 %v4537
      %v5030 = vpop.f32.mrb[0].mxu0
      %v5031 = vadd.f32 %v4822, %v5030
      %v5032 = vpop.f32.mrb[0].mxu0
      %v5033 = vpop.f32.mrb[0].mxu0
      %v5034 = vadd.f32 %v4825, %v5033
      %v5035 = vpop.f32.mrb[0].mxu0
      %5036 = vdwg.mxu0
      %v5037 = vld [vmem:[#allocation3 + $0x9] sm:$0xff]
      %v5038 = vld [vmem:[#allocation3 + $0x11] sm:$0xff]
      %v5039 = vld [vmem:[#allocation3 + $0x19] sm:$0xff]
      %v5040 = vld [vmem:[#allocation3 + $0x21] sm:$0xff]
      %v5041 = vld [vmem:[#allocation3 + $0x29] sm:$0xff]
      %v5042 = vld [vmem:[#allocation3 + $0x31] sm:$0xff]
      %v5043 = vld [vmem:[#allocation3 + $0x39] sm:$0xff]
      %v5044 = vld [vmem:[#allocation3 + $0x41] sm:$0xff]
      %v5045 = vld [vmem:[#allocation3 + $0x49] sm:$0xff]
      %v5046 = vld [vmem:[#allocation3 + $0x51] sm:$0xff]
      %v5047 = vld [vmem:[#allocation3 + $0x59] sm:$0xff]
      %v5048 = vld [vmem:[#allocation3 + $0x61] sm:$0xff]
      %v5049 = vld [vmem:[#allocation3 + $0x69] sm:$0xff]
      %v5050 = vld [vmem:[#allocation3 + $0x71] sm:$0xff]
      %v5051 = vld [vmem:[#allocation3 + $0x79] sm:$0xff]
      %v5052 = vld [vmem:[#allocation3 + $0x81] sm:$0xff]
      %v5053 = vld [vmem:[#allocation3 + $0x89] sm:$0xff]
      %v5054 = vld [vmem:[#allocation3 + $0x91] sm:$0xff]
      %v5055 = vld [vmem:[#allocation3 + $0x99] sm:$0xff]
      %v5056 = vld [vmem:[#allocation3 + $0xa1] sm:$0xff]
      %v5057 = vld [vmem:[#allocation3 + $0xa9] sm:$0xff]
      %v5058 = vld [vmem:[#allocation3 + $0xb1] sm:$0xff]
      %v5059 = vld [vmem:[#allocation3 + $0xb9] sm:$0xff]
      %v5060 = vld [vmem:[#allocation3 + $0xc1] sm:$0xff]
      %v5061 = vld [vmem:[#allocation3 + $0xc9] sm:$0xff]
      %v5062 = vld [vmem:[#allocation3 + $0xd1] sm:$0xff]
      %v5063 = vld [vmem:[#allocation3 + $0xd9] sm:$0xff]
      %v5064 = vld [vmem:[#allocation3 + $0xe1] sm:$0xff]
      %v5065 = vld [vmem:[#allocation3 + $0xe9] sm:$0xff]
      %v5066 = vld [vmem:[#allocation3 + $0xf1] sm:$0xff]
      %v5067 = vld [vmem:[#allocation3 + $0xf9] sm:$0xff]
      %v5068 = vld [vmem:[#allocation3 + $0x101] sm:$0xff]
      %v5069 = vsel %vm1983, %v5037, 0.0
      %v5070 = vsel %vm1984, %v5038, 0.0
      %v5071 = vsel %vm1985, %v5039, 0.0
      %v5072 = vsel %vm1986, %v5040, 0.0
      %v5073 = vsel %vm1987, %v5041, 0.0
      %v5074 = vsel %vm1988, %v5042, 0.0
      %v5075 = vsel %vm1989, %v5043, 0.0
      %v5076 = vsel %vm1990, %v5044, 0.0
      %v5077 = vsel %vm1991, %v5045, 0.0
      %v5078 = vsel %vm1992, %v5046, 0.0
      %v5079 = vsel %vm1993, %v5047, 0.0
      %v5080 = vsel %vm1994, %v5048, 0.0
      %v5081 = vsel %vm1995, %v5049, 0.0
      %v5082 = vsel %vm1996, %v5050, 0.0
      %v5083 = vsel %vm1997, %v5051, 0.0
      %v5084 = vsel %vm1998, %v5052, 0.0
      %v5085 = vsel %vm1999, %v5053, 0.0
      %v5086 = vsel %vm2000, %v5054, 0.0
      %v5087 = vsel %vm2001, %v5055, 0.0
      %v5088 = vsel %vm2002, %v5056, 0.0
      %v5089 = vsel %vm2003, %v5057, 0.0
      %v5090 = vsel %vm2004, %v5058, 0.0
      %v5091 = vsel %vm2005, %v5059, 0.0
      %v5092 = vsel %vm2006, %v5060, 0.0
      %v5093 = vsel %vm2007, %v5061, 0.0
      %v5094 = vsel %vm2008, %v5062, 0.0
      %v5095 = vsel %vm2009, %v5063, 0.0
      %v5096 = vsel %vm2010, %v5064, 0.0
      %v5097 = vsel %vm2011, %v5065, 0.0
      %v5098 = vsel %vm2012, %v5066, 0.0
      %v5099 = vsel %vm2013, %v5067, 0.0
      %v5100 = vsel %vm2014, %v5068, 0.0
      %v5101 = vpack.c.bf16 %v5070, %v5069
      %v5102 = vpack.c.bf16 %v5072, %v5071
      %v5103 = vpack.c.bf16 %v5074, %v5073
      %v5104 = vpack.c.bf16 %v5076, %v5075
      %v5105 = vpack.c.bf16 %v5078, %v5077
      %v5106 = vpack.c.bf16 %v5080, %v5079
      %v5107 = vpack.c.bf16 %v5082, %v5081
      %v5108 = vpack.c.bf16 %v5084, %v5083
      %v5109 = vpack.c.bf16 %v5086, %v5085
      %v5110 = vpack.c.bf16 %v5088, %v5087
      %v5111 = vpack.c.bf16 %v5090, %v5089
      %v5112 = vpack.c.bf16 %v5092, %v5091
      %v5113 = vpack.c.bf16 %v5094, %v5093
      %v5114 = vpack.c.bf16 %v5096, %v5095
      %v5115 = vpack.c.bf16 %v5098, %v5097
      %v5116 = vpack.c.bf16 %v5100, %v5099
      %s5117 = scalar_lea.vmem %s5, 128
      %v5118 = vld [vmem:[%s5117] sm:$0xf]
      %v5119 = vld [vmem:[%s5117 + $0x4] sm:$0xf]
      %v5120 = vld [vmem:[%s5117 + $0x8] sm:$0xf]
      %v5121 = vld [vmem:[%s5117 + $0xc] sm:$0xf]
      %v5122 = vld [vmem:[%s5117 + $0x10] sm:$0xf]
      %v5123 = vld [vmem:[%s5117 + $0x14] sm:$0xf]
      %v5124 = vld [vmem:[%s5117 + $0x18] sm:$0xf]
      %v5125 = vld [vmem:[%s5117 + $0x1c] sm:$0xf]
      %v5126 = vld [vmem:[%s5117 + $0x20] sm:$0xf]
      %v5127 = vld [vmem:[%s5117 + $0x24] sm:$0xf]
      %v5128 = vld [vmem:[%s5117 + $0x28] sm:$0xf]
      %v5129 = vld [vmem:[%s5117 + $0x2c] sm:$0xf]
      %v5130 = vld [vmem:[%s5117 + $0x30] sm:$0xf]
      %v5131 = vld [vmem:[%s5117 + $0x34] sm:$0xf]
      %v5132 = vld [vmem:[%s5117 + $0x38] sm:$0xf]
      %v5133 = vld [vmem:[%s5117 + $0x3c] sm:$0xf]
      %v5150 = vunpack.c.l.b16 %v5118
      %v5151 = vunpack.c.l.b16 %v5119
      %v5152 = vunpack.c.l.b16 %v5120
      %v5153 = vunpack.c.l.b16 %v5121
      %v5154 = vunpack.c.l.b16 %v5122
      %v5155 = vunpack.c.l.b16 %v5123
      %v5156 = vunpack.c.l.b16 %v5124
      %v5157 = vunpack.c.l.b16 %v5125
      %v5158 = vunpack.c.l.b16 %v5126
      %v5159 = vunpack.c.l.b16 %v5127
      %v5160 = vunpack.c.l.b16 %v5128
      %v5161 = vunpack.c.l.b16 %v5129
      %v5162 = vunpack.c.l.b16 %v5130
      %v5163 = vunpack.c.l.b16 %v5131
      %v5164 = vunpack.c.l.b16 %v5132
      %v5165 = vunpack.c.l.b16 %v5133
      %v5166 = vpack.c.b16 %v5151, %v5150
      %v5167 = vpack.c.b16 %v5153, %v5152
      %v5168 = vpack.c.b16 %v5155, %v5154
      %v5169 = vpack.c.b16 %v5157, %v5156
      %v5170 = vpack.c.b16 %v5159, %v5158
      %v5171 = vpack.c.b16 %v5161, %v5160
      %v5172 = vpack.c.b16 %v5163, %v5162
      %v5173 = vpack.c.b16 %v5165, %v5164
      %5182 = vmatprep.subr.bf16.mxu0 0
      %5183 = vmatpush1.bf16.msra.mxu0 %v5166
      %5184 = vmatprep.subr.bf16.mxu0 0
      %5185 = vmatpush1.bf16.msra.mxu0 %v5167
      %5186 = vmatprep.subr.bf16.mxu0 0
      %5187 = vmatpush1.bf16.msra.mxu0 %v5168
      %5188 = vmatprep.subr.bf16.mxu0 0
      %5189 = vmatpush1.bf16.msra.mxu0 %v5169
      %5190 = vmatprep.subr.bf16.mxu0 0
      %5191 = vmatpush1.bf16.msra.mxu0 %v5170
      %5192 = vmatprep.subr.bf16.mxu0 0
      %5193 = vmatpush1.bf16.msra.mxu0 %v5171
      %5194 = vmatprep.subr.bf16.mxu0 0
      %5195 = vmatpush1.bf16.msra.mxu0 %v5172
      %5196 = vmatprep.subr.bf16.mxu0 0
      %5197 = vmatpush1.bf16.msra.mxu0 %v5173
      %5198 = vmatprep.subr.bf16.mxu0 0
      %5199 = vmatpush1.bf16.msra.mxu0 0
      %5200 = vmatprep.subr.bf16.mxu0 0
      %5201 = vmatpush1.bf16.msra.mxu0 0
      %5202 = vmatprep.subr.bf16.mxu0 0
      %5203 = vmatpush1.bf16.msra.mxu0 0
      %5204 = vmatprep.subr.bf16.mxu0 0
      %5205 = vmatpush1.bf16.msra.mxu0 0
      %5206 = vmatprep.subr.bf16.mxu0 0
      %5207 = vmatpush1.bf16.msra.mxu0 0
      %5208 = vmatprep.subr.bf16.mxu0 0
      %5209 = vmatpush1.bf16.msra.mxu0 0
      %5210 = vmatprep.subr.bf16.mxu0 0
      %5211 = vmatpush1.bf16.msra.mxu0 0
      %5212 = vmatprep.subr.bf16.mxu0 0
      %5213 = vmatpush1.bf16.msra.mxu0 0
      %5214 = vmatprep.mubr.bf16.mxu0 0
      %5215 = vmatmul.mubr.bf16.gmra.mrb[0].mxu0 %v5101
      %v5216 = vpop.f32.mrb[0].mxu0
      %v5217 = vadd.f32 0.0, %v5216
      %v5218 = vpop.f32.mrb[0].mxu0
      %v5219 = vpop.f32.mrb[0].mxu0
      %v5220 = vadd.f32 0.0, %v5219
      %v5221 = vpop.f32.mrb[0].mxu0
      %5222 = vmatprep.mubr.bf16.mxu0 0
      %5223 = vmatmul.mubr.bf16.gmra.mrb[0].mxu0 %v5102
      %v5224 = vpop.f32.mrb[0].mxu0
      %v5225 = vadd.f32 0.0, %v5224
      %v5226 = vpop.f32.mrb[0].mxu0
      %v5227 = vpop.f32.mrb[0].mxu0
      %v5228 = vadd.f32 0.0, %v5227
      %v5229 = vpop.f32.mrb[0].mxu0
      %5230 = vmatprep.mubr.bf16.mxu0 0
      %5231 = vmatmul.mubr.bf16.gmra.mrb[0].mxu0 %v5103
      %v5232 = vpop.f32.mrb[0].mxu0
      %v5233 = vadd.f32 0.0, %v5232
      %v5234 = vpop.f32.mrb[0].mxu0
      %v5235 = vpop.f32.mrb[0].mxu0
      %v5236 = vadd.f32 0.0, %v5235
      %v5237 = vpop.f32.mrb[0].mxu0
      %5238 = vmatprep.mubr.bf16.mxu0 0
      %5239 = vmatmul.mubr.bf16.gmra.mrb[0].mxu0 %v5104
      %v5240 = vpop.f32.mrb[0].mxu0
      %v5241 = vadd.f32 0.0, %v5240
      %v5242 = vpop.f32.mrb[0].mxu0
      %v5243 = vpop.f32.mrb[0].mxu0
      %v5244 = vadd.f32 0.0, %v5243
      %v5245 = vpop.f32.mrb[0].mxu0
      %5246 = vmatprep.mubr.bf16.mxu0 0
      %5247 = vmatmul.mubr.bf16.gmra.mrb[0].mxu0 %v5105
      %v5248 = vpop.f32.mrb[0].mxu0
      %v5249 = vadd.f32 0.0, %v5248
      %v5250 = vpop.f32.mrb[0].mxu0
      %v5251 = vpop.f32.mrb[0].mxu0
      %v5252 = vadd.f32 0.0, %v5251
      %v5253 = vpop.f32.mrb[0].mxu0
      %5254 = vmatprep.mubr.bf16.mxu0 0
      %5255 = vmatmul.mubr.bf16.gmra.mrb[0].mxu0 %v5106
      %v5256 = vpop.f32.mrb[0].mxu0
      %v5257 = vadd.f32 0.0, %v5256
      %v5258 = vpop.f32.mrb[0].mxu0
      %v5259 = vpop.f32.mrb[0].mxu0
      %v5260 = vadd.f32 0.0, %v5259
      %v5261 = vpop.f32.mrb[0].mxu0
      %5262 = vmatprep.mubr.bf16.mxu0 0
      %5263 = vmatmul.mubr.bf16.gmra.mrb[0].mxu0 %v5107
      %v5264 = vpop.f32.mrb[0].mxu0
      %v5265 = vadd.f32 0.0, %v5264
      %v5266 = vpop.f32.mrb[0].mxu0
      %v5267 = vpop.f32.mrb[0].mxu0
      %v5268 = vadd.f32 0.0, %v5267
      %v5269 = vpop.f32.mrb[0].mxu0
      %5270 = vmatprep.mubr.bf16.mxu0 0
      %5271 = vmatmul.mubr.bf16.gmra.mrb[0].mxu0 %v5108
      %v5272 = vpop.f32.mrb[0].mxu0
      %v5273 = vadd.f32 0.0, %v5272
      %v5274 = vpop.f32.mrb[0].mxu0
      %v5275 = vpop.f32.mrb[0].mxu0
      %v5276 = vadd.f32 0.0, %v5275
      %v5277 = vpop.f32.mrb[0].mxu0
      %5278 = vmatprep.mubr.bf16.mxu0 0
      %5279 = vmatmul.mubr.bf16.gmra.mrb[0].mxu0 %v5109
      %v5280 = vpop.f32.mrb[0].mxu0
      %v5281 = vadd.f32 0.0, %v5280
      %v5282 = vpop.f32.mrb[0].mxu0
      %v5283 = vpop.f32.mrb[0].mxu0
      %v5284 = vadd.f32 0.0, %v5283
      %v5285 = vpop.f32.mrb[0].mxu0
      %5286 = vmatprep.mubr.bf16.mxu0 0
      %5287 = vmatmul.mubr.bf16.gmra.mrb[0].mxu0 %v5110
      %v5288 = vpop.f32.mrb[0].mxu0
      %v5289 = vadd.f32 0.0, %v5288
      %v5290 = vpop.f32.mrb[0].mxu0
      %v5291 = vpop.f32.mrb[0].mxu0
      %v5292 = vadd.f32 0.0, %v5291
      %v5293 = vpop.f32.mrb[0].mxu0
      %5294 = vmatprep.mubr.bf16.mxu0 0
      %5295 = vmatmul.mubr.bf16.gmra.mrb[0].mxu0 %v5111
      %v5296 = vpop.f32.mrb[0].mxu0
      %v5297 = vadd.f32 0.0, %v5296
      %v5298 = vpop.f32.mrb[0].mxu0
      %v5299 = vpop.f32.mrb[0].mxu0
      %v5300 = vadd.f32 0.0, %v5299
      %v5301 = vpop.f32.mrb[0].mxu0
      %5302 = vmatprep.mubr.bf16.mxu0 0
      %5303 = vmatmul.mubr.bf16.gmra.mrb[0].mxu0 %v5112
      %v5304 = vpop.f32.mrb[0].mxu0
      %v5305 = vadd.f32 0.0, %v5304
      %v5306 = vpop.f32.mrb[0].mxu0
      %v5307 = vpop.f32.mrb[0].mxu0
      %v5308 = vadd.f32 0.0, %v5307
      %v5309 = vpop.f32.mrb[0].mxu0
      %5310 = vmatprep.mubr.bf16.mxu0 0
      %5311 = vmatmul.mubr.bf16.gmra.mrb[0].mxu0 %v5113
      %v5312 = vpop.f32.mrb[0].mxu0
      %v5313 = vadd.f32 0.0, %v5312
      %v5314 = vpop.f32.mrb[0].mxu0
      %v5315 = vpop.f32.mrb[0].mxu0
      %v5316 = vadd.f32 0.0, %v5315
      %v5317 = vpop.f32.mrb[0].mxu0
      %5318 = vmatprep.mubr.bf16.mxu0 0
      %5319 = vmatmul.mubr.bf16.gmra.mrb[0].mxu0 %v5114
      %v5320 = vpop.f32.mrb[0].mxu0
      %v5321 = vadd.f32 0.0, %v5320
      %v5322 = vpop.f32.mrb[0].mxu0
      %v5323 = vpop.f32.mrb[0].mxu0
      %v5324 = vadd.f32 0.0, %v5323
      %v5325 = vpop.f32.mrb[0].mxu0
      %5326 = vmatprep.mubr.bf16.mxu0 0
      %5327 = vmatmul.mubr.bf16.gmra.mrb[0].mxu0 %v5115
      %v5328 = vpop.f32.mrb[0].mxu0
      %v5329 = vadd.f32 0.0, %v5328
      %v5330 = vpop.f32.mrb[0].mxu0
      %v5331 = vpop.f32.mrb[0].mxu0
      %v5332 = vadd.f32 0.0, %v5331
      %v5333 = vpop.f32.mrb[0].mxu0
      %5334 = vmatprep.mubr.bf16.mxu0 0
      %5335 = vmatmul.mubr.bf16.gmra.mrb[0].mxu0 %v5116
      %v5336 = vpop.f32.mrb[0].mxu0
      %v5337 = vadd.f32 0.0, %v5336
      %v5338 = vpop.f32.mrb[0].mxu0
      %v5339 = vpop.f32.mrb[0].mxu0
      %v5340 = vadd.f32 0.0, %v5339
      %v5341 = vpop.f32.mrb[0].mxu0
      %5342 = vdwg.mxu0
      %v5343 = vadd.f32 %v4911, %v5217
      %v5344 = vadd.f32 %v4914, %v5220
      %v5345 = vadd.f32 %v4919, %v5225
      %v5346 = vadd.f32 %v4922, %v5228
      %v5347 = vadd.f32 %v4927, %v5233
      %v5348 = vadd.f32 %v4930, %v5236
      %v5349 = vadd.f32 %v4935, %v5241
      %v5350 = vadd.f32 %v4938, %v5244
      %v5351 = vadd.f32 %v4943, %v5249
      %v5352 = vadd.f32 %v4946, %v5252
      %v5353 = vadd.f32 %v4951, %v5257
      %v5354 = vadd.f32 %v4954, %v5260
      %v5355 = vadd.f32 %v4959, %v5265
      %v5356 = vadd.f32 %v4962, %v5268
      %v5357 = vadd.f32 %v4967, %v5273
      %v5358 = vadd.f32 %v4970, %v5276
      %v5359 = vadd.f32 %v4975, %v5281
      %v5360 = vadd.f32 %v4978, %v5284
      %v5361 = vadd.f32 %v4983, %v5289
      %v5362 = vadd.f32 %v4986, %v5292
      %v5363 = vadd.f32 %v4991, %v5297
      %v5364 = vadd.f32 %v4994, %v5300
      %v5365 = vadd.f32 %v4999, %v5305
      %v5366 = vadd.f32 %v5002, %v5308
      %v5367 = vadd.f32 %v5007, %v5313
      %v5368 = vadd.f32 %v5010, %v5316
      %v5369 = vadd.f32 %v5015, %v5321
      %v5370 = vadd.f32 %v5018, %v5324
      %v5371 = vadd.f32 %v5023, %v5329
      %v5372 = vadd.f32 %v5026, %v5332
      %v5373 = vadd.f32 %v5031, %v5337
      %v5374 = vadd.f32 %v5034, %v5340
      %v5375 = vld [vmem:[#allocation3 + $0x17] sm:$0xff]
      %v5376 = vld [vmem:[#allocation3 + $0x1f] sm:$0xff]
      %v5377 = vld [vmem:[#allocation3 + $0x27] sm:$0xff]
      %v5378 = vld [vmem:[#allocation3 + $0x2f] sm:$0xff]
      %v5379 = vld [vmem:[#allocation3 + $0x37] sm:$0xff]
      %v5380 = vld [vmem:[#allocation3 + $0x3f] sm:$0xff]
      %v5381 = vld [vmem:[#allocation3 + $0x47] sm:$0xff]
      %v5382 = vld [vmem:[#allocation3 + $0x4f] sm:$0xff]
      %v5383 = vld [vmem:[#allocation3 + $0x57] sm:$0xff]
      %v5384 = vld [vmem:[#allocation3 + $0x5f] sm:$0xff]
      %v5385 = vld [vmem:[#allocation3 + $0x67] sm:$0xff]
      %v5386 = vld [vmem:[#allocation3 + $0x6f] sm:$0xff]
      %v5387 = vld [vmem:[#allocation3 + $0x77] sm:$0xff]
      %v5388 = vld [vmem:[#allocation3 + $0x7f] sm:$0xff]
      %v5389 = vld [vmem:[#allocation3 + $0x87] sm:$0xff]
      %v5390 = vld [vmem:[#allocation3 + $0x8f] sm:$0xff]
      %v5391 = vld [vmem:[#allocation3 + $0x97] sm:$0xff]
      %v5392 = vld [vmem:[#allocation3 + $0x9f] sm:$0xff]
      %v5393 = vld [vmem:[#allocation3 + $0xa7] sm:$0xff]
      %v5394 = vld [vmem:[#allocation3 + $0xaf] sm:$0xff]
      %v5395 = vld [vmem:[#allocation3 + $0xb7] sm:$0xff]
      %v5396 = vld [vmem:[#allocation3 + $0xbf] sm:$0xff]
      %v5397 = vld [vmem:[#allocation3 + $0xc7] sm:$0xff]
      %v5398 = vld [vmem:[#allocation3 + $0xcf] sm:$0xff]
      %v5399 = vld [vmem:[#allocation3 + $0xd7] sm:$0xff]
      %v5400 = vld [vmem:[#allocation3 + $0xdf] sm:$0xff]
      %v5401 = vld [vmem:[#allocation3 + $0xe7] sm:$0xff]
      %v5402 = vld [vmem:[#allocation3 + $0xef] sm:$0xff]
      %v5403 = vld [vmem:[#allocation3 + $0xf7] sm:$0xff]
      %v5404 = vld [vmem:[#allocation3 + $0xff] sm:$0xff]
      %v5405 = vld [vmem:[#allocation3 + $0x107] sm:$0xff]
      %v5406 = vld [vmem:[#allocation3 + $0x10f] sm:$0xff]
      %v5407 = vsel %vm1340, %v5375, 0.0
      %v5408 = vsel %vm1341, %v5376, 0.0
      %v5409 = vsel %vm1342, %v5377, 0.0
      %v5410 = vsel %vm1343, %v5378, 0.0
      %v5411 = vsel %vm1344, %v5379, 0.0
      %v5412 = vsel %vm1345, %v5380, 0.0
      %v5413 = vsel %vm1346, %v5381, 0.0
      %v5414 = vsel %vm1347, %v5382, 0.0
      %v5415 = vsel %vm1348, %v5383, 0.0
      %v5416 = vsel %vm1349, %v5384, 0.0
      %v5417 = vsel %vm1350, %v5385, 0.0
      %v5418 = vsel %vm1351, %v5386, 0.0
      %v5419 = vsel %vm1352, %v5387, 0.0
      %v5420 = vsel %vm1353, %v5388, 0.0
      %v5421 = vsel %vm1354, %v5389, 0.0
      %v5422 = vsel %vm1355, %v5390, 0.0
      %v5423 = vsel %vm1356, %v5391, 0.0
      %v5424 = vsel %vm1357, %v5392, 0.0
      %v5425 = vsel %vm1358, %v5393, 0.0
      %v5426 = vsel %vm1359, %v5394, 0.0
      %v5427 = vsel %vm1360, %v5395, 0.0
      %v5428 = vsel %vm1361, %v5396, 0.0
      %v5429 = vsel %vm1362, %v5397, 0.0
      %v5430 = vsel %vm1363, %v5398, 0.0
      %v5431 = vsel %vm1364, %v5399, 0.0
      %v5432 = vsel %vm1365, %v5400, 0.0
      %v5433 = vsel %vm1366, %v5401, 0.0
      %v5434 = vsel %vm1367, %v5402, 0.0
      %v5435 = vsel %vm1368, %v5403, 0.0
      %v5436 = vsel %vm1369, %v5404, 0.0
      %v5437 = vsel %vm1370, %v5405, 0.0
      %v5438 = vsel %vm1371, %v5406, 0.0
      %v5439 = vpack.c.bf16 %v5408, %v5407
      %v5440 = vpack.c.bf16 %v5410, %v5409
      %v5441 = vpack.c.bf16 %v5412, %v5411
      %v5442 = vpack.c.bf16 %v5414, %v5413
      %v5443 = vpack.c.bf16 %v5416, %v5415
      %v5444 = vpack.c.bf16 %v5418, %v5417
      %v5445 = vpack.c.bf16 %v5420, %v5419
      %v5446 = vpack.c.bf16 %v5422, %v5421
      %v5447 = vpack.c.bf16 %v5424, %v5423
      %v5448 = vpack.c.bf16 %v5426, %v5425
      %v5449 = vpack.c.bf16 %v5428, %v5427
      %v5450 = vpack.c.bf16 %v5430, %v5429
      %v5451 = vpack.c.bf16 %v5432, %v5431
      %v5452 = vpack.c.bf16 %v5434, %v5433
      %v5453 = vpack.c.bf16 %v5436, %v5435
      %v5454 = vpack.c.bf16 %v5438, %v5437
      %s5455 = scalar_lea.vmem %s5, 192
      %v5456 = vld [vmem:[%s5455] sm:$0xf]
      %v5457 = vld [vmem:[%s5455 + $0x4] sm:$0xf]
      %v5458 = vld [vmem:[%s5455 + $0x8] sm:$0xf]
      %v5459 = vld [vmem:[%s5455 + $0xc] sm:$0xf]
      %v5460 = vld [vmem:[%s5455 + $0x10] sm:$0xf]
      %v5461 = vld [vmem:[%s5455 + $0x14] sm:$0xf]
      %v5462 = vld [vmem:[%s5455 + $0x18] sm:$0xf]
      %v5463 = vld [vmem:[%s5455 + $0x1c] sm:$0xf]
      %v5464 = vld [vmem:[%s5455 + $0x20] sm:$0xf]
      %v5465 = vld [vmem:[%s5455 + $0x24] sm:$0xf]
      %v5466 = vld [vmem:[%s5455 + $0x28] sm:$0xf]
      %v5467 = vld [vmem:[%s5455 + $0x2c] sm:$0xf]
      %v5468 = vld [vmem:[%s5455 + $0x30] sm:$0xf]
      %v5469 = vld [vmem:[%s5455 + $0x34] sm:$0xf]
      %v5470 = vld [vmem:[%s5455 + $0x38] sm:$0xf]
      %v5471 = vld [vmem:[%s5455 + $0x3c] sm:$0xf]
      %v5488 = vunpack.c.l.b16 %v5456
      %v5489 = vunpack.c.l.b16 %v5457
      %v5490 = vunpack.c.l.b16 %v5458
      %v5491 = vunpack.c.l.b16 %v5459
      %v5492 = vunpack.c.l.b16 %v5460
      %v5493 = vunpack.c.l.b16 %v5461
      %v5494 = vunpack.c.l.b16 %v5462
      %v5495 = vunpack.c.l.b16 %v5463
      %v5496 = vunpack.c.l.b16 %v5464
      %v5497 = vunpack.c.l.b16 %v5465
      %v5498 = vunpack.c.l.b16 %v5466
      %v5499 = vunpack.c.l.b16 %v5467
      %v5500 = vunpack.c.l.b16 %v5468
      %v5501 = vunpack.c.l.b16 %v5469
      %v5502 = vunpack.c.l.b16 %v5470
      %v5503 = vunpack.c.l.b16 %v5471
      %v5504 = vpack.c.b16 %v5489, %v5488
      %v5505 = vpack.c.b16 %v5491, %v5490
      %v5506 = vpack.c.b16 %v5493, %v5492
      %v5507 = vpack.c.b16 %v5495, %v5494
      %v5508 = vpack.c.b16 %v5497, %v5496
      %v5509 = vpack.c.b16 %v5499, %v5498
      %v5510 = vpack.c.b16 %v5501, %v5500
      %v5511 = vpack.c.b16 %v5503, %v5502
      %5520 = vmatprep.subr.bf16.mxu0 0
      %5521 = vmatpush1.bf16.msra.mxu0 %v5504
      %5522 = vmatprep.subr.bf16.mxu0 0
      %5523 = vmatpush1.bf16.msra.mxu0 %v5505
      %5524 = vmatprep.subr.bf16.mxu0 0
      %5525 = vmatpush1.bf16.msra.mxu0 %v5506
      %5526 = vmatprep.subr.bf16.mxu0 0
      %5527 = vmatpush1.bf16.msra.mxu0 %v5507
      %5528 = vmatprep.subr.bf16.mxu0 0
      %5529 = vmatpush1.bf16.msra.mxu0 %v5508
      %5530 = vmatprep.subr.bf16.mxu0 0
      %5531 = vmatpush1.bf16.msra.mxu0 %v5509
      %5532 = vmatprep.subr.bf16.mxu0 0
      %5533 = vmatpush1.bf16.msra.mxu0 %v5510
      %5534 = vmatprep.subr.bf16.mxu0 0
      %5535 = vmatpush1.bf16.msra.mxu0 %v5511
      %5536 = vmatprep.subr.bf16.mxu0 0
      %5537 = vmatpush1.bf16.msra.mxu0 0
      %5538 = vmatprep.subr.bf16.mxu0 0
      %5539 = vmatpush1.bf16.msra.mxu0 0
      %5540 = vmatprep.subr.bf16.mxu0 0
      %5541 = vmatpush1.bf16.msra.mxu0 0
      %5542 = vmatprep.subr.bf16.mxu0 0
      %5543 = vmatpush1.bf16.msra.mxu0 0
      %5544 = vmatprep.subr.bf16.mxu0 0
      %5545 = vmatpush1.bf16.msra.mxu0 0
      %5546 = vmatprep.subr.bf16.mxu0 0
      %5547 = vmatpush1.bf16.msra.mxu0 0
      %5548 = vmatprep.subr.bf16.mxu0 0
      %5549 = vmatpush1.bf16.msra.mxu0 0
      %5550 = vmatprep.subr.bf16.mxu0 0
      %5551 = vmatpush1.bf16.msra.mxu0 0
      %5552 = vmatprep.mubr.bf16.mxu0 0
      %5553 = vmatmul.mubr.bf16.gmra.mrb[0].mxu0 %v5439
      %v5554 = vpop.f32.mrb[0].mxu0
      %v5555 = vadd.f32 0.0, %v5554
      %v5556 = vpop.f32.mrb[0].mxu0
      %v5557 = vpop.f32.mrb[0].mxu0
      %v5558 = vadd.f32 0.0, %v5557
      %v5559 = vpop.f32.mrb[0].mxu0
      %5560 = vmatprep.mubr.bf16.mxu0 0
      %5561 = vmatmul.mubr.bf16.gmra.mrb[0].mxu0 %v5440
      %v5562 = vpop.f32.mrb[0].mxu0
      %v5563 = vadd.f32 0.0, %v5562
      %v5564 = vpop.f32.mrb[0].mxu0
      %v5565 = vpop.f32.mrb[0].mxu0
      %v5566 = vadd.f32 0.0, %v5565
      %v5567 = vpop.f32.mrb[0].mxu0
      %5568 = vmatprep.mubr.bf16.mxu0 0
      %5569 = vmatmul.mubr.bf16.gmra.mrb[0].mxu0 %v5441
      %v5570 = vpop.f32.mrb[0].mxu0
      %v5571 = vadd.f32 0.0, %v5570
      %v5572 = vpop.f32.mrb[0].mxu0
      %v5573 = vpop.f32.mrb[0].mxu0
      %v5574 = vadd.f32 0.0, %v5573
      %v5575 = vpop.f32.mrb[0].mxu0
      %5576 = vmatprep.mubr.bf16.mxu0 0
      %5577 = vmatmul.mubr.bf16.gmra.mrb[0].mxu0 %v5442
      %v5578 = vpop.f32.mrb[0].mxu0
      %v5579 = vadd.f32 0.0, %v5578
      %v5580 = vpop.f32.mrb[0].mxu0
      %v5581 = vpop.f32.mrb[0].mxu0
      %v5582 = vadd.f32 0.0, %v5581
      %v5583 = vpop.f32.mrb[0].mxu0
      %5584 = vmatprep.mubr.bf16.mxu0 0
      %5585 = vmatmul.mubr.bf16.gmra.mrb[0].mxu0 %v5443
      %v5586 = vpop.f32.mrb[0].mxu0
      %v5587 = vadd.f32 0.0, %v5586
      %v5588 = vpop.f32.mrb[0].mxu0
      %v5589 = vpop.f32.mrb[0].mxu0
      %v5590 = vadd.f32 0.0, %v5589
      %v5591 = vpop.f32.mrb[0].mxu0
      %5592 = vmatprep.mubr.bf16.mxu0 0
      %5593 = vmatmul.mubr.bf16.gmra.mrb[0].mxu0 %v5444
      %v5594 = vpop.f32.mrb[0].mxu0
      %v5595 = vadd.f32 0.0, %v5594
      %v5596 = vpop.f32.mrb[0].mxu0
      %v5597 = vpop.f32.mrb[0].mxu0
      %v5598 = vadd.f32 0.0, %v5597
      %v5599 = vpop.f32.mrb[0].mxu0
      %5600 = vmatprep.mubr.bf16.mxu0 0
      %5601 = vmatmul.mubr.bf16.gmra.mrb[0].mxu0 %v5445
      %v5602 = vpop.f32.mrb[0].mxu0
      %v5603 = vadd.f32 0.0, %v5602
      %v5604 = vpop.f32.mrb[0].mxu0
      %v5605 = vpop.f32.mrb[0].mxu0
      %v5606 = vadd.f32 0.0, %v5605
      %v5607 = vpop.f32.mrb[0].mxu0
      %5608 = vmatprep.mubr.bf16.mxu0 0
      %5609 = vmatmul.mubr.bf16.gmra.mrb[0].mxu0 %v5446
      %v5610 = vpop.f32.mrb[0].mxu0
      %v5611 = vadd.f32 0.0, %v5610
      %v5612 = vpop.f32.mrb[0].mxu0
      %v5613 = vpop.f32.mrb[0].mxu0
      %v5614 = vadd.f32 0.0, %v5613
      %v5615 = vpop.f32.mrb[0].mxu0
      %5616 = vmatprep.mubr.bf16.mxu0 0
      %5617 = vmatmul.mubr.bf16.gmra.mrb[0].mxu0 %v5447
      %v5618 = vpop.f32.mrb[0].mxu0
      %v5619 = vadd.f32 0.0, %v5618
      %v5620 = vpop.f32.mrb[0].mxu0
      %v5621 = vpop.f32.mrb[0].mxu0
      %v5622 = vadd.f32 0.0, %v5621
      %v5623 = vpop.f32.mrb[0].mxu0
      %5624 = vmatprep.mubr.bf16.mxu0 0
      %5625 = vmatmul.mubr.bf16.gmra.mrb[0].mxu0 %v5448
      %v5626 = vpop.f32.mrb[0].mxu0
      %v5627 = vadd.f32 0.0, %v5626
      %v5628 = vpop.f32.mrb[0].mxu0
      %v5629 = vpop.f32.mrb[0].mxu0
      %v5630 = vadd.f32 0.0, %v5629
      %v5631 = vpop.f32.mrb[0].mxu0
      %5632 = vmatprep.mubr.bf16.mxu0 0
      %5633 = vmatmul.mubr.bf16.gmra.mrb[0].mxu0 %v5449
      %v5634 = vpop.f32.mrb[0].mxu0
      %v5635 = vadd.f32 0.0, %v5634
      %v5636 = vpop.f32.mrb[0].mxu0
      %v5637 = vpop.f32.mrb[0].mxu0
      %v5638 = vadd.f32 0.0, %v5637
      %v5639 = vpop.f32.mrb[0].mxu0
      %5640 = vmatprep.mubr.bf16.mxu0 0
      %5641 = vmatmul.mubr.bf16.gmra.mrb[0].mxu0 %v5450
      %v5642 = vpop.f32.mrb[0].mxu0
      %v5643 = vadd.f32 0.0, %v5642
      %v5644 = vpop.f32.mrb[0].mxu0
      %v5645 = vpop.f32.mrb[0].mxu0
      %v5646 = vadd.f32 0.0, %v5645
      %v5647 = vpop.f32.mrb[0].mxu0
      %5648 = vmatprep.mubr.bf16.mxu0 0
      %5649 = vmatmul.mubr.bf16.gmra.mrb[0].mxu0 %v5451
      %v5650 = vpop.f32.mrb[0].mxu0
      %v5651 = vadd.f32 0.0, %v5650
      %v5652 = vpop.f32.mrb[0].mxu0
      %v5653 = vpop.f32.mrb[0].mxu0
      %v5654 = vadd.f32 0.0, %v5653
      %v5655 = vpop.f32.mrb[0].mxu0
      %5656 = vmatprep.mubr.bf16.mxu0 0
      %5657 = vmatmul.mubr.bf16.gmra.mrb[0].mxu0 %v5452
      %v5658 = vpop.f32.mrb[0].mxu0
      %v5659 = vadd.f32 0.0, %v5658
      %v5660 = vpop.f32.mrb[0].mxu0
      %v5661 = vpop.f32.mrb[0].mxu0
      %v5662 = vadd.f32 0.0, %v5661
      %v5663 = vpop.f32.mrb[0].mxu0
      %5664 = vmatprep.mubr.bf16.mxu0 0
      %5665 = vmatmul.mubr.bf16.gmra.mrb[0].mxu0 %v5453
      %v5666 = vpop.f32.mrb[0].mxu0
      %v5667 = vadd.f32 0.0, %v5666
      %v5668 = vpop.f32.mrb[0].mxu0
      %v5669 = vpop.f32.mrb[0].mxu0
      %v5670 = vadd.f32 0.0, %v5669
      %v5671 = vpop.f32.mrb[0].mxu0
      %5672 = vmatprep.mubr.bf16.mxu0 0
      %5673 = vmatmul.mubr.bf16.gmra.mrb[0].mxu0 %v5454
      %v5674 = vpop.f32.mrb[0].mxu0
      %v5675 = vadd.f32 0.0, %v5674
      %v5676 = vpop.f32.mrb[0].mxu0
      %v5677 = vpop.f32.mrb[0].mxu0
      %v5678 = vadd.f32 0.0, %v5677
      %v5679 = vpop.f32.mrb[0].mxu0
      %5680 = vdwg.mxu0
      %v5681 = vadd.f32 %v5343, %v5555
      %v5682 = vadd.f32 %v5344, %v5558
      %v5683 = vadd.f32 %v5345, %v5563
      %v5684 = vadd.f32 %v5346, %v5566
      %v5685 = vadd.f32 %v5347, %v5571
      %v5686 = vadd.f32 %v5348, %v5574
      %v5687 = vadd.f32 %v5349, %v5579
      %v5688 = vadd.f32 %v5350, %v5582
      %v5689 = vadd.f32 %v5351, %v5587
      %v5690 = vadd.f32 %v5352, %v5590
      %v5691 = vadd.f32 %v5353, %v5595
      %v5692 = vadd.f32 %v5354, %v5598
      %v5693 = vadd.f32 %v5355, %v5603
      %v5694 = vadd.f32 %v5356, %v5606
      %v5695 = vadd.f32 %v5357, %v5611
      %v5696 = vadd.f32 %v5358, %v5614
      %v5697 = vadd.f32 %v5359, %v5619
      %v5698 = vadd.f32 %v5360, %v5622
      %v5699 = vadd.f32 %v5361, %v5627
      %v5700 = vadd.f32 %v5362, %v5630
      %v5701 = vadd.f32 %v5363, %v5635
      %v5702 = vadd.f32 %v5364, %v5638
      %v5703 = vadd.f32 %v5365, %v5643
      %v5704 = vadd.f32 %v5366, %v5646
      %v5705 = vadd.f32 %v5367, %v5651
      %v5706 = vadd.f32 %v5368, %v5654
      %v5707 = vadd.f32 %v5369, %v5659
      %v5708 = vadd.f32 %v5370, %v5662
      %v5709 = vadd.f32 %v5371, %v5667
      %v5710 = vadd.f32 %v5372, %v5670
      %v5711 = vadd.f32 %v5373, %v5675
      %v5712 = vadd.f32 %v5374, %v5678
      %v5713 = vld [vmem:[#allocation3 + $0x18] sm:$0xff]
      %v5714 = vld [vmem:[#allocation3 + $0x20] sm:$0xff]
      %v5715 = vld [vmem:[#allocation3 + $0x28] sm:$0xff]
      %v5716 = vld [vmem:[#allocation3 + $0x30] sm:$0xff]
      %v5717 = vld [vmem:[#allocation3 + $0x38] sm:$0xff]
      %v5718 = vld [vmem:[#allocation3 + $0x40] sm:$0xff]
      %v5719 = vld [vmem:[#allocation3 + $0x48] sm:$0xff]
      %v5720 = vld [vmem:[#allocation3 + $0x50] sm:$0xff]
      %v5721 = vld [vmem:[#allocation3 + $0x58] sm:$0xff]
      %v5722 = vld [vmem:[#allocation3 + $0x60] sm:$0xff]
      %v5723 = vld [vmem:[#allocation3 + $0x68] sm:$0xff]
      %v5724 = vld [vmem:[#allocation3 + $0x70] sm:$0xff]
      %v5725 = vld [vmem:[#allocation3 + $0x78] sm:$0xff]
      %v5726 = vld [vmem:[#allocation3 + $0x80] sm:$0xff]
      %v5727 = vld [vmem:[#allocation3 + $0x88] sm:$0xff]
      %v5728 = vld [vmem:[#allocation3 + $0x90] sm:$0xff]
      %v5729 = vld [vmem:[#allocation3 + $0x98] sm:$0xff]
      %v5730 = vld [vmem:[#allocation3 + $0xa0] sm:$0xff]
      %v5731 = vld [vmem:[#allocation3 + $0xa8] sm:$0xff]
      %v5732 = vld [vmem:[#allocation3 + $0xb0] sm:$0xff]
      %v5733 = vld [vmem:[#allocation3 + $0xb8] sm:$0xff]
      %v5734 = vld [vmem:[#allocation3 + $0xc0] sm:$0xff]
      %v5735 = vld [vmem:[#allocation3 + $0xc8] sm:$0xff]
      %v5736 = vld [vmem:[#allocation3 + $0xd0] sm:$0xff]
      %v5737 = vld [vmem:[#allocation3 + $0xd8] sm:$0xff]
      %v5738 = vld [vmem:[#allocation3 + $0xe0] sm:$0xff]
      %v5739 = vld [vmem:[#allocation3 + $0xe8] sm:$0xff]
      %v5740 = vld [vmem:[#allocation3 + $0xf0] sm:$0xff]
      %v5741 = vld [vmem:[#allocation3 + $0xf8] sm:$0xff]
      %v5742 = vld [vmem:[#allocation3 + $0x100] sm:$0xff]
      %v5743 = vld [vmem:[#allocation3 + $0x108] sm:$0xff]
      %v5744 = vld [vmem:[#allocation3 + $0x110] sm:$0xff]
      %v5745 = vpack.c.bf16 %v5714, %v5713
      %v5746 = vpack.c.bf16 %v5716, %v5715
      %v5747 = vpack.c.bf16 %v5718, %v5717
      %v5748 = vpack.c.bf16 %v5720, %v5719
      %v5749 = vpack.c.bf16 %v5722, %v5721
      %v5750 = vpack.c.bf16 %v5724, %v5723
      %v5751 = vpack.c.bf16 %v5726, %v5725
      %v5752 = vpack.c.bf16 %v5728, %v5727
      %v5753 = vpack.c.bf16 %v5730, %v5729
      %v5754 = vpack.c.bf16 %v5732, %v5731
      %v5755 = vpack.c.bf16 %v5734, %v5733
      %v5756 = vpack.c.bf16 %v5736, %v5735
      %v5757 = vpack.c.bf16 %v5738, %v5737
      %v5758 = vpack.c.bf16 %v5740, %v5739
      %v5759 = vpack.c.bf16 %v5742, %v5741
      %v5760 = vpack.c.bf16 %v5744, %v5743
      %s5761 = scalar_lea.vmem %s5, 256
      %v5762 = vld [vmem:[%s5761] sm:$0xf]
      %v5763 = vld [vmem:[%s5761 + $0x4] sm:$0xf]
      %v5764 = vld [vmem:[%s5761 + $0x8] sm:$0xf]
      %v5765 = vld [vmem:[%s5761 + $0xc] sm:$0xf]
      %v5766 = vld [vmem:[%s5761 + $0x10] sm:$0xf]
      %v5767 = vld [vmem:[%s5761 + $0x14] sm:$0xf]
      %v5768 = vld [vmem:[%s5761 + $0x18] sm:$0xf]
      %v5769 = vld [vmem:[%s5761 + $0x1c] sm:$0xf]
      %v5770 = vld [vmem:[%s5761 + $0x20] sm:$0xf]
      %v5771 = vld [vmem:[%s5761 + $0x24] sm:$0xf]
      %v5772 = vld [vmem:[%s5761 + $0x28] sm:$0xf]
      %v5773 = vld [vmem:[%s5761 + $0x2c] sm:$0xf]
      %v5774 = vld [vmem:[%s5761 + $0x30] sm:$0xf]
      %v5775 = vld [vmem:[%s5761 + $0x34] sm:$0xf]
      %v5776 = vld [vmem:[%s5761 + $0x38] sm:$0xf]
      %v5777 = vld [vmem:[%s5761 + $0x3c] sm:$0xf]
      %v5794 = vunpack.c.l.b16 %v5762
      %v5795 = vunpack.c.l.b16 %v5763
      %v5796 = vunpack.c.l.b16 %v5764
      %v5797 = vunpack.c.l.b16 %v5765
      %v5798 = vunpack.c.l.b16 %v5766
      %v5799 = vunpack.c.l.b16 %v5767
      %v5800 = vunpack.c.l.b16 %v5768
      %v5801 = vunpack.c.l.b16 %v5769
      %v5802 = vunpack.c.l.b16 %v5770
      %v5803 = vunpack.c.l.b16 %v5771
      %v5804 = vunpack.c.l.b16 %v5772
      %v5805 = vunpack.c.l.b16 %v5773
      %v5806 = vunpack.c.l.b16 %v5774
      %v5807 = vunpack.c.l.b16 %v5775
      %v5808 = vunpack.c.l.b16 %v5776
      %v5809 = vunpack.c.l.b16 %v5777
      %v5810 = vpack.c.b16 %v5795, %v5794
      %v5811 = vpack.c.b16 %v5797, %v5796
      %v5812 = vpack.c.b16 %v5799, %v5798
      %v5813 = vpack.c.b16 %v5801, %v5800
      %v5814 = vpack.c.b16 %v5803, %v5802
      %v5815 = vpack.c.b16 %v5805, %v5804
      %v5816 = vpack.c.b16 %v5807, %v5806
      %v5817 = vpack.c.b16 %v5809, %v5808
      %5826 = vmatprep.subr.bf16.mxu0 0
      %5827 = vmatpush1.bf16.msra.mxu0 %v5810
      %5828 = vmatprep.subr.bf16.mxu0 0
      %5829 = vmatpush1.bf16.msra.mxu0 %v5811
      %5830 = vmatprep.subr.bf16.mxu0 0
      %5831 = vmatpush1.bf16.msra.mxu0 %v5812
      %5832 = vmatprep.subr.bf16.mxu0 0
      %5833 = vmatpush1.bf16.msra.mxu0 %v5813
      %5834 = vmatprep.subr.bf16.mxu0 0
      %5835 = vmatpush1.bf16.msra.mxu0 %v5814
      %5836 = vmatprep.subr.bf16.mxu0 0
      %5837 = vmatpush1.bf16.msra.mxu0 %v5815
      %5838 = vmatprep.subr.bf16.mxu0 0
      %5839 = vmatpush1.bf16.msra.mxu0 %v5816
      %5840 = vmatprep.subr.bf16.mxu0 0
      %5841 = vmatpush1.bf16.msra.mxu0 %v5817
      %5842 = vmatprep.subr.bf16.mxu0 0
      %5843 = vmatpush1.bf16.msra.mxu0 0
      %5844 = vmatprep.subr.bf16.mxu0 0
      %5845 = vmatpush1.bf16.msra.mxu0 0
      %5846 = vmatprep.subr.bf16.mxu0 0
      %5847 = vmatpush1.bf16.msra.mxu0 0
      %5848 = vmatprep.subr.bf16.mxu0 0
      %5849 = vmatpush1.bf16.msra.mxu0 0
      %5850 = vmatprep.subr.bf16.mxu0 0
      %5851 = vmatpush1.bf16.msra.mxu0 0
      %5852 = vmatprep.subr.bf16.mxu0 0
      %5853 = vmatpush1.bf16.msra.mxu0 0
      %5854 = vmatprep.subr.bf16.mxu0 0
      %5855 = vmatpush1.bf16.msra.mxu0 0
      %5856 = vmatprep.subr.bf16.mxu0 0
      %5857 = vmatpush1.bf16.msra.mxu0 0
      %5858 = vmatprep.mubr.bf16.mxu0 0
      %5859 = vmatmul.mubr.bf16.gmra.mrb[0].mxu0 %v5745
      %v5860 = vpop.f32.mrb[0].mxu0
      %v5861 = vadd.f32 0.0, %v5860
      %v5862 = vpop.f32.mrb[0].mxu0
      %v5863 = vpop.f32.mrb[0].mxu0
      %v5864 = vadd.f32 0.0, %v5863
      %v5865 = vpop.f32.mrb[0].mxu0
      %5866 = vmatprep.mubr.bf16.mxu0 0
      %5867 = vmatmul.mubr.bf16.gmra.mrb[0].mxu0 %v5746
      %v5868 = vpop.f32.mrb[0].mxu0
      %v5869 = vadd.f32 0.0, %v5868
      %v5870 = vpop.f32.mrb[0].mxu0
      %v5871 = vpop.f32.mrb[0].mxu0
      %v5872 = vadd.f32 0.0, %v5871
      %v5873 = vpop.f32.mrb[0].mxu0
      %5874 = vmatprep.mubr.bf16.mxu0 0
      %5875 = vmatmul.mubr.bf16.gmra.mrb[0].mxu0 %v5747
      %v5876 = vpop.f32.mrb[0].mxu0
      %v5877 = vadd.f32 0.0, %v5876
      %v5878 = vpop.f32.mrb[0].mxu0
      %v5879 = vpop.f32.mrb[0].mxu0
      %v5880 = vadd.f32 0.0, %v5879
      %v5881 = vpop.f32.mrb[0].mxu0
      %5882 = vmatprep.mubr.bf16.mxu0 0
      %5883 = vmatmul.mubr.bf16.gmra.mrb[0].mxu0 %v5748
      %v5884 = vpop.f32.mrb[0].mxu0
      %v5885 = vadd.f32 0.0, %v5884
      %v5886 = vpop.f32.mrb[0].mxu0
      %v5887 = vpop.f32.mrb[0].mxu0
      %v5888 = vadd.f32 0.0, %v5887
      %v5889 = vpop.f32.mrb[0].mxu0
      %5890 = vmatprep.mubr.bf16.mxu0 0
      %5891 = vmatmul.mubr.bf16.gmra.mrb[0].mxu0 %v5749
      %v5892 = vpop.f32.mrb[0].mxu0
      %v5893 = vadd.f32 0.0, %v5892
      %v5894 = vpop.f32.mrb[0].mxu0
      %v5895 = vpop.f32.mrb[0].mxu0
      %v5896 = vadd.f32 0.0, %v5895
      %v5897 = vpop.f32.mrb[0].mxu0
      %5898 = vmatprep.mubr.bf16.mxu0 0
      %5899 = vmatmul.mubr.bf16.gmra.mrb[0].mxu0 %v5750
      %v5900 = vpop.f32.mrb[0].mxu0
      %v5901 = vadd.f32 0.0, %v5900
      %v5902 = vpop.f32.mrb[0].mxu0
      %v5903 = vpop.f32.mrb[0].mxu0
      %v5904 = vadd.f32 0.0, %v5903
      %v5905 = vpop.f32.mrb[0].mxu0
      %5906 = vmatprep.mubr.bf16.mxu0 0
      %5907 = vmatmul.mubr.bf16.gmra.mrb[0].mxu0 %v5751
      %v5908 = vpop.f32.mrb[0].mxu0
      %v5909 = vadd.f32 0.0, %v5908
      %v5910 = vpop.f32.mrb[0].mxu0
      %v5911 = vpop.f32.mrb[0].mxu0
      %v5912 = vadd.f32 0.0, %v5911
      %v5913 = vpop.f32.mrb[0].mxu0
      %5914 = vmatprep.mubr.bf16.mxu0 0
      %5915 = vmatmul.mubr.bf16.gmra.mrb[0].mxu0 %v5752
      %v5916 = vpop.f32.mrb[0].mxu0
      %v5917 = vadd.f32 0.0, %v5916
      %v5918 = vpop.f32.mrb[0].mxu0
      %v5919 = vpop.f32.mrb[0].mxu0
      %v5920 = vadd.f32 0.0, %v5919
      %v5921 = vpop.f32.mrb[0].mxu0
      %5922 = vmatprep.mubr.bf16.mxu0 0
      %5923 = vmatmul.mubr.bf16.gmra.mrb[0].mxu0 %v5753
      %v5924 = vpop.f32.mrb[0].mxu0
      %v5925 = vadd.f32 0.0, %v5924
      %v5926 = vpop.f32.mrb[0].mxu0
      %v5927 = vpop.f32.mrb[0].mxu0
      %v5928 = vadd.f32 0.0, %v5927
      %v5929 = vpop.f32.mrb[0].mxu0
      %5930 = vmatprep.mubr.bf16.mxu0 0
      %5931 = vmatmul.mubr.bf16.gmra.mrb[0].mxu0 %v5754
      %v5932 = vpop.f32.mrb[0].mxu0
      %v5933 = vadd.f32 0.0, %v5932
      %v5934 = vpop.f32.mrb[0].mxu0
      %v5935 = vpop.f32.mrb[0].mxu0
      %v5936 = vadd.f32 0.0, %v5935
      %v5937 = vpop.f32.mrb[0].mxu0
      %5938 = vmatprep.mubr.bf16.mxu0 0
      %5939 = vmatmul.mubr.bf16.gmra.mrb[0].mxu0 %v5755
      %v5940 = vpop.f32.mrb[0].mxu0
      %v5941 = vadd.f32 0.0, %v5940
      %v5942 = vpop.f32.mrb[0].mxu0
      %v5943 = vpop.f32.mrb[0].mxu0
      %v5944 = vadd.f32 0.0, %v5943
      %v5945 = vpop.f32.mrb[0].mxu0
      %5946 = vmatprep.mubr.bf16.mxu0 0
      %5947 = vmatmul.mubr.bf16.gmra.mrb[0].mxu0 %v5756
      %v5948 = vpop.f32.mrb[0].mxu0
      %v5949 = vadd.f32 0.0, %v5948
      %v5950 = vpop.f32.mrb[0].mxu0
      %v5951 = vpop.f32.mrb[0].mxu0
      %v5952 = vadd.f32 0.0, %v5951
      %v5953 = vpop.f32.mrb[0].mxu0
      %5954 = vmatprep.mubr.bf16.mxu0 0
      %5955 = vmatmul.mubr.bf16.gmra.mrb[0].mxu0 %v5757
      %v5956 = vpop.f32.mrb[0].mxu0
      %v5957 = vadd.f32 0.0, %v5956
      %v5958 = vpop.f32.mrb[0].mxu0
      %v5959 = vpop.f32.mrb[0].mxu0
      %v5960 = vadd.f32 0.0, %v5959
      %v5961 = vpop.f32.mrb[0].mxu0
      %5962 = vmatprep.mubr.bf16.mxu0 0
      %5963 = vmatmul.mubr.bf16.gmra.mrb[0].mxu0 %v5758
      %v5964 = vpop.f32.mrb[0].mxu0
      %v5965 = vadd.f32 0.0, %v5964
      %v5966 = vpop.f32.mrb[0].mxu0
      %v5967 = vpop.f32.mrb[0].mxu0
      %v5968 = vadd.f32 0.0, %v5967
      %v5969 = vpop.f32.mrb[0].mxu0
      %5970 = vmatprep.mubr.bf16.mxu0 0
      %5971 = vmatmul.mubr.bf16.gmra.mrb[0].mxu0 %v5759
      %v5972 = vpop.f32.mrb[0].mxu0
      %v5973 = vadd.f32 0.0, %v5972
      %v5974 = vpop.f32.mrb[0].mxu0
      %v5975 = vpop.f32.mrb[0].mxu0
      %v5976 = vadd.f32 0.0, %v5975
      %v5977 = vpop.f32.mrb[0].mxu0
      %5978 = vmatprep.mubr.bf16.mxu0 0
      %5979 = vmatmul.mubr.bf16.gmra.mrb[0].mxu0 %v5760
      %v5980 = vpop.f32.mrb[0].mxu0
      %v5981 = vadd.f32 0.0, %v5980
      %v5982 = vpop.f32.mrb[0].mxu0
      %v5983 = vpop.f32.mrb[0].mxu0
      %v5984 = vadd.f32 0.0, %v5983
      %v5985 = vpop.f32.mrb[0].mxu0
      %5986 = vdwg.mxu0
      %v5987 = vadd.f32 %v5681, %v5861
      %v5988 = vadd.f32 %v5682, %v5864
      %v5989 = vadd.f32 %v5683, %v5869
      %v5990 = vadd.f32 %v5684, %v5872
      %v5991 = vadd.f32 %v5685, %v5877
      %v5992 = vadd.f32 %v5686, %v5880
      %v5993 = vadd.f32 %v5687, %v5885
      %v5994 = vadd.f32 %v5688, %v5888
      %v5995 = vadd.f32 %v5689, %v5893
      %v5996 = vadd.f32 %v5690, %v5896
      %v5997 = vadd.f32 %v5691, %v5901
      %v5998 = vadd.f32 %v5692, %v5904
      %v5999 = vadd.f32 %v5693, %v5909
      %v6000 = vadd.f32 %v5694, %v5912
      %v6001 = vadd.f32 %v5695, %v5917
      %v6002 = vadd.f32 %v5696, %v5920
      %v6003 = vadd.f32 %v5697, %v5925
      %v6004 = vadd.f32 %v5698, %v5928
      %v6005 = vadd.f32 %v5699, %v5933
      %v6006 = vadd.f32 %v5700, %v5936
      %v6007 = vadd.f32 %v5701, %v5941
      %v6008 = vadd.f32 %v5702, %v5944
      %v6009 = vadd.f32 %v5703, %v5949
      %v6010 = vadd.f32 %v5704, %v5952
      %v6011 = vadd.f32 %v5705, %v5957
      %v6012 = vadd.f32 %v5706, %v5960
      %v6013 = vadd.f32 %v5707, %v5965
      %v6014 = vadd.f32 %v5708, %v5968
      %v6015 = vadd.f32 %v5709, %v5973
      %v6016 = vadd.f32 %v5710, %v5976
      %v6017 = vadd.f32 %v5711, %v5981
      %v6018 = vadd.f32 %v5712, %v5984
      %v6019 = vld [vmem:[#allocation3 + $0x19] sm:$0xff]
      %v6020 = vld [vmem:[#allocation3 + $0x21] sm:$0xff]
      %v6021 = vld [vmem:[#allocation3 + $0x29] sm:$0xff]
      %v6022 = vld [vmem:[#allocation3 + $0x31] sm:$0xff]
      %v6023 = vld [vmem:[#allocation3 + $0x39] sm:$0xff]
      %v6024 = vld [vmem:[#allocation3 + $0x41] sm:$0xff]
      %v6025 = vld [vmem:[#allocation3 + $0x49] sm:$0xff]
      %v6026 = vld [vmem:[#allocation3 + $0x51] sm:$0xff]
      %v6027 = vld [vmem:[#allocation3 + $0x59] sm:$0xff]
      %v6028 = vld [vmem:[#allocation3 + $0x61] sm:$0xff]
      %v6029 = vld [vmem:[#allocation3 + $0x69] sm:$0xff]
      %v6030 = vld [vmem:[#allocation3 + $0x71] sm:$0xff]
      %v6031 = vld [vmem:[#allocation3 + $0x79] sm:$0xff]
      %v6032 = vld [vmem:[#allocation3 + $0x81] sm:$0xff]
      %v6033 = vld [vmem:[#allocation3 + $0x89] sm:$0xff]
      %v6034 = vld [vmem:[#allocation3 + $0x91] sm:$0xff]
      %v6035 = vld [vmem:[#allocation3 + $0x99] sm:$0xff]
      %v6036 = vld [vmem:[#allocation3 + $0xa1] sm:$0xff]
      %v6037 = vld [vmem:[#allocation3 + $0xa9] sm:$0xff]
      %v6038 = vld [vmem:[#allocation3 + $0xb1] sm:$0xff]
      %v6039 = vld [vmem:[#allocation3 + $0xb9] sm:$0xff]
      %v6040 = vld [vmem:[#allocation3 + $0xc1] sm:$0xff]
      %v6041 = vld [vmem:[#allocation3 + $0xc9] sm:$0xff]
      %v6042 = vld [vmem:[#allocation3 + $0xd1] sm:$0xff]
      %v6043 = vld [vmem:[#allocation3 + $0xd9] sm:$0xff]
      %v6044 = vld [vmem:[#allocation3 + $0xe1] sm:$0xff]
      %v6045 = vld [vmem:[#allocation3 + $0xe9] sm:$0xff]
      %v6046 = vld [vmem:[#allocation3 + $0xf1] sm:$0xff]
      %v6047 = vld [vmem:[#allocation3 + $0xf9] sm:$0xff]
      %v6048 = vld [vmem:[#allocation3 + $0x101] sm:$0xff]
      %v6049 = vld [vmem:[#allocation3 + $0x109] sm:$0xff]
      %v6050 = vld [vmem:[#allocation3 + $0x111] sm:$0xff]
      %v6051 = vsel %vm1983, %v6019, 0.0
      %v6052 = vsel %vm1984, %v6020, 0.0
      %v6053 = vsel %vm1985, %v6021, 0.0
      %v6054 = vsel %vm1986, %v6022, 0.0
      %v6055 = vsel %vm1987, %v6023, 0.0
      %v6056 = vsel %vm1988, %v6024, 0.0
      %v6057 = vsel %vm1989, %v6025, 0.0
      %v6058 = vsel %vm1990, %v6026, 0.0
      %v6059 = vsel %vm1991, %v6027, 0.0
      %v6060 = vsel %vm1992, %v6028, 0.0
      %v6061 = vsel %vm1993, %v6029, 0.0
      %v6062 = vsel %vm1994, %v6030, 0.0
      %v6063 = vsel %vm1995, %v6031, 0.0
      %v6064 = vsel %vm1996, %v6032, 0.0
      %v6065 = vsel %vm1997, %v6033, 0.0
      %v6066 = vsel %vm1998, %v6034, 0.0
      %v6067 = vsel %vm1999, %v6035, 0.0
      %v6068 = vsel %vm2000, %v6036, 0.0
      %v6069 = vsel %vm2001, %v6037, 0.0
      %v6070 = vsel %vm2002, %v6038, 0.0
      %v6071 = vsel %vm2003, %v6039, 0.0
      %v6072 = vsel %vm2004, %v6040, 0.0
      %v6073 = vsel %vm2005, %v6041, 0.0
      %v6074 = vsel %vm2006, %v6042, 0.0
      %v6075 = vsel %vm2007, %v6043, 0.0
      %v6076 = vsel %vm2008, %v6044, 0.0
      %v6077 = vsel %vm2009, %v6045, 0.0
      %v6078 = vsel %vm2010, %v6046, 0.0
      %v6079 = vsel %vm2011, %v6047, 0.0
      %v6080 = vsel %vm2012, %v6048, 0.0
      %v6081 = vsel %vm2013, %v6049, 0.0
      %v6082 = vsel %vm2014, %v6050, 0.0
      %v6083 = vpack.c.bf16 %v6052, %v6051
      %v6084 = vpack.c.bf16 %v6054, %v6053
      %v6085 = vpack.c.bf16 %v6056, %v6055
      %v6086 = vpack.c.bf16 %v6058, %v6057
      %v6087 = vpack.c.bf16 %v6060, %v6059
      %v6088 = vpack.c.bf16 %v6062, %v6061
      %v6089 = vpack.c.bf16 %v6064, %v6063
      %v6090 = vpack.c.bf16 %v6066, %v6065
      %v6091 = vpack.c.bf16 %v6068, %v6067
      %v6092 = vpack.c.bf16 %v6070, %v6069
      %v6093 = vpack.c.bf16 %v6072, %v6071
      %v6094 = vpack.c.bf16 %v6074, %v6073
      %v6095 = vpack.c.bf16 %v6076, %v6075
      %v6096 = vpack.c.bf16 %v6078, %v6077
      %v6097 = vpack.c.bf16 %v6080, %v6079
      %v6098 = vpack.c.bf16 %v6082, %v6081
      %s6099 = scalar_lea.vmem %s5, 320
      %v6100 = vld [vmem:[%s6099] sm:$0xf]
      %v6101 = vld [vmem:[%s6099 + $0x4] sm:$0xf]
      %v6102 = vld [vmem:[%s6099 + $0x8] sm:$0xf]
      %v6103 = vld [vmem:[%s6099 + $0xc] sm:$0xf]
      %v6104 = vld [vmem:[%s6099 + $0x10] sm:$0xf]
      %v6105 = vld [vmem:[%s6099 + $0x14] sm:$0xf]
      %v6106 = vld [vmem:[%s6099 + $0x18] sm:$0xf]
      %v6107 = vld [vmem:[%s6099 + $0x1c] sm:$0xf]
      %v6108 = vld [vmem:[%s6099 + $0x20] sm:$0xf]
      %v6109 = vld [vmem:[%s6099 + $0x24] sm:$0xf]
      %v6110 = vld [vmem:[%s6099 + $0x28] sm:$0xf]
      %v6111 = vld [vmem:[%s6099 + $0x2c] sm:$0xf]
      %v6112 = vld [vmem:[%s6099 + $0x30] sm:$0xf]
      %v6113 = vld [vmem:[%s6099 + $0x34] sm:$0xf]
      %v6114 = vld [vmem:[%s6099 + $0x38] sm:$0xf]
      %v6115 = vld [vmem:[%s6099 + $0x3c] sm:$0xf]
      %v6132 = vunpack.c.l.b16 %v6100
      %v6133 = vunpack.c.l.b16 %v6101
      %v6134 = vunpack.c.l.b16 %v6102
      %v6135 = vunpack.c.l.b16 %v6103
      %v6136 = vunpack.c.l.b16 %v6104
      %v6137 = vunpack.c.l.b16 %v6105
      %v6138 = vunpack.c.l.b16 %v6106
      %v6139 = vunpack.c.l.b16 %v6107
      %v6140 = vunpack.c.l.b16 %v6108
      %v6141 = vunpack.c.l.b16 %v6109
      %v6142 = vunpack.c.l.b16 %v6110
      %v6143 = vunpack.c.l.b16 %v6111
      %v6144 = vunpack.c.l.b16 %v6112
      %v6145 = vunpack.c.l.b16 %v6113
      %v6146 = vunpack.c.l.b16 %v6114
      %v6147 = vunpack.c.l.b16 %v6115
      %v6148 = vpack.c.b16 %v6133, %v6132
      %v6149 = vpack.c.b16 %v6135, %v6134
      %v6150 = vpack.c.b16 %v6137, %v6136
      %v6151 = vpack.c.b16 %v6139, %v6138
      %v6152 = vpack.c.b16 %v6141, %v6140
      %v6153 = vpack.c.b16 %v6143, %v6142
      %v6154 = vpack.c.b16 %v6145, %v6144
      %v6155 = vpack.c.b16 %v6147, %v6146
      %6164 = vmatprep.subr.bf16.mxu0 0
      %6165 = vmatpush1.bf16.msra.mxu0 %v6148
      %6166 = vmatprep.subr.bf16.mxu0 0
      %6167 = vmatpush1.bf16.msra.mxu0 %v6149
      %6168 = vmatprep.subr.bf16.mxu0 0
      %6169 = vmatpush1.bf16.msra.mxu0 %v6150
      %6170 = vmatprep.subr.bf16.mxu0 0
      %6171 = vmatpush1.bf16.msra.mxu0 %v6151
      %6172 = vmatprep.subr.bf16.mxu0 0
      %6173 = vmatpush1.bf16.msra.mxu0 %v6152
      %6174 = vmatprep.subr.bf16.mxu0 0
      %6175 = vmatpush1.bf16.msra.mxu0 %v6153
      %6176 = vmatprep.subr.bf16.mxu0 0
      %6177 = vmatpush1.bf16.msra.mxu0 %v6154
      %6178 = vmatprep.subr.bf16.mxu0 0
      %6179 = vmatpush1.bf16.msra.mxu0 %v6155
      %6180 = vmatprep.subr.bf16.mxu0 0
      %6181 = vmatpush1.bf16.msra.mxu0 0
      %6182 = vmatprep.subr.bf16.mxu0 0
      %6183 = vmatpush1.bf16.msra.mxu0 0
      %6184 = vmatprep.subr.bf16.mxu0 0
      %6185 = vmatpush1.bf16.msra.mxu0 0
      %6186 = vmatprep.subr.bf16.mxu0 0
      %6187 = vmatpush1.bf16.msra.mxu0 0
      %6188 = vmatprep.subr.bf16.mxu0 0
      %6189 = vmatpush1.bf16.msra.mxu0 0
      %6190 = vmatprep.subr.bf16.mxu0 0
      %6191 = vmatpush1.bf16.msra.mxu0 0
      %6192 = vmatprep.subr.bf16.mxu0 0
      %6193 = vmatpush1.bf16.msra.mxu0 0
      %6194 = vmatprep.subr.bf16.mxu0 0
      %6195 = vmatpush1.bf16.msra.mxu0 0
      %6196 = vmatprep.mubr.bf16.mxu0 0
      %6197 = vmatmul.mubr.bf16.gmra.mrb[0].mxu0 %v6083
      %v6198 = vpop.f32.mrb[0].mxu0
      %v6199 = vadd.f32 0.0, %v6198
      %v6200 = vpop.f32.mrb[0].mxu0
      %v6201 = vpop.f32.mrb[0].mxu0
      %v6202 = vadd.f32 0.0, %v6201
      %v6203 = vpop.f32.mrb[0].mxu0
      %6204 = vmatprep.mubr.bf16.mxu0 0
      %6205 = vmatmul.mubr.bf16.gmra.mrb[0].mxu0 %v6084
      %v6206 = vpop.f32.mrb[0].mxu0
      %v6207 = vadd.f32 0.0, %v6206
      %v6208 = vpop.f32.mrb[0].mxu0
      %v6209 = vpop.f32.mrb[0].mxu0
      %v6210 = vadd.f32 0.0, %v6209
      %v6211 = vpop.f32.mrb[0].mxu0
      %6212 = vmatprep.mubr.bf16.mxu0 0
      %6213 = vmatmul.mubr.bf16.gmra.mrb[0].mxu0 %v6085
      %v6214 = vpop.f32.mrb[0].mxu0
      %v6215 = vadd.f32 0.0, %v6214
      %v6216 = vpop.f32.mrb[0].mxu0
      %v6217 = vpop.f32.mrb[0].mxu0
      %v6218 = vadd.f32 0.0, %v6217
      %v6219 = vpop.f32.mrb[0].mxu0
      %6220 = vmatprep.mubr.bf16.mxu0 0
      %6221 = vmatmul.mubr.bf16.gmra.mrb[0].mxu0 %v6086
      %v6222 = vpop.f32.mrb[0].mxu0
      %v6223 = vadd.f32 0.0, %v6222
      %v6224 = vpop.f32.mrb[0].mxu0
      %v6225 = vpop.f32.mrb[0].mxu0
      %v6226 = vadd.f32 0.0, %v6225
      %v6227 = vpop.f32.mrb[0].mxu0
      %6228 = vmatprep.mubr.bf16.mxu0 0
      %6229 = vmatmul.mubr.bf16.gmra.mrb[0].mxu0 %v6087
      %v6230 = vpop.f32.mrb[0].mxu0
      %v6231 = vadd.f32 0.0, %v6230
      %v6232 = vpop.f32.mrb[0].mxu0
      %v6233 = vpop.f32.mrb[0].mxu0
      %v6234 = vadd.f32 0.0, %v6233
      %v6235 = vpop.f32.mrb[0].mxu0
      %6236 = vmatprep.mubr.bf16.mxu0 0
      %6237 = vmatmul.mubr.bf16.gmra.mrb[0].mxu0 %v6088
      %v6238 = vpop.f32.mrb[0].mxu0
      %v6239 = vadd.f32 0.0, %v6238
      %v6240 = vpop.f32.mrb[0].mxu0
      %v6241 = vpop.f32.mrb[0].mxu0
      %v6242 = vadd.f32 0.0, %v6241
      %v6243 = vpop.f32.mrb[0].mxu0
      %6244 = vmatprep.mubr.bf16.mxu0 0
      %6245 = vmatmul.mubr.bf16.gmra.mrb[0].mxu0 %v6089
      %v6246 = vpop.f32.mrb[0].mxu0
      %v6247 = vadd.f32 0.0, %v6246
      %v6248 = vpop.f32.mrb[0].mxu0
      %v6249 = vpop.f32.mrb[0].mxu0
      %v6250 = vadd.f32 0.0, %v6249
      %v6251 = vpop.f32.mrb[0].mxu0
      %6252 = vmatprep.mubr.bf16.mxu0 0
      %6253 = vmatmul.mubr.bf16.gmra.mrb[0].mxu0 %v6090
      %v6254 = vpop.f32.mrb[0].mxu0
      %v6255 = vadd.f32 0.0, %v6254
      %v6256 = vpop.f32.mrb[0].mxu0
      %v6257 = vpop.f32.mrb[0].mxu0
      %v6258 = vadd.f32 0.0, %v6257
      %v6259 = vpop.f32.mrb[0].mxu0
      %6260 = vmatprep.mubr.bf16.mxu0 0
      %6261 = vmatmul.mubr.bf16.gmra.mrb[0].mxu0 %v6091
      %v6262 = vpop.f32.mrb[0].mxu0
      %v6263 = vadd.f32 0.0, %v6262
      %v6264 = vpop.f32.mrb[0].mxu0
      %v6265 = vpop.f32.mrb[0].mxu0
      %v6266 = vadd.f32 0.0, %v6265
      %v6267 = vpop.f32.mrb[0].mxu0
      %6268 = vmatprep.mubr.bf16.mxu0 0
      %6269 = vmatmul.mubr.bf16.gmra.mrb[0].mxu0 %v6092
      %v6270 = vpop.f32.mrb[0].mxu0
      %v6271 = vadd.f32 0.0, %v6270
      %v6272 = vpop.f32.mrb[0].mxu0
      %v6273 = vpop.f32.mrb[0].mxu0
      %v6274 = vadd.f32 0.0, %v6273
      %v6275 = vpop.f32.mrb[0].mxu0
      %6276 = vmatprep.mubr.bf16.mxu0 0
      %6277 = vmatmul.mubr.bf16.gmra.mrb[0].mxu0 %v6093
      %v6278 = vpop.f32.mrb[0].mxu0
      %v6279 = vadd.f32 0.0, %v6278
      %v6280 = vpop.f32.mrb[0].mxu0
      %v6281 = vpop.f32.mrb[0].mxu0
      %v6282 = vadd.f32 0.0, %v6281
      %v6283 = vpop.f32.mrb[0].mxu0
      %6284 = vmatprep.mubr.bf16.mxu0 0
      %6285 = vmatmul.mubr.bf16.gmra.mrb[0].mxu0 %v6094
      %v6286 = vpop.f32.mrb[0].mxu0
      %v6287 = vadd.f32 0.0, %v6286
      %v6288 = vpop.f32.mrb[0].mxu0
      %v6289 = vpop.f32.mrb[0].mxu0
      %v6290 = vadd.f32 0.0, %v6289
      %v6291 = vpop.f32.mrb[0].mxu0
      %6292 = vmatprep.mubr.bf16.mxu0 0
      %6293 = vmatmul.mubr.bf16.gmra.mrb[0].mxu0 %v6095
      %v6294 = vpop.f32.mrb[0].mxu0
      %v6295 = vadd.f32 0.0, %v6294
      %v6296 = vpop.f32.mrb[0].mxu0
      %v6297 = vpop.f32.mrb[0].mxu0
      %v6298 = vadd.f32 0.0, %v6297
      %v6299 = vpop.f32.mrb[0].mxu0
      %6300 = vmatprep.mubr.bf16.mxu0 0
      %6301 = vmatmul.mubr.bf16.gmra.mrb[0].mxu0 %v6096
      %v6302 = vpop.f32.mrb[0].mxu0
      %v6303 = vadd.f32 0.0, %v6302
      %v6304 = vpop.f32.mrb[0].mxu0
      %v6305 = vpop.f32.mrb[0].mxu0
      %v6306 = vadd.f32 0.0, %v6305
      %v6307 = vpop.f32.mrb[0].mxu0
      %6308 = vmatprep.mubr.bf16.mxu0 0
      %6309 = vmatmul.mubr.bf16.gmra.mrb[0].mxu0 %v6097
      %v6310 = vpop.f32.mrb[0].mxu0
      %v6311 = vadd.f32 0.0, %v6310
      %v6312 = vpop.f32.mrb[0].mxu0
      %v6313 = vpop.f32.mrb[0].mxu0
      %v6314 = vadd.f32 0.0, %v6313
      %v6315 = vpop.f32.mrb[0].mxu0
      %6316 = vmatprep.mubr.bf16.mxu0 0
      %6317 = vmatmul.mubr.bf16.gmra.mrb[0].mxu0 %v6098
      %v6318 = vpop.f32.mrb[0].mxu0
      %v6319 = vadd.f32 0.0, %v6318
      %v6320 = vpop.f32.mrb[0].mxu0
      %v6321 = vpop.f32.mrb[0].mxu0
      %v6322 = vadd.f32 0.0, %v6321
      %v6323 = vpop.f32.mrb[0].mxu0
      %6324 = vdwg.mxu0
      %v6325 = vadd.f32 %v5987, %v6199
      %v6326 = vadd.f32 %v5988, %v6202
      %v6327 = vadd.f32 %v5989, %v6207
      %v6328 = vadd.f32 %v5990, %v6210
      %v6329 = vadd.f32 %v5991, %v6215
      %v6330 = vadd.f32 %v5992, %v6218
      %v6331 = vadd.f32 %v5993, %v6223
      %v6332 = vadd.f32 %v5994, %v6226
      %v6333 = vadd.f32 %v5995, %v6231
      %v6334 = vadd.f32 %v5996, %v6234
      %v6335 = vadd.f32 %v5997, %v6239
      %v6336 = vadd.f32 %v5998, %v6242
      %v6337 = vadd.f32 %v5999, %v6247
      %v6338 = vadd.f32 %v6000, %v6250
      %v6339 = vadd.f32 %v6001, %v6255
      %v6340 = vadd.f32 %v6002, %v6258
      %v6341 = vadd.f32 %v6003, %v6263
      %v6342 = vadd.f32 %v6004, %v6266
      %v6343 = vadd.f32 %v6005, %v6271
      %v6344 = vadd.f32 %v6006, %v6274
      %v6345 = vadd.f32 %v6007, %v6279
      %v6346 = vadd.f32 %v6008, %v6282
      %v6347 = vadd.f32 %v6009, %v6287
      %v6348 = vadd.f32 %v6010, %v6290
      %v6349 = vadd.f32 %v6011, %v6295
      %v6350 = vadd.f32 %v6012, %v6298
      %v6351 = vadd.f32 %v6013, %v6303
      %v6352 = vadd.f32 %v6014, %v6306
      %v6353 = vadd.f32 %v6015, %v6311
      %v6354 = vadd.f32 %v6016, %v6314
      %v6355 = vadd.f32 %v6017, %v6319
      %v6356 = vadd.f32 %v6018, %v6322
      %v6357 = vld [vmem:[#allocation3 + $0x27] sm:$0xff]
      %v6358 = vld [vmem:[#allocation3 + $0x2f] sm:$0xff]
      %v6359 = vld [vmem:[#allocation3 + $0x37] sm:$0xff]
      %v6360 = vld [vmem:[#allocation3 + $0x3f] sm:$0xff]
      %v6361 = vld [vmem:[#allocation3 + $0x47] sm:$0xff]
      %v6362 = vld [vmem:[#allocation3 + $0x4f] sm:$0xff]
      %v6363 = vld [vmem:[#allocation3 + $0x57] sm:$0xff]
      %v6364 = vld [vmem:[#allocation3 + $0x5f] sm:$0xff]
      %v6365 = vld [vmem:[#allocation3 + $0x67] sm:$0xff]
      %v6366 = vld [vmem:[#allocation3 + $0x6f] sm:$0xff]
      %v6367 = vld [vmem:[#allocation3 + $0x77] sm:$0xff]
      %v6368 = vld [vmem:[#allocation3 + $0x7f] sm:$0xff]
      %v6369 = vld [vmem:[#allocation3 + $0x87] sm:$0xff]
      %v6370 = vld [vmem:[#allocation3 + $0x8f] sm:$0xff]
      %v6371 = vld [vmem:[#allocation3 + $0x97] sm:$0xff]
      %v6372 = vld [vmem:[#allocation3 + $0x9f] sm:$0xff]
      %v6373 = vld [vmem:[#allocation3 + $0xa7] sm:$0xff]
      %v6374 = vld [vmem:[#allocation3 + $0xaf] sm:$0xff]
      %v6375 = vld [vmem:[#allocation3 + $0xb7] sm:$0xff]
      %v6376 = vld [vmem:[#allocation3 + $0xbf] sm:$0xff]
      %v6377 = vld [vmem:[#allocation3 + $0xc7] sm:$0xff]
      %v6378 = vld [vmem:[#allocation3 + $0xcf] sm:$0xff]
      %v6379 = vld [vmem:[#allocation3 + $0xd7] sm:$0xff]
      %v6380 = vld [vmem:[#allocation3 + $0xdf] sm:$0xff]
      %v6381 = vld [vmem:[#allocation3 + $0xe7] sm:$0xff]
      %v6382 = vld [vmem:[#allocation3 + $0xef] sm:$0xff]
      %v6383 = vld [vmem:[#allocation3 + $0xf7] sm:$0xff]
      %v6384 = vld [vmem:[#allocation3 + $0xff] sm:$0xff]
      %v6385 = vld [vmem:[#allocation3 + $0x107] sm:$0xff]
      %v6386 = vld [vmem:[#allocation3 + $0x10f] sm:$0xff]
      %v6387 = vld [vmem:[#allocation3 + $0x117] sm:$0xff]
      %v6388 = vld [vmem:[#allocation3 + $0x11f] sm:$0xff]
      %v6389 = vsel %vm1340, %v6357, 0.0
      %v6390 = vsel %vm1341, %v6358, 0.0
      %v6391 = vsel %vm1342, %v6359, 0.0
      %v6392 = vsel %vm1343, %v6360, 0.0
      %v6393 = vsel %vm1344, %v6361, 0.0
      %v6394 = vsel %vm1345, %v6362, 0.0
      %v6395 = vsel %vm1346, %v6363, 0.0
      %v6396 = vsel %vm1347, %v6364, 0.0
      %v6397 = vsel %vm1348, %v6365, 0.0
      %v6398 = vsel %vm1349, %v6366, 0.0
      %v6399 = vsel %vm1350, %v6367, 0.0
      %v6400 = vsel %vm1351, %v6368, 0.0
      %v6401 = vsel %vm1352, %v6369, 0.0
      %v6402 = vsel %vm1353, %v6370, 0.0
      %v6403 = vsel %vm1354, %v6371, 0.0
      %v6404 = vsel %vm1355, %v6372, 0.0
      %v6405 = vsel %vm1356, %v6373, 0.0
      %v6406 = vsel %vm1357, %v6374, 0.0
      %v6407 = vsel %vm1358, %v6375, 0.0
      %v6408 = vsel %vm1359, %v6376, 0.0
      %v6409 = vsel %vm1360, %v6377, 0.0
      %v6410 = vsel %vm1361, %v6378, 0.0
      %v6411 = vsel %vm1362, %v6379, 0.0
      %v6412 = vsel %vm1363, %v6380, 0.0
      %v6413 = vsel %vm1364, %v6381, 0.0
      %v6414 = vsel %vm1365, %v6382, 0.0
      %v6415 = vsel %vm1366, %v6383, 0.0
      %v6416 = vsel %vm1367, %v6384, 0.0
      %v6417 = vsel %vm1368, %v6385, 0.0
      %v6418 = vsel %vm1369, %v6386, 0.0
      %v6419 = vsel %vm1370, %v6387, 0.0
      %v6420 = vsel %vm1371, %v6388, 0.0
      %v6421 = vpack.c.bf16 %v6390, %v6389
      %v6422 = vpack.c.bf16 %v6392, %v6391
      %v6423 = vpack.c.bf16 %v6394, %v6393
      %v6424 = vpack.c.bf16 %v6396, %v6395
      %v6425 = vpack.c.bf16 %v6398, %v6397
      %v6426 = vpack.c.bf16 %v6400, %v6399
      %v6427 = vpack.c.bf16 %v6402, %v6401
      %v6428 = vpack.c.bf16 %v6404, %v6403
      %v6429 = vpack.c.bf16 %v6406, %v6405
      %v6430 = vpack.c.bf16 %v6408, %v6407
      %v6431 = vpack.c.bf16 %v6410, %v6409
      %v6432 = vpack.c.bf16 %v6412, %v6411
      %v6433 = vpack.c.bf16 %v6414, %v6413
      %v6434 = vpack.c.bf16 %v6416, %v6415
      %v6435 = vpack.c.bf16 %v6418, %v6417
      %v6436 = vpack.c.bf16 %v6420, %v6419
      %s6437 = scalar_lea.vmem %s5, 384
      %v6438 = vld [vmem:[%s6437] sm:$0xf]
      %v6439 = vld [vmem:[%s6437 + $0x4] sm:$0xf]
      %v6440 = vld [vmem:[%s6437 + $0x8] sm:$0xf]
      %v6441 = vld [vmem:[%s6437 + $0xc] sm:$0xf]
      %v6442 = vld [vmem:[%s6437 + $0x10] sm:$0xf]
      %v6443 = vld [vmem:[%s6437 + $0x14] sm:$0xf]
      %v6444 = vld [vmem:[%s6437 + $0x18] sm:$0xf]
      %v6445 = vld [vmem:[%s6437 + $0x1c] sm:$0xf]
      %v6446 = vld [vmem:[%s6437 + $0x20] sm:$0xf]
      %v6447 = vld [vmem:[%s6437 + $0x24] sm:$0xf]
      %v6448 = vld [vmem:[%s6437 + $0x28] sm:$0xf]
      %v6449 = vld [vmem:[%s6437 + $0x2c] sm:$0xf]
      %v6450 = vld [vmem:[%s6437 + $0x30] sm:$0xf]
      %v6451 = vld [vmem:[%s6437 + $0x34] sm:$0xf]
      %v6452 = vld [vmem:[%s6437 + $0x38] sm:$0xf]
      %v6453 = vld [vmem:[%s6437 + $0x3c] sm:$0xf]
      %v6470 = vunpack.c.l.b16 %v6438
      %v6471 = vunpack.c.l.b16 %v6439
      %v6472 = vunpack.c.l.b16 %v6440
      %v6473 = vunpack.c.l.b16 %v6441
      %v6474 = vunpack.c.l.b16 %v6442
      %v6475 = vunpack.c.l.b16 %v6443
      %v6476 = vunpack.c.l.b16 %v6444
      %v6477 = vunpack.c.l.b16 %v6445
      %v6478 = vunpack.c.l.b16 %v6446
      %v6479 = vunpack.c.l.b16 %v6447
      %v6480 = vunpack.c.l.b16 %v6448
      %v6481 = vunpack.c.l.b16 %v6449
      %v6482 = vunpack.c.l.b16 %v6450
      %v6483 = vunpack.c.l.b16 %v6451
      %v6484 = vunpack.c.l.b16 %v6452
      %v6485 = vunpack.c.l.b16 %v6453
      %v6486 = vpack.c.b16 %v6471, %v6470
      %v6487 = vpack.c.b16 %v6473, %v6472
      %v6488 = vpack.c.b16 %v6475, %v6474
      %v6489 = vpack.c.b16 %v6477, %v6476
      %v6490 = vpack.c.b16 %v6479, %v6478
      %v6491 = vpack.c.b16 %v6481, %v6480
      %v6492 = vpack.c.b16 %v6483, %v6482
      %v6493 = vpack.c.b16 %v6485, %v6484
      %6502 = vmatprep.subr.bf16.mxu0 0
      %6503 = vmatpush1.bf16.msra.mxu0 %v6486
      %6504 = vmatprep.subr.bf16.mxu0 0
      %6505 = vmatpush1.bf16.msra.mxu0 %v6487
      %6506 = vmatprep.subr.bf16.mxu0 0
      %6507 = vmatpush1.bf16.msra.mxu0 %v6488
      %6508 = vmatprep.subr.bf16.mxu0 0
      %6509 = vmatpush1.bf16.msra.mxu0 %v6489
      %6510 = vmatprep.subr.bf16.mxu0 0
      %6511 = vmatpush1.bf16.msra.mxu0 %v6490
      %6512 = vmatprep.subr.bf16.mxu0 0
      %6513 = vmatpush1.bf16.msra.mxu0 %v6491
      %6514 = vmatprep.subr.bf16.mxu0 0
      %6515 = vmatpush1.bf16.msra.mxu0 %v6492
      %6516 = vmatprep.subr.bf16.mxu0 0
      %6517 = vmatpush1.bf16.msra.mxu0 %v6493
      %6518 = vmatprep.subr.bf16.mxu0 0
      %6519 = vmatpush1.bf16.msra.mxu0 0
      %6520 = vmatprep.subr.bf16.mxu0 0
      %6521 = vmatpush1.bf16.msra.mxu0 0
      %6522 = vmatprep.subr.bf16.mxu0 0
      %6523 = vmatpush1.bf16.msra.mxu0 0
      %6524 = vmatprep.subr.bf16.mxu0 0
      %6525 = vmatpush1.bf16.msra.mxu0 0
      %6526 = vmatprep.subr.bf16.mxu0 0
      %6527 = vmatpush1.bf16.msra.mxu0 0
      %6528 = vmatprep.subr.bf16.mxu0 0
      %6529 = vmatpush1.bf16.msra.mxu0 0
      %6530 = vmatprep.subr.bf16.mxu0 0
      %6531 = vmatpush1.bf16.msra.mxu0 0
      %6532 = vmatprep.subr.bf16.mxu0 0
      %6533 = vmatpush1.bf16.msra.mxu0 0
      %6534 = vmatprep.mubr.bf16.mxu0 0
      %6535 = vmatmul.mubr.bf16.gmra.mrb[0].mxu0 %v6421
      %v6536 = vpop.f32.mrb[0].mxu0
      %v6537 = vadd.f32 0.0, %v6536
      %v6538 = vpop.f32.mrb[0].mxu0
      %v6539 = vpop.f32.mrb[0].mxu0
      %v6540 = vadd.f32 0.0, %v6539
      %v6541 = vpop.f32.mrb[0].mxu0
      %6542 = vmatprep.mubr.bf16.mxu0 0
      %6543 = vmatmul.mubr.bf16.gmra.mrb[0].mxu0 %v6422
      %v6544 = vpop.f32.mrb[0].mxu0
      %v6545 = vadd.f32 0.0, %v6544
      %v6546 = vpop.f32.mrb[0].mxu0
      %v6547 = vpop.f32.mrb[0].mxu0
      %v6548 = vadd.f32 0.0, %v6547
      %v6549 = vpop.f32.mrb[0].mxu0
      %6550 = vmatprep.mubr.bf16.mxu0 0
      %6551 = vmatmul.mubr.bf16.gmra.mrb[0].mxu0 %v6423
      %v6552 = vpop.f32.mrb[0].mxu0
      %v6553 = vadd.f32 0.0, %v6552
      %v6554 = vpop.f32.mrb[0].mxu0
      %v6555 = vpop.f32.mrb[0].mxu0
      %v6556 = vadd.f32 0.0, %v6555
      %v6557 = vpop.f32.mrb[0].mxu0
      %6558 = vmatprep.mubr.bf16.mxu0 0
      %6559 = vmatmul.mubr.bf16.gmra.mrb[0].mxu0 %v6424
      %v6560 = vpop.f32.mrb[0].mxu0
      %v6561 = vadd.f32 0.0, %v6560
      %v6562 = vpop.f32.mrb[0].mxu0
      %v6563 = vpop.f32.mrb[0].mxu0
      %v6564 = vadd.f32 0.0, %v6563
      %v6565 = vpop.f32.mrb[0].mxu0
      %6566 = vmatprep.mubr.bf16.mxu0 0
      %6567 = vmatmul.mubr.bf16.gmra.mrb[0].mxu0 %v6425
      %v6568 = vpop.f32.mrb[0].mxu0
      %v6569 = vadd.f32 0.0, %v6568
      %v6570 = vpop.f32.mrb[0].mxu0
      %v6571 = vpop.f32.mrb[0].mxu0
      %v6572 = vadd.f32 0.0, %v6571
      %v6573 = vpop.f32.mrb[0].mxu0
      %6574 = vmatprep.mubr.bf16.mxu0 0
      %6575 = vmatmul.mubr.bf16.gmra.mrb[0].mxu0 %v6426
      %v6576 = vpop.f32.mrb[0].mxu0
      %v6577 = vadd.f32 0.0, %v6576
      %v6578 = vpop.f32.mrb[0].mxu0
      %v6579 = vpop.f32.mrb[0].mxu0
      %v6580 = vadd.f32 0.0, %v6579
      %v6581 = vpop.f32.mrb[0].mxu0
      %6582 = vmatprep.mubr.bf16.mxu0 0
      %6583 = vmatmul.mubr.bf16.gmra.mrb[0].mxu0 %v6427
      %v6584 = vpop.f32.mrb[0].mxu0
      %v6585 = vadd.f32 0.0, %v6584
      %v6586 = vpop.f32.mrb[0].mxu0
      %v6587 = vpop.f32.mrb[0].mxu0
      %v6588 = vadd.f32 0.0, %v6587
      %v6589 = vpop.f32.mrb[0].mxu0
      %6590 = vmatprep.mubr.bf16.mxu0 0
      %6591 = vmatmul.mubr.bf16.gmra.mrb[0].mxu0 %v6428
      %v6592 = vpop.f32.mrb[0].mxu0
      %v6593 = vadd.f32 0.0, %v6592
      %v6594 = vpop.f32.mrb[0].mxu0
      %v6595 = vpop.f32.mrb[0].mxu0
      %v6596 = vadd.f32 0.0, %v6595
      %v6597 = vpop.f32.mrb[0].mxu0
      %6598 = vmatprep.mubr.bf16.mxu0 0
      %6599 = vmatmul.mubr.bf16.gmra.mrb[0].mxu0 %v6429
      %v6600 = vpop.f32.mrb[0].mxu0
      %v6601 = vadd.f32 0.0, %v6600
      %v6602 = vpop.f32.mrb[0].mxu0
      %v6603 = vpop.f32.mrb[0].mxu0
      %v6604 = vadd.f32 0.0, %v6603
      %v6605 = vpop.f32.mrb[0].mxu0
      %6606 = vmatprep.mubr.bf16.mxu0 0
      %6607 = vmatmul.mubr.bf16.gmra.mrb[0].mxu0 %v6430
      %v6608 = vpop.f32.mrb[0].mxu0
      %v6609 = vadd.f32 0.0, %v6608
      %v6610 = vpop.f32.mrb[0].mxu0
      %v6611 = vpop.f32.mrb[0].mxu0
      %v6612 = vadd.f32 0.0, %v6611
      %v6613 = vpop.f32.mrb[0].mxu0
      %6614 = vmatprep.mubr.bf16.mxu0 0
      %6615 = vmatmul.mubr.bf16.gmra.mrb[0].mxu0 %v6431
      %v6616 = vpop.f32.mrb[0].mxu0
      %v6617 = vadd.f32 0.0, %v6616
      %v6618 = vpop.f32.mrb[0].mxu0
      %v6619 = vpop.f32.mrb[0].mxu0
      %v6620 = vadd.f32 0.0, %v6619
      %v6621 = vpop.f32.mrb[0].mxu0
      %6622 = vmatprep.mubr.bf16.mxu0 0
      %6623 = vmatmul.mubr.bf16.gmra.mrb[0].mxu0 %v6432
      %v6624 = vpop.f32.mrb[0].mxu0
      %v6625 = vadd.f32 0.0, %v6624
      %v6626 = vpop.f32.mrb[0].mxu0
      %v6627 = vpop.f32.mrb[0].mxu0
      %v6628 = vadd.f32 0.0, %v6627
      %v6629 = vpop.f32.mrb[0].mxu0
      %6630 = vmatprep.mubr.bf16.mxu0 0
      %6631 = vmatmul.mubr.bf16.gmra.mrb[0].mxu0 %v6433
      %v6632 = vpop.f32.mrb[0].mxu0
      %v6633 = vadd.f32 0.0, %v6632
      %v6634 = vpop.f32.mrb[0].mxu0
      %v6635 = vpop.f32.mrb[0].mxu0
      %v6636 = vadd.f32 0.0, %v6635
      %v6637 = vpop.f32.mrb[0].mxu0
      %6638 = vmatprep.mubr.bf16.mxu0 0
      %6639 = vmatmul.mubr.bf16.gmra.mrb[0].mxu0 %v6434
      %v6640 = vpop.f32.mrb[0].mxu0
      %v6641 = vadd.f32 0.0, %v6640
      %v6642 = vpop.f32.mrb[0].mxu0
      %v6643 = vpop.f32.mrb[0].mxu0
      %v6644 = vadd.f32 0.0, %v6643
      %v6645 = vpop.f32.mrb[0].mxu0
      %6646 = vmatprep.mubr.bf16.mxu0 0
      %6647 = vmatmul.mubr.bf16.gmra.mrb[0].mxu0 %v6435
      %v6648 = vpop.f32.mrb[0].mxu0
      %v6649 = vadd.f32 0.0, %v6648
      %v6650 = vpop.f32.mrb[0].mxu0
      %v6651 = vpop.f32.mrb[0].mxu0
      %v6652 = vadd.f32 0.0, %v6651
      %v6653 = vpop.f32.mrb[0].mxu0
      %6654 = vmatprep.mubr.bf16.mxu0 0
      %6655 = vmatmul.mubr.bf16.gmra.mrb[0].mxu0 %v6436
      %v6656 = vpop.f32.mrb[0].mxu0
      %v6657 = vadd.f32 0.0, %v6656
      %v6658 = vpop.f32.mrb[0].mxu0
      %v6659 = vpop.f32.mrb[0].mxu0
      %v6660 = vadd.f32 0.0, %v6659
      %v6661 = vpop.f32.mrb[0].mxu0
      %6662 = vdwg.mxu0
      %v6663 = vadd.f32 %v6325, %v6537
      %v6664 = vadd.f32 %v6326, %v6540
      %v6665 = vadd.f32 %v6327, %v6545
      %v6666 = vadd.f32 %v6328, %v6548
      %v6667 = vadd.f32 %v6329, %v6553
      %v6668 = vadd.f32 %v6330, %v6556
      %v6669 = vadd.f32 %v6331, %v6561
      %v6670 = vadd.f32 %v6332, %v6564
      %v6671 = vadd.f32 %v6333, %v6569
      %v6672 = vadd.f32 %v6334, %v6572
      %v6673 = vadd.f32 %v6335, %v6577
      %v6674 = vadd.f32 %v6336, %v6580
      %v6675 = vadd.f32 %v6337, %v6585
      %v6676 = vadd.f32 %v6338, %v6588
      %v6677 = vadd.f32 %v6339, %v6593
      %v6678 = vadd.f32 %v6340, %v6596
      %v6679 = vadd.f32 %v6341, %v6601
      %v6680 = vadd.f32 %v6342, %v6604
      %v6681 = vadd.f32 %v6343, %v6609
      %v6682 = vadd.f32 %v6344, %v6612
      %v6683 = vadd.f32 %v6345, %v6617
      %v6684 = vadd.f32 %v6346, %v6620
      %v6685 = vadd.f32 %v6347, %v6625
      %v6686 = vadd.f32 %v6348, %v6628
      %v6687 = vadd.f32 %v6349, %v6633
      %v6688 = vadd.f32 %v6350, %v6636
      %v6689 = vadd.f32 %v6351, %v6641
      %v6690 = vadd.f32 %v6352, %v6644
      %v6691 = vadd.f32 %v6353, %v6649
      %v6692 = vadd.f32 %v6354, %v6652
      %v6693 = vadd.f32 %v6355, %v6657
      %v6694 = vadd.f32 %v6356, %v6660
      %v6695 = vld [vmem:[#allocation3 + $0x28] sm:$0xff]
      %v6696 = vld [vmem:[#allocation3 + $0x30] sm:$0xff]
      %v6697 = vld [vmem:[#allocation3 + $0x38] sm:$0xff]
      %v6698 = vld [vmem:[#allocation3 + $0x40] sm:$0xff]
      %v6699 = vld [vmem:[#allocation3 + $0x48] sm:$0xff]
      %v6700 = vld [vmem:[#allocation3 + $0x50] sm:$0xff]
      %v6701 = vld [vmem:[#allocation3 + $0x58] sm:$0xff]
      %v6702 = vld [vmem:[#allocation3 + $0x60] sm:$0xff]
      %v6703 = vld [vmem:[#allocation3 + $0x68] sm:$0xff]
      %v6704 = vld [vmem:[#allocation3 + $0x70] sm:$0xff]
      %v6705 = vld [vmem:[#allocation3 + $0x78] sm:$0xff]
      %v6706 = vld [vmem:[#allocation3 + $0x80] sm:$0xff]
      %v6707 = vld [vmem:[#allocation3 + $0x88] sm:$0xff]
      %v6708 = vld [vmem:[#allocation3 + $0x90] sm:$0xff]
      %v6709 = vld [vmem:[#allocation3 + $0x98] sm:$0xff]
      %v6710 = vld [vmem:[#allocation3 + $0xa0] sm:$0xff]
      %v6711 = vld [vmem:[#allocation3 + $0xa8] sm:$0xff]
      %v6712 = vld [vmem:[#allocation3 + $0xb0] sm:$0xff]
      %v6713 = vld [vmem:[#allocation3 + $0xb8] sm:$0xff]
      %v6714 = vld [vmem:[#allocation3 + $0xc0] sm:$0xff]
      %v6715 = vld [vmem:[#allocation3 + $0xc8] sm:$0xff]
      %v6716 = vld [vmem:[#allocation3 + $0xd0] sm:$0xff]
      %v6717 = vld [vmem:[#allocation3 + $0xd8] sm:$0xff]
      %v6718 = vld [vmem:[#allocation3 + $0xe0] sm:$0xff]
      %v6719 = vld [vmem:[#allocation3 + $0xe8] sm:$0xff]
      %v6720 = vld [vmem:[#allocation3 + $0xf0] sm:$0xff]
      %v6721 = vld [vmem:[#allocation3 + $0xf8] sm:$0xff]
      %v6722 = vld [vmem:[#allocation3 + $0x100] sm:$0xff]
      %v6723 = vld [vmem:[#allocation3 + $0x108] sm:$0xff]
      %v6724 = vld [vmem:[#allocation3 + $0x110] sm:$0xff]
      %v6725 = vld [vmem:[#allocation3 + $0x118] sm:$0xff]
      %v6726 = vld [vmem:[#allocation3 + $0x120] sm:$0xff]
      %v6727 = vpack.c.bf16 %v6696, %v6695
      %v6728 = vpack.c.bf16 %v6698, %v6697
      %v6729 = vpack.c.bf16 %v6700, %v6699
      %v6730 = vpack.c.bf16 %v6702, %v6701
      %v6731 = vpack.c.bf16 %v6704, %v6703
      %v6732 = vpack.c.bf16 %v6706, %v6705
      %v6733 = vpack.c.bf16 %v6708, %v6707
      %v6734 = vpack.c.bf16 %v6710, %v6709
      %v6735 = vpack.c.bf16 %v6712, %v6711
      %v6736 = vpack.c.bf16 %v6714, %v6713
      %v6737 = vpack.c.bf16 %v6716, %v6715
      %v6738 = vpack.c.bf16 %v6718, %v6717
      %v6739 = vpack.c.bf16 %v6720, %v6719
      %v6740 = vpack.c.bf16 %v6722, %v6721
      %v6741 = vpack.c.bf16 %v6724, %v6723
      %v6742 = vpack.c.bf16 %v6726, %v6725
      %s6743 = scalar_lea.vmem %s5, 448
      %v6744 = vld [vmem:[%s6743] sm:$0xf]
      %v6745 = vld [vmem:[%s6743 + $0x4] sm:$0xf]
      %v6746 = vld [vmem:[%s6743 + $0x8] sm:$0xf]
      %v6747 = vld [vmem:[%s6743 + $0xc] sm:$0xf]
      %v6748 = vld [vmem:[%s6743 + $0x10] sm:$0xf]
      %v6749 = vld [vmem:[%s6743 + $0x14] sm:$0xf]
      %v6750 = vld [vmem:[%s6743 + $0x18] sm:$0xf]
      %v6751 = vld [vmem:[%s6743 + $0x1c] sm:$0xf]
      %v6752 = vld [vmem:[%s6743 + $0x20] sm:$0xf]
      %v6753 = vld [vmem:[%s6743 + $0x24] sm:$0xf]
      %v6754 = vld [vmem:[%s6743 + $0x28] sm:$0xf]
      %v6755 = vld [vmem:[%s6743 + $0x2c] sm:$0xf]
      %v6756 = vld [vmem:[%s6743 + $0x30] sm:$0xf]
      %v6757 = vld [vmem:[%s6743 + $0x34] sm:$0xf]
      %v6758 = vld [vmem:[%s6743 + $0x38] sm:$0xf]
      %v6759 = vld [vmem:[%s6743 + $0x3c] sm:$0xf]
      %v6776 = vunpack.c.l.b16 %v6744
      %v6777 = vunpack.c.l.b16 %v6745
      %v6778 = vunpack.c.l.b16 %v6746
      %v6779 = vunpack.c.l.b16 %v6747
      %v6780 = vunpack.c.l.b16 %v6748
      %v6781 = vunpack.c.l.b16 %v6749
      %v6782 = vunpack.c.l.b16 %v6750
      %v6783 = vunpack.c.l.b16 %v6751
      %v6784 = vunpack.c.l.b16 %v6752
      %v6785 = vunpack.c.l.b16 %v6753
      %v6786 = vunpack.c.l.b16 %v6754
      %v6787 = vunpack.c.l.b16 %v6755
      %v6788 = vunpack.c.l.b16 %v6756
      %v6789 = vunpack.c.l.b16 %v6757
      %v6790 = vunpack.c.l.b16 %v6758
      %v6791 = vunpack.c.l.b16 %v6759
      %v6792 = vpack.c.b16 %v6777, %v6776
      %v6793 = vpack.c.b16 %v6779, %v6778
      %v6794 = vpack.c.b16 %v6781, %v6780
      %v6795 = vpack.c.b16 %v6783, %v6782
      %v6796 = vpack.c.b16 %v6785, %v6784
      %v6797 = vpack.c.b16 %v6787, %v6786
      %v6798 = vpack.c.b16 %v6789, %v6788
      %v6799 = vpack.c.b16 %v6791, %v6790
      %6808 = vmatprep.subr.bf16.mxu0 0
      %6809 = vmatpush1.bf16.msra.mxu0 %v6792
      %6810 = vmatprep.subr.bf16.mxu0 0
      %6811 = vmatpush1.bf16.msra.mxu0 %v6793
      %6812 = vmatprep.subr.bf16.mxu0 0
      %6813 = vmatpush1.bf16.msra.mxu0 %v6794
      %6814 = vmatprep.subr.bf16.mxu0 0
      %6815 = vmatpush1.bf16.msra.mxu0 %v6795
      %6816 = vmatprep.subr.bf16.mxu0 0
      %6817 = vmatpush1.bf16.msra.mxu0 %v6796
      %6818 = vmatprep.subr.bf16.mxu0 0
      %6819 = vmatpush1.bf16.msra.mxu0 %v6797
      %6820 = vmatprep.subr.bf16.mxu0 0
      %6821 = vmatpush1.bf16.msra.mxu0 %v6798
      %6822 = vmatprep.subr.bf16.mxu0 0
      %6823 = vmatpush1.bf16.msra.mxu0 %v6799
      %6824 = vmatprep.subr.bf16.mxu0 0
      %6825 = vmatpush1.bf16.msra.mxu0 0
      %6826 = vmatprep.subr.bf16.mxu0 0
      %6827 = vmatpush1.bf16.msra.mxu0 0
      %6828 = vmatprep.subr.bf16.mxu0 0
      %6829 = vmatpush1.bf16.msra.mxu0 0
      %6830 = vmatprep.subr.bf16.mxu0 0
      %6831 = vmatpush1.bf16.msra.mxu0 0
      %6832 = vmatprep.subr.bf16.mxu0 0
      %6833 = vmatpush1.bf16.msra.mxu0 0
      %6834 = vmatprep.subr.bf16.mxu0 0
      %6835 = vmatpush1.bf16.msra.mxu0 0
      %6836 = vmatprep.subr.bf16.mxu0 0
      %6837 = vmatpush1.bf16.msra.mxu0 0
      %6838 = vmatprep.subr.bf16.mxu0 0
      %6839 = vmatpush1.bf16.msra.mxu0 0
      %6840 = vmatprep.mubr.bf16.mxu0 0
      %6841 = vmatmul.mubr.bf16.gmra.mrb[0].mxu0 %v6727
      %v6842 = vpop.f32.mrb[0].mxu0
      %v6843 = vadd.f32 0.0, %v6842
      %v6844 = vpop.f32.mrb[0].mxu0
      %v6845 = vpop.f32.mrb[0].mxu0
      %v6846 = vadd.f32 0.0, %v6845
      %v6847 = vpop.f32.mrb[0].mxu0
      %6848 = vmatprep.mubr.bf16.mxu0 0
      %6849 = vmatmul.mubr.bf16.gmra.mrb[0].mxu0 %v6728
      %v6850 = vpop.f32.mrb[0].mxu0
      %v6851 = vadd.f32 0.0, %v6850
      %v6852 = vpop.f32.mrb[0].mxu0
      %v6853 = vpop.f32.mrb[0].mxu0
      %v6854 = vadd.f32 0.0, %v6853
      %v6855 = vpop.f32.mrb[0].mxu0
      %6856 = vmatprep.mubr.bf16.mxu0 0
      %6857 = vmatmul.mubr.bf16.gmra.mrb[0].mxu0 %v6729
      %v6858 = vpop.f32.mrb[0].mxu0
      %v6859 = vadd.f32 0.0, %v6858
      %v6860 = vpop.f32.mrb[0].mxu0
      %v6861 = vpop.f32.mrb[0].mxu0
      %v6862 = vadd.f32 0.0, %v6861
      %v6863 = vpop.f32.mrb[0].mxu0
      %6864 = vmatprep.mubr.bf16.mxu0 0
      %6865 = vmatmul.mubr.bf16.gmra.mrb[0].mxu0 %v6730
      %v6866 = vpop.f32.mrb[0].mxu0
      %v6867 = vadd.f32 0.0, %v6866
      %v6868 = vpop.f32.mrb[0].mxu0
      %v6869 = vpop.f32.mrb[0].mxu0
      %v6870 = vadd.f32 0.0, %v6869
      %v6871 = vpop.f32.mrb[0].mxu0
      %6872 = vmatprep.mubr.bf16.mxu0 0
      %6873 = vmatmul.mubr.bf16.gmra.mrb[0].mxu0 %v6731
      %v6874 = vpop.f32.mrb[0].mxu0
      %v6875 = vadd.f32 0.0, %v6874
      %v6876 = vpop.f32.mrb[0].mxu0
      %v6877 = vpop.f32.mrb[0].mxu0
      %v6878 = vadd.f32 0.0, %v6877
      %v6879 = vpop.f32.mrb[0].mxu0
      %6880 = vmatprep.mubr.bf16.mxu0 0
      %6881 = vmatmul.mubr.bf16.gmra.mrb[0].mxu0 %v6732
      %v6882 = vpop.f32.mrb[0].mxu0
      %v6883 = vadd.f32 0.0, %v6882
      %v6884 = vpop.f32.mrb[0].mxu0
      %v6885 = vpop.f32.mrb[0].mxu0
      %v6886 = vadd.f32 0.0, %v6885
      %v6887 = vpop.f32.mrb[0].mxu0
      %6888 = vmatprep.mubr.bf16.mxu0 0
      %6889 = vmatmul.mubr.bf16.gmra.mrb[0].mxu0 %v6733
      %v6890 = vpop.f32.mrb[0].mxu0
      %v6891 = vadd.f32 0.0, %v6890
      %v6892 = vpop.f32.mrb[0].mxu0
      %v6893 = vpop.f32.mrb[0].mxu0
      %v6894 = vadd.f32 0.0, %v6893
      %v6895 = vpop.f32.mrb[0].mxu0
      %6896 = vmatprep.mubr.bf16.mxu0 0
      %6897 = vmatmul.mubr.bf16.gmra.mrb[0].mxu0 %v6734
      %v6898 = vpop.f32.mrb[0].mxu0
      %v6899 = vadd.f32 0.0, %v6898
      %v6900 = vpop.f32.mrb[0].mxu0
      %v6901 = vpop.f32.mrb[0].mxu0
      %v6902 = vadd.f32 0.0, %v6901
      %v6903 = vpop.f32.mrb[0].mxu0
      %6904 = vmatprep.mubr.bf16.mxu0 0
      %6905 = vmatmul.mubr.bf16.gmra.mrb[0].mxu0 %v6735
      %v6906 = vpop.f32.mrb[0].mxu0
      %v6907 = vadd.f32 0.0, %v6906
      %v6908 = vpop.f32.mrb[0].mxu0
      %v6909 = vpop.f32.mrb[0].mxu0
      %v6910 = vadd.f32 0.0, %v6909
      %v6911 = vpop.f32.mrb[0].mxu0
      %6912 = vmatprep.mubr.bf16.mxu0 0
      %6913 = vmatmul.mubr.bf16.gmra.mrb[0].mxu0 %v6736
      %v6914 = vpop.f32.mrb[0].mxu0
      %v6915 = vadd.f32 0.0, %v6914
      %v6916 = vpop.f32.mrb[0].mxu0
      %v6917 = vpop.f32.mrb[0].mxu0
      %v6918 = vadd.f32 0.0, %v6917
      %v6919 = vpop.f32.mrb[0].mxu0
      %6920 = vmatprep.mubr.bf16.mxu0 0
      %6921 = vmatmul.mubr.bf16.gmra.mrb[0].mxu0 %v6737
      %v6922 = vpop.f32.mrb[0].mxu0
      %v6923 = vadd.f32 0.0, %v6922
      %v6924 = vpop.f32.mrb[0].mxu0
      %v6925 = vpop.f32.mrb[0].mxu0
      %v6926 = vadd.f32 0.0, %v6925
      %v6927 = vpop.f32.mrb[0].mxu0
      %6928 = vmatprep.mubr.bf16.mxu0 0
      %6929 = vmatmul.mubr.bf16.gmra.mrb[0].mxu0 %v6738
      %v6930 = vpop.f32.mrb[0].mxu0
      %v6931 = vadd.f32 0.0, %v6930
      %v6932 = vpop.f32.mrb[0].mxu0
      %v6933 = vpop.f32.mrb[0].mxu0
      %v6934 = vadd.f32 0.0, %v6933
      %v6935 = vpop.f32.mrb[0].mxu0
      %6936 = vmatprep.mubr.bf16.mxu0 0
      %6937 = vmatmul.mubr.bf16.gmra.mrb[0].mxu0 %v6739
      %v6938 = vpop.f32.mrb[0].mxu0
      %v6939 = vadd.f32 0.0, %v6938
      %v6940 = vpop.f32.mrb[0].mxu0
      %v6941 = vpop.f32.mrb[0].mxu0
      %v6942 = vadd.f32 0.0, %v6941
      %v6943 = vpop.f32.mrb[0].mxu0
      %6944 = vmatprep.mubr.bf16.mxu0 0
      %6945 = vmatmul.mubr.bf16.gmra.mrb[0].mxu0 %v6740
      %v6946 = vpop.f32.mrb[0].mxu0
      %v6947 = vadd.f32 0.0, %v6946
      %v6948 = vpop.f32.mrb[0].mxu0
      %v6949 = vpop.f32.mrb[0].mxu0
      %v6950 = vadd.f32 0.0, %v6949
      %v6951 = vpop.f32.mrb[0].mxu0
      %6952 = vmatprep.mubr.bf16.mxu0 0
      %6953 = vmatmul.mubr.bf16.gmra.mrb[0].mxu0 %v6741
      %v6954 = vpop.f32.mrb[0].mxu0
      %v6955 = vadd.f32 0.0, %v6954
      %v6956 = vpop.f32.mrb[0].mxu0
      %v6957 = vpop.f32.mrb[0].mxu0
      %v6958 = vadd.f32 0.0, %v6957
      %v6959 = vpop.f32.mrb[0].mxu0
      %6960 = vmatprep.mubr.bf16.mxu0 0
      %6961 = vmatmul.mubr.bf16.gmra.mrb[0].mxu0 %v6742
      %v6962 = vpop.f32.mrb[0].mxu0
      %v6963 = vadd.f32 0.0, %v6962
      %v6964 = vpop.f32.mrb[0].mxu0
      %v6965 = vpop.f32.mrb[0].mxu0
      %v6966 = vadd.f32 0.0, %v6965
      %v6967 = vpop.f32.mrb[0].mxu0
      %6968 = vdwg.mxu0
      %v6969 = vadd.f32 %v6663, %v6843
      %v6970 = vadd.f32 %v6664, %v6846
      %v6971 = vadd.f32 %v6665, %v6851
      %v6972 = vadd.f32 %v6666, %v6854
      %v6973 = vadd.f32 %v6667, %v6859
      %v6974 = vadd.f32 %v6668, %v6862
      %v6975 = vadd.f32 %v6669, %v6867
      %v6976 = vadd.f32 %v6670, %v6870
      %v6977 = vadd.f32 %v6671, %v6875
      %v6978 = vadd.f32 %v6672, %v6878
      %v6979 = vadd.f32 %v6673, %v6883
      %v6980 = vadd.f32 %v6674, %v6886
      %v6981 = vadd.f32 %v6675, %v6891
      %v6982 = vadd.f32 %v6676, %v6894
      %v6983 = vadd.f32 %v6677, %v6899
      %v6984 = vadd.f32 %v6678, %v6902
      %v6985 = vadd.f32 %v6679, %v6907
      %v6986 = vadd.f32 %v6680, %v6910
      %v6987 = vadd.f32 %v6681, %v6915
      %v6988 = vadd.f32 %v6682, %v6918
      %v6989 = vadd.f32 %v6683, %v6923
      %v6990 = vadd.f32 %v6684, %v6926
      %v6991 = vadd.f32 %v6685, %v6931
      %v6992 = vadd.f32 %v6686, %v6934
      %v6993 = vadd.f32 %v6687, %v6939
      %v6994 = vadd.f32 %v6688, %v6942
      %v6995 = vadd.f32 %v6689, %v6947
      %v6996 = vadd.f32 %v6690, %v6950
      %v6997 = vadd.f32 %v6691, %v6955
      %v6998 = vadd.f32 %v6692, %v6958
      %v6999 = vadd.f32 %v6693, %v6963
      %v7000 = vadd.f32 %v6694, %v6966
      %v7001 = vld [vmem:[#allocation3 + $0x29] sm:$0xff]
      %v7002 = vld [vmem:[#allocation3 + $0x31] sm:$0xff]
      %v7003 = vld [vmem:[#allocation3 + $0x39] sm:$0xff]
      %v7004 = vld [vmem:[#allocation3 + $0x41] sm:$0xff]
      %v7005 = vld [vmem:[#allocation3 + $0x49] sm:$0xff]
      %v7006 = vld [vmem:[#allocation3 + $0x51] sm:$0xff]
      %v7007 = vld [vmem:[#allocation3 + $0x59] sm:$0xff]
      %v7008 = vld [vmem:[#allocation3 + $0x61] sm:$0xff]
      %v7009 = vld [vmem:[#allocation3 + $0x69] sm:$0xff]
      %v7010 = vld [vmem:[#allocation3 + $0x71] sm:$0xff]
      %v7011 = vld [vmem:[#allocation3 + $0x79] sm:$0xff]
      %v7012 = vld [vmem:[#allocation3 + $0x81] sm:$0xff]
      %v7013 = vld [vmem:[#allocation3 + $0x89] sm:$0xff]
      %v7014 = vld [vmem:[#allocation3 + $0x91] sm:$0xff]
      %v7015 = vld [vmem:[#allocation3 + $0x99] sm:$0xff]
      %v7016 = vld [vmem:[#allocation3 + $0xa1] sm:$0xff]
      %v7017 = vld [vmem:[#allocation3 + $0xa9] sm:$0xff]
      %v7018 = vld [vmem:[#allocation3 + $0xb1] sm:$0xff]
      %v7019 = vld [vmem:[#allocation3 + $0xb9] sm:$0xff]
      %v7020 = vld [vmem:[#allocation3 + $0xc1] sm:$0xff]
      %v7021 = vld [vmem:[#allocation3 + $0xc9] sm:$0xff]
      %v7022 = vld [vmem:[#allocation3 + $0xd1] sm:$0xff]
      %v7023 = vld [vmem:[#allocation3 + $0xd9] sm:$0xff]
      %v7024 = vld [vmem:[#allocation3 + $0xe1] sm:$0xff]
      %v7025 = vld [vmem:[#allocation3 + $0xe9] sm:$0xff]
      %v7026 = vld [vmem:[#allocation3 + $0xf1] sm:$0xff]
      %v7027 = vld [vmem:[#allocation3 + $0xf9] sm:$0xff]
      %v7028 = vld [vmem:[#allocation3 + $0x101] sm:$0xff]
      %v7029 = vld [vmem:[#allocation3 + $0x109] sm:$0xff]
      %v7030 = vld [vmem:[#allocation3 + $0x111] sm:$0xff]
      %v7031 = vld [vmem:[#allocation3 + $0x119] sm:$0xff]
      %v7032 = vld [vmem:[#allocation3 + $0x121] sm:$0xff]
      %v7033 = vsel %vm1983, %v7001, 0.0
      %v7034 = vsel %vm1984, %v7002, 0.0
      %v7035 = vsel %vm1985, %v7003, 0.0
      %v7036 = vsel %vm1986, %v7004, 0.0
      %v7037 = vsel %vm1987, %v7005, 0.0
      %v7038 = vsel %vm1988, %v7006, 0.0
      %v7039 = vsel %vm1989, %v7007, 0.0
      %v7040 = vsel %vm1990, %v7008, 0.0
      %v7041 = vsel %vm1991, %v7009, 0.0
      %v7042 = vsel %vm1992, %v7010, 0.0
      %v7043 = vsel %vm1993, %v7011, 0.0
      %v7044 = vsel %vm1994, %v7012, 0.0
      %v7045 = vsel %vm1995, %v7013, 0.0
      %v7046 = vsel %vm1996, %v7014, 0.0
      %v7047 = vsel %vm1997, %v7015, 0.0
      %v7048 = vsel %vm1998, %v7016, 0.0
      %v7049 = vsel %vm1999, %v7017, 0.0
      %v7050 = vsel %vm2000, %v7018, 0.0
      %v7051 = vsel %vm2001, %v7019, 0.0
      %v7052 = vsel %vm2002, %v7020, 0.0
      %v7053 = vsel %vm2003, %v7021, 0.0
      %v7054 = vsel %vm2004, %v7022, 0.0
      %v7055 = vsel %vm2005, %v7023, 0.0
      %v7056 = vsel %vm2006, %v7024, 0.0
      %v7057 = vsel %vm2007, %v7025, 0.0
      %v7058 = vsel %vm2008, %v7026, 0.0
      %v7059 = vsel %vm2009, %v7027, 0.0
      %v7060 = vsel %vm2010, %v7028, 0.0
      %v7061 = vsel %vm2011, %v7029, 0.0
      %v7062 = vsel %vm2012, %v7030, 0.0
      %v7063 = vsel %vm2013, %v7031, 0.0
      %v7064 = vsel %vm2014, %v7032, 0.0
      %v7065 = vpack.c.bf16 %v7034, %v7033
      %v7066 = vpack.c.bf16 %v7036, %v7035
      %v7067 = vpack.c.bf16 %v7038, %v7037
      %v7068 = vpack.c.bf16 %v7040, %v7039
      %v7069 = vpack.c.bf16 %v7042, %v7041
      %v7070 = vpack.c.bf16 %v7044, %v7043
      %v7071 = vpack.c.bf16 %v7046, %v7045
      %v7072 = vpack.c.bf16 %v7048, %v7047
      %v7073 = vpack.c.bf16 %v7050, %v7049
      %v7074 = vpack.c.bf16 %v7052, %v7051
      %v7075 = vpack.c.bf16 %v7054, %v7053
      %v7076 = vpack.c.bf16 %v7056, %v7055
      %v7077 = vpack.c.bf16 %v7058, %v7057
      %v7078 = vpack.c.bf16 %v7060, %v7059
      %v7079 = vpack.c.bf16 %v7062, %v7061
      %v7080 = vpack.c.bf16 %v7064, %v7063
      %s7081 = scalar_lea.vmem %s5, 512
      %v7082 = vld [vmem:[%s7081] sm:$0xf]
      %v7083 = vld [vmem:[%s7081 + $0x4] sm:$0xf]
      %v7084 = vld [vmem:[%s7081 + $0x8] sm:$0xf]
      %v7085 = vld [vmem:[%s7081 + $0xc] sm:$0xf]
      %v7086 = vld [vmem:[%s7081 + $0x10] sm:$0xf]
      %v7087 = vld [vmem:[%s7081 + $0x14] sm:$0xf]
      %v7088 = vld [vmem:[%s7081 + $0x18] sm:$0xf]
      %v7089 = vld [vmem:[%s7081 + $0x1c] sm:$0xf]
      %v7090 = vld [vmem:[%s7081 + $0x20] sm:$0xf]
      %v7091 = vld [vmem:[%s7081 + $0x24] sm:$0xf]
      %v7092 = vld [vmem:[%s7081 + $0x28] sm:$0xf]
      %v7093 = vld [vmem:[%s7081 + $0x2c] sm:$0xf]
      %v7094 = vld [vmem:[%s7081 + $0x30] sm:$0xf]
      %v7095 = vld [vmem:[%s7081 + $0x34] sm:$0xf]
      %v7096 = vld [vmem:[%s7081 + $0x38] sm:$0xf]
      %v7097 = vld [vmem:[%s7081 + $0x3c] sm:$0xf]
      %v7114 = vunpack.c.l.b16 %v7082
      %v7115 = vunpack.c.l.b16 %v7083
      %v7116 = vunpack.c.l.b16 %v7084
      %v7117 = vunpack.c.l.b16 %v7085
      %v7118 = vunpack.c.l.b16 %v7086
      %v7119 = vunpack.c.l.b16 %v7087
      %v7120 = vunpack.c.l.b16 %v7088
      %v7121 = vunpack.c.l.b16 %v7089
      %v7122 = vunpack.c.l.b16 %v7090
      %v7123 = vunpack.c.l.b16 %v7091
      %v7124 = vunpack.c.l.b16 %v7092
      %v7125 = vunpack.c.l.b16 %v7093
      %v7126 = vunpack.c.l.b16 %v7094
      %v7127 = vunpack.c.l.b16 %v7095
      %v7128 = vunpack.c.l.b16 %v7096
      %v7129 = vunpack.c.l.b16 %v7097
      %v7130 = vpack.c.b16 %v7115, %v7114
      %v7131 = vpack.c.b16 %v7117, %v7116
      %v7132 = vpack.c.b16 %v7119, %v7118
      %v7133 = vpack.c.b16 %v7121, %v7120
      %v7134 = vpack.c.b16 %v7123, %v7122
      %v7135 = vpack.c.b16 %v7125, %v7124
      %v7136 = vpack.c.b16 %v7127, %v7126
      %v7137 = vpack.c.b16 %v7129, %v7128
      %7146 = vmatprep.subr.bf16.mxu0 0
      %7147 = vmatpush1.bf16.msra.mxu0 %v7130
      %7148 = vmatprep.subr.bf16.mxu0 0
      %7149 = vmatpush1.bf16.msra.mxu0 %v7131
      %7150 = vmatprep.subr.bf16.mxu0 0
      %7151 = vmatpush1.bf16.msra.mxu0 %v7132
      %7152 = vmatprep.subr.bf16.mxu0 0
      %7153 = vmatpush1.bf16.msra.mxu0 %v7133
      %7154 = vmatprep.subr.bf16.mxu0 0
      %7155 = vmatpush1.bf16.msra.mxu0 %v7134
      %7156 = vmatprep.subr.bf16.mxu0 0
      %7157 = vmatpush1.bf16.msra.mxu0 %v7135
      %7158 = vmatprep.subr.bf16.mxu0 0
      %7159 = vmatpush1.bf16.msra.mxu0 %v7136
      %7160 = vmatprep.subr.bf16.mxu0 0
      %7161 = vmatpush1.bf16.msra.mxu0 %v7137
      %7162 = vmatprep.subr.bf16.mxu0 0
      %7163 = vmatpush1.bf16.msra.mxu0 0
      %7164 = vmatprep.subr.bf16.mxu0 0
      %7165 = vmatpush1.bf16.msra.mxu0 0
      %7166 = vmatprep.subr.bf16.mxu0 0
      %7167 = vmatpush1.bf16.msra.mxu0 0
      %7168 = vmatprep.subr.bf16.mxu0 0
      %7169 = vmatpush1.bf16.msra.mxu0 0
      %7170 = vmatprep.subr.bf16.mxu0 0
      %7171 = vmatpush1.bf16.msra.mxu0 0
      %7172 = vmatprep.subr.bf16.mxu0 0
      %7173 = vmatpush1.bf16.msra.mxu0 0
      %7174 = vmatprep.subr.bf16.mxu0 0
      %7175 = vmatpush1.bf16.msra.mxu0 0
      %7176 = vmatprep.subr.bf16.mxu0 0
      %7177 = vmatpush1.bf16.msra.mxu0 0
      %7178 = vmatprep.mubr.bf16.mxu0 0
      %7179 = vmatmul.mubr.bf16.gmra.mrb[0].mxu0 %v7065
      %v7180 = vpop.f32.mrb[0].mxu0
      %v7181 = vadd.f32 0.0, %v7180
      %v7182 = vpop.f32.mrb[0].mxu0
      %v7183 = vpop.f32.mrb[0].mxu0
      %v7184 = vadd.f32 0.0, %v7183
      %v7185 = vpop.f32.mrb[0].mxu0
      %7186 = vmatprep.mubr.bf16.mxu0 0
      %7187 = vmatmul.mubr.bf16.gmra.mrb[0].mxu0 %v7066
      %v7188 = vpop.f32.mrb[0].mxu0
      %v7189 = vadd.f32 0.0, %v7188
      %v7190 = vpop.f32.mrb[0].mxu0
      %v7191 = vpop.f32.mrb[0].mxu0
      %v7192 = vadd.f32 0.0, %v7191
      %v7193 = vpop.f32.mrb[0].mxu0
      %7194 = vmatprep.mubr.bf16.mxu0 0
      %7195 = vmatmul.mubr.bf16.gmra.mrb[0].mxu0 %v7067
      %v7196 = vpop.f32.mrb[0].mxu0
      %v7197 = vadd.f32 0.0, %v7196
      %v7198 = vpop.f32.mrb[0].mxu0
      %v7199 = vpop.f32.mrb[0].mxu0
      %v7200 = vadd.f32 0.0, %v7199
      %v7201 = vpop.f32.mrb[0].mxu0
      %7202 = vmatprep.mubr.bf16.mxu0 0
      %7203 = vmatmul.mubr.bf16.gmra.mrb[0].mxu0 %v7068
      %v7204 = vpop.f32.mrb[0].mxu0
      %v7205 = vadd.f32 0.0, %v7204
      %v7206 = vpop.f32.mrb[0].mxu0
      %v7207 = vpop.f32.mrb[0].mxu0
      %v7208 = vadd.f32 0.0, %v7207
      %v7209 = vpop.f32.mrb[0].mxu0
      %7210 = vmatprep.mubr.bf16.mxu0 0
      %7211 = vmatmul.mubr.bf16.gmra.mrb[0].mxu0 %v7069
      %v7212 = vpop.f32.mrb[0].mxu0
      %v7213 = vadd.f32 0.0, %v7212
      %v7214 = vpop.f32.mrb[0].mxu0
      %v7215 = vpop.f32.mrb[0].mxu0
      %v7216 = vadd.f32 0.0, %v7215
      %v7217 = vpop.f32.mrb[0].mxu0
      %7218 = vmatprep.mubr.bf16.mxu0 0
      %7219 = vmatmul.mubr.bf16.gmra.mrb[0].mxu0 %v7070
      %v7220 = vpop.f32.mrb[0].mxu0
      %v7221 = vadd.f32 0.0, %v7220
      %v7222 = vpop.f32.mrb[0].mxu0
      %v7223 = vpop.f32.mrb[0].mxu0
      %v7224 = vadd.f32 0.0, %v7223
      %v7225 = vpop.f32.mrb[0].mxu0
      %7226 = vmatprep.mubr.bf16.mxu0 0
      %7227 = vmatmul.mubr.bf16.gmra.mrb[0].mxu0 %v7071
      %v7228 = vpop.f32.mrb[0].mxu0
      %v7229 = vadd.f32 0.0, %v7228
      %v7230 = vpop.f32.mrb[0].mxu0
      %v7231 = vpop.f32.mrb[0].mxu0
      %v7232 = vadd.f32 0.0, %v7231
      %v7233 = vpop.f32.mrb[0].mxu0
      %7234 = vmatprep.mubr.bf16.mxu0 0
      %7235 = vmatmul.mubr.bf16.gmra.mrb[0].mxu0 %v7072
      %v7236 = vpop.f32.mrb[0].mxu0
      %v7237 = vadd.f32 0.0, %v7236
      %v7238 = vpop.f32.mrb[0].mxu0
      %v7239 = vpop.f32.mrb[0].mxu0
      %v7240 = vadd.f32 0.0, %v7239
      %v7241 = vpop.f32.mrb[0].mxu0
      %7242 = vmatprep.mubr.bf16.mxu0 0
      %7243 = vmatmul.mubr.bf16.gmra.mrb[0].mxu0 %v7073
      %v7244 = vpop.f32.mrb[0].mxu0
      %v7245 = vadd.f32 0.0, %v7244
      %v7246 = vpop.f32.mrb[0].mxu0
      %v7247 = vpop.f32.mrb[0].mxu0
      %v7248 = vadd.f32 0.0, %v7247
      %v7249 = vpop.f32.mrb[0].mxu0
      %7250 = vmatprep.mubr.bf16.mxu0 0
      %7251 = vmatmul.mubr.bf16.gmra.mrb[0].mxu0 %v7074
      %v7252 = vpop.f32.mrb[0].mxu0
      %v7253 = vadd.f32 0.0, %v7252
      %v7254 = vpop.f32.mrb[0].mxu0
      %v7255 = vpop.f32.mrb[0].mxu0
      %v7256 = vadd.f32 0.0, %v7255
      %v7257 = vpop.f32.mrb[0].mxu0
      %7258 = vmatprep.mubr.bf16.mxu0 0
      %7259 = vmatmul.mubr.bf16.gmra.mrb[0].mxu0 %v7075
      %v7260 = vpop.f32.mrb[0].mxu0
      %v7261 = vadd.f32 0.0, %v7260
      %v7262 = vpop.f32.mrb[0].mxu0
      %v7263 = vpop.f32.mrb[0].mxu0
      %v7264 = vadd.f32 0.0, %v7263
      %v7265 = vpop.f32.mrb[0].mxu0
      %7266 = vmatprep.mubr.bf16.mxu0 0
      %7267 = vmatmul.mubr.bf16.gmra.mrb[0].mxu0 %v7076
      %v7268 = vpop.f32.mrb[0].mxu0
      %v7269 = vadd.f32 0.0, %v7268
      %v7270 = vpop.f32.mrb[0].mxu0
      %v7271 = vpop.f32.mrb[0].mxu0
      %v7272 = vadd.f32 0.0, %v7271
      %v7273 = vpop.f32.mrb[0].mxu0
      %7274 = vmatprep.mubr.bf16.mxu0 0
      %7275 = vmatmul.mubr.bf16.gmra.mrb[0].mxu0 %v7077
      %v7276 = vpop.f32.mrb[0].mxu0
      %v7277 = vadd.f32 0.0, %v7276
      %v7278 = vpop.f32.mrb[0].mxu0
      %v7279 = vpop.f32.mrb[0].mxu0
      %v7280 = vadd.f32 0.0, %v7279
      %v7281 = vpop.f32.mrb[0].mxu0
      %7282 = vmatprep.mubr.bf16.mxu0 0
      %7283 = vmatmul.mubr.bf16.gmra.mrb[0].mxu0 %v7078
      %v7284 = vpop.f32.mrb[0].mxu0
      %v7285 = vadd.f32 0.0, %v7284
      %v7286 = vpop.f32.mrb[0].mxu0
      %v7287 = vpop.f32.mrb[0].mxu0
      %v7288 = vadd.f32 0.0, %v7287
      %v7289 = vpop.f32.mrb[0].mxu0
      %7290 = vmatprep.mubr.bf16.mxu0 0
      %7291 = vmatmul.mubr.bf16.gmra.mrb[0].mxu0 %v7079
      %v7292 = vpop.f32.mrb[0].mxu0
      %v7293 = vadd.f32 0.0, %v7292
      %v7294 = vpop.f32.mrb[0].mxu0
      %v7295 = vpop.f32.mrb[0].mxu0
      %v7296 = vadd.f32 0.0, %v7295
      %v7297 = vpop.f32.mrb[0].mxu0
      %7298 = vmatprep.mubr.bf16.mxu0 0
      %7299 = vmatmul.mubr.bf16.gmra.mrb[0].mxu0 %v7080
      %v7300 = vpop.f32.mrb[0].mxu0
      %v7301 = vadd.f32 0.0, %v7300
      %v7302 = vpop.f32.mrb[0].mxu0
      %v7303 = vpop.f32.mrb[0].mxu0
      %v7304 = vadd.f32 0.0, %v7303
      %v7305 = vpop.f32.mrb[0].mxu0
      %7306 = vdwg.mxu0
      %v7307 = vadd.f32 %v6969, %v7181
      %v7308 = vadd.f32 %v6970, %v7184
      %v7309 = vadd.f32 %v6971, %v7189
      %v7310 = vadd.f32 %v6972, %v7192
      %v7311 = vadd.f32 %v6973, %v7197
      %v7312 = vadd.f32 %v6974, %v7200
      %v7313 = vadd.f32 %v6975, %v7205
      %v7314 = vadd.f32 %v6976, %v7208
      %v7315 = vadd.f32 %v6977, %v7213
      %v7316 = vadd.f32 %v6978, %v7216
      %v7317 = vadd.f32 %v6979, %v7221
      %v7318 = vadd.f32 %v6980, %v7224
      %v7319 = vadd.f32 %v6981, %v7229
      %v7320 = vadd.f32 %v6982, %v7232
      %v7321 = vadd.f32 %v6983, %v7237
      %v7322 = vadd.f32 %v6984, %v7240
      %v7323 = vadd.f32 %v6985, %v7245
      %v7324 = vadd.f32 %v6986, %v7248
      %v7325 = vadd.f32 %v6987, %v7253
      %v7326 = vadd.f32 %v6988, %v7256
      %v7327 = vadd.f32 %v6989, %v7261
      %v7328 = vadd.f32 %v6990, %v7264
      %v7329 = vadd.f32 %v6991, %v7269
      %v7330 = vadd.f32 %v6992, %v7272
      %v7331 = vadd.f32 %v6993, %v7277
      %v7332 = vadd.f32 %v6994, %v7280
      %v7333 = vadd.f32 %v6995, %v7285
      %v7334 = vadd.f32 %v6996, %v7288
      %v7335 = vadd.f32 %v6997, %v7293
      %v7336 = vadd.f32 %v6998, %v7296
      %v7337 = vadd.f32 %v6999, %v7301
      %v7338 = vadd.f32 %v7000, %v7304
      %v7339 = vld [vmem:[%s6] sm:$0x1]
      %v7341 = vlaneseq
      %v7342 = vshrl.u32 %v7341, 7
      %v7343 = vsub.s32 0, %v7342
      %v7344 = vrot.slane %v7339, %v7343
      %v7346 = vadd.f32 %v7307, %v7344
      %v7347 = vadd.f32 %v7308, %v7344
      %v7348 = vadd.f32 %v7309, %v7344
      %v7349 = vadd.f32 %v7310, %v7344
      %v7350 = vadd.f32 %v7311, %v7344
      %v7351 = vadd.f32 %v7312, %v7344
      %v7352 = vadd.f32 %v7313, %v7344
      %v7353 = vadd.f32 %v7314, %v7344
      %v7354 = vadd.f32 %v7315, %v7344
      %v7355 = vadd.f32 %v7316, %v7344
      %v7356 = vadd.f32 %v7317, %v7344
      %v7357 = vadd.f32 %v7318, %v7344
      %v7358 = vadd.f32 %v7319, %v7344
      %v7359 = vadd.f32 %v7320, %v7344
      %v7360 = vadd.f32 %v7321, %v7344
      %v7361 = vadd.f32 %v7322, %v7344
      %v7362 = vadd.f32 %v7323, %v7344
      %v7363 = vadd.f32 %v7324, %v7344
      %v7364 = vadd.f32 %v7325, %v7344
      %v7365 = vadd.f32 %v7326, %v7344
      %v7366 = vadd.f32 %v7327, %v7344
      %v7367 = vadd.f32 %v7328, %v7344
      %v7368 = vadd.f32 %v7329, %v7344
      %v7369 = vadd.f32 %v7330, %v7344
      %v7370 = vadd.f32 %v7331, %v7344
      %v7371 = vadd.f32 %v7332, %v7344
      %v7372 = vadd.f32 %v7333, %v7344
      %v7373 = vadd.f32 %v7334, %v7344
      %v7374 = vadd.f32 %v7335, %v7344
      %v7375 = vadd.f32 %v7336, %v7344
      %v7376 = vadd.f32 %v7337, %v7344
      %v7377 = vadd.f32 %v7338, %v7344
      %v7378 = vadd.f32 %v7346, %v4426
      %v7379 = vadd.f32 %v7347, %v4427
      %v7380 = vadd.f32 %v7348, %v4428
      %v7381 = vadd.f32 %v7349, %v4429
      %v7382 = vadd.f32 %v7350, %v4430
      %v7383 = vadd.f32 %v7351, %v4431
      %v7384 = vadd.f32 %v7352, %v4432
      %v7385 = vadd.f32 %v7353, %v4433
      %v7386 = vadd.f32 %v7354, %v4434
      %v7387 = vadd.f32 %v7355, %v4435
      %v7388 = vadd.f32 %v7356, %v4436
      %v7389 = vadd.f32 %v7357, %v4437
      %v7390 = vadd.f32 %v7358, %v4438
      %v7391 = vadd.f32 %v7359, %v4439
      %v7392 = vadd.f32 %v7360, %v4440
      %v7393 = vadd.f32 %v7361, %v4441
      %v7394 = vadd.f32 %v7362, %v4442
      %v7395 = vadd.f32 %v7363, %v4443
      %v7396 = vadd.f32 %v7364, %v4444
      %v7397 = vadd.f32 %v7365, %v4445
      %v7398 = vadd.f32 %v7366, %v4446
      %v7399 = vadd.f32 %v7367, %v4447
      %v7400 = vadd.f32 %v7368, %v4448
      %v7401 = vadd.f32 %v7369, %v4449
      %v7402 = vadd.f32 %v7370, %v4450
      %v7403 = vadd.f32 %v7371, %v4451
      %v7404 = vadd.f32 %v7372, %v4452
      %v7405 = vadd.f32 %v7373, %v4453
      %v7406 = vadd.f32 %v7374, %v4454
      %v7407 = vadd.f32 %v7375, %v4455
      %v7408 = vadd.f32 %v7376, %v4456
      %v7409 = vadd.f32 %v7377, %v4457
      %v7410 = vmax.f32 %v7378, 0.0
      %v7411 = vmax.f32 %v7379, 0.0
      %v7412 = vmax.f32 %v7380, 0.0
      %v7413 = vmax.f32 %v7381, 0.0
      %v7414 = vmax.f32 %v7382, 0.0
      %v7415 = vmax.f32 %v7383, 0.0
      %v7416 = vmax.f32 %v7384, 0.0
      %v7417 = vmax.f32 %v7385, 0.0
      %v7418 = vmax.f32 %v7386, 0.0
      %v7419 = vmax.f32 %v7387, 0.0
      %v7420 = vmax.f32 %v7388, 0.0
      %v7421 = vmax.f32 %v7389, 0.0
      %v7422 = vmax.f32 %v7390, 0.0
      %v7423 = vmax.f32 %v7391, 0.0
      %v7424 = vmax.f32 %v7392, 0.0
      %v7425 = vmax.f32 %v7393, 0.0
      %v7426 = vmax.f32 %v7394, 0.0
      %v7427 = vmax.f32 %v7395, 0.0
      %v7428 = vmax.f32 %v7396, 0.0
      %v7429 = vmax.f32 %v7397, 0.0
      %v7430 = vmax.f32 %v7398, 0.0
      %v7431 = vmax.f32 %v7399, 0.0
      %v7432 = vmax.f32 %v7400, 0.0
      %v7433 = vmax.f32 %v7401, 0.0
      %v7434 = vmax.f32 %v7402, 0.0
      %v7435 = vmax.f32 %v7403, 0.0
      %v7436 = vmax.f32 %v7404, 0.0
      %v7437 = vmax.f32 %v7405, 0.0
      %v7438 = vmax.f32 %v7406, 0.0
      %v7439 = vmax.f32 %v7407, 0.0
      %v7440 = vmax.f32 %v7408, 0.0
      %v7441 = vmax.f32 %v7409, 0.0
      %v7442 = vpack.c.bf16 %v7411, %v7410
      %v7443 = vpack.c.bf16 %v7413, %v7412
      %v7444 = vpack.c.bf16 %v7415, %v7414
      %v7445 = vpack.c.bf16 %v7417, %v7416
      %v7446 = vpack.c.bf16 %v7419, %v7418
      %v7447 = vpack.c.bf16 %v7421, %v7420
      %v7448 = vpack.c.bf16 %v7423, %v7422
      %v7449 = vpack.c.bf16 %v7425, %v7424
      %v7450 = vpack.c.bf16 %v7427, %v7426
      %v7451 = vpack.c.bf16 %v7429, %v7428
      %v7452 = vpack.c.bf16 %v7431, %v7430
      %v7453 = vpack.c.bf16 %v7433, %v7432
      %v7454 = vpack.c.bf16 %v7435, %v7434
      %v7455 = vpack.c.bf16 %v7437, %v7436
      %v7456 = vpack.c.bf16 %v7439, %v7438
      %v7457 = vpack.c.bf16 %v7441, %v7440
      %7458 = vmatprep.subr.bf16.mxu0 0
      %7459 = vmatpush1.bf16.msra.mxu0 %v7442
      %7460 = vmatprep.subr.bf16.mxu0 0
      %7461 = vmatpush1.bf16.msra.mxu0 %v7443
      %7462 = vmatprep.subr.bf16.mxu0 0
      %7463 = vmatpush1.bf16.msra.mxu0 %v7444
      %7464 = vmatprep.subr.bf16.mxu0 0
      %7465 = vmatpush1.bf16.msra.mxu0 %v7445
      %7466 = vmatprep.subr.bf16.mxu0 0
      %7467 = vmatpush1.bf16.msra.mxu0 %v7446
      %7468 = vmatprep.subr.bf16.mxu0 0
      %7469 = vmatpush1.bf16.msra.mxu0 %v7447
      %7470 = vmatprep.subr.bf16.mxu0 0
      %7471 = vmatpush1.bf16.msra.mxu0 %v7448
      %7472 = vmatprep.subr.bf16.mxu0 0
      %7473 = vmatpush1.bf16.msra.mxu0 %v7449
      %7474 = vmatprep.subr.bf16.mxu0 0
      %7475 = vmatpush1.bf16.msra.mxu0 %v7450
      %7476 = vmatprep.subr.bf16.mxu0 0
      %7477 = vmatpush1.bf16.msra.mxu0 %v7451
      %7478 = vmatprep.subr.bf16.mxu0 0
      %7479 = vmatpush1.bf16.msra.mxu0 %v7452
      %7480 = vmatprep.subr.bf16.mxu0 0
      %7481 = vmatpush1.bf16.msra.mxu0 %v7453
      %7482 = vmatprep.subr.bf16.mxu0 0
      %7483 = vmatpush1.bf16.msra.mxu0 %v7454
      %7484 = vmatprep.subr.bf16.mxu0 0
      %7485 = vmatpush1.bf16.msra.mxu0 %v7455
      %7486 = vmatprep.subr.bf16.mxu0 0
      %7487 = vmatpush1.bf16.msra.mxu0 %v7456
      %7488 = vmatprep.subr.bf16.mxu0 0
      %7489 = vmatpush1.bf16.msra.mxu0 %v7457
      %7490 = vmatprep.mubr.bf16.mxu0 1065369472
      %7491 = vmatmul.mubr.bf16.gmra.mrb[0].mxu0 1065369472
      %v7492 = vpop.f32.mrb[0].mxu0
      %v7493 = vadd.f32 0.0, %v7492
      %v7494 = vpop.f32.mrb[0].mxu0
      %v7495 = vpop.f32.mrb[0].mxu0
      %v7496 = vpop.f32.mrb[0].mxu0
      %7497 = vdwg.mxu0
      %v7498 = vpack.c.bf16 %v7493, %v7493
      %v7499 = vld [vmem:[%s7] sm:$0xf]
      %v7500 = vld [vmem:[%s7 + $0x4] sm:$0xf]
      %v7501 = vld [vmem:[%s7 + $0x8] sm:$0xf]
      %v7502 = vld [vmem:[%s7 + $0xc] sm:$0xf]
      %v7503 = vld [vmem:[%s7 + $0x10] sm:$0xf]
      %v7504 = vld [vmem:[%s7 + $0x14] sm:$0xf]
      %v7505 = vld [vmem:[%s7 + $0x18] sm:$0xf]
      %v7506 = vld [vmem:[%s7 + $0x1c] sm:$0xf]
      %v7507 = vld [vmem:[%s7 + $0x20] sm:$0xf]
      %v7508 = vld [vmem:[%s7 + $0x24] sm:$0xf]
      %v7509 = vld [vmem:[%s7 + $0x28] sm:$0xf]
      %v7510 = vld [vmem:[%s7 + $0x2c] sm:$0xf]
      %v7511 = vld [vmem:[%s7 + $0x30] sm:$0xf]
      %v7512 = vld [vmem:[%s7 + $0x34] sm:$0xf]
      %v7513 = vld [vmem:[%s7 + $0x38] sm:$0xf]
      %v7514 = vld [vmem:[%s7 + $0x3c] sm:$0xf]
      %v7515 = vld [vmem:[%s8] sm:$0x1]
      %v7532 = vunpack.c.l.b16 %v7499
      %v7533 = vunpack.c.l.b16 %v7500
      %v7534 = vunpack.c.l.b16 %v7501
      %v7535 = vunpack.c.l.b16 %v7502
      %v7536 = vunpack.c.l.b16 %v7503
      %v7537 = vunpack.c.l.b16 %v7504
      %v7538 = vunpack.c.l.b16 %v7505
      %v7539 = vunpack.c.l.b16 %v7506
      %v7540 = vunpack.c.l.b16 %v7507
      %v7541 = vunpack.c.l.b16 %v7508
      %v7542 = vunpack.c.l.b16 %v7509
      %v7543 = vunpack.c.l.b16 %v7510
      %v7544 = vunpack.c.l.b16 %v7511
      %v7545 = vunpack.c.l.b16 %v7512
      %v7546 = vunpack.c.l.b16 %v7513
      %v7547 = vunpack.c.l.b16 %v7514
      %v7548 = vpack.c.b16 %v7533, %v7532
      %v7549 = vpack.c.b16 %v7535, %v7534
      %v7550 = vpack.c.b16 %v7537, %v7536
      %v7551 = vpack.c.b16 %v7539, %v7538
      %v7552 = vpack.c.b16 %v7541, %v7540
      %v7553 = vpack.c.b16 %v7543, %v7542
      %v7554 = vpack.c.b16 %v7545, %v7544
      %v7555 = vpack.c.b16 %v7547, %v7546
      %7564 = vmatprep.subr.bf16.mxu0 0
      %7565 = vmatpush1.bf16.msra.mxu0 %v7548
      %7566 = vmatprep.subr.bf16.mxu0 0
      %7567 = vmatpush1.bf16.msra.mxu0 %v7549
      %7568 = vmatprep.subr.bf16.mxu0 0
      %7569 = vmatpush1.bf16.msra.mxu0 %v7550
      %7570 = vmatprep.subr.bf16.mxu0 0
      %7571 = vmatpush1.bf16.msra.mxu0 %v7551
      %7572 = vmatprep.subr.bf16.mxu0 0
      %7573 = vmatpush1.bf16.msra.mxu0 %v7552
      %7574 = vmatprep.subr.bf16.mxu0 0
      %7575 = vmatpush1.bf16.msra.mxu0 %v7553
      %7576 = vmatprep.subr.bf16.mxu0 0
      %7577 = vmatpush1.bf16.msra.mxu0 %v7554
      %7578 = vmatprep.subr.bf16.mxu0 0
      %7579 = vmatpush1.bf16.msra.mxu0 %v7555
      %7580 = vmatprep.subr.bf16.mxu0 0
      %7581 = vmatpush1.bf16.msra.mxu0 0
      %7582 = vmatprep.subr.bf16.mxu0 0
      %7583 = vmatpush1.bf16.msra.mxu0 0
      %7584 = vmatprep.subr.bf16.mxu0 0
      %7585 = vmatpush1.bf16.msra.mxu0 0
      %7586 = vmatprep.subr.bf16.mxu0 0
      %7587 = vmatpush1.bf16.msra.mxu0 0
      %7588 = vmatprep.subr.bf16.mxu0 0
      %7589 = vmatpush1.bf16.msra.mxu0 0
      %7590 = vmatprep.subr.bf16.mxu0 0
      %7591 = vmatpush1.bf16.msra.mxu0 0
      %7592 = vmatprep.subr.bf16.mxu0 0
      %7593 = vmatpush1.bf16.msra.mxu0 0
      %7594 = vmatprep.subr.bf16.mxu0 0
      %7595 = vmatpush1.bf16.msra.mxu0 0
      %7596 = vmatprep.mubr.bf16.mxu0 0
      %7597 = vmatmul.mubr.bf16.gmra.mrb[0].mxu0 %v7498
      %v7598 = vpop.f32.mrb[0].mxu0
      %v7599 = vadd.f32 %v7515, %v7598
      %v7600 = vpop.f32.mrb[0].mxu0
      %v7601 = vpop.f32.mrb[0].mxu0
      %v7602 = vpop.f32.mrb[0].mxu0
      %7603 = vdwg.mxu0
      %v7604 = vlaneseq
      %v7605 = vand.u32 %v7604, 127
      %vm7606 = vcmp.lt.s32.totalorder %v7605, 16
      %v7607 = vsel %vm7606, %v7599, -inf
      %vm7608 = vcmask 1040384
      %v7609 = vsel %vm7608, %v7607, -inf
      %7610 = vmax.xlane.f32.xlu0 %v7609
      %v7611 = vpop.xlane.xlu0 %7610
      %v7612 = vsub.f32 %v7607, %v7611
      %v7613 = vmul.f32 %v7612, 1.442695
      %v7614 = vpow.pop %v7613
      %v7615 = vsel %vm7608, %v7614, 0.0
      %7616 = vadd.xlane.f32.xlu0 %v7615
      %v7617 = vpop.xlane.xlu0 %7616
      %v7618 = vrcp.pop %v7617
      %v7619 = vmul.f32 %v7614, %v7618
      %v7620 = vlaneseq
      %v7621 = vshrl.u32 %v7620, 7
      %v7622 = vsub.s32 0, %v7621
      %v7623 = vrot.slane %v7619, %v7622
      %7624 = vst [vmem:[%s330] sm:$0xff] %v7623
      %p7625 = scmp.lt.s32.totalorder %s20, 1
      %s7626 = scalar_select %p7625, %s20, 1
      %s7627 = smul.addr %s7626, 8
      %s7628 = scalar_lea.vmem %s9, %s7627
      // Predicated region
      $region57: #{forward.1} parent=55 // pred_check
        %p7629 = pneg %p232
      $region58: #{forward.1} parent=55 // pred_check_branch
        %7631 = sbr.rel (%p7629) target = $region60
      $region59: #{forward.1} parent=55 // pred_region
        _
      $region60: #{forward.1} parent=55 // pred_fallthru
        _
    $region56: #{forward.1} parent=5 // pred_fallthru
      _
    %p7632 = scmp.le.s32.totalorder 2, %s15
    // Predicated region
    $region61: #{forward.1} parent=5 // pred_check
      %p7633 = pneg %p7632
    $region62: #{forward.1} parent=5 // pred_check_branch
      %7635 = sbr.rel (%p7633) target = $region64
    $region63: #{forward.1} parent=5 // pred_region
      %s7636 = ssub.s32 %s15, 2
      // Predicated region
      $region65: #{forward.1} parent=63 // pred_check
        %p7637 = pneg %p238
      $region66: #{forward.1} parent=63 // pred_check_branch
        %7639 = sbr.rel (%p7637) target = $region68
      $region67: #{forward.1} parent=63 // pred_region
        %p7640 = scmp.lt.s32.totalorder %s21, 1
        %s7641 = scalar_select %p7640, %s21, 1
        %s7642 = smul.addr %s7641, 8
        %s7643 = scalar_lea.vmem %s9, %s7642
      $region68: #{forward.1} parent=63 // pred_fallthru
        _
    $region64: #{forward.1} parent=5 // pred_fallthru
      _
  $region6: #{forward.1} parent=0 // loop_footer
    %s19 = sadd.s32 1, %s15
  $region7: #{forward.1} parent=0 // loop_footer_branch
    %14 = sbr.rel target = $region3
  $region8: #{forward.1} parent=0 // loop_exit
    _

</llo_original>
